<compile_context>
chip_gen: v6e
topology: v6e:2x2x1
jax: 0.10.0
libtpu: 0.0.40
codegen_flags: <defaults>
</compile_context>

<pallas_src>
import functools

import jax
import jax.numpy as jnp
from jax import lax
from jax.experimental import pallas as pl
from jax.experimental.pallas import tpu as pltpu


def _round_up(x, m):
    return ((x + m - 1) // m) * m


# ----------------------------------------------------------------------------
# Fused "unbottleneck" linear: one GEMM for all layers' (h0, c0), Hp-aligned out
# ----------------------------------------------------------------------------
def _fused_linear_kernel(x_ref, w_ref, b_ref, o_ref):
    o_ref[...] = (
        jnp.dot(x_ref[...], w_ref[...], preferred_element_type=jnp.float32)
        + b_ref[...]
    )


def fused_unbottleneck(ic_padded, w_stacked_t, b_stacked):
    """ic_padded: (Bp, Dc), w_stacked_t: (Dc, L*2*Hp), b_stacked: (1, L*2*Hp)."""
    Bp = ic_padded.shape[0]
    Dout = w_stacked_t.shape[1]
    return pl.pallas_call(
        _fused_linear_kernel,
        out_shape=jax.ShapeDtypeStruct((Bp, Dout), jnp.float32),
    )(ic_padded, w_stacked_t, b_stacked)


# ----------------------------------------------------------------------------
# LSTM layer kernel: time-chunked recurrence with hoisted input projection
# ----------------------------------------------------------------------------
def _sigmoid_eup(x):
    # Exact identity sigmoid(x) = 0.5*tanh(0.5*x) + 0.5 — one EUP op per element
    # (vs exp + reciprocal); the extra mul/add lands on the 4-slot VPU (slack).
    return 0.5 * jnp.tanh(0.5 * x) + 0.5


def _lstm_chunk_kernel(x_ref, wih_ref, whh_ref, b_ref, h0_ref, c0_ref,
                       out_ref, h_scr, c_scr, xg_scr, *, t_chunk, hidden_pad,
                       unroll):
    Hp = hidden_pad
    Bb = x_ref.shape[1]
    Din = x_ref.shape[2]

    # h/c carry persists in scratch across time chunks; (re)initialize it at the
    # first chunk of every batch block (time axis is sequential / 'arbitrary').
    @pl.when(pl.program_id(1) == 0)
    def _():
        h_scr[...] = h0_ref[...]
        c_scr[...] = c0_ref[...]

    # Hoisted input projection: one (Tc*Bb, Din) @ (Din, 4*Hp) bf16 GEMM per chunk
    # (no time dependency), f32 accumulation, stored to VMEM scratch.
    x2d = x_ref[...].reshape(t_chunk * Bb, Din).astype(jnp.bfloat16)
    xg = jnp.dot(x2d, wih_ref[...], preferred_element_type=jnp.float32) + b_ref[...]
    xg_scr[...] = xg.reshape(t_chunk, Bb, 4 * Hp).astype(xg_scr.dtype)

    # Serial recurrence over the chunk; only h @ W_hh^T is on the per-step path.
    # h/c are loop-carried values (no per-step VMEM round-trip of the carry).
    def step(t, carry):
        h, c = carry
        gates = xg_scr[t].astype(jnp.float32) + jnp.dot(
            h.astype(jnp.bfloat16), whh_ref[...],
            preferred_element_type=jnp.float32)
        # Gate boundaries are multiples of Hp (128-lane aligned): no intra-vreg
        # slicing / XLU shuffles on the critical path. PyTorch order [i, f, g, o].
        i_g = _sigmoid_eup(gates[:, 0 * Hp:1 * Hp])
        f_g = _sigmoid_eup(gates[:, 1 * Hp:2 * Hp])
        g_g = jnp.tanh(gates[:, 2 * Hp:3 * Hp])
        o_g = _sigmoid_eup(gates[:, 3 * Hp:4 * Hp])
        c_new = f_g * c + i_g * g_g
        h_new = o_g * jnp.tanh(c_new)
        out_ref[t] = h_new.astype(out_ref.dtype)   # (Bb, Hp): lane-dense store
        return h_new, c_new

    h_fin, c_fin = lax.fori_loop(0, t_chunk, step, (h_scr[...], c_scr[...]),
                                 unroll=unroll)
    h_scr[...] = h_fin
    c_scr[...] = c_fin


def lstm_layer_pallas(x_tbd, w_ih_t, w_hh_t, bias, h0, c0, *, t_chunk, block_b,
                      out_dtype, xg_dtype):
    """One LSTM layer over the whole (padded) sequence.

    x_tbd:  (Tp, Bp, Din)   time-major input (bf16)
    w_ih_t: (Din, 4*Hp)     packed/padded, bf16
    w_hh_t: (Hp, 4*Hp)      packed/padded, bf16
    bias:   (1, 4*Hp)       b_ih + b_hh, padded, f32
    h0,c0:  (Bp, Hp)        padded initial states, f32
    returns (Tp, Bp, Hp) in out_dtype
    """
    Tp, Bp, Din = x_tbd.shape
    Hp = h0.shape[1]
    nb = Bp // block_b
    nc = Tp // t_chunk

    kernel = functools.partial(
        _lstm_chunk_kernel, t_chunk=t_chunk, hidden_pad=Hp,
        unroll=(t_chunk if t_chunk <= 16 else 8))

    return pl.pallas_call(
        kernel,
        out_shape=jax.ShapeDtypeStruct((Tp, Bp, Hp), out_dtype),
        grid_spec=pltpu.PrefetchScalarGridSpec(
            num_scalar_prefetch=0,
            grid=(nb, nc),                                            # (batch, time)
            in_specs=[
                pl.BlockSpec((t_chunk, block_b, Din), lambda b, c: (c, b, 0)),  # x chunk
                pl.BlockSpec((Din, 4 * Hp), lambda b, c: (0, 0)),     # W_ih^T (const)
                pl.BlockSpec((Hp, 4 * Hp), lambda b, c: (0, 0)),      # W_hh^T (const)
                pl.BlockSpec((1, 4 * Hp), lambda b, c: (0, 0)),       # bias   (const)
                pl.BlockSpec((block_b, Hp), lambda b, c: (b, 0)),     # h0
                pl.BlockSpec((block_b, Hp), lambda b, c: (b, 0)),     # c0
            ],
            out_specs=pl.BlockSpec((t_chunk, block_b, Hp), lambda b, c: (c, b, 0)),
            scratch_shapes=[
                pltpu.VMEM((block_b, Hp), jnp.float32),                # h carry
                pltpu.VMEM((block_b, Hp), jnp.float32),                # c carry
                pltpu.VMEM((t_chunk, block_b, 4 * Hp), xg_dtype),      # input gates
            ],
        ),
        compiler_params=pltpu.CompilerParams(
            # batch blocks are independent (v7x 2-TC sharding); time is sequential.
            dimension_semantics=("parallel", "arbitrary"),
            # above the 16/32 MiB scoped defaults, below v7x's 64 MiB physical VMEM.
            vmem_limit_bytes=48 * 1024 * 1024,
        ),
    )(x_tbd, w_ih_t, w_hh_t, bias, h0, c0)


# ----------------------------------------------------------------------------
# One-time weight packing: pad H -> Hp, 128-lane-aligned gate offsets
# ----------------------------------------------------------------------------
def _pack_lstm_layer(w_ih, w_hh, b_ih, b_hh, H, Hp, din_pad):
    """torch layout: w_ih (4H, Din), w_hh (4H, H), gate order [i, f, g, o]."""
    Din = w_ih.shape[1]
    w_ih_t = jnp.zeros((din_pad, 4 * Hp), jnp.float32)
    w_hh_t = jnp.zeros((Hp, 4 * Hp), jnp.float32)
    bias = jnp.zeros((1, 4 * Hp), jnp.float32)
    for k in range(4):
        w_ih_t = w_ih_t.at[:Din, k * Hp:k * Hp + H].set(w_ih[k * H:(k + 1) * H, :].T)
        w_hh_t = w_hh_t.at[:H, k * Hp:k * Hp + H].set(w_hh[k * H:(k + 1) * H, :].T)
        bias = bias.at[0, k * Hp:k * Hp + H].set(
            b_ih[k * H:(k + 1) * H] + b_hh[k * H:(k + 1) * H])
    # bf16 matmul operands (MXU), f32 bias/accumulation.
    return w_ih_t.astype(jnp.bfloat16), w_hh_t.astype(jnp.bfloat16), bias


def pack_custom_lstm_params(params, input_size, hidden_size, num_hidden_layers):
    """Precompute all padded/packed weights ONCE (not on every forward)."""
    H, L = hidden_size, num_hidden_layers
    Hp = _round_up(H, 128)
    Din0p = _round_up(input_size, 128)
    Dc = params["unbottlenecks"][0]["w"].shape[1]

    # Fused unbottleneck weights with an Hp-aligned output layout:
    # columns [l0_h | l0_c | l1_h | l1_c | ...], pad lanes exactly zero.
    ub_w = jnp.zeros((L * 2 * Hp, Dc), jnp.float32)
    ub_b = jnp.zeros((L * 2 * Hp,), jnp.float32)
    for l in range(L):
        w = params["unbottlenecks"][l]["w"]        # (2H, Dc)
        b = params["unbottlenecks"][l]["b"]        # (2H,)
        ub_w = ub_w.at[(2 * l) * Hp:(2 * l) * Hp + H].set(w[:H])
        ub_w = ub_w.at[(2 * l + 1) * Hp:(2 * l + 1) * Hp + H].set(w[H:])
        ub_b = ub_b.at[(2 * l) * Hp:(2 * l) * Hp + H].set(b[:H])
        ub_b = ub_b.at[(2 * l + 1) * Hp:(2 * l + 1) * Hp + H].set(b[H:])

    layers = []
    for l in range(L):
        lp = params["lstm"][l]
        din_pad = Din0p if l == 0 else Hp
        w_ih_t, w_hh_t, bias = _pack_lstm_layer(
            lp["w_ih"], lp["w_hh"], lp["b_ih"], lp["b_hh"], H, Hp, din_pad)
        layers.append({"w_ih_t": w_ih_t, "w_hh_t": w_hh_t, "bias": bias})

    return {"ub_w_t": ub_w.T, "ub_b": ub_b.reshape(1, -1), "layers": layers}


# ----------------------------------------------------------------------------
# CustomLSTM forward (Pallas implementation)
# ----------------------------------------------------------------------------
def init_custom_lstm_params(key, input_size, hidden_size, num_hidden_layers,
                            init_cond_dim):
    """Deterministic PyTorch-like uniform(-1/sqrt(fan), 1/sqrt(fan)) init."""
    params = {"lstm": [], "unbottlenecks": []}
    k = 1.0 / jnp.sqrt(hidden_size)

    def uni(key, shape, bound):
        return jax.random.uniform(key, shape, jnp.float32, -bound, bound)

    for layer in range(num_hidden_layers):
        din = input_size if layer == 0 else hidden_size
        key, k1, k2, k3, k4 = jax.random.split(key, 5)
        params["lstm"].append({
            "w_ih": uni(k1, (4 * hidden_size, din), k),
            "w_hh": uni(k2, (4 * hidden_size, hidden_size), k),
            "b_ih": uni(k3, (4 * hidden_size,), k),
            "b_hh": uni(k4, (4 * hidden_size,), k),
        })
        key, k5, k6 = jax.random.split(key, 3)
        lin_bound = 1.0 / jnp.sqrt(init_cond_dim)
        params["unbottlenecks"].append({
            "w": uni(k5, (2 * hidden_size, init_cond_dim), lin_bound),
            "b": uni(k6, (2 * hidden_size,), lin_bound),
        })
    return params


def _choose_blocking(B, T, Hp):
    """Adaptive batch-block / time-chunk / xg-dtype choice (VMEM re-derived per shape)."""
    Bp0 = _round_up(B, 8)
    if Bp0 <= 32:
        block_b = Bp0                                  # single (full-dim) batch block
    elif Bp0 <= 256:
        # two batch blocks so v7x's 2 TensorCores both work; multiple of 16 for bf16
        block_b = _round_up(pl.cdiv(Bp0, 2), 16)
    else:
        block_b = 128                                  # MXU-row-saturating LHS height
    Bp = _round_up(B, block_b)

    # xg scratch budget ~8 MiB keeps total resident VMEM well inside v7x's 64 MiB.
    xg_budget = 8 * 1024 * 1024
    xg_dtype = jnp.float32
    t_budget = xg_budget // (block_b * 4 * Hp * 4)
    if t_budget < 16:
        xg_dtype = jnp.bfloat16                        # halve xg residency at large H
        t_budget = xg_budget // (block_b * 4 * Hp * 2)
    t_chunk = int(min(T, max(8, min(128, t_budget))))
    Tp = _round_up(T, t_chunk)
    return block_b, Bp, t_chunk, Tp, xg_dtype


def custom_lstm_forward(packed, inputs, initial_condition, seq_lens,
                        hidden_size, num_hidden_layers):
    """inputs: (B, T, input_size) [batch_first=True]
       initial_condition: (B, init_cond_dim)
       seq_lens: unused (matches the PyTorch forward, which never touches it)
       returns: (B, T, hidden_size)
    """
    del seq_lens  # unused in the reference forward
    B, T, Din0 = inputs.shape
    H = hidden_size
    L = num_hidden_layers
    layers = packed["layers"]
    Hp = layers[0]["w_hh_t"].shape[0]
    Din0p = layers[0]["w_ih_t"].shape[0]

    block_b, Bp, t_chunk, Tp, xg_dtype = _choose_blocking(B, T, Hp)

    # --- fused unbottleneck: single GEMM for all layers, Hp-aligned output --
    Dc = initial_condition.shape[1]
    ic_pad = jnp.zeros((Bp, Dc), jnp.float32).at[:B].set(initial_condition)
    ub = fused_unbottleneck(ic_pad, packed["ub_w_t"], packed["ub_b"])  # (Bp, L*2*Hp)

    # --- multi-layer LSTM (time-major, padded, bf16 activations) ------------
    x = jnp.zeros((Tp, Bp, Din0p), jnp.bfloat16).at[:T, :B, :Din0].set(
        jnp.transpose(inputs, (1, 0, 2)).astype(jnp.bfloat16))
    for l in range(L):
        lp = layers[l]
        h0 = ub[:, (2 * l) * Hp:(2 * l + 1) * Hp]      # 128-lane-aligned slices
        c0 = ub[:, (2 * l + 1) * Hp:(2 * l + 2) * Hp]
        # intermediate layers stay bf16 (halves inter-layer HBM traffic);
        # the final layer returns f32.
        out_dtype = jnp.bfloat16 if l < L - 1 else jnp.float32
        x = lstm_layer_pallas(x, lp["w_ih_t"], lp["w_hh_t"], lp["bias"], h0, c0,
                              t_chunk=t_chunk, block_b=block_b,
                              out_dtype=out_dtype, xg_dtype=xg_dtype)

    # strip padding, back to batch-first (B, T, H)
    return jnp.transpose(x[:T, :B, :H], (1, 0, 2))


# ----------------------------------------------------------------------------
# Pure-JAX f32 reference (numerical sanity check)
# ----------------------------------------------------------------------------
def reference_forward(params, inputs, initial_condition, hidden_size,
                      num_hidden_layers):
    H = hidden_size
    x = jnp.transpose(inputs, (1, 0, 2))  # (T, B, D)
    for layer in range(num_hidden_layers):
        lin = params["unbottlenecks"][layer]
        ub = initial_condition @ lin["w"].T + lin["b"]
        h0, c0 = ub[:, :H], ub[:, H:]
        lp = params["lstm"][layer]
        w_ih_t, w_hh_t = lp["w_ih"].T, lp["w_hh"].T
        bias = lp["b_ih"] + lp["b_hh"]

        def step(carry, x_t):
            h, c = carry
            gates = x_t @ w_ih_t + h @ w_hh_t + bias
            i_g = jax.nn.sigmoid(gates[:, 0 * H:1 * H])
            f_g = jax.nn.sigmoid(gates[:, 1 * H:2 * H])
            g_g = jnp.tanh(gates[:, 2 * H:3 * H])
            o_g = jax.nn.sigmoid(gates[:, 3 * H:4 * H])
            c_new = f_g * c + i_g * g_g
            h_new = o_g * jnp.tanh(c_new)
            return (h_new, c_new), h_new

        (_, _), x = lax.scan(step, (h0, c0), x)
    return jnp.transpose(x, (1, 0, 2))


# ----------------------------------------------------------------------------
if __name__ == "__main__":
    batch = 2
    seq = 8
    input_size = 16
    hidden_size = 32
    num_hidden_layers = 2
    init_cond_dim = 8

    key = jax.random.PRNGKey(0)
    key, kx, kc = jax.random.split(key, 3)

    inputs = jax.random.normal(kx, (batch, seq, input_size), jnp.float32)
    initial_condition = jax.random.normal(kc, (batch, init_cond_dim), jnp.float32)
    seq_lens = jnp.full((batch,), seq, jnp.int32)  # unused, as in PyTorch forward

    params = init_custom_lstm_params(key, input_size, hidden_size,
                                     num_hidden_layers, init_cond_dim)
    # One-time packing (pad/transpose/stack) at parameter-load time.
    packed = jax.tree_util.tree_map(
        jax.block_until_ready,
        pack_custom_lstm_params(params, input_size, hidden_size, num_hidden_layers))

    fwd = jax.jit(functools.partial(custom_lstm_forward,
                                    hidden_size=hidden_size,
                                    num_hidden_layers=num_hidden_layers))
    out = jax.block_until_ready(fwd(packed, inputs, initial_condition, seq_lens))

    ref = reference_forward(params, inputs, initial_condition,
                            hidden_size, num_hidden_layers)
    assert out.shape == (batch, seq, hidden_size)
    max_err = float(jnp.max(jnp.abs(out - ref)))
    # bf16 matmul operands / bf16 inter-layer activations (f32 accumulation)
    # vs pure-f32 reference.
    assert jnp.allclose(out, ref, atol=2e-2, rtol=2e-2), (
        f"mismatch vs JAX reference (max abs err {max_err})")

    print("KERNEL_OK")
</pallas_src>

<mosaic_0001>
module attributes {stable_mosaic.version = 11 : i64} {
  func.func @_fused_linear_kernel(%arg0: memref<8x8xf32, #tpu.memory_space<vmem>>, %arg1: memref<8x512xf32, #tpu.memory_space<vmem>>, %arg2: memref<1x512xf32, #tpu.memory_space<vmem>>, %arg3: memref<8x512xf32, #tpu.memory_space<vmem>>) attributes {dimension_semantics = [], scalar_prefetch = 0 : i64, scratch_operands = 0 : i64, tpu.core_type = #tpu.core_type<tc>} {
    %c0 = arith.constant 0 : index
    %c0_0 = arith.constant 0 : index
    %0 = vector.load %arg0[%c0, %c0_0] : memref<8x8xf32, #tpu.memory_space<vmem>>, vector<8x8xf32>
    %c0_1 = arith.constant 0 : index
    %c0_2 = arith.constant 0 : index
    %1 = vector.load %arg1[%c0_1, %c0_2] : memref<8x512xf32, #tpu.memory_space<vmem>>, vector<8x512xf32>
    %cst = arith.constant dense<0.000000e+00> : vector<8x512xf32>
    %2 = tpu.matmul %0, %1, %cst {dimension_numbers = #tpu.dot_dimension_numbers<[1], [0], [0], [1], [0, 0, 1, 1], [], []>} : vector<8x8xf32>, vector<8x512xf32>, vector<8x512xf32> -> vector<8x512xf32>
    %c0_3 = arith.constant 0 : index
    %c0_4 = arith.constant 0 : index
    %3 = vector.load %arg2[%c0_3, %c0_4] : memref<1x512xf32, #tpu.memory_space<vmem>>, vector<1x512xf32>
    %4 = vector.broadcast %3 : vector<1x512xf32> to vector<8x512xf32>
    %5 = arith.addf %2, %4 : vector<8x512xf32>
    %c0_5 = arith.constant 0 : index
    %c0_6 = arith.constant 0 : index
    %6 = vector.load %arg3[%c0_5, %c0_6] : memref<8x512xf32, #tpu.memory_space<vmem>>, vector<8x512xf32>
    tpu.vector_store %arg3[%c0_5, %c0_6], %5 {strides = array<i32>} : memref<8x512xf32, #tpu.memory_space<vmem>>, vector<8x512xf32>,
    return
  }
}

module attributes {stable_mosaic.version = 11 : i64} {
  func.func @_lstm_chunk_kernel(%arg0: i32, %arg1: i32, %arg2: memref<8x8x128xbf16, #tpu.memory_space<vmem>>, %arg3: memref<128x512xbf16, #tpu.memory_space<vmem>>, %arg4: memref<128x512xbf16, #tpu.memory_space<vmem>>, %arg5: memref<1x512xf32, #tpu.memory_space<vmem>>, %arg6: memref<8x128xf32, #tpu.memory_space<vmem>>, %arg7: memref<8x128xf32, #tpu.memory_space<vmem>>, %arg8: memref<8x8x128xbf16, #tpu.memory_space<vmem>>, %arg9: memref<8x128xf32, #tpu.memory_space<vmem>>, %arg10: memref<8x128xf32, #tpu.memory_space<vmem>>, %arg11: memref<8x8x512xf32, #tpu.memory_space<vmem>>) attributes {dimension_semantics = [#tpu.dimension_semantics<parallel>, #tpu.dimension_semantics<arbitrary>], iteration_bounds = array<i64: 1, 1>, scalar_prefetch = 0 : i64, scratch_operands = 3 : i64, tpu.core_type = #tpu.core_type<tc>, window_params = [{transform_indices = @transform_0, window_bounds = array<i64: 8, 8, 128>}, {pipeline_mode = #tpu.pipeline_mode<synchronous>, transform_indices = @transform_1, window_bounds = array<i64: 128, 512>}, {pipeline_mode = #tpu.pipeline_mode<synchronous>, transform_indices = @transform_2, window_bounds = array<i64: 128, 512>}, {pipeline_mode = #tpu.pipeline_mode<synchronous>, transform_indices = @transform_3, window_bounds = array<i64: 1, 512>}, {transform_indices = @transform_4, window_bounds = array<i64: 8, 128>}, {transform_indices = @transform_5, window_bounds = array<i64: 8, 128>}, {transform_indices = @transform_6, window_bounds = array<i64: 8, 8, 128>}]} {
    %c0_i32 = arith.constant 0 : i32
    %0 = arith.cmpi eq, %arg1, %c0_i32 : i32
    %1 = arith.extui %0 : i1 to i32
    %c0_i32_0 = arith.constant 0 : i32
    %2 = arith.cmpi ne, %1, %c0_i32_0 : i32
    scf.if %2 {
      %c0_147 = arith.constant 0 : index
      %c0_148 = arith.constant 0 : index
      %360 = vector.load %arg6[%c0_147, %c0_148] : memref<8x128xf32, #tpu.memory_space<vmem>>, vector<8x128xf32>
      %c0_149 = arith.constant 0 : index
      %c0_150 = arith.constant 0 : index
      %361 = vector.load %arg9[%c0_149, %c0_150] : memref<8x128xf32, #tpu.memory_space<vmem>>, vector<8x128xf32>
      tpu.vector_store %arg9[%c0_149, %c0_150], %360 {strides = array<i32>} : memref<8x128xf32, #tpu.memory_space<vmem>>, vector<8x128xf32>,
      %c0_151 = arith.constant 0 : index
      %c0_152 = arith.constant 0 : index
      %362 = vector.load %arg7[%c0_151, %c0_152] : memref<8x128xf32, #tpu.memory_space<vmem>>, vector<8x128xf32>
      %c0_153 = arith.constant 0 : index
      %c0_154 = arith.constant 0 : index
      %363 = vector.load %arg10[%c0_153, %c0_154] : memref<8x128xf32, #tpu.memory_space<vmem>>, vector<8x128xf32>
      tpu.vector_store %arg10[%c0_153, %c0_154], %362 {strides = array<i32>} : memref<8x128xf32, #tpu.memory_space<vmem>>, vector<8x128xf32>,
    } else {
    }
    %c0 = arith.constant 0 : index
    %c0_1 = arith.constant 0 : index
    %c0_2 = arith.constant 0 : index
    %3 = vector.load %arg2[%c0, %c0_1, %c0_2] : memref<8x8x128xbf16, #tpu.memory_space<vmem>>, vector<8x8x128xbf16>
    %4 = vector.shape_cast %3 : vector<8x8x128xbf16> to vector<64x128xbf16>
    %c0_3 = arith.constant 0 : index
    %c0_4 = arith.constant 0 : index
    %5 = vector.load %arg3[%c0_3, %c0_4] : memref<128x512xbf16, #tpu.memory_space<vmem>>, vector<128x512xbf16>
    %cst = arith.constant dense<0.000000e+00> : vector<64x512xf32>
    %6 = tpu.matmul %4, %5, %cst {dimension_numbers = #tpu.dot_dimension_numbers<[1], [0], [0], [1], [0, 0, 1, 1], [], []>} : vector<64x128xbf16>, vector<128x512xbf16>, vector<64x512xf32> -> vector<64x512xf32>
    %c0_5 = arith.constant 0 : index
    %c0_6 = arith.constant 0 : index
    %7 = vector.load %arg5[%c0_5, %c0_6] : memref<1x512xf32, #tpu.memory_space<vmem>>, vector<1x512xf32>
    %8 = vector.broadcast %7 : vector<1x512xf32> to vector<64x512xf32>
    %9 = arith.addf %6, %8 : vector<64x512xf32>
    %10 = vector.shape_cast %9 : vector<64x512xf32> to vector<8x8x512xf32>
    %c0_7 = arith.constant 0 : index
    %c0_8 = arith.constant 0 : index
    %c0_9 = arith.constant 0 : index
    %11 = vector.load %arg11[%c0_7, %c0_8, %c0_9] : memref<8x8x512xf32, #tpu.memory_space<vmem>>, vector<8x8x512xf32>
    tpu.vector_store %arg11[%c0_7, %c0_8, %c0_9], %10 {strides = array<i32>} : memref<8x8x512xf32, #tpu.memory_space<vmem>>, vector<8x8x512xf32>,
    %c0_10 = arith.constant 0 : index
    %c0_11 = arith.constant 0 : index
    %12 = vector.load %arg9[%c0_10, %c0_11] : memref<8x128xf32, #tpu.memory_space<vmem>>, vector<8x128xf32>
    %c0_12 = arith.constant 0 : index
    %c0_13 = arith.constant 0 : index
    %13 = vector.load %arg10[%c0_12, %c0_13] : memref<8x128xf32, #tpu.memory_space<vmem>>, vector<8x128xf32>
    %c0_i32_14 = arith.constant 0 : i32
    %14 = arith.index_cast %c0_i32_14 : i32 to index
    %c0_15 = arith.constant 0 : index
    %c0_16 = arith.constant 0 : index
    %15 = vector.load %arg11[%14, %c0_15, %c0_16] : memref<8x8x512xf32, #tpu.memory_space<vmem>>, vector<1x8x512xf32>
    %16 = vector.shape_cast %15 : vector<1x8x512xf32> to vector<8x512xf32>
    %17 = arith.truncf %12 : vector<8x128xf32> to vector<8x128xbf16>
    %c0_17 = arith.constant 0 : index
    %c0_18 = arith.constant 0 : index
    %18 = vector.load %arg4[%c0_17, %c0_18] : memref<128x512xbf16, #tpu.memory_space<vmem>>, vector<128x512xbf16>
    %cst_19 = arith.constant dense<0.000000e+00> : vector<8x512xf32>
    %19 = tpu.matmul %17, %18, %cst_19 {dimension_numbers = #tpu.dot_dimension_numbers<[1], [0], [0], [1], [0, 0, 1, 1], [], []>} : vector<8x128xbf16>, vector<128x512xbf16>, vector<8x512xf32> -> vector<8x512xf32>
    %20 = arith.addf %16, %19 : vector<8x512xf32>
    %21 = vector.extract_strided_slice %20 {offsets = [0, 0], sizes = [8, 128], strides = [1, 1]} : vector<8x512xf32> to vector<8x128xf32>
    %cst_20 = arith.constant 5.000000e-01 : f32
    %22 = vector.broadcast %cst_20 : f32 to vector<8x128xf32>
    %23 = arith.mulf %22, %21 : vector<8x128xf32>
    %24 = math.tanh %23 : vector<8x128xf32>
    %cst_21 = arith.constant 5.000000e-01 : f32
    %25 = vector.broadcast %cst_21 : f32 to vector<8x128xf32>
    %26 = arith.mulf %25, %24 : vector<8x128xf32>
    %cst_22 = arith.constant 5.000000e-01 : f32
    %27 = vector.broadcast %cst_22 : f32 to vector<8x128xf32>
    %28 = arith.addf %26, %27 : vector<8x128xf32>
    %29 = vector.extract_strided_slice %20 {offsets = [0, 128], sizes = [8, 128], strides = [1, 1]} : vector<8x512xf32> to vector<8x128xf32>
    %cst_23 = arith.constant 5.000000e-01 : f32
    %30 = vector.broadcast %cst_23 : f32 to vector<8x128xf32>
    %31 = arith.mulf %30, %29 : vector<8x128xf32>
    %32 = math.tanh %31 : vector<8x128xf32>
    %cst_24 = arith.constant 5.000000e-01 : f32
    %33 = vector.broadcast %cst_24 : f32 to vector<8x128xf32>
    %34 = arith.mulf %33, %32 : vector<8x128xf32>
    %cst_25 = arith.constant 5.000000e-01 : f32
    %35 = vector.broadcast %cst_25 : f32 to vector<8x128xf32>
    %36 = arith.addf %34, %35 : vector<8x128xf32>
    %37 = vector.extract_strided_slice %20 {offsets = [0, 256], sizes = [8, 128], strides = [1, 1]} : vector<8x512xf32> to vector<8x128xf32>
    %38 = math.tanh %37 : vector<8x128xf32>
    %39 = vector.extract_strided_slice %20 {offsets = [0, 384], sizes = [8, 128], strides = [1, 1]} : vector<8x512xf32> to vector<8x128xf32>
    %cst_26 = arith.constant 5.000000e-01 : f32
    %40 = vector.broadcast %cst_26 : f32 to vector<8x128xf32>
    %41 = arith.mulf %40, %39 : vector<8x128xf32>
    %42 = math.tanh %41 : vector<8x128xf32>
    %cst_27 = arith.constant 5.000000e-01 : f32
    %43 = vector.broadcast %cst_27 : f32 to vector<8x128xf32>
    %44 = arith.mulf %43, %42 : vector<8x128xf32>
    %cst_28 = arith.constant 5.000000e-01 : f32
    %45 = vector.broadcast %cst_28 : f32 to vector<8x128xf32>
    %46 = arith.addf %44, %45 : vector<8x128xf32>
    %47 = arith.mulf %36, %13 : vector<8x128xf32>
    %48 = arith.mulf %28, %38 : vector<8x128xf32>
    %49 = arith.addf %47, %48 : vector<8x128xf32>
    %50 = math.tanh %49 : vector<8x128xf32>
    %51 = arith.mulf %46, %50 : vector<8x128xf32>
    %52 = arith.truncf %51 : vector<8x128xf32> to vector<8x128xbf16>
    %53 = arith.index_cast %c0_i32_14 : i32 to index
    %c0_29 = arith.constant 0 : index
    %c0_30 = arith.constant 0 : index
    %54 = vector.load %arg8[%53, %c0_29, %c0_30] : memref<8x8x128xbf16, #tpu.memory_space<vmem>>, vector<1x8x128xbf16>
    %55 = vector.shape_cast %54 : vector<1x8x128xbf16> to vector<8x128xbf16>
    %56 = vector.shape_cast %52 : vector<8x128xbf16> to vector<1x8x128xbf16>
    tpu.vector_store %arg8[%53, %c0_29, %c0_30], %56 {strides = array<i32>} : memref<8x8x128xbf16, #tpu.memory_space<vmem>>, vector<1x8x128xbf16>,
    %c1_i32 = arith.constant 1 : i32
    %57 = arith.index_cast %c1_i32 : i32 to index
    %c0_31 = arith.constant 0 : index
    %c0_32 = arith.constant 0 : index
    %58 = vector.load %arg11[%57, %c0_31, %c0_32] : memref<8x8x512xf32, #tpu.memory_space<vmem>>, vector<1x8x512xf32>
    %59 = vector.shape_cast %58 : vector<1x8x512xf32> to vector<8x512xf32>
    %60 = arith.truncf %51 : vector<8x128xf32> to vector<8x128xbf16>
    %c0_33 = arith.constant 0 : index
    %c0_34 = arith.constant 0 : index
    %61 = vector.load %arg4[%c0_33, %c0_34] : memref<128x512xbf16, #tpu.memory_space<vmem>>, vector<128x512xbf16>
    %cst_35 = arith.constant dense<0.000000e+00> : vector<8x512xf32>
    %62 = tpu.matmul %60, %61, %cst_35 {dimension_numbers = #tpu.dot_dimension_numbers<[1], [0], [0], [1], [0, 0, 1, 1], [], []>} : vector<8x128xbf16>, vector<128x512xbf16>, vector<8x512xf32> -> vector<8x512xf32>
    %63 = arith.addf %59, %62 : vector<8x512xf32>
    %64 = vector.extract_strided_slice %63 {offsets = [0, 0], sizes = [8, 128], strides = [1, 1]} : vector<8x512xf32> to vector<8x128xf32>
    %cst_36 = arith.constant 5.000000e-01 : f32
    %65 = vector.broadcast %cst_36 : f32 to vector<8x128xf32>
    %66 = arith.mulf %65, %64 : vector<8x128xf32>
    %67 = math.tanh %66 : vector<8x128xf32>
    %cst_37 = arith.constant 5.000000e-01 : f32
    %68 = vector.broadcast %cst_37 : f32 to vector<8x128xf32>
    %69 = arith.mulf %68, %67 : vector<8x128xf32>
    %cst_38 = arith.constant 5.000000e-01 : f32
    %70 = vector.broadcast %cst_38 : f32 to vector<8x128xf32>
    %71 = arith.addf %69, %70 : vector<8x128xf32>
    %72 = vector.extract_strided_slice %63 {offsets = [0, 128], sizes = [8, 128], strides = [1, 1]} : vector<8x512xf32> to vector<8x128xf32>
    %cst_39 = arith.constant 5.000000e-01 : f32
    %73 = vector.broadcast %cst_39 : f32 to vector<8x128xf32>
    %74 = arith.mulf %73, %72 : vector<8x128xf32>
    %75 = math.tanh %74 : vector<8x128xf32>
    %cst_40 = arith.constant 5.000000e-01 : f32
    %76 = vector.broadcast %cst_40 : f32 to vector<8x128xf32>
    %77 = arith.mulf %76, %75 : vector<8x128xf32>
    %cst_41 = arith.constant 5.000000e-01 : f32
    %78 = vector.broadcast %cst_41 : f32 to vector<8x128xf32>
    %79 = arith.addf %77, %78 : vector<8x128xf32>
    %80 = vector.extract_strided_slice %63 {offsets = [0, 256], sizes = [8, 128], strides = [1, 1]} : vector<8x512xf32> to vector<8x128xf32>
    %81 = math.tanh %80 : vector<8x128xf32>
    %82 = vector.extract_strided_slice %63 {offsets = [0, 384], sizes = [8, 128], strides = [1, 1]} : vector<8x512xf32> to vector<8x128xf32>
    %cst_42 = arith.constant 5.000000e-01 : f32
    %83 = vector.broadcast %cst_42 : f32 to vector<8x128xf32>
    %84 = arith.mulf %83, %82 : vector<8x128xf32>
    %85 = math.tanh %84 : vector<8x128xf32>
    %cst_43 = arith.constant 5.000000e-01 : f32
    %86 = vector.broadcast %cst_43 : f32 to vector<8x128xf32>
    %87 = arith.mulf %86, %85 : vector<8x128xf32>
    %cst_44 = arith.constant 5.000000e-01 : f32
    %88 = vector.broadcast %cst_44 : f32 to vector<8x128xf32>
    %89 = arith.addf %87, %88 : vector<8x128xf32>
    %90 = arith.mulf %79, %49 : vector<8x128xf32>
    %91 = arith.mulf %71, %81 : vector<8x128xf32>
    %92 = arith.addf %90, %91 : vector<8x128xf32>
    %93 = math.tanh %92 : vector<8x128xf32>
    %94 = arith.mulf %89, %93 : vector<8x128xf32>
    %95 = arith.truncf %94 : vector<8x128xf32> to vector<8x128xbf16>
    %96 = arith.index_cast %c1_i32 : i32 to index
    %c0_45 = arith.constant 0 : index
    %c0_46 = arith.constant 0 : index
    %97 = vector.load %arg8[%96, %c0_45, %c0_46] : memref<8x8x128xbf16, #tpu.memory_space<vmem>>, vector<1x8x128xbf16>
    %98 = vector.shape_cast %97 : vector<1x8x128xbf16> to vector<8x128xbf16>
    %99 = vector.shape_cast %95 : vector<8x128xbf16> to vector<1x8x128xbf16>
    tpu.vector_store %arg8[%96, %c0_45, %c0_46], %99 {strides = array<i32>} : memref<8x8x128xbf16, #tpu.memory_space<vmem>>, vector<1x8x128xbf16>,
    %c2_i32 = arith.constant 2 : i32
    %100 = arith.index_cast %c2_i32 : i32 to index
    %c0_47 = arith.constant 0 : index
    %c0_48 = arith.constant 0 : index
    %101 = vector.load %arg11[%100, %c0_47, %c0_48] : memref<8x8x512xf32, #tpu.memory_space<vmem>>, vector<1x8x512xf32>
    %102 = vector.shape_cast %101 : vector<1x8x512xf32> to vector<8x512xf32>
    %103 = arith.truncf %94 : vector<8x128xf32> to vector<8x128xbf16>
    %c0_49 = arith.constant 0 : index
    %c0_50 = arith.constant 0 : index
    %104 = vector.load %arg4[%c0_49, %c0_50] : memref<128x512xbf16, #tpu.memory_space<vmem>>, vector<128x512xbf16>
    %cst_51 = arith.constant dense<0.000000e+00> : vector<8x512xf32>
    %105 = tpu.matmul %103, %104, %cst_51 {dimension_numbers = #tpu.dot_dimension_numbers<[1], [0], [0], [1], [0, 0, 1, 1], [], []>} : vector<8x128xbf16>, vector<128x512xbf16>, vector<8x512xf32> -> vector<8x512xf32>
    %106 = arith.addf %102, %105 : vector<8x512xf32>
    %107 = vector.extract_strided_slice %106 {offsets = [0, 0], sizes = [8, 128], strides = [1, 1]} : vector<8x512xf32> to vector<8x128xf32>
    %cst_52 = arith.constant 5.000000e-01 : f32
    %108 = vector.broadcast %cst_52 : f32 to vector<8x128xf32>
    %109 = arith.mulf %108, %107 : vector<8x128xf32>
    %110 = math.tanh %109 : vector<8x128xf32>
    %cst_53 = arith.constant 5.000000e-01 : f32
    %111 = vector.broadcast %cst_53 : f32 to vector<8x128xf32>
    %112 = arith.mulf %111, %110 : vector<8x128xf32>
    %cst_54 = arith.constant 5.000000e-01 : f32
    %113 = vector.broadcast %cst_54 : f32 to vector<8x128xf32>
    %114 = arith.addf %112, %113 : vector<8x128xf32>
    %115 = vector.extract_strided_slice %106 {offsets = [0, 128], sizes = [8, 128], strides = [1, 1]} : vector<8x512xf32> to vector<8x128xf32>
    %cst_55 = arith.constant 5.000000e-01 : f32
    %116 = vector.broadcast %cst_55 : f32 to vector<8x128xf32>
    %117 = arith.mulf %116, %115 : vector<8x128xf32>
    %118 = math.tanh %117 : vector<8x128xf32>
    %cst_56 = arith.constant 5.000000e-01 : f32
    %119 = vector.broadcast %cst_56 : f32 to vector<8x128xf32>
    %120 = arith.mulf %119, %118 : vector<8x128xf32>
    %cst_57 = arith.constant 5.000000e-01 : f32
    %121 = vector.broadcast %cst_57 : f32 to vector<8x128xf32>
    %122 = arith.addf %120, %121 : vector<8x128xf32>
    %123 = vector.extract_strided_slice %106 {offsets = [0, 256], sizes = [8, 128], strides = [1, 1]} : vector<8x512xf32> to vector<8x128xf32>
    %124 = math.tanh %123 : vector<8x128xf32>
    %125 = vector.extract_strided_slice %106 {offsets = [0, 384], sizes = [8, 128], strides = [1, 1]} : vector<8x512xf32> to vector<8x128xf32>
    %cst_58 = arith.constant 5.000000e-01 : f32
    %126 = vector.broadcast %cst_58 : f32 to vector<8x128xf32>
    %127 = arith.mulf %126, %125 : vector<8x128xf32>
    %128 = math.tanh %127 : vector<8x128xf32>
    %cst_59 = arith.constant 5.000000e-01 : f32
    %129 = vector.broadcast %cst_59 : f32 to vector<8x128xf32>
    %130 = arith.mulf %129, %128 : vector<8x128xf32>
    %cst_60 = arith.constant 5.000000e-01 : f32
    %131 = vector.broadcast %cst_60 : f32 to vector<8x128xf32>
    %132 = arith.addf %130, %131 : vector<8x128xf32>
    %133 = arith.mulf %122, %92 : vector<8x128xf32>
    %134 = arith.mulf %114, %124 : vector<8x128xf32>
    %135 = arith.addf %133, %134 : vector<8x128xf32>
    %136 = math.tanh %135 : vector<8x128xf32>
    %137 = arith.mulf %132, %136 : vector<8x128xf32>
    %138 = arith.truncf %137 : vector<8x128xf32> to vector<8x128xbf16>
    %139 = arith.index_cast %c2_i32 : i32 to index
    %c0_61 = arith.constant 0 : index
    %c0_62 = arith.constant 0 : index
    %140 = vector.load %arg8[%139, %c0_61, %c0_62] : memref<8x8x128xbf16, #tpu.memory_space<vmem>>, vector<1x8x128xbf16>
    %141 = vector.shape_cast %140 : vector<1x8x128xbf16> to vector<8x128xbf16>
    %142 = vector.shape_cast %138 : vector<8x128xbf16> to vector<1x8x128xbf16>
    tpu.vector_store %arg8[%139, %c0_61, %c0_62], %142 {strides = array<i32>} : memref<8x8x128xbf16, #tpu.memory_space<vmem>>, vector<1x8x128xbf16>,
    %c3_i32 = arith.constant 3 : i32
    %143 = arith.index_cast %c3_i32 : i32 to index
    %c0_63 = arith.constant 0 : index
    %c0_64 = arith.constant 0 : index
    %144 = vector.load %arg11[%143, %c0_63, %c0_64] : memref<8x8x512xf32, #tpu.memory_space<vmem>>, vector<1x8x512xf32>
    %145 = vector.shape_cast %144 : vector<1x8x512xf32> to vector<8x512xf32>
    %146 = arith.truncf %137 : vector<8x128xf32> to vector<8x128xbf16>
    %c0_65 = arith.constant 0 : index
    %c0_66 = arith.constant 0 : index
    %147 = vector.load %arg4[%c0_65, %c0_66] : memref<128x512xbf16, #tpu.memory_space<vmem>>, vector<128x512xbf16>
    %cst_67 = arith.constant dense<0.000000e+00> : vector<8x512xf32>
    %148 = tpu.matmul %146, %147, %cst_67 {dimension_numbers = #tpu.dot_dimension_numbers<[1], [0], [0], [1], [0, 0, 1, 1], [], []>} : vector<8x128xbf16>, vector<128x512xbf16>, vector<8x512xf32> -> vector<8x512xf32>
    %149 = arith.addf %145, %148 : vector<8x512xf32>
    %150 = vector.extract_strided_slice %149 {offsets = [0, 0], sizes = [8, 128], strides = [1, 1]} : vector<8x512xf32> to vector<8x128xf32>
    %cst_68 = arith.constant 5.000000e-01 : f32
    %151 = vector.broadcast %cst_68 : f32 to vector<8x128xf32>
    %152 = arith.mulf %151, %150 : vector<8x128xf32>
    %153 = math.tanh %152 : vector<8x128xf32>
    %cst_69 = arith.constant 5.000000e-01 : f32
    %154 = vector.broadcast %cst_69 : f32 to vector<8x128xf32>
    %155 = arith.mulf %154, %153 : vector<8x128xf32>
    %cst_70 = arith.constant 5.000000e-01 : f32
    %156 = vector.broadcast %cst_70 : f32 to vector<8x128xf32>
    %157 = arith.addf %155, %156 : vector<8x128xf32>
    %158 = vector.extract_strided_slice %149 {offsets = [0, 128], sizes = [8, 128], strides = [1, 1]} : vector<8x512xf32> to vector<8x128xf32>
    %cst_71 = arith.constant 5.000000e-01 : f32
    %159 = vector.broadcast %cst_71 : f32 to vector<8x128xf32>
    %160 = arith.mulf %159, %158 : vector<8x128xf32>
    %161 = math.tanh %160 : vector<8x128xf32>
    %cst_72 = arith.constant 5.000000e-01 : f32
    %162 = vector.broadcast %cst_72 : f32 to vector<8x128xf32>
    %163 = arith.mulf %162, %161 : vector<8x128xf32>
    %cst_73 = arith.constant 5.000000e-01 : f32
    %164 = vector.broadcast %cst_73 : f32 to vector<8x128xf32>
    %165 = arith.addf %163, %164 : vector<8x128xf32>
    %166 = vector.extract_strided_slice %149 {offsets = [0, 256], sizes = [8, 128], strides = [1, 1]} : vector<8x512xf32> to vector<8x128xf32>
    %167 = math.tanh %166 : vector<8x128xf32>
    %168 = vector.extract_strided_slice %149 {offsets = [0, 384], sizes = [8, 128], strides = [1, 1]} : vector<8x512xf32> to vector<8x128xf32>
    %cst_74 = arith.constant 5.000000e-01 : f32
    %169 = vector.broadcast %cst_74 : f32 to vector<8x128xf32>
    %170 = arith.mulf %169, %168 : vector<8x128xf32>
    %171 = math.tanh %170 : vector<8x128xf32>
    %cst_75 = arith.constant 5.000000e-01 : f32
    %172 = vector.broadcast %cst_75 : f32 to vector<8x128xf32>
    %173 = arith.mulf %172, %171 : vector<8x128xf32>
    %cst_76 = arith.constant 5.000000e-01 : f32
    %174 = vector.broadcast %cst_76 : f32 to vector<8x128xf32>
    %175 = arith.addf %173, %174 : vector<8x128xf32>
    %176 = arith.mulf %165, %135 : vector<8x128xf32>
    %177 = arith.mulf %157, %167 : vector<8x128xf32>
    %178 = arith.addf %176, %177 : vector<8x128xf32>
    %179 = math.tanh %178 : vector<8x128xf32>
    %180 = arith.mulf %175, %179 : vector<8x128xf32>
    %181 = arith.truncf %180 : vector<8x128xf32> to vector<8x128xbf16>
    %182 = arith.index_cast %c3_i32 : i32 to index
    %c0_77 = arith.constant 0 : index
    %c0_78 = arith.constant 0 : index
    %183 = vector.load %arg8[%182, %c0_77, %c0_78] : memref<8x8x128xbf16, #tpu.memory_space<vmem>>, vector<1x8x128xbf16>
    %184 = vector.shape_cast %183 : vector<1x8x128xbf16> to vector<8x128xbf16>
    %185 = vector.shape_cast %181 : vector<8x128xbf16> to vector<1x8x128xbf16>
    tpu.vector_store %arg8[%182, %c0_77, %c0_78], %185 {strides = array<i32>} : memref<8x8x128xbf16, #tpu.memory_space<vmem>>, vector<1x8x128xbf16>,
    %c4_i32 = arith.constant 4 : i32
    %186 = arith.index_cast %c4_i32 : i32 to index
    %c0_79 = arith.constant 0 : index
    %c0_80 = arith.constant 0 : index
    %187 = vector.load %arg11[%186, %c0_79, %c0_80] : memref<8x8x512xf32, #tpu.memory_space<vmem>>, vector<1x8x512xf32>
    %188 = vector.shape_cast %187 : vector<1x8x512xf32> to vector<8x512xf32>
    %189 = arith.truncf %180 : vector<8x128xf32> to vector<8x128xbf16>
    %c0_81 = arith.constant 0 : index
    %c0_82 = arith.constant 0 : index
    %190 = vector.load %arg4[%c0_81, %c0_82] : memref<128x512xbf16, #tpu.memory_space<vmem>>, vector<128x512xbf16>
    %cst_83 = arith.constant dense<0.000000e+00> : vector<8x512xf32>
    %191 = tpu.matmul %189, %190, %cst_83 {dimension_numbers = #tpu.dot_dimension_numbers<[1], [0], [0], [1], [0, 0, 1, 1], [], []>} : vector<8x128xbf16>, vector<128x512xbf16>, vector<8x512xf32> -> vector<8x512xf32>
    %192 = arith.addf %188, %191 : vector<8x512xf32>
    %193 = vector.extract_strided_slice %192 {offsets = [0, 0], sizes = [8, 128], strides = [1, 1]} : vector<8x512xf32> to vector<8x128xf32>
    %cst_84 = arith.constant 5.000000e-01 : f32
    %194 = vector.broadcast %cst_84 : f32 to vector<8x128xf32>
    %195 = arith.mulf %194, %193 : vector<8x128xf32>
    %196 = math.tanh %195 : vector<8x128xf32>
    %cst_85 = arith.constant 5.000000e-01 : f32
    %197 = vector.broadcast %cst_85 : f32 to vector<8x128xf32>
    %198 = arith.mulf %197, %196 : vector<8x128xf32>
    %cst_86 = arith.constant 5.000000e-01 : f32
    %199 = vector.broadcast %cst_86 : f32 to vector<8x128xf32>
    %200 = arith.addf %198, %199 : vector<8x128xf32>
    %201 = vector.extract_strided_slice %192 {offsets = [0, 128], sizes = [8, 128], strides = [1, 1]} : vector<8x512xf32> to vector<8x128xf32>
    %cst_87 = arith.constant 5.000000e-01 : f32
    %202 = vector.broadcast %cst_87 : f32 to vector<8x128xf32>
    %203 = arith.mulf %202, %201 : vector<8x128xf32>
    %204 = math.tanh %203 : vector<8x128xf32>
    %cst_88 = arith.constant 5.000000e-01 : f32
    %205 = vector.broadcast %cst_88 : f32 to vector<8x128xf32>
    %206 = arith.mulf %205, %204 : vector<8x128xf32>
    %cst_89 = arith.constant 5.000000e-01 : f32
    %207 = vector.broadcast %cst_89 : f32 to vector<8x128xf32>
    %208 = arith.addf %206, %207 : vector<8x128xf32>
    %209 = vector.extract_strided_slice %192 {offsets = [0, 256], sizes = [8, 128], strides = [1, 1]} : vector<8x512xf32> to vector<8x128xf32>
    %210 = math.tanh %209 : vector<8x128xf32>
    %211 = vector.extract_strided_slice %192 {offsets = [0, 384], sizes = [8, 128], strides = [1, 1]} : vector<8x512xf32> to vector<8x128xf32>
    %cst_90 = arith.constant 5.000000e-01 : f32
    %212 = vector.broadcast %cst_90 : f32 to vector<8x128xf32>
    %213 = arith.mulf %212, %211 : vector<8x128xf32>
    %214 = math.tanh %213 : vector<8x128xf32>
    %cst_91 = arith.constant 5.000000e-01 : f32
    %215 = vector.broadcast %cst_91 : f32 to vector<8x128xf32>
    %216 = arith.mulf %215, %214 : vector<8x128xf32>
    %cst_92 = arith.constant 5.000000e-01 : f32
    %217 = vector.broadcast %cst_92 : f32 to vector<8x128xf32>
    %218 = arith.addf %216, %217 : vector<8x128xf32>
    %219 = arith.mulf %208, %178 : vector<8x128xf32>
    %220 = arith.mulf %200, %210 : vector<8x128xf32>
    %221 = arith.addf %219, %220 : vector<8x128xf32>
    %222 = math.tanh %221 : vector<8x128xf32>
    %223 = arith.mulf %218, %222 : vector<8x128xf32>
    %224 = arith.truncf %223 : vector<8x128xf32> to vector<8x128xbf16>
    %225 = arith.index_cast %c4_i32 : i32 to index
    %c0_93 = arith.constant 0 : index
    %c0_94 = arith.constant 0 : index
    %226 = vector.load %arg8[%225, %c0_93, %c0_94] : memref<8x8x128xbf16, #tpu.memory_space<vmem>>, vector<1x8x128xbf16>
    %227 = vector.shape_cast %226 : vector<1x8x128xbf16> to vector<8x128xbf16>
    %228 = vector.shape_cast %224 : vector<8x128xbf16> to vector<1x8x128xbf16>
    tpu.vector_store %arg8[%225, %c0_93, %c0_94], %228 {strides = array<i32>} : memref<8x8x128xbf16, #tpu.memory_space<vmem>>, vector<1x8x128xbf16>,
    %c5_i32 = arith.constant 5 : i32
    %229 = arith.index_cast %c5_i32 : i32 to index
    %c0_95 = arith.constant 0 : index
    %c0_96 = arith.constant 0 : index
    %230 = vector.load %arg11[%229, %c0_95, %c0_96] : memref<8x8x512xf32, #tpu.memory_space<vmem>>, vector<1x8x512xf32>
    %231 = vector.shape_cast %230 : vector<1x8x512xf32> to vector<8x512xf32>
    %232 = arith.truncf %223 : vector<8x128xf32> to vector<8x128xbf16>
    %c0_97 = arith.constant 0 : index
    %c0_98 = arith.constant 0 : index
    %233 = vector.load %arg4[%c0_97, %c0_98] : memref<128x512xbf16, #tpu.memory_space<vmem>>, vector<128x512xbf16>
    %cst_99 = arith.constant dense<0.000000e+00> : vector<8x512xf32>
    %234 = tpu.matmul %232, %233, %cst_99 {dimension_numbers = #tpu.dot_dimension_numbers<[1], [0], [0], [1], [0, 0, 1, 1], [], []>} : vector<8x128xbf16>, vector<128x512xbf16>, vector<8x512xf32> -> vector<8x512xf32>
    %235 = arith.addf %231, %234 : vector<8x512xf32>
    %236 = vector.extract_strided_slice %235 {offsets = [0, 0], sizes = [8, 128], strides = [1, 1]} : vector<8x512xf32> to vector<8x128xf32>
    %cst_100 = arith.constant 5.000000e-01 : f32
    %237 = vector.broadcast %cst_100 : f32 to vector<8x128xf32>
    %238 = arith.mulf %237, %236 : vector<8x128xf32>
    %239 = math.tanh %238 : vector<8x128xf32>
    %cst_101 = arith.constant 5.000000e-01 : f32
    %240 = vector.broadcast %cst_101 : f32 to vector<8x128xf32>
    %241 = arith.mulf %240, %239 : vector<8x128xf32>
    %cst_102 = arith.constant 5.000000e-01 : f32
    %242 = vector.broadcast %cst_102 : f32 to vector<8x128xf32>
    %243 = arith.addf %241, %242 : vector<8x128xf32>
    %244 = vector.extract_strided_slice %235 {offsets = [0, 128], sizes = [8, 128], strides = [1, 1]} : vector<8x512xf32> to vector<8x128xf32>
    %cst_103 = arith.constant 5.000000e-01 : f32
    %245 = vector.broadcast %cst_103 : f32 to vector<8x128xf32>
    %246 = arith.mulf %245, %244 : vector<8x128xf32>
    %247 = math.tanh %246 : vector<8x128xf32>
    %cst_104 = arith.constant 5.000000e-01 : f32
    %248 = vector.broadcast %cst_104 : f32 to vector<8x128xf32>
    %249 = arith.mulf %248, %247 : vector<8x128xf32>
    %cst_105 = arith.constant 5.000000e-01 : f32
    %250 = vector.broadcast %cst_105 : f32 to vector<8x128xf32>
    %251 = arith.addf %249, %250 : vector<8x128xf32>
    %252 = vector.extract_strided_slice %235 {offsets = [0, 256], sizes = [8, 128], strides = [1, 1]} : vector<8x512xf32> to vector<8x128xf32>
    %253 = math.tanh %252 : vector<8x128xf32>
    %254 = vector.extract_strided_slice %235 {offsets = [0, 384], sizes = [8, 128], strides = [1, 1]} : vector<8x512xf32> to vector<8x128xf32>
    %cst_106 = arith.constant 5.000000e-01 : f32
    %255 = vector.broadcast %cst_106 : f32 to vector<8x128xf32>
    %256 = arith.mulf %255, %254 : vector<8x128xf32>
    %257 = math.tanh %256 : vector<8x128xf32>
    %cst_107 = arith.constant 5.000000e-01 : f32
    %258 = vector.broadcast %cst_107 : f32 to vector<8x128xf32>
    %259 = arith.mulf %258, %257 : vector<8x128xf32>
    %cst_108 = arith.constant 5.000000e-01 : f32
    %260 = vector.broadcast %cst_108 : f32 to vector<8x128xf32>
    %261 = arith.addf %259, %260 : vector<8x128xf32>
    %262 = arith.mulf %251, %221 : vector<8x128xf32>
    %263 = arith.mulf %243, %253 : vector<8x128xf32>
    %264 = arith.addf %262, %263 : vector<8x128xf32>
    %265 = math.tanh %264 : vector<8x128xf32>
    %266 = arith.mulf %261, %265 : vector<8x128xf32>
    %267 = arith.truncf %266 : vector<8x128xf32> to vector<8x128xbf16>
    %268 = arith.index_cast %c5_i32 : i32 to index
    %c0_109 = arith.constant 0 : index
    %c0_110 = arith.constant 0 : index
    %269 = vector.load %arg8[%268, %c0_109, %c0_110] : memref<8x8x128xbf16, #tpu.memory_space<vmem>>, vector<1x8x128xbf16>
    %270 = vector.shape_cast %269 : vector<1x8x128xbf16> to vector<8x128xbf16>
    %271 = vector.shape_cast %267 : vector<8x128xbf16> to vector<1x8x128xbf16>
    tpu.vector_store %arg8[%268, %c0_109, %c0_110], %271 {strides = array<i32>} : memref<8x8x128xbf16, #tpu.memory_space<vmem>>, vector<1x8x128xbf16>,
    %c6_i32 = arith.constant 6 : i32
    %272 = arith.index_cast %c6_i32 : i32 to index
    %c0_111 = arith.constant 0 : index
    %c0_112 = arith.constant 0 : index
    %273 = vector.load %arg11[%272, %c0_111, %c0_112] : memref<8x8x512xf32, #tpu.memory_space<vmem>>, vector<1x8x512xf32>
    %274 = vector.shape_cast %273 : vector<1x8x512xf32> to vector<8x512xf32>
    %275 = arith.truncf %266 : vector<8x128xf32> to vector<8x128xbf16>
    %c0_113 = arith.constant 0 : index
    %c0_114 = arith.constant 0 : index
    %276 = vector.load %arg4[%c0_113, %c0_114] : memref<128x512xbf16, #tpu.memory_space<vmem>>, vector<128x512xbf16>
    %cst_115 = arith.constant dense<0.000000e+00> : vector<8x512xf32>
    %277 = tpu.matmul %275, %276, %cst_115 {dimension_numbers = #tpu.dot_dimension_numbers<[1], [0], [0], [1], [0, 0, 1, 1], [], []>} : vector<8x128xbf16>, vector<128x512xbf16>, vector<8x512xf32> -> vector<8x512xf32>
    %278 = arith.addf %274, %277 : vector<8x512xf32>
    %279 = vector.extract_strided_slice %278 {offsets = [0, 0], sizes = [8, 128], strides = [1, 1]} : vector<8x512xf32> to vector<8x128xf32>
    %cst_116 = arith.constant 5.000000e-01 : f32
    %280 = vector.broadcast %cst_116 : f32 to vector<8x128xf32>
    %281 = arith.mulf %280, %279 : vector<8x128xf32>
    %282 = math.tanh %281 : vector<8x128xf32>
    %cst_117 = arith.constant 5.000000e-01 : f32
    %283 = vector.broadcast %cst_117 : f32 to vector<8x128xf32>
    %284 = arith.mulf %283, %282 : vector<8x128xf32>
    %cst_118 = arith.constant 5.000000e-01 : f32
    %285 = vector.broadcast %cst_118 : f32 to vector<8x128xf32>
    %286 = arith.addf %284, %285 : vector<8x128xf32>
    %287 = vector.extract_strided_slice %278 {offsets = [0, 128], sizes = [8, 128], strides = [1, 1]} : vector<8x512xf32> to vector<8x128xf32>
    %cst_119 = arith.constant 5.000000e-01 : f32
    %288 = vector.broadcast %cst_119 : f32 to vector<8x128xf32>
    %289 = arith.mulf %288, %287 : vector<8x128xf32>
    %290 = math.tanh %289 : vector<8x128xf32>
    %cst_120 = arith.constant 5.000000e-01 : f32
    %291 = vector.broadcast %cst_120 : f32 to vector<8x128xf32>
    %292 = arith.mulf %291, %290 : vector<8x128xf32>
    %cst_121 = arith.constant 5.000000e-01 : f32
    %293 = vector.broadcast %cst_121 : f32 to vector<8x128xf32>
    %294 = arith.addf %292, %293 : vector<8x128xf32>
    %295 = vector.extract_strided_slice %278 {offsets = [0, 256], sizes = [8, 128], strides = [1, 1]} : vector<8x512xf32> to vector<8x128xf32>
    %296 = math.tanh %295 : vector<8x128xf32>
    %297 = vector.extract_strided_slice %278 {offsets = [0, 384], sizes = [8, 128], strides = [1, 1]} : vector<8x512xf32> to vector<8x128xf32>
    %cst_122 = arith.constant 5.000000e-01 : f32
    %298 = vector.broadcast %cst_122 : f32 to vector<8x128xf32>
    %299 = arith.mulf %298, %297 : vector<8x128xf32>
    %300 = math.tanh %299 : vector<8x128xf32>
    %cst_123 = arith.constant 5.000000e-01 : f32
    %301 = vector.broadcast %cst_123 : f32 to vector<8x128xf32>
    %302 = arith.mulf %301, %300 : vector<8x128xf32>
    %cst_124 = arith.constant 5.000000e-01 : f32
    %303 = vector.broadcast %cst_124 : f32 to vector<8x128xf32>
    %304 = arith.addf %302, %303 : vector<8x128xf32>
    %305 = arith.mulf %294, %264 : vector<8x128xf32>
    %306 = arith.mulf %286, %296 : vector<8x128xf32>
    %307 = arith.addf %305, %306 : vector<8x128xf32>
    %308 = math.tanh %307 : vector<8x128xf32>
    %309 = arith.mulf %304, %308 : vector<8x128xf32>
    %310 = arith.truncf %309 : vector<8x128xf32> to vector<8x128xbf16>
    %311 = arith.index_cast %c6_i32 : i32 to index
    %c0_125 = arith.constant 0 : index
    %c0_126 = arith.constant 0 : index
    %312 = vector.load %arg8[%311, %c0_125, %c0_126] : memref<8x8x128xbf16, #tpu.memory_space<vmem>>, vector<1x8x128xbf16>
    %313 = vector.shape_cast %312 : vector<1x8x128xbf16> to vector<8x128xbf16>
    %314 = vector.shape_cast %310 : vector<8x128xbf16> to vector<1x8x128xbf16>
    tpu.vector_store %arg8[%311, %c0_125, %c0_126], %314 {strides = array<i32>} : memref<8x8x128xbf16, #tpu.memory_space<vmem>>, vector<1x8x128xbf16>,
    %c7_i32 = arith.constant 7 : i32
    %315 = arith.index_cast %c7_i32 : i32 to index
    %c0_127 = arith.constant 0 : index
    %c0_128 = arith.constant 0 : index
    %316 = vector.load %arg11[%315, %c0_127, %c0_128] : memref<8x8x512xf32, #tpu.memory_space<vmem>>, vector<1x8x512xf32>
    %317 = vector.shape_cast %316 : vector<1x8x512xf32> to vector<8x512xf32>
    %318 = arith.truncf %309 : vector<8x128xf32> to vector<8x128xbf16>
    %c0_129 = arith.constant 0 : index
    %c0_130 = arith.constant 0 : index
    %319 = vector.load %arg4[%c0_129, %c0_130] : memref<128x512xbf16, #tpu.memory_space<vmem>>, vector<128x512xbf16>
    %cst_131 = arith.constant dense<0.000000e+00> : vector<8x512xf32>
    %320 = tpu.matmul %318, %319, %cst_131 {dimension_numbers = #tpu.dot_dimension_numbers<[1], [0], [0], [1], [0, 0, 1, 1], [], []>} : vector<8x128xbf16>, vector<128x512xbf16>, vector<8x512xf32> -> vector<8x512xf32>
    %321 = arith.addf %317, %320 : vector<8x512xf32>
    %322 = vector.extract_strided_slice %321 {offsets = [0, 0], sizes = [8, 128], strides = [1, 1]} : vector<8x512xf32> to vector<8x128xf32>
    %cst_132 = arith.constant 5.000000e-01 : f32
    %323 = vector.broadcast %cst_132 : f32 to vector<8x128xf32>
    %324 = arith.mulf %323, %322 : vector<8x128xf32>
    %325 = math.tanh %324 : vector<8x128xf32>
    %cst_133 = arith.constant 5.000000e-01 : f32
    %326 = vector.broadcast %cst_133 : f32 to vector<8x128xf32>
    %327 = arith.mulf %326, %325 : vector<8x128xf32>
    %cst_134 = arith.constant 5.000000e-01 : f32
    %328 = vector.broadcast %cst_134 : f32 to vector<8x128xf32>
    %329 = arith.addf %327, %328 : vector<8x128xf32>
    %330 = vector.extract_strided_slice %321 {offsets = [0, 128], sizes = [8, 128], strides = [1, 1]} : vector<8x512xf32> to vector<8x128xf32>
    %cst_135 = arith.constant 5.000000e-01 : f32
    %331 = vector.broadcast %cst_135 : f32 to vector<8x128xf32>
    %332 = arith.mulf %331, %330 : vector<8x128xf32>
    %333 = math.tanh %332 : vector<8x128xf32>
    %cst_136 = arith.constant 5.000000e-01 : f32
    %334 = vector.broadcast %cst_136 : f32 to vector<8x128xf32>
    %335 = arith.mulf %334, %333 : vector<8x128xf32>
    %cst_137 = arith.constant 5.000000e-01 : f32
    %336 = vector.broadcast %cst_137 : f32 to vector<8x128xf32>
    %337 = arith.addf %335, %336 : vector<8x128xf32>
    %338 = vector.extract_strided_slice %321 {offsets = [0, 256], sizes = [8, 128], strides = [1, 1]} : vector<8x512xf32> to vector<8x128xf32>
    %339 = math.tanh %338 : vector<8x128xf32>
    %340 = vector.extract_strided_slice %321 {offsets = [0, 384], sizes = [8, 128], strides = [1, 1]} : vector<8x512xf32> to vector<8x128xf32>
    %cst_138 = arith.constant 5.000000e-01 : f32
    %341 = vector.broadcast %cst_138 : f32 to vector<8x128xf32>
    %342 = arith.mulf %341, %340 : vector<8x128xf32>
    %343 = math.tanh %342 : vector<8x128xf32>
    %cst_139 = arith.constant 5.000000e-01 : f32
    %344 = vector.broadcast %cst_139 : f32 to vector<8x128xf32>
    %345 = arith.mulf %344, %343 : vector<8x128xf32>
    %cst_140 = arith.constant 5.000000e-01 : f32
    %346 = vector.broadcast %cst_140 : f32 to vector<8x128xf32>
    %347 = arith.addf %345, %346 : vector<8x128xf32>
    %348 = arith.mulf %337, %307 : vector<8x128xf32>
    %349 = arith.mulf %329, %339 : vector<8x128xf32>
    %350 = arith.addf %348, %349 : vector<8x128xf32>
    %351 = math.tanh %350 : vector<8x128xf32>
    %352 = arith.mulf %347, %351 : vector<8x128xf32>
    %353 = arith.truncf %352 : vector<8x128xf32> to vector<8x128xbf16>
    %354 = arith.index_cast %c7_i32 : i32 to index
    %c0_141 = arith.constant 0 : index
    %c0_142 = arith.constant 0 : index
    %355 = vector.load %arg8[%354, %c0_141, %c0_142] : memref<8x8x128xbf16, #tpu.memory_space<vmem>>, vector<1x8x128xbf16>
    %356 = vector.shape_cast %355 : vector<1x8x128xbf16> to vector<8x128xbf16>
    %357 = vector.shape_cast %353 : vector<8x128xbf16> to vector<1x8x128xbf16>
    tpu.vector_store %arg8[%354, %c0_141, %c0_142], %357 {strides = array<i32>} : memref<8x8x128xbf16, #tpu.memory_space<vmem>>, vector<1x8x128xbf16>,
    %c8_i32 = arith.constant 8 : i32
    %c0_143 = arith.constant 0 : index
    %c0_144 = arith.constant 0 : index
    %358 = vector.load %arg9[%c0_143, %c0_144] : memref<8x128xf32, #tpu.memory_space<vmem>>, vector<8x128xf32>
    tpu.vector_store %arg9[%c0_143, %c0_144], %352 {strides = array<i32>} : memref<8x128xf32, #tpu.memory_space<vmem>>, vector<8x128xf32>,
    %c0_145 = arith.constant 0 : index
    %c0_146 = arith.constant 0 : index
    %359 = vector.load %arg10[%c0_145, %c0_146] : memref<8x128xf32, #tpu.memory_space<vmem>>, vector<8x128xf32>
    tpu.vector_store %arg10[%c0_145, %c0_146], %350 {strides = array<i32>} : memref<8x128xf32, #tpu.memory_space<vmem>>, vector<8x128xf32>,
    return
  }
  func.func @transform_0(%arg0: i32, %arg1: i32) -> (i32, i32, i32) {
    %c0_i32 = arith.constant 0 : i32
    %c0_i32_0 = arith.constant 0 : i32
    return %arg1, %arg0, %c0_i32 : i32, i32, i32
  }
  func.func @transform_1(%arg0: i32, %arg1: i32) -> (i32, i32) {
    %c0_i32 = arith.constant 0 : i32
    %c0_i32_0 = arith.constant 0 : i32
    %c0_i32_1 = arith.constant 0 : i32
    return %c0_i32, %c0_i32_0 : i32, i32
  }
  func.func @transform_2(%arg0: i32, %arg1: i32) -> (i32, i32) {
    %c0_i32 = arith.constant 0 : i32
    %c0_i32_0 = arith.constant 0 : i32
    %c0_i32_1 = arith.constant 0 : i32
    return %c0_i32, %c0_i32_0 : i32, i32
  }
  func.func @transform_3(%arg0: i32, %arg1: i32) -> (i32, i32) {
    %c0_i32 = arith.constant 0 : i32
    %c0_i32_0 = arith.constant 0 : i32
    %c0_i32_1 = arith.constant 0 : i32
    return %c0_i32, %c0_i32_0 : i32, i32
  }
  func.func @transform_4(%arg0: i32, %arg1: i32) -> (i32, i32) {
    %c0_i32 = arith.constant 0 : i32
    %c0_i32_0 = arith.constant 0 : i32
    return %arg0, %c0_i32 : i32, i32
  }
  func.func @transform_5(%arg0: i32, %arg1: i32) -> (i32, i32) {
    %c0_i32 = arith.constant 0 : i32
    %c0_i32_0 = arith.constant 0 : i32
    return %arg0, %c0_i32 : i32, i32
  }
  func.func @transform_6(%arg0: i32, %arg1: i32) -> (i32, i32, i32) {
    %c0_i32 = arith.constant 0 : i32
    %c0_i32_0 = arith.constant 0 : i32
    return %arg1, %arg0, %c0_i32 : i32, i32, i32
  }
}

module attributes {stable_mosaic.version = 11 : i64} {
  func.func @_lstm_chunk_kernel(%arg0: i32, %arg1: i32, %arg2: memref<8x8x128xbf16, #tpu.memory_space<vmem>>, %arg3: memref<128x512xbf16, #tpu.memory_space<vmem>>, %arg4: memref<128x512xbf16, #tpu.memory_space<vmem>>, %arg5: memref<1x512xf32, #tpu.memory_space<vmem>>, %arg6: memref<8x128xf32, #tpu.memory_space<vmem>>, %arg7: memref<8x128xf32, #tpu.memory_space<vmem>>, %arg8: memref<8x8x128xf32, #tpu.memory_space<vmem>>, %arg9: memref<8x128xf32, #tpu.memory_space<vmem>>, %arg10: memref<8x128xf32, #tpu.memory_space<vmem>>, %arg11: memref<8x8x512xf32, #tpu.memory_space<vmem>>) attributes {dimension_semantics = [#tpu.dimension_semantics<parallel>, #tpu.dimension_semantics<arbitrary>], iteration_bounds = array<i64: 1, 1>, scalar_prefetch = 0 : i64, scratch_operands = 3 : i64, tpu.core_type = #tpu.core_type<tc>, window_params = [{transform_indices = @transform_0, window_bounds = array<i64: 8, 8, 128>}, {pipeline_mode = #tpu.pipeline_mode<synchronous>, transform_indices = @transform_1, window_bounds = array<i64: 128, 512>}, {pipeline_mode = #tpu.pipeline_mode<synchronous>, transform_indices = @transform_2, window_bounds = array<i64: 128, 512>}, {pipeline_mode = #tpu.pipeline_mode<synchronous>, transform_indices = @transform_3, window_bounds = array<i64: 1, 512>}, {transform_indices = @transform_4, window_bounds = array<i64: 8, 128>}, {transform_indices = @transform_5, window_bounds = array<i64: 8, 128>}, {transform_indices = @transform_6, window_bounds = array<i64: 8, 8, 128>}]} {
    %c0_i32 = arith.constant 0 : i32
    %0 = arith.cmpi eq, %arg1, %c0_i32 : i32
    %1 = arith.extui %0 : i1 to i32
    %c0_i32_0 = arith.constant 0 : i32
    %2 = arith.cmpi ne, %1, %c0_i32_0 : i32
    scf.if %2 {
      %c0_147 = arith.constant 0 : index
      %c0_148 = arith.constant 0 : index
      %352 = vector.load %arg6[%c0_147, %c0_148] : memref<8x128xf32, #tpu.memory_space<vmem>>, vector<8x128xf32>
      %c0_149 = arith.constant 0 : index
      %c0_150 = arith.constant 0 : index
      %353 = vector.load %arg9[%c0_149, %c0_150] : memref<8x128xf32, #tpu.memory_space<vmem>>, vector<8x128xf32>
      tpu.vector_store %arg9[%c0_149, %c0_150], %352 {strides = array<i32>} : memref<8x128xf32, #tpu.memory_space<vmem>>, vector<8x128xf32>,
      %c0_151 = arith.constant 0 : index
      %c0_152 = arith.constant 0 : index
      %354 = vector.load %arg7[%c0_151, %c0_152] : memref<8x128xf32, #tpu.memory_space<vmem>>, vector<8x128xf32>
      %c0_153 = arith.constant 0 : index
      %c0_154 = arith.constant 0 : index
      %355 = vector.load %arg10[%c0_153, %c0_154] : memref<8x128xf32, #tpu.memory_space<vmem>>, vector<8x128xf32>
      tpu.vector_store %arg10[%c0_153, %c0_154], %354 {strides = array<i32>} : memref<8x128xf32, #tpu.memory_space<vmem>>, vector<8x128xf32>,
    } else {
    }
    %c0 = arith.constant 0 : index
    %c0_1 = arith.constant 0 : index
    %c0_2 = arith.constant 0 : index
    %3 = vector.load %arg2[%c0, %c0_1, %c0_2] : memref<8x8x128xbf16, #tpu.memory_space<vmem>>, vector<8x8x128xbf16>
    %4 = vector.shape_cast %3 : vector<8x8x128xbf16> to vector<64x128xbf16>
    %c0_3 = arith.constant 0 : index
    %c0_4 = arith.constant 0 : index
    %5 = vector.load %arg3[%c0_3, %c0_4] : memref<128x512xbf16, #tpu.memory_space<vmem>>, vector<128x512xbf16>
    %cst = arith.constant dense<0.000000e+00> : vector<64x512xf32>
    %6 = tpu.matmul %4, %5, %cst {dimension_numbers = #tpu.dot_dimension_numbers<[1], [0], [0], [1], [0, 0, 1, 1], [], []>} : vector<64x128xbf16>, vector<128x512xbf16>, vector<64x512xf32> -> vector<64x512xf32>
    %c0_5 = arith.constant 0 : index
    %c0_6 = arith.constant 0 : index
    %7 = vector.load %arg5[%c0_5, %c0_6] : memref<1x512xf32, #tpu.memory_space<vmem>>, vector<1x512xf32>
    %8 = vector.broadcast %7 : vector<1x512xf32> to vector<64x512xf32>
    %9 = arith.addf %6, %8 : vector<64x512xf32>
    %10 = vector.shape_cast %9 : vector<64x512xf32> to vector<8x8x512xf32>
    %c0_7 = arith.constant 0 : index
    %c0_8 = arith.constant 0 : index
    %c0_9 = arith.constant 0 : index
    %11 = vector.load %arg11[%c0_7, %c0_8, %c0_9] : memref<8x8x512xf32, #tpu.memory_space<vmem>>, vector<8x8x512xf32>
    tpu.vector_store %arg11[%c0_7, %c0_8, %c0_9], %10 {strides = array<i32>} : memref<8x8x512xf32, #tpu.memory_space<vmem>>, vector<8x8x512xf32>,
    %c0_10 = arith.constant 0 : index
    %c0_11 = arith.constant 0 : index
    %12 = vector.load %arg9[%c0_10, %c0_11] : memref<8x128xf32, #tpu.memory_space<vmem>>, vector<8x128xf32>
    %c0_12 = arith.constant 0 : index
    %c0_13 = arith.constant 0 : index
    %13 = vector.load %arg10[%c0_12, %c0_13] : memref<8x128xf32, #tpu.memory_space<vmem>>, vector<8x128xf32>
    %c0_i32_14 = arith.constant 0 : i32
    %14 = arith.index_cast %c0_i32_14 : i32 to index
    %c0_15 = arith.constant 0 : index
    %c0_16 = arith.constant 0 : index
    %15 = vector.load %arg11[%14, %c0_15, %c0_16] : memref<8x8x512xf32, #tpu.memory_space<vmem>>, vector<1x8x512xf32>
    %16 = vector.shape_cast %15 : vector<1x8x512xf32> to vector<8x512xf32>
    %17 = arith.truncf %12 : vector<8x128xf32> to vector<8x128xbf16>
    %c0_17 = arith.constant 0 : index
    %c0_18 = arith.constant 0 : index
    %18 = vector.load %arg4[%c0_17, %c0_18] : memref<128x512xbf16, #tpu.memory_space<vmem>>, vector<128x512xbf16>
    %cst_19 = arith.constant dense<0.000000e+00> : vector<8x512xf32>
    %19 = tpu.matmul %17, %18, %cst_19 {dimension_numbers = #tpu.dot_dimension_numbers<[1], [0], [0], [1], [0, 0, 1, 1], [], []>} : vector<8x128xbf16>, vector<128x512xbf16>, vector<8x512xf32> -> vector<8x512xf32>
    %20 = arith.addf %16, %19 : vector<8x512xf32>
    %21 = vector.extract_strided_slice %20 {offsets = [0, 0], sizes = [8, 128], strides = [1, 1]} : vector<8x512xf32> to vector<8x128xf32>
    %cst_20 = arith.constant 5.000000e-01 : f32
    %22 = vector.broadcast %cst_20 : f32 to vector<8x128xf32>
    %23 = arith.mulf %22, %21 : vector<8x128xf32>
    %24 = math.tanh %23 : vector<8x128xf32>
    %cst_21 = arith.constant 5.000000e-01 : f32
    %25 = vector.broadcast %cst_21 : f32 to vector<8x128xf32>
    %26 = arith.mulf %25, %24 : vector<8x128xf32>
    %cst_22 = arith.constant 5.000000e-01 : f32
    %27 = vector.broadcast %cst_22 : f32 to vector<8x128xf32>
    %28 = arith.addf %26, %27 : vector<8x128xf32>
    %29 = vector.extract_strided_slice %20 {offsets = [0, 128], sizes = [8, 128], strides = [1, 1]} : vector<8x512xf32> to vector<8x128xf32>
    %cst_23 = arith.constant 5.000000e-01 : f32
    %30 = vector.broadcast %cst_23 : f32 to vector<8x128xf32>
    %31 = arith.mulf %30, %29 : vector<8x128xf32>
    %32 = math.tanh %31 : vector<8x128xf32>
    %cst_24 = arith.constant 5.000000e-01 : f32
    %33 = vector.broadcast %cst_24 : f32 to vector<8x128xf32>
    %34 = arith.mulf %33, %32 : vector<8x128xf32>
    %cst_25 = arith.constant 5.000000e-01 : f32
    %35 = vector.broadcast %cst_25 : f32 to vector<8x128xf32>
    %36 = arith.addf %34, %35 : vector<8x128xf32>
    %37 = vector.extract_strided_slice %20 {offsets = [0, 256], sizes = [8, 128], strides = [1, 1]} : vector<8x512xf32> to vector<8x128xf32>
    %38 = math.tanh %37 : vector<8x128xf32>
    %39 = vector.extract_strided_slice %20 {offsets = [0, 384], sizes = [8, 128], strides = [1, 1]} : vector<8x512xf32> to vector<8x128xf32>
    %cst_26 = arith.constant 5.000000e-01 : f32
    %40 = vector.broadcast %cst_26 : f32 to vector<8x128xf32>
    %41 = arith.mulf %40, %39 : vector<8x128xf32>
    %42 = math.tanh %41 : vector<8x128xf32>
    %cst_27 = arith.constant 5.000000e-01 : f32
    %43 = vector.broadcast %cst_27 : f32 to vector<8x128xf32>
    %44 = arith.mulf %43, %42 : vector<8x128xf32>
    %cst_28 = arith.constant 5.000000e-01 : f32
    %45 = vector.broadcast %cst_28 : f32 to vector<8x128xf32>
    %46 = arith.addf %44, %45 : vector<8x128xf32>
    %47 = arith.mulf %36, %13 : vector<8x128xf32>
    %48 = arith.mulf %28, %38 : vector<8x128xf32>
    %49 = arith.addf %47, %48 : vector<8x128xf32>
    %50 = math.tanh %49 : vector<8x128xf32>
    %51 = arith.mulf %46, %50 : vector<8x128xf32>
    %52 = arith.index_cast %c0_i32_14 : i32 to index
    %c0_29 = arith.constant 0 : index
    %c0_30 = arith.constant 0 : index
    %53 = vector.load %arg8[%52, %c0_29, %c0_30] : memref<8x8x128xf32, #tpu.memory_space<vmem>>, vector<1x8x128xf32>
    %54 = vector.shape_cast %53 : vector<1x8x128xf32> to vector<8x128xf32>
    %55 = vector.shape_cast %51 : vector<8x128xf32> to vector<1x8x128xf32>
    tpu.vector_store %arg8[%52, %c0_29, %c0_30], %55 {strides = array<i32>} : memref<8x8x128xf32, #tpu.memory_space<vmem>>, vector<1x8x128xf32>,
    %c1_i32 = arith.constant 1 : i32
    %56 = arith.index_cast %c1_i32 : i32 to index
    %c0_31 = arith.constant 0 : index
    %c0_32 = arith.constant 0 : index
    %57 = vector.load %arg11[%56, %c0_31, %c0_32] : memref<8x8x512xf32, #tpu.memory_space<vmem>>, vector<1x8x512xf32>
    %58 = vector.shape_cast %57 : vector<1x8x512xf32> to vector<8x512xf32>
    %59 = arith.truncf %51 : vector<8x128xf32> to vector<8x128xbf16>
    %c0_33 = arith.constant 0 : index
    %c0_34 = arith.constant 0 : index
    %60 = vector.load %arg4[%c0_33, %c0_34] : memref<128x512xbf16, #tpu.memory_space<vmem>>, vector<128x512xbf16>
    %cst_35 = arith.constant dense<0.000000e+00> : vector<8x512xf32>
    %61 = tpu.matmul %59, %60, %cst_35 {dimension_numbers = #tpu.dot_dimension_numbers<[1], [0], [0], [1], [0, 0, 1, 1], [], []>} : vector<8x128xbf16>, vector<128x512xbf16>, vector<8x512xf32> -> vector<8x512xf32>
    %62 = arith.addf %58, %61 : vector<8x512xf32>
    %63 = vector.extract_strided_slice %62 {offsets = [0, 0], sizes = [8, 128], strides = [1, 1]} : vector<8x512xf32> to vector<8x128xf32>
    %cst_36 = arith.constant 5.000000e-01 : f32
    %64 = vector.broadcast %cst_36 : f32 to vector<8x128xf32>
    %65 = arith.mulf %64, %63 : vector<8x128xf32>
    %66 = math.tanh %65 : vector<8x128xf32>
    %cst_37 = arith.constant 5.000000e-01 : f32
    %67 = vector.broadcast %cst_37 : f32 to vector<8x128xf32>
    %68 = arith.mulf %67, %66 : vector<8x128xf32>
    %cst_38 = arith.constant 5.000000e-01 : f32
    %69 = vector.broadcast %cst_38 : f32 to vector<8x128xf32>
    %70 = arith.addf %68, %69 : vector<8x128xf32>
    %71 = vector.extract_strided_slice %62 {offsets = [0, 128], sizes = [8, 128], strides = [1, 1]} : vector<8x512xf32> to vector<8x128xf32>
    %cst_39 = arith.constant 5.000000e-01 : f32
    %72 = vector.broadcast %cst_39 : f32 to vector<8x128xf32>
    %73 = arith.mulf %72, %71 : vector<8x128xf32>
    %74 = math.tanh %73 : vector<8x128xf32>
    %cst_40 = arith.constant 5.000000e-01 : f32
    %75 = vector.broadcast %cst_40 : f32 to vector<8x128xf32>
    %76 = arith.mulf %75, %74 : vector<8x128xf32>
    %cst_41 = arith.constant 5.000000e-01 : f32
    %77 = vector.broadcast %cst_41 : f32 to vector<8x128xf32>
    %78 = arith.addf %76, %77 : vector<8x128xf32>
    %79 = vector.extract_strided_slice %62 {offsets = [0, 256], sizes = [8, 128], strides = [1, 1]} : vector<8x512xf32> to vector<8x128xf32>
    %80 = math.tanh %79 : vector<8x128xf32>
    %81 = vector.extract_strided_slice %62 {offsets = [0, 384], sizes = [8, 128], strides = [1, 1]} : vector<8x512xf32> to vector<8x128xf32>
    %cst_42 = arith.constant 5.000000e-01 : f32
    %82 = vector.broadcast %cst_42 : f32 to vector<8x128xf32>
    %83 = arith.mulf %82, %81 : vector<8x128xf32>
    %84 = math.tanh %83 : vector<8x128xf32>
    %cst_43 = arith.constant 5.000000e-01 : f32
    %85 = vector.broadcast %cst_43 : f32 to vector<8x128xf32>
    %86 = arith.mulf %85, %84 : vector<8x128xf32>
    %cst_44 = arith.constant 5.000000e-01 : f32
    %87 = vector.broadcast %cst_44 : f32 to vector<8x128xf32>
    %88 = arith.addf %86, %87 : vector<8x128xf32>
    %89 = arith.mulf %78, %49 : vector<8x128xf32>
    %90 = arith.mulf %70, %80 : vector<8x128xf32>
    %91 = arith.addf %89, %90 : vector<8x128xf32>
    %92 = math.tanh %91 : vector<8x128xf32>
    %93 = arith.mulf %88, %92 : vector<8x128xf32>
    %94 = arith.index_cast %c1_i32 : i32 to index
    %c0_45 = arith.constant 0 : index
    %c0_46 = arith.constant 0 : index
    %95 = vector.load %arg8[%94, %c0_45, %c0_46] : memref<8x8x128xf32, #tpu.memory_space<vmem>>, vector<1x8x128xf32>
    %96 = vector.shape_cast %95 : vector<1x8x128xf32> to vector<8x128xf32>
    %97 = vector.shape_cast %93 : vector<8x128xf32> to vector<1x8x128xf32>
    tpu.vector_store %arg8[%94, %c0_45, %c0_46], %97 {strides = array<i32>} : memref<8x8x128xf32, #tpu.memory_space<vmem>>, vector<1x8x128xf32>,
    %c2_i32 = arith.constant 2 : i32
    %98 = arith.index_cast %c2_i32 : i32 to index
    %c0_47 = arith.constant 0 : index
    %c0_48 = arith.constant 0 : index
    %99 = vector.load %arg11[%98, %c0_47, %c0_48] : memref<8x8x512xf32, #tpu.memory_space<vmem>>, vector<1x8x512xf32>
    %100 = vector.shape_cast %99 : vector<1x8x512xf32> to vector<8x512xf32>
    %101 = arith.truncf %93 : vector<8x128xf32> to vector<8x128xbf16>
    %c0_49 = arith.constant 0 : index
    %c0_50 = arith.constant 0 : index
    %102 = vector.load %arg4[%c0_49, %c0_50] : memref<128x512xbf16, #tpu.memory_space<vmem>>, vector<128x512xbf16>
    %cst_51 = arith.constant dense<0.000000e+00> : vector<8x512xf32>
    %103 = tpu.matmul %101, %102, %cst_51 {dimension_numbers = #tpu.dot_dimension_numbers<[1], [0], [0], [1], [0, 0, 1, 1], [], []>} : vector<8x128xbf16>, vector<128x512xbf16>, vector<8x512xf32> -> vector<8x512xf32>
    %104 = arith.addf %100, %103 : vector<8x512xf32>
    %105 = vector.extract_strided_slice %104 {offsets = [0, 0], sizes = [8, 128], strides = [1, 1]} : vector<8x512xf32> to vector<8x128xf32>
    %cst_52 = arith.constant 5.000000e-01 : f32
    %106 = vector.broadcast %cst_52 : f32 to vector<8x128xf32>
    %107 = arith.mulf %106, %105 : vector<8x128xf32>
    %108 = math.tanh %107 : vector<8x128xf32>
    %cst_53 = arith.constant 5.000000e-01 : f32
    %109 = vector.broadcast %cst_53 : f32 to vector<8x128xf32>
    %110 = arith.mulf %109, %108 : vector<8x128xf32>
    %cst_54 = arith.constant 5.000000e-01 : f32
    %111 = vector.broadcast %cst_54 : f32 to vector<8x128xf32>
    %112 = arith.addf %110, %111 : vector<8x128xf32>
    %113 = vector.extract_strided_slice %104 {offsets = [0, 128], sizes = [8, 128], strides = [1, 1]} : vector<8x512xf32> to vector<8x128xf32>
    %cst_55 = arith.constant 5.000000e-01 : f32
    %114 = vector.broadcast %cst_55 : f32 to vector<8x128xf32>
    %115 = arith.mulf %114, %113 : vector<8x128xf32>
    %116 = math.tanh %115 : vector<8x128xf32>
    %cst_56 = arith.constant 5.000000e-01 : f32
    %117 = vector.broadcast %cst_56 : f32 to vector<8x128xf32>
    %118 = arith.mulf %117, %116 : vector<8x128xf32>
    %cst_57 = arith.constant 5.000000e-01 : f32
    %119 = vector.broadcast %cst_57 : f32 to vector<8x128xf32>
    %120 = arith.addf %118, %119 : vector<8x128xf32>
    %121 = vector.extract_strided_slice %104 {offsets = [0, 256], sizes = [8, 128], strides = [1, 1]} : vector<8x512xf32> to vector<8x128xf32>
    %122 = math.tanh %121 : vector<8x128xf32>
    %123 = vector.extract_strided_slice %104 {offsets = [0, 384], sizes = [8, 128], strides = [1, 1]} : vector<8x512xf32> to vector<8x128xf32>
    %cst_58 = arith.constant 5.000000e-01 : f32
    %124 = vector.broadcast %cst_58 : f32 to vector<8x128xf32>
    %125 = arith.mulf %124, %123 : vector<8x128xf32>
    %126 = math.tanh %125 : vector<8x128xf32>
    %cst_59 = arith.constant 5.000000e-01 : f32
    %127 = vector.broadcast %cst_59 : f32 to vector<8x128xf32>
    %128 = arith.mulf %127, %126 : vector<8x128xf32>
    %cst_60 = arith.constant 5.000000e-01 : f32
    %129 = vector.broadcast %cst_60 : f32 to vector<8x128xf32>
    %130 = arith.addf %128, %129 : vector<8x128xf32>
    %131 = arith.mulf %120, %91 : vector<8x128xf32>
    %132 = arith.mulf %112, %122 : vector<8x128xf32>
    %133 = arith.addf %131, %132 : vector<8x128xf32>
    %134 = math.tanh %133 : vector<8x128xf32>
    %135 = arith.mulf %130, %134 : vector<8x128xf32>
    %136 = arith.index_cast %c2_i32 : i32 to index
    %c0_61 = arith.constant 0 : index
    %c0_62 = arith.constant 0 : index
    %137 = vector.load %arg8[%136, %c0_61, %c0_62] : memref<8x8x128xf32, #tpu.memory_space<vmem>>, vector<1x8x128xf32>
    %138 = vector.shape_cast %137 : vector<1x8x128xf32> to vector<8x128xf32>
    %139 = vector.shape_cast %135 : vector<8x128xf32> to vector<1x8x128xf32>
    tpu.vector_store %arg8[%136, %c0_61, %c0_62], %139 {strides = array<i32>} : memref<8x8x128xf32, #tpu.memory_space<vmem>>, vector<1x8x128xf32>,
    %c3_i32 = arith.constant 3 : i32
    %140 = arith.index_cast %c3_i32 : i32 to index
    %c0_63 = arith.constant 0 : index
    %c0_64 = arith.constant 0 : index
    %141 = vector.load %arg11[%140, %c0_63, %c0_64] : memref<8x8x512xf32, #tpu.memory_space<vmem>>, vector<1x8x512xf32>
    %142 = vector.shape_cast %141 : vector<1x8x512xf32> to vector<8x512xf32>
    %143 = arith.truncf %135 : vector<8x128xf32> to vector<8x128xbf16>
    %c0_65 = arith.constant 0 : index
    %c0_66 = arith.constant 0 : index
    %144 = vector.load %arg4[%c0_65, %c0_66] : memref<128x512xbf16, #tpu.memory_space<vmem>>, vector<128x512xbf16>
    %cst_67 = arith.constant dense<0.000000e+00> : vector<8x512xf32>
    %145 = tpu.matmul %143, %144, %cst_67 {dimension_numbers = #tpu.dot_dimension_numbers<[1], [0], [0], [1], [0, 0, 1, 1], [], []>} : vector<8x128xbf16>, vector<128x512xbf16>, vector<8x512xf32> -> vector<8x512xf32>
    %146 = arith.addf %142, %145 : vector<8x512xf32>
    %147 = vector.extract_strided_slice %146 {offsets = [0, 0], sizes = [8, 128], strides = [1, 1]} : vector<8x512xf32> to vector<8x128xf32>
    %cst_68 = arith.constant 5.000000e-01 : f32
    %148 = vector.broadcast %cst_68 : f32 to vector<8x128xf32>
    %149 = arith.mulf %148, %147 : vector<8x128xf32>
    %150 = math.tanh %149 : vector<8x128xf32>
    %cst_69 = arith.constant 5.000000e-01 : f32
    %151 = vector.broadcast %cst_69 : f32 to vector<8x128xf32>
    %152 = arith.mulf %151, %150 : vector<8x128xf32>
    %cst_70 = arith.constant 5.000000e-01 : f32
    %153 = vector.broadcast %cst_70 : f32 to vector<8x128xf32>
    %154 = arith.addf %152, %153 : vector<8x128xf32>
    %155 = vector.extract_strided_slice %146 {offsets = [0, 128], sizes = [8, 128], strides = [1, 1]} : vector<8x512xf32> to vector<8x128xf32>
    %cst_71 = arith.constant 5.000000e-01 : f32
    %156 = vector.broadcast %cst_71 : f32 to vector<8x128xf32>
    %157 = arith.mulf %156, %155 : vector<8x128xf32>
    %158 = math.tanh %157 : vector<8x128xf32>
    %cst_72 = arith.constant 5.000000e-01 : f32
    %159 = vector.broadcast %cst_72 : f32 to vector<8x128xf32>
    %160 = arith.mulf %159, %158 : vector<8x128xf32>
    %cst_73 = arith.constant 5.000000e-01 : f32
    %161 = vector.broadcast %cst_73 : f32 to vector<8x128xf32>
    %162 = arith.addf %160, %161 : vector<8x128xf32>
    %163 = vector.extract_strided_slice %146 {offsets = [0, 256], sizes = [8, 128], strides = [1, 1]} : vector<8x512xf32> to vector<8x128xf32>
    %164 = math.tanh %163 : vector<8x128xf32>
    %165 = vector.extract_strided_slice %146 {offsets = [0, 384], sizes = [8, 128], strides = [1, 1]} : vector<8x512xf32> to vector<8x128xf32>
    %cst_74 = arith.constant 5.000000e-01 : f32
    %166 = vector.broadcast %cst_74 : f32 to vector<8x128xf32>
    %167 = arith.mulf %166, %165 : vector<8x128xf32>
    %168 = math.tanh %167 : vector<8x128xf32>
    %cst_75 = arith.constant 5.000000e-01 : f32
    %169 = vector.broadcast %cst_75 : f32 to vector<8x128xf32>
    %170 = arith.mulf %169, %168 : vector<8x128xf32>
    %cst_76 = arith.constant 5.000000e-01 : f32
    %171 = vector.broadcast %cst_76 : f32 to vector<8x128xf32>
    %172 = arith.addf %170, %171 : vector<8x128xf32>
    %173 = arith.mulf %162, %133 : vector<8x128xf32>
    %174 = arith.mulf %154, %164 : vector<8x128xf32>
    %175 = arith.addf %173, %174 : vector<8x128xf32>
    %176 = math.tanh %175 : vector<8x128xf32>
    %177 = arith.mulf %172, %176 : vector<8x128xf32>
    %178 = arith.index_cast %c3_i32 : i32 to index
    %c0_77 = arith.constant 0 : index
    %c0_78 = arith.constant 0 : index
    %179 = vector.load %arg8[%178, %c0_77, %c0_78] : memref<8x8x128xf32, #tpu.memory_space<vmem>>, vector<1x8x128xf32>
    %180 = vector.shape_cast %179 : vector<1x8x128xf32> to vector<8x128xf32>
    %181 = vector.shape_cast %177 : vector<8x128xf32> to vector<1x8x128xf32>
    tpu.vector_store %arg8[%178, %c0_77, %c0_78], %181 {strides = array<i32>} : memref<8x8x128xf32, #tpu.memory_space<vmem>>, vector<1x8x128xf32>,
    %c4_i32 = arith.constant 4 : i32
    %182 = arith.index_cast %c4_i32 : i32 to index
    %c0_79 = arith.constant 0 : index
    %c0_80 = arith.constant 0 : index
    %183 = vector.load %arg11[%182, %c0_79, %c0_80] : memref<8x8x512xf32, #tpu.memory_space<vmem>>, vector<1x8x512xf32>
    %184 = vector.shape_cast %183 : vector<1x8x512xf32> to vector<8x512xf32>
    %185 = arith.truncf %177 : vector<8x128xf32> to vector<8x128xbf16>
    %c0_81 = arith.constant 0 : index
    %c0_82 = arith.constant 0 : index
    %186 = vector.load %arg4[%c0_81, %c0_82] : memref<128x512xbf16, #tpu.memory_space<vmem>>, vector<128x512xbf16>
    %cst_83 = arith.constant dense<0.000000e+00> : vector<8x512xf32>
    %187 = tpu.matmul %185, %186, %cst_83 {dimension_numbers = #tpu.dot_dimension_numbers<[1], [0], [0], [1], [0, 0, 1, 1], [], []>} : vector<8x128xbf16>, vector<128x512xbf16>, vector<8x512xf32> -> vector<8x512xf32>
    %188 = arith.addf %184, %187 : vector<8x512xf32>
    %189 = vector.extract_strided_slice %188 {offsets = [0, 0], sizes = [8, 128], strides = [1, 1]} : vector<8x512xf32> to vector<8x128xf32>
    %cst_84 = arith.constant 5.000000e-01 : f32
    %190 = vector.broadcast %cst_84 : f32 to vector<8x128xf32>
    %191 = arith.mulf %190, %189 : vector<8x128xf32>
    %192 = math.tanh %191 : vector<8x128xf32>
    %cst_85 = arith.constant 5.000000e-01 : f32
    %193 = vector.broadcast %cst_85 : f32 to vector<8x128xf32>
    %194 = arith.mulf %193, %192 : vector<8x128xf32>
    %cst_86 = arith.constant 5.000000e-01 : f32
    %195 = vector.broadcast %cst_86 : f32 to vector<8x128xf32>
    %196 = arith.addf %194, %195 : vector<8x128xf32>
    %197 = vector.extract_strided_slice %188 {offsets = [0, 128], sizes = [8, 128], strides = [1, 1]} : vector<8x512xf32> to vector<8x128xf32>
    %cst_87 = arith.constant 5.000000e-01 : f32
    %198 = vector.broadcast %cst_87 : f32 to vector<8x128xf32>
    %199 = arith.mulf %198, %197 : vector<8x128xf32>
    %200 = math.tanh %199 : vector<8x128xf32>
    %cst_88 = arith.constant 5.000000e-01 : f32
    %201 = vector.broadcast %cst_88 : f32 to vector<8x128xf32>
    %202 = arith.mulf %201, %200 : vector<8x128xf32>
    %cst_89 = arith.constant 5.000000e-01 : f32
    %203 = vector.broadcast %cst_89 : f32 to vector<8x128xf32>
    %204 = arith.addf %202, %203 : vector<8x128xf32>
    %205 = vector.extract_strided_slice %188 {offsets = [0, 256], sizes = [8, 128], strides = [1, 1]} : vector<8x512xf32> to vector<8x128xf32>
    %206 = math.tanh %205 : vector<8x128xf32>
    %207 = vector.extract_strided_slice %188 {offsets = [0, 384], sizes = [8, 128], strides = [1, 1]} : vector<8x512xf32> to vector<8x128xf32>
    %cst_90 = arith.constant 5.000000e-01 : f32
    %208 = vector.broadcast %cst_90 : f32 to vector<8x128xf32>
    %209 = arith.mulf %208, %207 : vector<8x128xf32>
    %210 = math.tanh %209 : vector<8x128xf32>
    %cst_91 = arith.constant 5.000000e-01 : f32
    %211 = vector.broadcast %cst_91 : f32 to vector<8x128xf32>
    %212 = arith.mulf %211, %210 : vector<8x128xf32>
    %cst_92 = arith.constant 5.000000e-01 : f32
    %213 = vector.broadcast %cst_92 : f32 to vector<8x128xf32>
    %214 = arith.addf %212, %213 : vector<8x128xf32>
    %215 = arith.mulf %204, %175 : vector<8x128xf32>
    %216 = arith.mulf %196, %206 : vector<8x128xf32>
    %217 = arith.addf %215, %216 : vector<8x128xf32>
    %218 = math.tanh %217 : vector<8x128xf32>
    %219 = arith.mulf %214, %218 : vector<8x128xf32>
    %220 = arith.index_cast %c4_i32 : i32 to index
    %c0_93 = arith.constant 0 : index
    %c0_94 = arith.constant 0 : index
    %221 = vector.load %arg8[%220, %c0_93, %c0_94] : memref<8x8x128xf32, #tpu.memory_space<vmem>>, vector<1x8x128xf32>
    %222 = vector.shape_cast %221 : vector<1x8x128xf32> to vector<8x128xf32>
    %223 = vector.shape_cast %219 : vector<8x128xf32> to vector<1x8x128xf32>
    tpu.vector_store %arg8[%220, %c0_93, %c0_94], %223 {strides = array<i32>} : memref<8x8x128xf32, #tpu.memory_space<vmem>>, vector<1x8x128xf32>,
    %c5_i32 = arith.constant 5 : i32
    %224 = arith.index_cast %c5_i32 : i32 to index
    %c0_95 = arith.constant 0 : index
    %c0_96 = arith.constant 0 : index
    %225 = vector.load %arg11[%224, %c0_95, %c0_96] : memref<8x8x512xf32, #tpu.memory_space<vmem>>, vector<1x8x512xf32>
    %226 = vector.shape_cast %225 : vector<1x8x512xf32> to vector<8x512xf32>
    %227 = arith.truncf %219 : vector<8x128xf32> to vector<8x128xbf16>
    %c0_97 = arith.constant 0 : index
    %c0_98 = arith.constant 0 : index
    %228 = vector.load %arg4[%c0_97, %c0_98] : memref<128x512xbf16, #tpu.memory_space<vmem>>, vector<128x512xbf16>
    %cst_99 = arith.constant dense<0.000000e+00> : vector<8x512xf32>
    %229 = tpu.matmul %227, %228, %cst_99 {dimension_numbers = #tpu.dot_dimension_numbers<[1], [0], [0], [1], [0, 0, 1, 1], [], []>} : vector<8x128xbf16>, vector<128x512xbf16>, vector<8x512xf32> -> vector<8x512xf32>
    %230 = arith.addf %226, %229 : vector<8x512xf32>
    %231 = vector.extract_strided_slice %230 {offsets = [0, 0], sizes = [8, 128], strides = [1, 1]} : vector<8x512xf32> to vector<8x128xf32>
    %cst_100 = arith.constant 5.000000e-01 : f32
    %232 = vector.broadcast %cst_100 : f32 to vector<8x128xf32>
    %233 = arith.mulf %232, %231 : vector<8x128xf32>
    %234 = math.tanh %233 : vector<8x128xf32>
    %cst_101 = arith.constant 5.000000e-01 : f32
    %235 = vector.broadcast %cst_101 : f32 to vector<8x128xf32>
    %236 = arith.mulf %235, %234 : vector<8x128xf32>
    %cst_102 = arith.constant 5.000000e-01 : f32
    %237 = vector.broadcast %cst_102 : f32 to vector<8x128xf32>
    %238 = arith.addf %236, %237 : vector<8x128xf32>
    %239 = vector.extract_strided_slice %230 {offsets = [0, 128], sizes = [8, 128], strides = [1, 1]} : vector<8x512xf32> to vector<8x128xf32>
    %cst_103 = arith.constant 5.000000e-01 : f32
    %240 = vector.broadcast %cst_103 : f32 to vector<8x128xf32>
    %241 = arith.mulf %240, %239 : vector<8x128xf32>
    %242 = math.tanh %241 : vector<8x128xf32>
    %cst_104 = arith.constant 5.000000e-01 : f32
    %243 = vector.broadcast %cst_104 : f32 to vector<8x128xf32>
    %244 = arith.mulf %243, %242 : vector<8x128xf32>
    %cst_105 = arith.constant 5.000000e-01 : f32
    %245 = vector.broadcast %cst_105 : f32 to vector<8x128xf32>
    %246 = arith.addf %244, %245 : vector<8x128xf32>
    %247 = vector.extract_strided_slice %230 {offsets = [0, 256], sizes = [8, 128], strides = [1, 1]} : vector<8x512xf32> to vector<8x128xf32>
    %248 = math.tanh %247 : vector<8x128xf32>
    %249 = vector.extract_strided_slice %230 {offsets = [0, 384], sizes = [8, 128], strides = [1, 1]} : vector<8x512xf32> to vector<8x128xf32>
    %cst_106 = arith.constant 5.000000e-01 : f32
    %250 = vector.broadcast %cst_106 : f32 to vector<8x128xf32>
    %251 = arith.mulf %250, %249 : vector<8x128xf32>
    %252 = math.tanh %251 : vector<8x128xf32>
    %cst_107 = arith.constant 5.000000e-01 : f32
    %253 = vector.broadcast %cst_107 : f32 to vector<8x128xf32>
    %254 = arith.mulf %253, %252 : vector<8x128xf32>
    %cst_108 = arith.constant 5.000000e-01 : f32
    %255 = vector.broadcast %cst_108 : f32 to vector<8x128xf32>
    %256 = arith.addf %254, %255 : vector<8x128xf32>
    %257 = arith.mulf %246, %217 : vector<8x128xf32>
    %258 = arith.mulf %238, %248 : vector<8x128xf32>
    %259 = arith.addf %257, %258 : vector<8x128xf32>
    %260 = math.tanh %259 : vector<8x128xf32>
    %261 = arith.mulf %256, %260 : vector<8x128xf32>
    %262 = arith.index_cast %c5_i32 : i32 to index
    %c0_109 = arith.constant 0 : index
    %c0_110 = arith.constant 0 : index
    %263 = vector.load %arg8[%262, %c0_109, %c0_110] : memref<8x8x128xf32, #tpu.memory_space<vmem>>, vector<1x8x128xf32>
    %264 = vector.shape_cast %263 : vector<1x8x128xf32> to vector<8x128xf32>
    %265 = vector.shape_cast %261 : vector<8x128xf32> to vector<1x8x128xf32>
    tpu.vector_store %arg8[%262, %c0_109, %c0_110], %265 {strides = array<i32>} : memref<8x8x128xf32, #tpu.memory_space<vmem>>, vector<1x8x128xf32>,
    %c6_i32 = arith.constant 6 : i32
    %266 = arith.index_cast %c6_i32 : i32 to index
    %c0_111 = arith.constant 0 : index
    %c0_112 = arith.constant 0 : index
    %267 = vector.load %arg11[%266, %c0_111, %c0_112] : memref<8x8x512xf32, #tpu.memory_space<vmem>>, vector<1x8x512xf32>
    %268 = vector.shape_cast %267 : vector<1x8x512xf32> to vector<8x512xf32>
    %269 = arith.truncf %261 : vector<8x128xf32> to vector<8x128xbf16>
    %c0_113 = arith.constant 0 : index
    %c0_114 = arith.constant 0 : index
    %270 = vector.load %arg4[%c0_113, %c0_114] : memref<128x512xbf16, #tpu.memory_space<vmem>>, vector<128x512xbf16>
    %cst_115 = arith.constant dense<0.000000e+00> : vector<8x512xf32>
    %271 = tpu.matmul %269, %270, %cst_115 {dimension_numbers = #tpu.dot_dimension_numbers<[1], [0], [0], [1], [0, 0, 1, 1], [], []>} : vector<8x128xbf16>, vector<128x512xbf16>, vector<8x512xf32> -> vector<8x512xf32>
    %272 = arith.addf %268, %271 : vector<8x512xf32>
    %273 = vector.extract_strided_slice %272 {offsets = [0, 0], sizes = [8, 128], strides = [1, 1]} : vector<8x512xf32> to vector<8x128xf32>
    %cst_116 = arith.constant 5.000000e-01 : f32
    %274 = vector.broadcast %cst_116 : f32 to vector<8x128xf32>
    %275 = arith.mulf %274, %273 : vector<8x128xf32>
    %276 = math.tanh %275 : vector<8x128xf32>
    %cst_117 = arith.constant 5.000000e-01 : f32
    %277 = vector.broadcast %cst_117 : f32 to vector<8x128xf32>
    %278 = arith.mulf %277, %276 : vector<8x128xf32>
    %cst_118 = arith.constant 5.000000e-01 : f32
    %279 = vector.broadcast %cst_118 : f32 to vector<8x128xf32>
    %280 = arith.addf %278, %279 : vector<8x128xf32>
    %281 = vector.extract_strided_slice %272 {offsets = [0, 128], sizes = [8, 128], strides = [1, 1]} : vector<8x512xf32> to vector<8x128xf32>
    %cst_119 = arith.constant 5.000000e-01 : f32
    %282 = vector.broadcast %cst_119 : f32 to vector<8x128xf32>
    %283 = arith.mulf %282, %281 : vector<8x128xf32>
    %284 = math.tanh %283 : vector<8x128xf32>
    %cst_120 = arith.constant 5.000000e-01 : f32
    %285 = vector.broadcast %cst_120 : f32 to vector<8x128xf32>
    %286 = arith.mulf %285, %284 : vector<8x128xf32>
    %cst_121 = arith.constant 5.000000e-01 : f32
    %287 = vector.broadcast %cst_121 : f32 to vector<8x128xf32>
    %288 = arith.addf %286, %287 : vector<8x128xf32>
    %289 = vector.extract_strided_slice %272 {offsets = [0, 256], sizes = [8, 128], strides = [1, 1]} : vector<8x512xf32> to vector<8x128xf32>
    %290 = math.tanh %289 : vector<8x128xf32>
    %291 = vector.extract_strided_slice %272 {offsets = [0, 384], sizes = [8, 128], strides = [1, 1]} : vector<8x512xf32> to vector<8x128xf32>
    %cst_122 = arith.constant 5.000000e-01 : f32
    %292 = vector.broadcast %cst_122 : f32 to vector<8x128xf32>
    %293 = arith.mulf %292, %291 : vector<8x128xf32>
    %294 = math.tanh %293 : vector<8x128xf32>
    %cst_123 = arith.constant 5.000000e-01 : f32
    %295 = vector.broadcast %cst_123 : f32 to vector<8x128xf32>
    %296 = arith.mulf %295, %294 : vector<8x128xf32>
    %cst_124 = arith.constant 5.000000e-01 : f32
    %297 = vector.broadcast %cst_124 : f32 to vector<8x128xf32>
    %298 = arith.addf %296, %297 : vector<8x128xf32>
    %299 = arith.mulf %288, %259 : vector<8x128xf32>
    %300 = arith.mulf %280, %290 : vector<8x128xf32>
    %301 = arith.addf %299, %300 : vector<8x128xf32>
    %302 = math.tanh %301 : vector<8x128xf32>
    %303 = arith.mulf %298, %302 : vector<8x128xf32>
    %304 = arith.index_cast %c6_i32 : i32 to index
    %c0_125 = arith.constant 0 : index
    %c0_126 = arith.constant 0 : index
    %305 = vector.load %arg8[%304, %c0_125, %c0_126] : memref<8x8x128xf32, #tpu.memory_space<vmem>>, vector<1x8x128xf32>
    %306 = vector.shape_cast %305 : vector<1x8x128xf32> to vector<8x128xf32>
    %307 = vector.shape_cast %303 : vector<8x128xf32> to vector<1x8x128xf32>
    tpu.vector_store %arg8[%304, %c0_125, %c0_126], %307 {strides = array<i32>} : memref<8x8x128xf32, #tpu.memory_space<vmem>>, vector<1x8x128xf32>,
    %c7_i32 = arith.constant 7 : i32
    %308 = arith.index_cast %c7_i32 : i32 to index
    %c0_127 = arith.constant 0 : index
    %c0_128 = arith.constant 0 : index
    %309 = vector.load %arg11[%308, %c0_127, %c0_128] : memref<8x8x512xf32, #tpu.memory_space<vmem>>, vector<1x8x512xf32>
    %310 = vector.shape_cast %309 : vector<1x8x512xf32> to vector<8x512xf32>
    %311 = arith.truncf %303 : vector<8x128xf32> to vector<8x128xbf16>
    %c0_129 = arith.constant 0 : index
    %c0_130 = arith.constant 0 : index
    %312 = vector.load %arg4[%c0_129, %c0_130] : memref<128x512xbf16, #tpu.memory_space<vmem>>, vector<128x512xbf16>
    %cst_131 = arith.constant dense<0.000000e+00> : vector<8x512xf32>
    %313 = tpu.matmul %311, %312, %cst_131 {dimension_numbers = #tpu.dot_dimension_numbers<[1], [0], [0], [1], [0, 0, 1, 1], [], []>} : vector<8x128xbf16>, vector<128x512xbf16>, vector<8x512xf32> -> vector<8x512xf32>
    %314 = arith.addf %310, %313 : vector<8x512xf32>
    %315 = vector.extract_strided_slice %314 {offsets = [0, 0], sizes = [8, 128], strides = [1, 1]} : vector<8x512xf32> to vector<8x128xf32>
    %cst_132 = arith.constant 5.000000e-01 : f32
    %316 = vector.broadcast %cst_132 : f32 to vector<8x128xf32>
    %317 = arith.mulf %316, %315 : vector<8x128xf32>
    %318 = math.tanh %317 : vector<8x128xf32>
    %cst_133 = arith.constant 5.000000e-01 : f32
    %319 = vector.broadcast %cst_133 : f32 to vector<8x128xf32>
    %320 = arith.mulf %319, %318 : vector<8x128xf32>
    %cst_134 = arith.constant 5.000000e-01 : f32
    %321 = vector.broadcast %cst_134 : f32 to vector<8x128xf32>
    %322 = arith.addf %320, %321 : vector<8x128xf32>
    %323 = vector.extract_strided_slice %314 {offsets = [0, 128], sizes = [8, 128], strides = [1, 1]} : vector<8x512xf32> to vector<8x128xf32>
    %cst_135 = arith.constant 5.000000e-01 : f32
    %324 = vector.broadcast %cst_135 : f32 to vector<8x128xf32>
    %325 = arith.mulf %324, %323 : vector<8x128xf32>
    %326 = math.tanh %325 : vector<8x128xf32>
    %cst_136 = arith.constant 5.000000e-01 : f32
    %327 = vector.broadcast %cst_136 : f32 to vector<8x128xf32>
    %328 = arith.mulf %327, %326 : vector<8x128xf32>
    %cst_137 = arith.constant 5.000000e-01 : f32
    %329 = vector.broadcast %cst_137 : f32 to vector<8x128xf32>
    %330 = arith.addf %328, %329 : vector<8x128xf32>
    %331 = vector.extract_strided_slice %314 {offsets = [0, 256], sizes = [8, 128], strides = [1, 1]} : vector<8x512xf32> to vector<8x128xf32>
    %332 = math.tanh %331 : vector<8x128xf32>
    %333 = vector.extract_strided_slice %314 {offsets = [0, 384], sizes = [8, 128], strides = [1, 1]} : vector<8x512xf32> to vector<8x128xf32>
    %cst_138 = arith.constant 5.000000e-01 : f32
    %334 = vector.broadcast %cst_138 : f32 to vector<8x128xf32>
    %335 = arith.mulf %334, %333 : vector<8x128xf32>
    %336 = math.tanh %335 : vector<8x128xf32>
    %cst_139 = arith.constant 5.000000e-01 : f32
    %337 = vector.broadcast %cst_139 : f32 to vector<8x128xf32>
    %338 = arith.mulf %337, %336 : vector<8x128xf32>
    %cst_140 = arith.constant 5.000000e-01 : f32
    %339 = vector.broadcast %cst_140 : f32 to vector<8x128xf32>
    %340 = arith.addf %338, %339 : vector<8x128xf32>
    %341 = arith.mulf %330, %301 : vector<8x128xf32>
    %342 = arith.mulf %322, %332 : vector<8x128xf32>
    %343 = arith.addf %341, %342 : vector<8x128xf32>
    %344 = math.tanh %343 : vector<8x128xf32>
    %345 = arith.mulf %340, %344 : vector<8x128xf32>
    %346 = arith.index_cast %c7_i32 : i32 to index
    %c0_141 = arith.constant 0 : index
    %c0_142 = arith.constant 0 : index
    %347 = vector.load %arg8[%346, %c0_141, %c0_142] : memref<8x8x128xf32, #tpu.memory_space<vmem>>, vector<1x8x128xf32>
    %348 = vector.shape_cast %347 : vector<1x8x128xf32> to vector<8x128xf32>
    %349 = vector.shape_cast %345 : vector<8x128xf32> to vector<1x8x128xf32>
    tpu.vector_store %arg8[%346, %c0_141, %c0_142], %349 {strides = array<i32>} : memref<8x8x128xf32, #tpu.memory_space<vmem>>, vector<1x8x128xf32>,
    %c8_i32 = arith.constant 8 : i32
    %c0_143 = arith.constant 0 : index
    %c0_144 = arith.constant 0 : index
    %350 = vector.load %arg9[%c0_143, %c0_144] : memref<8x128xf32, #tpu.memory_space<vmem>>, vector<8x128xf32>
    tpu.vector_store %arg9[%c0_143, %c0_144], %345 {strides = array<i32>} : memref<8x128xf32, #tpu.memory_space<vmem>>, vector<8x128xf32>,
    %c0_145 = arith.constant 0 : index
    %c0_146 = arith.constant 0 : index
    %351 = vector.load %arg10[%c0_145, %c0_146] : memref<8x128xf32, #tpu.memory_space<vmem>>, vector<8x128xf32>
    tpu.vector_store %arg10[%c0_145, %c0_146], %343 {strides = array<i32>} : memref<8x128xf32, #tpu.memory_space<vmem>>, vector<8x128xf32>,
    return
  }
  func.func @transform_0(%arg0: i32, %arg1: i32) -> (i32, i32, i32) {
    %c0_i32 = arith.constant 0 : i32
    %c0_i32_0 = arith.constant 0 : i32
    return %arg1, %arg0, %c0_i32 : i32, i32, i32
  }
  func.func @transform_1(%arg0: i32, %arg1: i32) -> (i32, i32) {
    %c0_i32 = arith.constant 0 : i32
    %c0_i32_0 = arith.constant 0 : i32
    %c0_i32_1 = arith.constant 0 : i32
    return %c0_i32, %c0_i32_0 : i32, i32
  }
  func.func @transform_2(%arg0: i32, %arg1: i32) -> (i32, i32) {
    %c0_i32 = arith.constant 0 : i32
    %c0_i32_0 = arith.constant 0 : i32
    %c0_i32_1 = arith.constant 0 : i32
    return %c0_i32, %c0_i32_0 : i32, i32
  }
  func.func @transform_3(%arg0: i32, %arg1: i32) -> (i32, i32) {
    %c0_i32 = arith.constant 0 : i32
    %c0_i32_0 = arith.constant 0 : i32
    %c0_i32_1 = arith.constant 0 : i32
    return %c0_i32, %c0_i32_0 : i32, i32
  }
  func.func @transform_4(%arg0: i32, %arg1: i32) -> (i32, i32) {
    %c0_i32 = arith.constant 0 : i32
    %c0_i32_0 = arith.constant 0 : i32
    return %arg0, %c0_i32 : i32, i32
  }
  func.func @transform_5(%arg0: i32, %arg1: i32) -> (i32, i32) {
    %c0_i32 = arith.constant 0 : i32
    %c0_i32_0 = arith.constant 0 : i32
    return %arg0, %c0_i32 : i32, i32
  }
  func.func @transform_6(%arg0: i32, %arg1: i32) -> (i32, i32, i32) {
    %c0_i32 = arith.constant 0 : i32
    %c0_i32_0 = arith.constant 0 : i32
    return %arg1, %arg0, %c0_i32 : i32, i32, i32
  }
}

</mosaic_0001>

<llo_original>
// kernel: custom_lstm_forward.3
$region0: #{custom_lstm_forward.3}
  #allocation0 [shape = 'u32[]', space=smem, size = 0x4, offset = 0x4, fixed_abs, tag = 'smem constant byte address 0x4 - core index']
  #allocation1 [shape = 'u32[144,128]{1,0:T(1,128)}', space=vmem, size = 0x12000, scoped, tag = 'internal scratch']
  %s0 = inlined_call_operand.vmem [shape: f32[8,8], index: 0, kind: input, shape index: {}]
  %s1 = inlined_call_operand.vmem [shape: f32[8,512], index: 1, kind: input, shape index: {}]
  %s2 = inlined_call_operand.vmem [shape: f32[1,512], index: 2, kind: input, shape index: {}]
  %s3 = inlined_call_operand.vmem [shape: f32[8,512], index: 3, kind: output, shape index: {}]
  %s4 = sld [smem:[#allocation0]]
  $region22: #{custom_lstm_forward.3} parent=0
    _
  %s6 = ssub.s32 1, %s4
  %s7 = scalar_select 0, %s6, %s4
  // Predicated region
  $region2: #{custom_lstm_forward.3} parent=0 // pred_check
    _
  $region3: #{custom_lstm_forward.3} parent=0 // pred_check_branch
    %9 = sbr.rel (0) target = $region5
  $region4: #{custom_lstm_forward.3} parent=0 // pred_region
    _
  $region5: #{custom_lstm_forward.3} parent=0 // pred_fallthru
    _
  // Predicated region
  $region6: #{custom_lstm_forward.3} parent=0 // pred_check
    _
  $region7: #{custom_lstm_forward.3} parent=0 // pred_check_branch
    %11 = sbr.rel (0) target = $region9
  $region8: #{custom_lstm_forward.3} parent=0 // pred_region
    _
  $region9: #{custom_lstm_forward.3} parent=0 // pred_fallthru
    _
  // Predicated region
  $region10: #{custom_lstm_forward.3} parent=0 // pred_check
    _
  $region11: #{custom_lstm_forward.3} parent=0 // pred_check_branch
    %13 = sbr.rel (0) target = $region13
  $region12: #{custom_lstm_forward.3} parent=0 // pred_region
    _
  $region13: #{custom_lstm_forward.3} parent=0 // pred_fallthru
    _
  %v14 = vld [vmem:[%s0] sm:$0xff]
  %v15 = vld [vmem:[%s1] sm:$0xff]
  %v16 = vld [vmem:[%s1 + $0x8] sm:$0xff]
  %v17 = vld [vmem:[%s1 + $0x10] sm:$0xff]
  %v18 = vld [vmem:[%s1 + $0x18] sm:$0xff]
  %v19 = vld [vmem:[%s2] sm:$0xf]
  %v21 = vlaneseq
  %v22 = vshrl.u32 %v21, 7
  %v23 = vsub.s32 0, %v22
  %v24 = vrot.slane %v19, %v23
  %v25 = vlaneseq
  %v26 = vshrl.u32 %v25, 7
  %v27 = vsub.s32 1, %v26
  %v28 = vrot.slane %v19, %v27
  %v29 = vlaneseq
  %v30 = vshrl.u32 %v29, 7
  %v31 = vsub.s32 2, %v30
  %v32 = vrot.slane %v19, %v31
  %v33 = vlaneseq
  %v34 = vshrl.u32 %v33, 7
  %v35 = vsub.s32 3, %v34
  %v36 = vrot.slane %v19, %v35
  %vm41 = vcmask 64512
  %v43 = vsel %vm41, %v14, 0
  %45 = vmatprep.subr.mxu0 0.0
  %46 = vmatpush1.msra.mxu0 0.0
  %47 = vmatprep.subr.mxu0 0.0
  %48 = vmatpush1.msra.mxu0 0.0
  %49 = vmatprep.subr.mxu0 0.0
  %50 = vmatpush1.msra.mxu0 0.0
  %51 = vmatprep.subr.mxu0 0.0
  %52 = vmatpush1.msra.mxu0 0.0
  %53 = vmatprep.subr.mxu0 0.0
  %54 = vmatpush1.msra.mxu0 0.0
  %55 = vmatprep.subr.mxu0 0.0
  %56 = vmatpush1.msra.mxu0 0.0
  %57 = vmatprep.subr.mxu0 0.0
  %58 = vmatpush1.msra.mxu0 0.0
  %59 = vmatprep.subr.mxu0 0.0
  %60 = vmatpush1.msra.mxu0 0.0
  %61 = vmatprep.subr.mxu0 0.0
  %62 = vmatpush1.msra.mxu0 0.0
  %63 = vmatprep.subr.mxu0 0.0
  %64 = vmatpush1.msra.mxu0 0.0
  %65 = vmatprep.subr.mxu0 0.0
  %66 = vmatpush1.msra.mxu0 0.0
  %67 = vmatprep.subr.mxu0 0.0
  %68 = vmatpush1.msra.mxu0 0.0
  %69 = vmatprep.subr.mxu0 0.0
  %70 = vmatpush1.msra.mxu0 0.0
  %71 = vmatprep.subr.mxu0 0.0
  %72 = vmatpush1.msra.mxu0 0.0
  %73 = vmatprep.subr.mxu0 0.0
  %74 = vmatpush1.msra.mxu0 0.0
  %75 = vmatprep.subr.mxu0 %v16
  %76 = vmatpush1.msra.mxu0 %v15
  %77 = vmatprep.subr.mxu0 0.0
  %78 = vmatpush2.msra.mxu0 0.0
  %79 = vmatprep.subr.mxu0 0.0
  %80 = vmatpush2.msra.mxu0 0.0
  %81 = vmatprep.subr.mxu0 0.0
  %82 = vmatpush2.msra.mxu0 0.0
  %83 = vmatprep.subr.mxu0 0.0
  %84 = vmatpush2.msra.mxu0 0.0
  %85 = vmatprep.subr.mxu0 0.0
  %86 = vmatpush2.msra.mxu0 0.0
  %87 = vmatprep.subr.mxu0 0.0
  %88 = vmatpush2.msra.mxu0 0.0
  %89 = vmatprep.subr.mxu0 0.0
  %90 = vmatpush2.msra.mxu0 0.0
  %91 = vmatprep.subr.mxu0 0.0
  %92 = vmatpush2.msra.mxu0 0.0
  %93 = vmatprep.subr.mxu0 0.0
  %94 = vmatpush2.msra.mxu0 0.0
  %95 = vmatprep.subr.mxu0 0.0
  %96 = vmatpush2.msra.mxu0 0.0
  %97 = vmatprep.subr.mxu0 0.0
  %98 = vmatpush2.msra.mxu0 0.0
  %99 = vmatprep.subr.mxu0 0.0
  %100 = vmatpush2.msra.mxu0 0.0
  %101 = vmatprep.subr.mxu0 0.0
  %102 = vmatpush2.msra.mxu0 0.0
  %103 = vmatprep.subr.mxu0 0.0
  %104 = vmatpush2.msra.mxu0 0.0
  %105 = vmatprep.subr.mxu0 0.0
  %106 = vmatpush2.msra.mxu0 0.0
  %107 = vmatprep.subr.mxu0 0.0
  %108 = vmatpush2.msra.mxu0 0.0
  %109 = vmatprep.mubr.f32.mxu0 0.0
  %110 = vmatmul.mubr.f32.gmra.mxu0 %v43
  %v111 = vpop.f32.mrf.mxu0
  %v112 = vadd.f32 %v24, %v111
  %v113 = vpop.f32.mrf.mxu0
  %v114 = vadd.f32 %v28, %v113
  %115 = vdwg.mxu0
  %116 = vmatprep.subr.mxu0 0.0
  %117 = vmatpush1.msra.mxu0 0.0
  %118 = vmatprep.subr.mxu0 0.0
  %119 = vmatpush1.msra.mxu0 0.0
  %120 = vmatprep.subr.mxu0 0.0
  %121 = vmatpush1.msra.mxu0 0.0
  %122 = vmatprep.subr.mxu0 0.0
  %123 = vmatpush1.msra.mxu0 0.0
  %124 = vmatprep.subr.mxu0 0.0
  %125 = vmatpush1.msra.mxu0 0.0
  %126 = vmatprep.subr.mxu0 0.0
  %127 = vmatpush1.msra.mxu0 0.0
  %128 = vmatprep.subr.mxu0 0.0
  %129 = vmatpush1.msra.mxu0 0.0
  %130 = vmatprep.subr.mxu0 0.0
  %131 = vmatpush1.msra.mxu0 0.0
  %132 = vmatprep.subr.mxu0 0.0
  %133 = vmatpush1.msra.mxu0 0.0
  %134 = vmatprep.subr.mxu0 0.0
  %135 = vmatpush1.msra.mxu0 0.0
  %136 = vmatprep.subr.mxu0 0.0
  %137 = vmatpush1.msra.mxu0 0.0
  %138 = vmatprep.subr.mxu0 0.0
  %139 = vmatpush1.msra.mxu0 0.0
  %140 = vmatprep.subr.mxu0 0.0
  %141 = vmatpush1.msra.mxu0 0.0
  %142 = vmatprep.subr.mxu0 0.0
  %143 = vmatpush1.msra.mxu0 0.0
  %144 = vmatprep.subr.mxu0 0.0
  %145 = vmatpush1.msra.mxu0 0.0
  %146 = vmatprep.subr.mxu0 %v18
  %147 = vmatpush1.msra.mxu0 %v17
  %148 = vmatprep.subr.mxu0 0.0
  %149 = vmatpush2.msra.mxu0 0.0
  %150 = vmatprep.subr.mxu0 0.0
  %151 = vmatpush2.msra.mxu0 0.0
  %152 = vmatprep.subr.mxu0 0.0
  %153 = vmatpush2.msra.mxu0 0.0
  %154 = vmatprep.subr.mxu0 0.0
  %155 = vmatpush2.msra.mxu0 0.0
  %156 = vmatprep.subr.mxu0 0.0
  %157 = vmatpush2.msra.mxu0 0.0
  %158 = vmatprep.subr.mxu0 0.0
  %159 = vmatpush2.msra.mxu0 0.0
  %160 = vmatprep.subr.mxu0 0.0
  %161 = vmatpush2.msra.mxu0 0.0
  %162 = vmatprep.subr.mxu0 0.0
  %163 = vmatpush2.msra.mxu0 0.0
  %164 = vmatprep.subr.mxu0 0.0
  %165 = vmatpush2.msra.mxu0 0.0
  %166 = vmatprep.subr.mxu0 0.0
  %167 = vmatpush2.msra.mxu0 0.0
  %168 = vmatprep.subr.mxu0 0.0
  %169 = vmatpush2.msra.mxu0 0.0
  %170 = vmatprep.subr.mxu0 0.0
  %171 = vmatpush2.msra.mxu0 0.0
  %172 = vmatprep.subr.mxu0 0.0
  %173 = vmatpush2.msra.mxu0 0.0
  %174 = vmatprep.subr.mxu0 0.0
  %175 = vmatpush2.msra.mxu0 0.0
  %176 = vmatprep.subr.mxu0 0.0
  %177 = vmatpush2.msra.mxu0 0.0
  %178 = vmatprep.subr.mxu0 0.0
  %179 = vmatpush2.msra.mxu0 0.0
  %180 = vmatprep.mubr.f32.mxu0 0.0
  %181 = vmatmul.mubr.f32.gmra.mxu0 %v43
  %v182 = vpop.f32.mrf.mxu0
  %v183 = vadd.f32 %v32, %v182
  %v184 = vpop.f32.mrf.mxu0
  %v185 = vadd.f32 %v36, %v184
  %186 = vdwg.mxu0
  %187 = vst [vmem:[%s3] sm:$0xff] %v112
  %188 = vst [vmem:[%s3 + $0x8] sm:$0xff] %v114
  %189 = vst [vmem:[%s3 + $0x10] sm:$0xff] %v183
  %190 = vst [vmem:[%s3 + $0x18] sm:$0xff] %v185
  // Predicated region
  $region14: #{custom_lstm_forward.3} parent=0 // pred_check
    _
  $region15: #{custom_lstm_forward.3} parent=0 // pred_check_branch
    %192 = sbr.rel (0) target = $region17
  $region16: #{custom_lstm_forward.3} parent=0 // pred_region
    _
  $region17: #{custom_lstm_forward.3} parent=0 // pred_fallthru
    _
  // Predicated region
  $region18: #{custom_lstm_forward.3} parent=0 // pred_check
    _
  $region19: #{custom_lstm_forward.3} parent=0 // pred_check_branch
    %194 = sbr.rel (0) target = $region21
  $region20: #{custom_lstm_forward.3} parent=0 // pred_region
    _
  $region21: #{custom_lstm_forward.3} parent=0 // pred_fallthru
    _

// kernel: custom_lstm_forward.4
$region0: #{custom_lstm_forward.4}
  #allocation0 [shape = 'u32[]', space=smem, size = 0x4, offset = 0x4, fixed_abs, tag = 'smem constant byte address 0x4 - core index']
  #allocation1 [shape = 'u32[144,128]{1,0:T(1,128)}', space=vmem, size = 0x12000, scoped, tag = 'internal scratch']
  #allocation2 [shape = 'f32[8,128]{1,0:T(8,128)}', space=vmem, size = 0x1000, scoped, tag = 'scratch operand']
  #allocation3 [shape = 'f32[8,128]{1,0:T(8,128)}', space=vmem, size = 0x1000, scoped, tag = 'scratch operand']
  #allocation4 [shape = 'f32[8,8,512]{2,1,0:T(8,128)}', space=vmem, size = 0x20000, scoped, tag = 'scratch operand']
  %s0 = inlined_call_operand.vmem [shape: bf16[8,8,128], index: 0, kind: input, shape index: {}]
  %s1 = inlined_call_operand.hbm [shape: bf16[128,512], index: 1, kind: input, shape index: {}]
  %s2 = inlined_call_operand.hbm [shape: bf16[128,512], index: 2, kind: input, shape index: {}]
  %s3 = inlined_call_operand.vmem [shape: f32[1,512], index: 3, kind: input, shape index: {}]
  %s4 = inlined_call_operand.vmem [shape: f32[8,128], index: 4, kind: input, shape index: {}]
  %s5 = inlined_call_operand.vmem [shape: f32[8,128], index: 5, kind: input, shape index: {}]
  %s6 = inlined_call_operand.vmem [shape: bf16[8,8,128], index: 6, kind: output, shape index: {}]
  %s7 = sld [smem:[#allocation0]]
  $region46: #{custom_lstm_forward.4} parent=0
    _
  %s9 = ssub.s32 1, %s7
  %s10 = scalar_select 0, %s9, %s7
  $region1: #{custom_lstm_forward.4} parent=0
    #allocation5 [shape = 'u8[131072]{0}', space=vmem, size = 0x20000, scoped, tag = 'input window, operand 1, single buffered']
    #allocation6 [shape = 's32[1]{0}', space=sflag, size = 0x4, scoped, tag = 'scoped memory for custom_lstm_forward.4']
    #allocation7 [shape = 'u8[131072]{0}', space=vmem, size = 0x20000, scoped, tag = 'input window, operand 2, single buffered']
    #allocation8 [shape = 's32[1]{0}', space=sflag, size = 0x4, scoped, tag = 'scoped memory for custom_lstm_forward.4']
    %11 = vsyncpa [#allocation6], 0
    %12 = vsyncpa [#allocation8], 0
    // Predicated region
    $region2: #{custom_lstm_forward.4} parent=1 // pred_check
      _
    $region3: #{custom_lstm_forward.4} parent=1 // pred_check_branch
      %14 = sbr.rel (0) target = $region5
    $region4: #{custom_lstm_forward.4} parent=1 // pred_region
      _
    $region5: #{custom_lstm_forward.4} parent=1 // pred_fallthru
      _
    // Predicated region
    $region6: #{custom_lstm_forward.4} parent=1 // pred_check
      _
    $region7: #{custom_lstm_forward.4} parent=1 // pred_check_branch
      %16 = sbr.rel (0) target = $region9
    $region8: #{custom_lstm_forward.4} parent=1 // pred_region
      %s18 = ssub.s32 4096, 4096
      %19 = vsyncadd [#allocation6], %s18
      %s20 = sshll.u32 [#allocation5], 4
      %s21 = int_to_ptr.vmem [resolvable:$true] %s20
      %26 = dma.hbm_to_vmem [thread:$0]  %s1, 4096, %s21, [#allocation6], 256, 256, 16
    $region9: #{custom_lstm_forward.4} parent=1 // pred_fallthru
      _
    // Predicated region
    $region10: #{custom_lstm_forward.4} parent=1 // pred_check
      _
    $region11: #{custom_lstm_forward.4} parent=1 // pred_check_branch
      %28 = sbr.rel (0) target = $region13
    $region12: #{custom_lstm_forward.4} parent=1 // pred_region
      %s30 = ssub.s32 4096, 4096
      %31 = vsyncadd [#allocation8], %s30
      %s32 = sshll.u32 [#allocation7], 4
      %s33 = int_to_ptr.vmem [resolvable:$true] %s32
      %38 = dma.hbm_to_vmem [thread:$0]  %s2, 4096, %s33, [#allocation8], 256, 256, 16
    $region13: #{custom_lstm_forward.4} parent=1 // pred_fallthru
      _
    // Predicated region
    $region14: #{custom_lstm_forward.4} parent=1 // pred_check
      _
    $region15: #{custom_lstm_forward.4} parent=1 // pred_check_branch
      %40 = sbr.rel (0) target = $region17
    $region16: #{custom_lstm_forward.4} parent=1 // pred_region
      _
    $region17: #{custom_lstm_forward.4} parent=1 // pred_fallthru
      _
    // Predicated region
    $region18: #{custom_lstm_forward.4} parent=1 // pred_check
      _
    $region19: #{custom_lstm_forward.4} parent=1 // pred_check_branch
      %42 = sbr.rel (0) target = $region21
    $region20: #{custom_lstm_forward.4} parent=1 // pred_region
      _
    $region21: #{custom_lstm_forward.4} parent=1 // pred_fallthru
      _
    // Predicated region
    $region22: #{custom_lstm_forward.4} parent=1 // pred_check
      _
    $region23: #{custom_lstm_forward.4} parent=1 // pred_check_branch
      %44 = sbr.rel (0) target = $region25
    $region24: #{custom_lstm_forward.4} parent=1 // pred_region
      _
    $region25: #{custom_lstm_forward.4} parent=1 // pred_fallthru
      _
    // Predicated region
    $region26: #{custom_lstm_forward.4} parent=1 // pred_check
      _
    $region27: #{custom_lstm_forward.4} parent=1 // pred_check_branch
      %46 = sbr.rel (0) target = $region29
    $region28: #{custom_lstm_forward.4} parent=1 // pred_region
      %47 = dma.done [#allocation6], 4096
    $region29: #{custom_lstm_forward.4} parent=1 // pred_fallthru
      _
    // Predicated region
    $region30: #{custom_lstm_forward.4} parent=1 // pred_check
      _
    $region31: #{custom_lstm_forward.4} parent=1 // pred_check_branch
      %49 = sbr.rel (0) target = $region33
    $region32: #{custom_lstm_forward.4} parent=1 // pred_region
      %50 = dma.done [#allocation8], 4096
    $region33: #{custom_lstm_forward.4} parent=1 // pred_fallthru
      _
    %p52 = scmp.eq.s32.totalorder 0, 0
    // Predicated region
    $region34: #{custom_lstm_forward.4} parent=1 // pred_check
      %p53 = pneg %p52
    $region35: #{custom_lstm_forward.4} parent=1 // pred_check_branch
      %55 = sbr.rel (%p53) target = $region37
    $region36: #{custom_lstm_forward.4} parent=1 // pred_region
      %v56 = vld [vmem:[%s4] sm:$0xff]
      %57 = vst [vmem:[#allocation2] sm:$0xff] %v56
      %v58 = vld [vmem:[%s5] sm:$0xff]
      %59 = vst [vmem:[#allocation3] sm:$0xff] %v58
    $region37: #{custom_lstm_forward.4} parent=1 // pred_fallthru
      _
    %v60 = vld [vmem:[%s0] sm:$0xf]
    %v61 = vld [vmem:[%s0 + $0x4] sm:$0xf]
    %v62 = vld [vmem:[%s0 + $0x8] sm:$0xf]
    %v63 = vld [vmem:[%s0 + $0xc] sm:$0xf]
    %v64 = vld [vmem:[%s0 + $0x10] sm:$0xf]
    %v65 = vld [vmem:[%s0 + $0x14] sm:$0xf]
    %v66 = vld [vmem:[%s0 + $0x18] sm:$0xf]
    %v67 = vld [vmem:[%s0 + $0x1c] sm:$0xf]
    %v68 = vld [vmem:[#allocation5] sm:$0xff]
    %v69 = vld [vmem:[#allocation5 + $0x8] sm:$0xff]
    %v70 = vld [vmem:[#allocation5 + $0x10] sm:$0xff]
    %v71 = vld [vmem:[#allocation5 + $0x18] sm:$0xff]
    %v72 = vld [vmem:[#allocation5 + $0x20] sm:$0xff]
    %v73 = vld [vmem:[#allocation5 + $0x28] sm:$0xff]
    %v74 = vld [vmem:[#allocation5 + $0x30] sm:$0xff]
    %v75 = vld [vmem:[#allocation5 + $0x38] sm:$0xff]
    %v76 = vld [vmem:[#allocation5 + $0x40] sm:$0xff]
    %v77 = vld [vmem:[#allocation5 + $0x48] sm:$0xff]
    %v78 = vld [vmem:[#allocation5 + $0x50] sm:$0xff]
    %v79 = vld [vmem:[#allocation5 + $0x58] sm:$0xff]
    %v80 = vld [vmem:[#allocation5 + $0x60] sm:$0xff]
    %v81 = vld [vmem:[#allocation5 + $0x68] sm:$0xff]
    %v82 = vld [vmem:[#allocation5 + $0x70] sm:$0xff]
    %v83 = vld [vmem:[#allocation5 + $0x78] sm:$0xff]
    %v84 = vld [vmem:[#allocation5 + $0x80] sm:$0xff]
    %v85 = vld [vmem:[#allocation5 + $0x88] sm:$0xff]
    %v86 = vld [vmem:[#allocation5 + $0x90] sm:$0xff]
    %v87 = vld [vmem:[#allocation5 + $0x98] sm:$0xff]
    %v88 = vld [vmem:[#allocation5 + $0xa0] sm:$0xff]
    %v89 = vld [vmem:[#allocation5 + $0xa8] sm:$0xff]
    %v90 = vld [vmem:[#allocation5 + $0xb0] sm:$0xff]
    %v91 = vld [vmem:[#allocation5 + $0xb8] sm:$0xff]
    %v92 = vld [vmem:[#allocation5 + $0xc0] sm:$0xff]
    %v93 = vld [vmem:[#allocation5 + $0xc8] sm:$0xff]
    %v94 = vld [vmem:[#allocation5 + $0xd0] sm:$0xff]
    %v95 = vld [vmem:[#allocation5 + $0xd8] sm:$0xff]
    %v96 = vld [vmem:[#allocation5 + $0xe0] sm:$0xff]
    %v97 = vld [vmem:[#allocation5 + $0xe8] sm:$0xff]
    %v98 = vld [vmem:[#allocation5 + $0xf0] sm:$0xff]
    %v99 = vld [vmem:[#allocation5 + $0xf8] sm:$0xff]
    %v100 = vld [vmem:[%s3] sm:$0xf]
    %v102 = vlaneseq
    %v103 = vshrl.u32 %v102, 7
    %v104 = vsub.s32 0, %v103
    %v105 = vrot.slane %v100, %v104
    %v106 = vlaneseq
    %v107 = vshrl.u32 %v106, 7
    %v108 = vsub.s32 1, %v107
    %v109 = vrot.slane %v100, %v108
    %v110 = vlaneseq
    %v111 = vshrl.u32 %v110, 7
    %v112 = vsub.s32 2, %v111
    %v113 = vrot.slane %v100, %v112
    %v114 = vlaneseq
    %v115 = vshrl.u32 %v114, 7
    %v116 = vsub.s32 3, %v115
    %v117 = vrot.slane %v100, %v116
    %v130 = vunpack.c.l.b16 %v60
    %v131 = vunpack.c.l.b16 %v61
    %v132 = vunpack.c.l.b16 %v62
    %v133 = vunpack.c.l.b16 %v63
    %v134 = vunpack.c.l.b16 %v64
    %v135 = vunpack.c.l.b16 %v65
    %v136 = vunpack.c.l.b16 %v66
    %v137 = vunpack.c.l.b16 %v67
    %v138 = vpack.c.b16 %v131, %v130
    %v139 = vpack.c.b16 %v133, %v132
    %v140 = vpack.c.b16 %v135, %v134
    %v141 = vpack.c.b16 %v137, %v136
    %v178 = vunpack.c.l.b16 %v68
    %v179 = vunpack.c.h.b16 %v68
    %v180 = vunpack.c.l.b16 %v69
    %v181 = vunpack.c.h.b16 %v69
    %v182 = vunpack.c.l.b16 %v70
    %v183 = vunpack.c.h.b16 %v70
    %v184 = vunpack.c.l.b16 %v71
    %v185 = vunpack.c.h.b16 %v71
    %v186 = vunpack.c.l.b16 %v72
    %v187 = vunpack.c.h.b16 %v72
    %v188 = vunpack.c.l.b16 %v73
    %v189 = vunpack.c.h.b16 %v73
    %v190 = vunpack.c.l.b16 %v74
    %v191 = vunpack.c.h.b16 %v74
    %v192 = vunpack.c.l.b16 %v75
    %v193 = vunpack.c.h.b16 %v75
    %v194 = vunpack.c.l.b16 %v76
    %v195 = vunpack.c.h.b16 %v76
    %v196 = vunpack.c.l.b16 %v77
    %v197 = vunpack.c.h.b16 %v77
    %v198 = vunpack.c.l.b16 %v78
    %v199 = vunpack.c.h.b16 %v78
    %v200 = vunpack.c.l.b16 %v79
    %v201 = vunpack.c.h.b16 %v79
    %v202 = vunpack.c.l.b16 %v80
    %v203 = vunpack.c.h.b16 %v80
    %v204 = vunpack.c.l.b16 %v81
    %v205 = vunpack.c.h.b16 %v81
    %v206 = vunpack.c.l.b16 %v82
    %v207 = vunpack.c.h.b16 %v82
    %v208 = vunpack.c.l.b16 %v83
    %v209 = vunpack.c.h.b16 %v83
    %v210 = vunpack.c.l.b16 %v84
    %v211 = vunpack.c.h.b16 %v84
    %v212 = vunpack.c.l.b16 %v85
    %v213 = vunpack.c.h.b16 %v85
    %v214 = vunpack.c.l.b16 %v86
    %v215 = vunpack.c.h.b16 %v86
    %v216 = vunpack.c.l.b16 %v87
    %v217 = vunpack.c.h.b16 %v87
    %v218 = vunpack.c.l.b16 %v88
    %v219 = vunpack.c.h.b16 %v88
    %v220 = vunpack.c.l.b16 %v89
    %v221 = vunpack.c.h.b16 %v89
    %v222 = vunpack.c.l.b16 %v90
    %v223 = vunpack.c.h.b16 %v90
    %v224 = vunpack.c.l.b16 %v91
    %v225 = vunpack.c.h.b16 %v91
    %v226 = vunpack.c.l.b16 %v92
    %v227 = vunpack.c.h.b16 %v92
    %v228 = vunpack.c.l.b16 %v93
    %v229 = vunpack.c.h.b16 %v93
    %v230 = vunpack.c.l.b16 %v94
    %v231 = vunpack.c.h.b16 %v94
    %v232 = vunpack.c.l.b16 %v95
    %v233 = vunpack.c.h.b16 %v95
    %v234 = vunpack.c.l.b16 %v96
    %v235 = vunpack.c.h.b16 %v96
    %v236 = vunpack.c.l.b16 %v97
    %v237 = vunpack.c.h.b16 %v97
    %v238 = vunpack.c.l.b16 %v98
    %v239 = vunpack.c.h.b16 %v98
    %v240 = vunpack.c.l.b16 %v99
    %v241 = vunpack.c.h.b16 %v99
    %v242 = vpack.c.b16 %v182, %v178
    %v243 = vpack.c.b16 %v183, %v179
    %v244 = vpack.c.b16 %v184, %v180
    %v245 = vpack.c.b16 %v185, %v181
    %v246 = vpack.c.b16 %v190, %v186
    %v247 = vpack.c.b16 %v191, %v187
    %v248 = vpack.c.b16 %v192, %v188
    %v249 = vpack.c.b16 %v193, %v189
    %v250 = vpack.c.b16 %v198, %v194
    %v251 = vpack.c.b16 %v199, %v195
    %v252 = vpack.c.b16 %v200, %v196
    %v253 = vpack.c.b16 %v201, %v197
    %v254 = vpack.c.b16 %v206, %v202
    %v255 = vpack.c.b16 %v207, %v203
    %v256 = vpack.c.b16 %v208, %v204
    %v257 = vpack.c.b16 %v209, %v205
    %v258 = vpack.c.b16 %v214, %v210
    %v259 = vpack.c.b16 %v215, %v211
    %v260 = vpack.c.b16 %v216, %v212
    %v261 = vpack.c.b16 %v217, %v213
    %v262 = vpack.c.b16 %v222, %v218
    %v263 = vpack.c.b16 %v223, %v219
    %v264 = vpack.c.b16 %v224, %v220
    %v265 = vpack.c.b16 %v225, %v221
    %v266 = vpack.c.b16 %v230, %v226
    %v267 = vpack.c.b16 %v231, %v227
    %v268 = vpack.c.b16 %v232, %v228
    %v269 = vpack.c.b16 %v233, %v229
    %v270 = vpack.c.b16 %v238, %v234
    %v271 = vpack.c.b16 %v239, %v235
    %v272 = vpack.c.b16 %v240, %v236
    %v273 = vpack.c.b16 %v241, %v237
    %306 = vmatprep.subr.bf16.mxu0 %v271
    %307 = vmatpush1.bf16.msra.mxu0 %v270
    %308 = vmatprep.subr.bf16.mxu0 %v267
    %309 = vmatpush1.bf16.msra.mxu0 %v266
    %310 = vmatprep.subr.bf16.mxu0 %v263
    %311 = vmatpush1.bf16.msra.mxu0 %v262
    %312 = vmatprep.subr.bf16.mxu0 %v259
    %313 = vmatpush1.bf16.msra.mxu0 %v258
    %314 = vmatprep.subr.bf16.mxu0 %v255
    %315 = vmatpush1.bf16.msra.mxu0 %v254
    %316 = vmatprep.subr.bf16.mxu0 %v251
    %317 = vmatpush1.bf16.msra.mxu0 %v250
    %318 = vmatprep.subr.bf16.mxu0 %v247
    %319 = vmatpush1.bf16.msra.mxu0 %v246
    %320 = vmatprep.subr.bf16.mxu0 %v243
    %321 = vmatpush1.bf16.msra.mxu0 %v242
    %322 = vmatprep.subr.bf16.mxu0 0
    %323 = vmatpush2.bf16.msra.mxu0 0
    %324 = vmatprep.subr.bf16.mxu0 0
    %325 = vmatpush2.bf16.msra.mxu0 0
    %326 = vmatprep.subr.bf16.mxu0 0
    %327 = vmatpush2.bf16.msra.mxu0 0
    %328 = vmatprep.subr.bf16.mxu0 0
    %329 = vmatpush2.bf16.msra.mxu0 0
    %330 = vmatprep.subr.bf16.mxu0 0
    %331 = vmatpush2.bf16.msra.mxu0 0
    %332 = vmatprep.subr.bf16.mxu0 0
    %333 = vmatpush2.bf16.msra.mxu0 0
    %334 = vmatprep.subr.bf16.mxu0 0
    %335 = vmatpush2.bf16.msra.mxu0 0
    %336 = vmatprep.subr.bf16.mxu0 0
    %337 = vmatpush2.bf16.msra.mxu0 0
    %338 = vmatprep.mubr.bf16.mxu0 0
    %339 = vmatmul.mubr.bf16.gmra.mxu0 %v138
    %v340 = vpop.f32.mrf.mxu0
    %v341 = vadd.f32 %v105, %v340
    %v342 = vpop.f32.mrf.mxu0
    %v343 = vadd.f32 %v109, %v342
    %v344 = vpop.f32.mrf.mxu0
    %v345 = vadd.f32 %v105, %v344
    %v346 = vpop.f32.mrf.mxu0
    %v347 = vadd.f32 %v109, %v346
    %348 = vmatprep.mubr.bf16.mxu0 0
    %349 = vmatmul.mubr.bf16.gmra.mxu0 %v139
    %v350 = vpop.f32.mrf.mxu0
    %v351 = vadd.f32 %v105, %v350
    %v352 = vpop.f32.mrf.mxu0
    %v353 = vadd.f32 %v109, %v352
    %v354 = vpop.f32.mrf.mxu0
    %v355 = vadd.f32 %v105, %v354
    %v356 = vpop.f32.mrf.mxu0
    %v357 = vadd.f32 %v109, %v356
    %358 = vmatprep.mubr.bf16.mxu0 0
    %359 = vmatmul.mubr.bf16.gmra.mxu0 %v140
    %v360 = vpop.f32.mrf.mxu0
    %v361 = vadd.f32 %v105, %v360
    %v362 = vpop.f32.mrf.mxu0
    %v363 = vadd.f32 %v109, %v362
    %v364 = vpop.f32.mrf.mxu0
    %v365 = vadd.f32 %v105, %v364
    %v366 = vpop.f32.mrf.mxu0
    %v367 = vadd.f32 %v109, %v366
    %368 = vmatprep.mubr.bf16.mxu0 0
    %369 = vmatmul.mubr.bf16.gmra.mxu0 %v141
    %v370 = vpop.f32.mrf.mxu0
    %v371 = vadd.f32 %v105, %v370
    %v372 = vpop.f32.mrf.mxu0
    %v373 = vadd.f32 %v109, %v372
    %v374 = vpop.f32.mrf.mxu0
    %v375 = vadd.f32 %v105, %v374
    %v376 = vpop.f32.mrf.mxu0
    %v377 = vadd.f32 %v109, %v376
    %378 = vdwg.mxu0
    %379 = vmatprep.subr.bf16.mxu0 %v273
    %380 = vmatpush1.bf16.msra.mxu0 %v272
    %381 = vmatprep.subr.bf16.mxu0 %v269
    %382 = vmatpush1.bf16.msra.mxu0 %v268
    %383 = vmatprep.subr.bf16.mxu0 %v265
    %384 = vmatpush1.bf16.msra.mxu0 %v264
    %385 = vmatprep.subr.bf16.mxu0 %v261
    %386 = vmatpush1.bf16.msra.mxu0 %v260
    %387 = vmatprep.subr.bf16.mxu0 %v257
    %388 = vmatpush1.bf16.msra.mxu0 %v256
    %389 = vmatprep.subr.bf16.mxu0 %v253
    %390 = vmatpush1.bf16.msra.mxu0 %v252
    %391 = vmatprep.subr.bf16.mxu0 %v249
    %392 = vmatpush1.bf16.msra.mxu0 %v248
    %393 = vmatprep.subr.bf16.mxu0 %v245
    %394 = vmatpush1.bf16.msra.mxu0 %v244
    %395 = vmatprep.subr.bf16.mxu0 0
    %396 = vmatpush2.bf16.msra.mxu0 0
    %397 = vmatprep.subr.bf16.mxu0 0
    %398 = vmatpush2.bf16.msra.mxu0 0
    %399 = vmatprep.subr.bf16.mxu0 0
    %400 = vmatpush2.bf16.msra.mxu0 0
    %401 = vmatprep.subr.bf16.mxu0 0
    %402 = vmatpush2.bf16.msra.mxu0 0
    %403 = vmatprep.subr.bf16.mxu0 0
    %404 = vmatpush2.bf16.msra.mxu0 0
    %405 = vmatprep.subr.bf16.mxu0 0
    %406 = vmatpush2.bf16.msra.mxu0 0
    %407 = vmatprep.subr.bf16.mxu0 0
    %408 = vmatpush2.bf16.msra.mxu0 0
    %409 = vmatprep.subr.bf16.mxu0 0
    %410 = vmatpush2.bf16.msra.mxu0 0
    %411 = vmatprep.mubr.bf16.mxu0 0
    %412 = vmatmul.mubr.bf16.gmra.mxu0 %v138
    %v413 = vpop.f32.mrf.mxu0
    %v414 = vadd.f32 %v113, %v413
    %v415 = vpop.f32.mrf.mxu0
    %v416 = vadd.f32 %v117, %v415
    %v417 = vpop.f32.mrf.mxu0
    %v418 = vadd.f32 %v113, %v417
    %v419 = vpop.f32.mrf.mxu0
    %v420 = vadd.f32 %v117, %v419
    %421 = vmatprep.mubr.bf16.mxu0 0
    %422 = vmatmul.mubr.bf16.gmra.mxu0 %v139
    %v423 = vpop.f32.mrf.mxu0
    %v424 = vadd.f32 %v113, %v423
    %v425 = vpop.f32.mrf.mxu0
    %v426 = vadd.f32 %v117, %v425
    %v427 = vpop.f32.mrf.mxu0
    %v428 = vadd.f32 %v113, %v427
    %v429 = vpop.f32.mrf.mxu0
    %v430 = vadd.f32 %v117, %v429
    %431 = vmatprep.mubr.bf16.mxu0 0
    %432 = vmatmul.mubr.bf16.gmra.mxu0 %v140
    %v433 = vpop.f32.mrf.mxu0
    %v434 = vadd.f32 %v113, %v433
    %v435 = vpop.f32.mrf.mxu0
    %v436 = vadd.f32 %v117, %v435
    %v437 = vpop.f32.mrf.mxu0
    %v438 = vadd.f32 %v113, %v437
    %v439 = vpop.f32.mrf.mxu0
    %v440 = vadd.f32 %v117, %v439
    %441 = vmatprep.mubr.bf16.mxu0 0
    %442 = vmatmul.mubr.bf16.gmra.mxu0 %v141
    %v443 = vpop.f32.mrf.mxu0
    %v444 = vadd.f32 %v113, %v443
    %v445 = vpop.f32.mrf.mxu0
    %v446 = vadd.f32 %v117, %v445
    %v447 = vpop.f32.mrf.mxu0
    %v448 = vadd.f32 %v113, %v447
    %v449 = vpop.f32.mrf.mxu0
    %v450 = vadd.f32 %v117, %v449
    %451 = vdwg.mxu0
    %452 = vst [vmem:[#allocation4] sm:$0xff] %v341
    %453 = vst [vmem:[#allocation4 + $0x8] sm:$0xff] %v343
    %454 = vst [vmem:[#allocation4 + $0x10] sm:$0xff] %v414
    %455 = vst [vmem:[#allocation4 + $0x18] sm:$0xff] %v416
    %456 = vst [vmem:[#allocation4 + $0x20] sm:$0xff] %v345
    %457 = vst [vmem:[#allocation4 + $0x28] sm:$0xff] %v347
    %458 = vst [vmem:[#allocation4 + $0x30] sm:$0xff] %v418
    %459 = vst [vmem:[#allocation4 + $0x38] sm:$0xff] %v420
    %460 = vst [vmem:[#allocation4 + $0x40] sm:$0xff] %v351
    %461 = vst [vmem:[#allocation4 + $0x48] sm:$0xff] %v353
    %462 = vst [vmem:[#allocation4 + $0x50] sm:$0xff] %v424
    %463 = vst [vmem:[#allocation4 + $0x58] sm:$0xff] %v426
    %464 = vst [vmem:[#allocation4 + $0x60] sm:$0xff] %v355
    %465 = vst [vmem:[#allocation4 + $0x68] sm:$0xff] %v357
    %466 = vst [vmem:[#allocation4 + $0x70] sm:$0xff] %v428
    %467 = vst [vmem:[#allocation4 + $0x78] sm:$0xff] %v430
    %468 = vst [vmem:[#allocation4 + $0x80] sm:$0xff] %v361
    %469 = vst [vmem:[#allocation4 + $0x88] sm:$0xff] %v363
    %470 = vst [vmem:[#allocation4 + $0x90] sm:$0xff] %v434
    %471 = vst [vmem:[#allocation4 + $0x98] sm:$0xff] %v436
    %472 = vst [vmem:[#allocation4 + $0xa0] sm:$0xff] %v365
    %473 = vst [vmem:[#allocation4 + $0xa8] sm:$0xff] %v367
    %474 = vst [vmem:[#allocation4 + $0xb0] sm:$0xff] %v438
    %475 = vst [vmem:[#allocation4 + $0xb8] sm:$0xff] %v440
    %476 = vst [vmem:[#allocation4 + $0xc0] sm:$0xff] %v371
    %477 = vst [vmem:[#allocation4 + $0xc8] sm:$0xff] %v373
    %478 = vst [vmem:[#allocation4 + $0xd0] sm:$0xff] %v444
    %479 = vst [vmem:[#allocation4 + $0xd8] sm:$0xff] %v446
    %480 = vst [vmem:[#allocation4 + $0xe0] sm:$0xff] %v375
    %481 = vst [vmem:[#allocation4 + $0xe8] sm:$0xff] %v377
    %482 = vst [vmem:[#allocation4 + $0xf0] sm:$0xff] %v448
    %483 = vst [vmem:[#allocation4 + $0xf8] sm:$0xff] %v450
    %v484 = vld [vmem:[#allocation2] sm:$0xff]
    %v485 = vld [vmem:[#allocation3] sm:$0xff]
    %v486 = vld [vmem:[#allocation4] sm:$0xff]
    %v487 = vld [vmem:[#allocation4 + $0x8] sm:$0xff]
    %v488 = vld [vmem:[#allocation4 + $0x10] sm:$0xff]
    %v489 = vld [vmem:[#allocation4 + $0x18] sm:$0xff]
    %v490 = vpack.c.bf16 %v484, %v484
    %v491 = vld [vmem:[#allocation7] sm:$0xff]
    %v492 = vld [vmem:[#allocation7 + $0x8] sm:$0xff]
    %v493 = vld [vmem:[#allocation7 + $0x10] sm:$0xff]
    %v494 = vld [vmem:[#allocation7 + $0x18] sm:$0xff]
    %v495 = vld [vmem:[#allocation7 + $0x20] sm:$0xff]
    %v496 = vld [vmem:[#allocation7 + $0x28] sm:$0xff]
    %v497 = vld [vmem:[#allocation7 + $0x30] sm:$0xff]
    %v498 = vld [vmem:[#allocation7 + $0x38] sm:$0xff]
    %v499 = vld [vmem:[#allocation7 + $0x40] sm:$0xff]
    %v500 = vld [vmem:[#allocation7 + $0x48] sm:$0xff]
    %v501 = vld [vmem:[#allocation7 + $0x50] sm:$0xff]
    %v502 = vld [vmem:[#allocation7 + $0x58] sm:$0xff]
    %v503 = vld [vmem:[#allocation7 + $0x60] sm:$0xff]
    %v504 = vld [vmem:[#allocation7 + $0x68] sm:$0xff]
    %v505 = vld [vmem:[#allocation7 + $0x70] sm:$0xff]
    %v506 = vld [vmem:[#allocation7 + $0x78] sm:$0xff]
    %v507 = vld [vmem:[#allocation7 + $0x80] sm:$0xff]
    %v508 = vld [vmem:[#allocation7 + $0x88] sm:$0xff]
    %v509 = vld [vmem:[#allocation7 + $0x90] sm:$0xff]
    %v510 = vld [vmem:[#allocation7 + $0x98] sm:$0xff]
    %v511 = vld [vmem:[#allocation7 + $0xa0] sm:$0xff]
    %v512 = vld [vmem:[#allocation7 + $0xa8] sm:$0xff]
    %v513 = vld [vmem:[#allocation7 + $0xb0] sm:$0xff]
    %v514 = vld [vmem:[#allocation7 + $0xb8] sm:$0xff]
    %v515 = vld [vmem:[#allocation7 + $0xc0] sm:$0xff]
    %v516 = vld [vmem:[#allocation7 + $0xc8] sm:$0xff]
    %v517 = vld [vmem:[#allocation7 + $0xd0] sm:$0xff]
    %v518 = vld [vmem:[#allocation7 + $0xd8] sm:$0xff]
    %v519 = vld [vmem:[#allocation7 + $0xe0] sm:$0xff]
    %v520 = vld [vmem:[#allocation7 + $0xe8] sm:$0xff]
    %v521 = vld [vmem:[#allocation7 + $0xf0] sm:$0xff]
    %v522 = vld [vmem:[#allocation7 + $0xf8] sm:$0xff]
    %v555 = vunpack.c.l.b16 %v491
    %v556 = vunpack.c.h.b16 %v491
    %v557 = vunpack.c.l.b16 %v492
    %v558 = vunpack.c.h.b16 %v492
    %v559 = vunpack.c.l.b16 %v493
    %v560 = vunpack.c.h.b16 %v493
    %v561 = vunpack.c.l.b16 %v494
    %v562 = vunpack.c.h.b16 %v494
    %v563 = vunpack.c.l.b16 %v495
    %v564 = vunpack.c.h.b16 %v495
    %v565 = vunpack.c.l.b16 %v496
    %v566 = vunpack.c.h.b16 %v496
    %v567 = vunpack.c.l.b16 %v497
    %v568 = vunpack.c.h.b16 %v497
    %v569 = vunpack.c.l.b16 %v498
    %v570 = vunpack.c.h.b16 %v498
    %v571 = vunpack.c.l.b16 %v499
    %v572 = vunpack.c.h.b16 %v499
    %v573 = vunpack.c.l.b16 %v500
    %v574 = vunpack.c.h.b16 %v500
    %v575 = vunpack.c.l.b16 %v501
    %v576 = vunpack.c.h.b16 %v501
    %v577 = vunpack.c.l.b16 %v502
    %v578 = vunpack.c.h.b16 %v502
    %v579 = vunpack.c.l.b16 %v503
    %v580 = vunpack.c.h.b16 %v503
    %v581 = vunpack.c.l.b16 %v504
    %v582 = vunpack.c.h.b16 %v504
    %v583 = vunpack.c.l.b16 %v505
    %v584 = vunpack.c.h.b16 %v505
    %v585 = vunpack.c.l.b16 %v506
    %v586 = vunpack.c.h.b16 %v506
    %v587 = vunpack.c.l.b16 %v507
    %v588 = vunpack.c.h.b16 %v507
    %v589 = vunpack.c.l.b16 %v508
    %v590 = vunpack.c.h.b16 %v508
    %v591 = vunpack.c.l.b16 %v509
    %v592 = vunpack.c.h.b16 %v509
    %v593 = vunpack.c.l.b16 %v510
    %v594 = vunpack.c.h.b16 %v510
    %v595 = vunpack.c.l.b16 %v511
    %v596 = vunpack.c.h.b16 %v511
    %v597 = vunpack.c.l.b16 %v512
    %v598 = vunpack.c.h.b16 %v512
    %v599 = vunpack.c.l.b16 %v513
    %v600 = vunpack.c.h.b16 %v513
    %v601 = vunpack.c.l.b16 %v514
    %v602 = vunpack.c.h.b16 %v514
    %v603 = vunpack.c.l.b16 %v515
    %v604 = vunpack.c.h.b16 %v515
    %v605 = vunpack.c.l.b16 %v516
    %v606 = vunpack.c.h.b16 %v516
    %v607 = vunpack.c.l.b16 %v517
    %v608 = vunpack.c.h.b16 %v517
    %v609 = vunpack.c.l.b16 %v518
    %v610 = vunpack.c.h.b16 %v518
    %v611 = vunpack.c.l.b16 %v519
    %v612 = vunpack.c.h.b16 %v519
    %v613 = vunpack.c.l.b16 %v520
    %v614 = vunpack.c.h.b16 %v520
    %v615 = vunpack.c.l.b16 %v521
    %v616 = vunpack.c.h.b16 %v521
    %v617 = vunpack.c.l.b16 %v522
    %v618 = vunpack.c.h.b16 %v522
    %v619 = vpack.c.b16 %v559, %v555
    %v620 = vpack.c.b16 %v560, %v556
    %v621 = vpack.c.b16 %v561, %v557
    %v622 = vpack.c.b16 %v562, %v558
    %v623 = vpack.c.b16 %v567, %v563
    %v624 = vpack.c.b16 %v568, %v564
    %v625 = vpack.c.b16 %v569, %v565
    %v626 = vpack.c.b16 %v570, %v566
    %v627 = vpack.c.b16 %v575, %v571
    %v628 = vpack.c.b16 %v576, %v572
    %v629 = vpack.c.b16 %v577, %v573
    %v630 = vpack.c.b16 %v578, %v574
    %v631 = vpack.c.b16 %v583, %v579
    %v632 = vpack.c.b16 %v584, %v580
    %v633 = vpack.c.b16 %v585, %v581
    %v634 = vpack.c.b16 %v586, %v582
    %v635 = vpack.c.b16 %v591, %v587
    %v636 = vpack.c.b16 %v592, %v588
    %v637 = vpack.c.b16 %v593, %v589
    %v638 = vpack.c.b16 %v594, %v590
    %v639 = vpack.c.b16 %v599, %v595
    %v640 = vpack.c.b16 %v600, %v596
    %v641 = vpack.c.b16 %v601, %v597
    %v642 = vpack.c.b16 %v602, %v598
    %v643 = vpack.c.b16 %v607, %v603
    %v644 = vpack.c.b16 %v608, %v604
    %v645 = vpack.c.b16 %v609, %v605
    %v646 = vpack.c.b16 %v610, %v606
    %v647 = vpack.c.b16 %v615, %v611
    %v648 = vpack.c.b16 %v616, %v612
    %v649 = vpack.c.b16 %v617, %v613
    %v650 = vpack.c.b16 %v618, %v614
    %683 = vmatprep.subr.bf16.mxu0 %v648
    %684 = vmatpush1.bf16.msra.mxu0 %v647
    %685 = vmatprep.subr.bf16.mxu0 %v644
    %686 = vmatpush1.bf16.msra.mxu0 %v643
    %687 = vmatprep.subr.bf16.mxu0 %v640
    %688 = vmatpush1.bf16.msra.mxu0 %v639
    %689 = vmatprep.subr.bf16.mxu0 %v636
    %690 = vmatpush1.bf16.msra.mxu0 %v635
    %691 = vmatprep.subr.bf16.mxu0 %v632
    %692 = vmatpush1.bf16.msra.mxu0 %v631
    %693 = vmatprep.subr.bf16.mxu0 %v628
    %694 = vmatpush1.bf16.msra.mxu0 %v627
    %695 = vmatprep.subr.bf16.mxu0 %v624
    %696 = vmatpush1.bf16.msra.mxu0 %v623
    %697 = vmatprep.subr.bf16.mxu0 %v620
    %698 = vmatpush1.bf16.msra.mxu0 %v619
    %699 = vmatprep.subr.bf16.mxu0 0
    %700 = vmatpush2.bf16.msra.mxu0 0
    %701 = vmatprep.subr.bf16.mxu0 0
    %702 = vmatpush2.bf16.msra.mxu0 0
    %703 = vmatprep.subr.bf16.mxu0 0
    %704 = vmatpush2.bf16.msra.mxu0 0
    %705 = vmatprep.subr.bf16.mxu0 0
    %706 = vmatpush2.bf16.msra.mxu0 0
    %707 = vmatprep.subr.bf16.mxu0 0
    %708 = vmatpush2.bf16.msra.mxu0 0
    %709 = vmatprep.subr.bf16.mxu0 0
    %710 = vmatpush2.bf16.msra.mxu0 0
    %711 = vmatprep.subr.bf16.mxu0 0
    %712 = vmatpush2.bf16.msra.mxu0 0
    %713 = vmatprep.subr.bf16.mxu0 0
    %714 = vmatpush2.bf16.msra.mxu0 0
    %715 = vmatprep.mubr.bf16.mxu0 0
    %716 = vmatmul.mubr.bf16.gmra.mxu0 %v490
    %v717 = vpop.f32.mrf.mxu0
    %v718 = vadd.f32 0.0, %v717
    %v719 = vpop.f32.mrf.mxu0
    %v720 = vadd.f32 0.0, %v719
    %v721 = vpop.f32.mrf.mxu0
    %v722 = vpop.f32.mrf.mxu0
    %723 = vdwg.mxu0
    %724 = vmatprep.subr.bf16.mxu0 %v650
    %725 = vmatpush1.bf16.msra.mxu0 %v649
    %726 = vmatprep.subr.bf16.mxu0 %v646
    %727 = vmatpush1.bf16.msra.mxu0 %v645
    %728 = vmatprep.subr.bf16.mxu0 %v642
    %729 = vmatpush1.bf16.msra.mxu0 %v641
    %730 = vmatprep.subr.bf16.mxu0 %v638
    %731 = vmatpush1.bf16.msra.mxu0 %v637
    %732 = vmatprep.subr.bf16.mxu0 %v634
    %733 = vmatpush1.bf16.msra.mxu0 %v633
    %734 = vmatprep.subr.bf16.mxu0 %v630
    %735 = vmatpush1.bf16.msra.mxu0 %v629
    %736 = vmatprep.subr.bf16.mxu0 %v626
    %737 = vmatpush1.bf16.msra.mxu0 %v625
    %738 = vmatprep.subr.bf16.mxu0 %v622
    %739 = vmatpush1.bf16.msra.mxu0 %v621
    %740 = vmatprep.subr.bf16.mxu0 0
    %741 = vmatpush2.bf16.msra.mxu0 0
    %742 = vmatprep.subr.bf16.mxu0 0
    %743 = vmatpush2.bf16.msra.mxu0 0
    %744 = vmatprep.subr.bf16.mxu0 0
    %745 = vmatpush2.bf16.msra.mxu0 0
    %746 = vmatprep.subr.bf16.mxu0 0
    %747 = vmatpush2.bf16.msra.mxu0 0
    %748 = vmatprep.subr.bf16.mxu0 0
    %749 = vmatpush2.bf16.msra.mxu0 0
    %750 = vmatprep.subr.bf16.mxu0 0
    %751 = vmatpush2.bf16.msra.mxu0 0
    %752 = vmatprep.subr.bf16.mxu0 0
    %753 = vmatpush2.bf16.msra.mxu0 0
    %754 = vmatprep.subr.bf16.mxu0 0
    %755 = vmatpush2.bf16.msra.mxu0 0
    %756 = vmatprep.mubr.bf16.mxu0 0
    %757 = vmatmul.mubr.bf16.gmra.mxu0 %v490
    %v758 = vpop.f32.mrf.mxu0
    %v759 = vadd.f32 0.0, %v758
    %v760 = vpop.f32.mrf.mxu0
    %v761 = vadd.f32 0.0, %v760
    %v762 = vpop.f32.mrf.mxu0
    %v763 = vpop.f32.mrf.mxu0
    %764 = vdwg.mxu0
    %v765 = vadd.f32 %v486, %v718
    %v766 = vadd.f32 %v487, %v720
    %v767 = vadd.f32 %v488, %v759
    %v768 = vadd.f32 %v489, %v761
    %v769 = vmul.f32 %v765, 0.5
    %v770 = vtanh.pop %v769
    %v771 = vmul.f32 %v770, 0.5
    %v772 = vadd.f32 %v771, 0.5
    %v773 = vmul.f32 %v766, 0.5
    %v774 = vtanh.pop %v773
    %v775 = vmul.f32 %v774, 0.5
    %v776 = vadd.f32 %v775, 0.5
    %v777 = vtanh.pop %v767
    %v778 = vmul.f32 %v768, 0.5
    %v779 = vtanh.pop %v778
    %v780 = vmul.f32 %v779, 0.5
    %v781 = vadd.f32 %v780, 0.5
    %v782 = vmul.f32 %v776, %v485
    %v783 = vmul.f32 %v772, %v777
    %v784 = vadd.f32 %v782, %v783
    %v785 = vtanh.pop %v784
    %v786 = vmul.f32 %v781, %v785
    %v787 = vpack.c.bf16 %v786, %v786
    %788 = vst [vmem:[%s6] sm:$0xf] %v787
    %s789 = scalar_lea.vmem [#allocation4], 32
    %v790 = vld [vmem:[%s789] sm:$0xff]
    %v791 = vld [vmem:[%s789 + $0x8] sm:$0xff]
    %v792 = vld [vmem:[%s789 + $0x10] sm:$0xff]
    %v793 = vld [vmem:[%s789 + $0x18] sm:$0xff]
    %v794 = vld [vmem:[#allocation7] sm:$0xff]
    %v795 = vld [vmem:[#allocation7 + $0x8] sm:$0xff]
    %v796 = vld [vmem:[#allocation7 + $0x10] sm:$0xff]
    %v797 = vld [vmem:[#allocation7 + $0x18] sm:$0xff]
    %v798 = vld [vmem:[#allocation7 + $0x20] sm:$0xff]
    %v799 = vld [vmem:[#allocation7 + $0x28] sm:$0xff]
    %v800 = vld [vmem:[#allocation7 + $0x30] sm:$0xff]
    %v801 = vld [vmem:[#allocation7 + $0x38] sm:$0xff]
    %v802 = vld [vmem:[#allocation7 + $0x40] sm:$0xff]
    %v803 = vld [vmem:[#allocation7 + $0x48] sm:$0xff]
    %v804 = vld [vmem:[#allocation7 + $0x50] sm:$0xff]
    %v805 = vld [vmem:[#allocation7 + $0x58] sm:$0xff]
    %v806 = vld [vmem:[#allocation7 + $0x60] sm:$0xff]
    %v807 = vld [vmem:[#allocation7 + $0x68] sm:$0xff]
    %v808 = vld [vmem:[#allocation7 + $0x70] sm:$0xff]
    %v809 = vld [vmem:[#allocation7 + $0x78] sm:$0xff]
    %v810 = vld [vmem:[#allocation7 + $0x80] sm:$0xff]
    %v811 = vld [vmem:[#allocation7 + $0x88] sm:$0xff]
    %v812 = vld [vmem:[#allocation7 + $0x90] sm:$0xff]
    %v813 = vld [vmem:[#allocation7 + $0x98] sm:$0xff]
    %v814 = vld [vmem:[#allocation7 + $0xa0] sm:$0xff]
    %v815 = vld [vmem:[#allocation7 + $0xa8] sm:$0xff]
    %v816 = vld [vmem:[#allocation7 + $0xb0] sm:$0xff]
    %v817 = vld [vmem:[#allocation7 + $0xb8] sm:$0xff]
    %v818 = vld [vmem:[#allocation7 + $0xc0] sm:$0xff]
    %v819 = vld [vmem:[#allocation7 + $0xc8] sm:$0xff]
    %v820 = vld [vmem:[#allocation7 + $0xd0] sm:$0xff]
    %v821 = vld [vmem:[#allocation7 + $0xd8] sm:$0xff]
    %v822 = vld [vmem:[#allocation7 + $0xe0] sm:$0xff]
    %v823 = vld [vmem:[#allocation7 + $0xe8] sm:$0xff]
    %v824 = vld [vmem:[#allocation7 + $0xf0] sm:$0xff]
    %v825 = vld [vmem:[#allocation7 + $0xf8] sm:$0xff]
    %v858 = vunpack.c.l.b16 %v794
    %v859 = vunpack.c.h.b16 %v794
    %v860 = vunpack.c.l.b16 %v795
    %v861 = vunpack.c.h.b16 %v795
    %v862 = vunpack.c.l.b16 %v796
    %v863 = vunpack.c.h.b16 %v796
    %v864 = vunpack.c.l.b16 %v797
    %v865 = vunpack.c.h.b16 %v797
    %v866 = vunpack.c.l.b16 %v798
    %v867 = vunpack.c.h.b16 %v798
    %v868 = vunpack.c.l.b16 %v799
    %v869 = vunpack.c.h.b16 %v799
    %v870 = vunpack.c.l.b16 %v800
    %v871 = vunpack.c.h.b16 %v800
    %v872 = vunpack.c.l.b16 %v801
    %v873 = vunpack.c.h.b16 %v801
    %v874 = vunpack.c.l.b16 %v802
    %v875 = vunpack.c.h.b16 %v802
    %v876 = vunpack.c.l.b16 %v803
    %v877 = vunpack.c.h.b16 %v803
    %v878 = vunpack.c.l.b16 %v804
    %v879 = vunpack.c.h.b16 %v804
    %v880 = vunpack.c.l.b16 %v805
    %v881 = vunpack.c.h.b16 %v805
    %v882 = vunpack.c.l.b16 %v806
    %v883 = vunpack.c.h.b16 %v806
    %v884 = vunpack.c.l.b16 %v807
    %v885 = vunpack.c.h.b16 %v807
    %v886 = vunpack.c.l.b16 %v808
    %v887 = vunpack.c.h.b16 %v808
    %v888 = vunpack.c.l.b16 %v809
    %v889 = vunpack.c.h.b16 %v809
    %v890 = vunpack.c.l.b16 %v810
    %v891 = vunpack.c.h.b16 %v810
    %v892 = vunpack.c.l.b16 %v811
    %v893 = vunpack.c.h.b16 %v811
    %v894 = vunpack.c.l.b16 %v812
    %v895 = vunpack.c.h.b16 %v812
    %v896 = vunpack.c.l.b16 %v813
    %v897 = vunpack.c.h.b16 %v813
    %v898 = vunpack.c.l.b16 %v814
    %v899 = vunpack.c.h.b16 %v814
    %v900 = vunpack.c.l.b16 %v815
    %v901 = vunpack.c.h.b16 %v815
    %v902 = vunpack.c.l.b16 %v816
    %v903 = vunpack.c.h.b16 %v816
    %v904 = vunpack.c.l.b16 %v817
    %v905 = vunpack.c.h.b16 %v817
    %v906 = vunpack.c.l.b16 %v818
    %v907 = vunpack.c.h.b16 %v818
    %v908 = vunpack.c.l.b16 %v819
    %v909 = vunpack.c.h.b16 %v819
    %v910 = vunpack.c.l.b16 %v820
    %v911 = vunpack.c.h.b16 %v820
    %v912 = vunpack.c.l.b16 %v821
    %v913 = vunpack.c.h.b16 %v821
    %v914 = vunpack.c.l.b16 %v822
    %v915 = vunpack.c.h.b16 %v822
    %v916 = vunpack.c.l.b16 %v823
    %v917 = vunpack.c.h.b16 %v823
    %v918 = vunpack.c.l.b16 %v824
    %v919 = vunpack.c.h.b16 %v824
    %v920 = vunpack.c.l.b16 %v825
    %v921 = vunpack.c.h.b16 %v825
    %v922 = vpack.c.b16 %v862, %v858
    %v923 = vpack.c.b16 %v863, %v859
    %v924 = vpack.c.b16 %v864, %v860
    %v925 = vpack.c.b16 %v865, %v861
    %v926 = vpack.c.b16 %v870, %v866
    %v927 = vpack.c.b16 %v871, %v867
    %v928 = vpack.c.b16 %v872, %v868
    %v929 = vpack.c.b16 %v873, %v869
    %v930 = vpack.c.b16 %v878, %v874
    %v931 = vpack.c.b16 %v879, %v875
    %v932 = vpack.c.b16 %v880, %v876
    %v933 = vpack.c.b16 %v881, %v877
    %v934 = vpack.c.b16 %v886, %v882
    %v935 = vpack.c.b16 %v887, %v883
    %v936 = vpack.c.b16 %v888, %v884
    %v937 = vpack.c.b16 %v889, %v885
    %v938 = vpack.c.b16 %v894, %v890
    %v939 = vpack.c.b16 %v895, %v891
    %v940 = vpack.c.b16 %v896, %v892
    %v941 = vpack.c.b16 %v897, %v893
    %v942 = vpack.c.b16 %v902, %v898
    %v943 = vpack.c.b16 %v903, %v899
    %v944 = vpack.c.b16 %v904, %v900
    %v945 = vpack.c.b16 %v905, %v901
    %v946 = vpack.c.b16 %v910, %v906
    %v947 = vpack.c.b16 %v911, %v907
    %v948 = vpack.c.b16 %v912, %v908
    %v949 = vpack.c.b16 %v913, %v909
    %v950 = vpack.c.b16 %v918, %v914
    %v951 = vpack.c.b16 %v919, %v915
    %v952 = vpack.c.b16 %v920, %v916
    %v953 = vpack.c.b16 %v921, %v917
    %986 = vmatprep.subr.bf16.mxu0 %v951
    %987 = vmatpush1.bf16.msra.mxu0 %v950
    %988 = vmatprep.subr.bf16.mxu0 %v947
    %989 = vmatpush1.bf16.msra.mxu0 %v946
    %990 = vmatprep.subr.bf16.mxu0 %v943
    %991 = vmatpush1.bf16.msra.mxu0 %v942
    %992 = vmatprep.subr.bf16.mxu0 %v939
    %993 = vmatpush1.bf16.msra.mxu0 %v938
    %994 = vmatprep.subr.bf16.mxu0 %v935
    %995 = vmatpush1.bf16.msra.mxu0 %v934
    %996 = vmatprep.subr.bf16.mxu0 %v931
    %997 = vmatpush1.bf16.msra.mxu0 %v930
    %998 = vmatprep.subr.bf16.mxu0 %v927
    %999 = vmatpush1.bf16.msra.mxu0 %v926
    %1000 = vmatprep.subr.bf16.mxu0 %v923
    %1001 = vmatpush1.bf16.msra.mxu0 %v922
    %1002 = vmatprep.subr.bf16.mxu0 0
    %1003 = vmatpush2.bf16.msra.mxu0 0
    %1004 = vmatprep.subr.bf16.mxu0 0
    %1005 = vmatpush2.bf16.msra.mxu0 0
    %1006 = vmatprep.subr.bf16.mxu0 0
    %1007 = vmatpush2.bf16.msra.mxu0 0
    %1008 = vmatprep.subr.bf16.mxu0 0
    %1009 = vmatpush2.bf16.msra.mxu0 0
    %1010 = vmatprep.subr.bf16.mxu0 0
    %1011 = vmatpush2.bf16.msra.mxu0 0
    %1012 = vmatprep.subr.bf16.mxu0 0
    %1013 = vmatpush2.bf16.msra.mxu0 0
    %1014 = vmatprep.subr.bf16.mxu0 0
    %1015 = vmatpush2.bf16.msra.mxu0 0
    %1016 = vmatprep.subr.bf16.mxu0 0
    %1017 = vmatpush2.bf16.msra.mxu0 0
    %1018 = vmatprep.mubr.bf16.mxu0 0
    %1019 = vmatmul.mubr.bf16.gmra.mxu0 %v787
    %v1020 = vpop.f32.mrf.mxu0
    %v1021 = vadd.f32 0.0, %v1020
    %v1022 = vpop.f32.mrf.mxu0
    %v1023 = vadd.f32 0.0, %v1022
    %v1024 = vpop.f32.mrf.mxu0
    %v1025 = vpop.f32.mrf.mxu0
    %1026 = vdwg.mxu0
    %1027 = vmatprep.subr.bf16.mxu0 %v953
    %1028 = vmatpush1.bf16.msra.mxu0 %v952
    %1029 = vmatprep.subr.bf16.mxu0 %v949
    %1030 = vmatpush1.bf16.msra.mxu0 %v948
    %1031 = vmatprep.subr.bf16.mxu0 %v945
    %1032 = vmatpush1.bf16.msra.mxu0 %v944
    %1033 = vmatprep.subr.bf16.mxu0 %v941
    %1034 = vmatpush1.bf16.msra.mxu0 %v940
    %1035 = vmatprep.subr.bf16.mxu0 %v937
    %1036 = vmatpush1.bf16.msra.mxu0 %v936
    %1037 = vmatprep.subr.bf16.mxu0 %v933
    %1038 = vmatpush1.bf16.msra.mxu0 %v932
    %1039 = vmatprep.subr.bf16.mxu0 %v929
    %1040 = vmatpush1.bf16.msra.mxu0 %v928
    %1041 = vmatprep.subr.bf16.mxu0 %v925
    %1042 = vmatpush1.bf16.msra.mxu0 %v924
    %1043 = vmatprep.subr.bf16.mxu0 0
    %1044 = vmatpush2.bf16.msra.mxu0 0
    %1045 = vmatprep.subr.bf16.mxu0 0
    %1046 = vmatpush2.bf16.msra.mxu0 0
    %1047 = vmatprep.subr.bf16.mxu0 0
    %1048 = vmatpush2.bf16.msra.mxu0 0
    %1049 = vmatprep.subr.bf16.mxu0 0
    %1050 = vmatpush2.bf16.msra.mxu0 0
    %1051 = vmatprep.subr.bf16.mxu0 0
    %1052 = vmatpush2.bf16.msra.mxu0 0
    %1053 = vmatprep.subr.bf16.mxu0 0
    %1054 = vmatpush2.bf16.msra.mxu0 0
    %1055 = vmatprep.subr.bf16.mxu0 0
    %1056 = vmatpush2.bf16.msra.mxu0 0
    %1057 = vmatprep.subr.bf16.mxu0 0
    %1058 = vmatpush2.bf16.msra.mxu0 0
    %1059 = vmatprep.mubr.bf16.mxu0 0
    %1060 = vmatmul.mubr.bf16.gmra.mxu0 %v787
    %v1061 = vpop.f32.mrf.mxu0
    %v1062 = vadd.f32 0.0, %v1061
    %v1063 = vpop.f32.mrf.mxu0
    %v1064 = vadd.f32 0.0, %v1063
    %v1065 = vpop.f32.mrf.mxu0
    %v1066 = vpop.f32.mrf.mxu0
    %1067 = vdwg.mxu0
    %v1068 = vadd.f32 %v790, %v1021
    %v1069 = vadd.f32 %v791, %v1023
    %v1070 = vadd.f32 %v792, %v1062
    %v1071 = vadd.f32 %v793, %v1064
    %v1072 = vmul.f32 %v1068, 0.5
    %v1073 = vtanh.pop %v1072
    %v1074 = vmul.f32 %v1073, 0.5
    %v1075 = vadd.f32 %v1074, 0.5
    %v1076 = vmul.f32 %v1069, 0.5
    %v1077 = vtanh.pop %v1076
    %v1078 = vmul.f32 %v1077, 0.5
    %v1079 = vadd.f32 %v1078, 0.5
    %v1080 = vtanh.pop %v1070
    %v1081 = vmul.f32 %v1071, 0.5
    %v1082 = vtanh.pop %v1081
    %v1083 = vmul.f32 %v1082, 0.5
    %v1084 = vadd.f32 %v1083, 0.5
    %v1085 = vmul.f32 %v1079, %v784
    %v1086 = vmul.f32 %v1075, %v1080
    %v1087 = vadd.f32 %v1085, %v1086
    %v1088 = vtanh.pop %v1087
    %v1089 = vmul.f32 %v1084, %v1088
    %v1090 = vpack.c.bf16 %v1089, %v1089
    %s1091 = scalar_lea.vmem %s6, 4
    %1092 = vst [vmem:[%s1091] sm:$0xf] %v1090
    %s1093 = scalar_lea.vmem [#allocation4], 64
    %v1094 = vld [vmem:[%s1093] sm:$0xff]
    %v1095 = vld [vmem:[%s1093 + $0x8] sm:$0xff]
    %v1096 = vld [vmem:[%s1093 + $0x10] sm:$0xff]
    %v1097 = vld [vmem:[%s1093 + $0x18] sm:$0xff]
    %v1098 = vld [vmem:[#allocation7] sm:$0xff]
    %v1099 = vld [vmem:[#allocation7 + $0x8] sm:$0xff]
    %v1100 = vld [vmem:[#allocation7 + $0x10] sm:$0xff]
    %v1101 = vld [vmem:[#allocation7 + $0x18] sm:$0xff]
    %v1102 = vld [vmem:[#allocation7 + $0x20] sm:$0xff]
    %v1103 = vld [vmem:[#allocation7 + $0x28] sm:$0xff]
    %v1104 = vld [vmem:[#allocation7 + $0x30] sm:$0xff]
    %v1105 = vld [vmem:[#allocation7 + $0x38] sm:$0xff]
    %v1106 = vld [vmem:[#allocation7 + $0x40] sm:$0xff]
    %v1107 = vld [vmem:[#allocation7 + $0x48] sm:$0xff]
    %v1108 = vld [vmem:[#allocation7 + $0x50] sm:$0xff]
    %v1109 = vld [vmem:[#allocation7 + $0x58] sm:$0xff]
    %v1110 = vld [vmem:[#allocation7 + $0x60] sm:$0xff]
    %v1111 = vld [vmem:[#allocation7 + $0x68] sm:$0xff]
    %v1112 = vld [vmem:[#allocation7 + $0x70] sm:$0xff]
    %v1113 = vld [vmem:[#allocation7 + $0x78] sm:$0xff]
    %v1114 = vld [vmem:[#allocation7 + $0x80] sm:$0xff]
    %v1115 = vld [vmem:[#allocation7 + $0x88] sm:$0xff]
    %v1116 = vld [vmem:[#allocation7 + $0x90] sm:$0xff]
    %v1117 = vld [vmem:[#allocation7 + $0x98] sm:$0xff]
    %v1118 = vld [vmem:[#allocation7 + $0xa0] sm:$0xff]
    %v1119 = vld [vmem:[#allocation7 + $0xa8] sm:$0xff]
    %v1120 = vld [vmem:[#allocation7 + $0xb0] sm:$0xff]
    %v1121 = vld [vmem:[#allocation7 + $0xb8] sm:$0xff]
    %v1122 = vld [vmem:[#allocation7 + $0xc0] sm:$0xff]
    %v1123 = vld [vmem:[#allocation7 + $0xc8] sm:$0xff]
    %v1124 = vld [vmem:[#allocation7 + $0xd0] sm:$0xff]
    %v1125 = vld [vmem:[#allocation7 + $0xd8] sm:$0xff]
    %v1126 = vld [vmem:[#allocation7 + $0xe0] sm:$0xff]
    %v1127 = vld [vmem:[#allocation7 + $0xe8] sm:$0xff]
    %v1128 = vld [vmem:[#allocation7 + $0xf0] sm:$0xff]
    %v1129 = vld [vmem:[#allocation7 + $0xf8] sm:$0xff]
    %v1162 = vunpack.c.l.b16 %v1098
    %v1163 = vunpack.c.h.b16 %v1098
    %v1164 = vunpack.c.l.b16 %v1099
    %v1165 = vunpack.c.h.b16 %v1099
    %v1166 = vunpack.c.l.b16 %v1100
    %v1167 = vunpack.c.h.b16 %v1100
    %v1168 = vunpack.c.l.b16 %v1101
    %v1169 = vunpack.c.h.b16 %v1101
    %v1170 = vunpack.c.l.b16 %v1102
    %v1171 = vunpack.c.h.b16 %v1102
    %v1172 = vunpack.c.l.b16 %v1103
    %v1173 = vunpack.c.h.b16 %v1103
    %v1174 = vunpack.c.l.b16 %v1104
    %v1175 = vunpack.c.h.b16 %v1104
    %v1176 = vunpack.c.l.b16 %v1105
    %v1177 = vunpack.c.h.b16 %v1105
    %v1178 = vunpack.c.l.b16 %v1106
    %v1179 = vunpack.c.h.b16 %v1106
    %v1180 = vunpack.c.l.b16 %v1107
    %v1181 = vunpack.c.h.b16 %v1107
    %v1182 = vunpack.c.l.b16 %v1108
    %v1183 = vunpack.c.h.b16 %v1108
    %v1184 = vunpack.c.l.b16 %v1109
    %v1185 = vunpack.c.h.b16 %v1109
    %v1186 = vunpack.c.l.b16 %v1110
    %v1187 = vunpack.c.h.b16 %v1110
    %v1188 = vunpack.c.l.b16 %v1111
    %v1189 = vunpack.c.h.b16 %v1111
    %v1190 = vunpack.c.l.b16 %v1112
    %v1191 = vunpack.c.h.b16 %v1112
    %v1192 = vunpack.c.l.b16 %v1113
    %v1193 = vunpack.c.h.b16 %v1113
    %v1194 = vunpack.c.l.b16 %v1114
    %v1195 = vunpack.c.h.b16 %v1114
    %v1196 = vunpack.c.l.b16 %v1115
    %v1197 = vunpack.c.h.b16 %v1115
    %v1198 = vunpack.c.l.b16 %v1116
    %v1199 = vunpack.c.h.b16 %v1116
    %v1200 = vunpack.c.l.b16 %v1117
    %v1201 = vunpack.c.h.b16 %v1117
    %v1202 = vunpack.c.l.b16 %v1118
    %v1203 = vunpack.c.h.b16 %v1118
    %v1204 = vunpack.c.l.b16 %v1119
    %v1205 = vunpack.c.h.b16 %v1119
    %v1206 = vunpack.c.l.b16 %v1120
    %v1207 = vunpack.c.h.b16 %v1120
    %v1208 = vunpack.c.l.b16 %v1121
    %v1209 = vunpack.c.h.b16 %v1121
    %v1210 = vunpack.c.l.b16 %v1122
    %v1211 = vunpack.c.h.b16 %v1122
    %v1212 = vunpack.c.l.b16 %v1123
    %v1213 = vunpack.c.h.b16 %v1123
    %v1214 = vunpack.c.l.b16 %v1124
    %v1215 = vunpack.c.h.b16 %v1124
    %v1216 = vunpack.c.l.b16 %v1125
    %v1217 = vunpack.c.h.b16 %v1125
    %v1218 = vunpack.c.l.b16 %v1126
    %v1219 = vunpack.c.h.b16 %v1126
    %v1220 = vunpack.c.l.b16 %v1127
    %v1221 = vunpack.c.h.b16 %v1127
    %v1222 = vunpack.c.l.b16 %v1128
    %v1223 = vunpack.c.h.b16 %v1128
    %v1224 = vunpack.c.l.b16 %v1129
    %v1225 = vunpack.c.h.b16 %v1129
    %v1226 = vpack.c.b16 %v1166, %v1162
    %v1227 = vpack.c.b16 %v1167, %v1163
    %v1228 = vpack.c.b16 %v1168, %v1164
    %v1229 = vpack.c.b16 %v1169, %v1165
    %v1230 = vpack.c.b16 %v1174, %v1170
    %v1231 = vpack.c.b16 %v1175, %v1171
    %v1232 = vpack.c.b16 %v1176, %v1172
    %v1233 = vpack.c.b16 %v1177, %v1173
    %v1234 = vpack.c.b16 %v1182, %v1178
    %v1235 = vpack.c.b16 %v1183, %v1179
    %v1236 = vpack.c.b16 %v1184, %v1180
    %v1237 = vpack.c.b16 %v1185, %v1181
    %v1238 = vpack.c.b16 %v1190, %v1186
    %v1239 = vpack.c.b16 %v1191, %v1187
    %v1240 = vpack.c.b16 %v1192, %v1188
    %v1241 = vpack.c.b16 %v1193, %v1189
    %v1242 = vpack.c.b16 %v1198, %v1194
    %v1243 = vpack.c.b16 %v1199, %v1195
    %v1244 = vpack.c.b16 %v1200, %v1196
    %v1245 = vpack.c.b16 %v1201, %v1197
    %v1246 = vpack.c.b16 %v1206, %v1202
    %v1247 = vpack.c.b16 %v1207, %v1203
    %v1248 = vpack.c.b16 %v1208, %v1204
    %v1249 = vpack.c.b16 %v1209, %v1205
    %v1250 = vpack.c.b16 %v1214, %v1210
    %v1251 = vpack.c.b16 %v1215, %v1211
    %v1252 = vpack.c.b16 %v1216, %v1212
    %v1253 = vpack.c.b16 %v1217, %v1213
    %v1254 = vpack.c.b16 %v1222, %v1218
    %v1255 = vpack.c.b16 %v1223, %v1219
    %v1256 = vpack.c.b16 %v1224, %v1220
    %v1257 = vpack.c.b16 %v1225, %v1221
    %1290 = vmatprep.subr.bf16.mxu0 %v1255
    %1291 = vmatpush1.bf16.msra.mxu0 %v1254
    %1292 = vmatprep.subr.bf16.mxu0 %v1251
    %1293 = vmatpush1.bf16.msra.mxu0 %v1250
    %1294 = vmatprep.subr.bf16.mxu0 %v1247
    %1295 = vmatpush1.bf16.msra.mxu0 %v1246
    %1296 = vmatprep.subr.bf16.mxu0 %v1243
    %1297 = vmatpush1.bf16.msra.mxu0 %v1242
    %1298 = vmatprep.subr.bf16.mxu0 %v1239
    %1299 = vmatpush1.bf16.msra.mxu0 %v1238
    %1300 = vmatprep.subr.bf16.mxu0 %v1235
    %1301 = vmatpush1.bf16.msra.mxu0 %v1234
    %1302 = vmatprep.subr.bf16.mxu0 %v1231
    %1303 = vmatpush1.bf16.msra.mxu0 %v1230
    %1304 = vmatprep.subr.bf16.mxu0 %v1227
    %1305 = vmatpush1.bf16.msra.mxu0 %v1226
    %1306 = vmatprep.subr.bf16.mxu0 0
    %1307 = vmatpush2.bf16.msra.mxu0 0
    %1308 = vmatprep.subr.bf16.mxu0 0
    %1309 = vmatpush2.bf16.msra.mxu0 0
    %1310 = vmatprep.subr.bf16.mxu0 0
    %1311 = vmatpush2.bf16.msra.mxu0 0
    %1312 = vmatprep.subr.bf16.mxu0 0
    %1313 = vmatpush2.bf16.msra.mxu0 0
    %1314 = vmatprep.subr.bf16.mxu0 0
    %1315 = vmatpush2.bf16.msra.mxu0 0
    %1316 = vmatprep.subr.bf16.mxu0 0
    %1317 = vmatpush2.bf16.msra.mxu0 0
    %1318 = vmatprep.subr.bf16.mxu0 0
    %1319 = vmatpush2.bf16.msra.mxu0 0
    %1320 = vmatprep.subr.bf16.mxu0 0
    %1321 = vmatpush2.bf16.msra.mxu0 0
    %1322 = vmatprep.mubr.bf16.mxu0 0
    %1323 = vmatmul.mubr.bf16.gmra.mxu0 %v1090
    %v1324 = vpop.f32.mrf.mxu0
    %v1325 = vadd.f32 0.0, %v1324
    %v1326 = vpop.f32.mrf.mxu0
    %v1327 = vadd.f32 0.0, %v1326
    %v1328 = vpop.f32.mrf.mxu0
    %v1329 = vpop.f32.mrf.mxu0
    %1330 = vdwg.mxu0
    %1331 = vmatprep.subr.bf16.mxu0 %v1257
    %1332 = vmatpush1.bf16.msra.mxu0 %v1256
    %1333 = vmatprep.subr.bf16.mxu0 %v1253
    %1334 = vmatpush1.bf16.msra.mxu0 %v1252
    %1335 = vmatprep.subr.bf16.mxu0 %v1249
    %1336 = vmatpush1.bf16.msra.mxu0 %v1248
    %1337 = vmatprep.subr.bf16.mxu0 %v1245
    %1338 = vmatpush1.bf16.msra.mxu0 %v1244
    %1339 = vmatprep.subr.bf16.mxu0 %v1241
    %1340 = vmatpush1.bf16.msra.mxu0 %v1240
    %1341 = vmatprep.subr.bf16.mxu0 %v1237
    %1342 = vmatpush1.bf16.msra.mxu0 %v1236
    %1343 = vmatprep.subr.bf16.mxu0 %v1233
    %1344 = vmatpush1.bf16.msra.mxu0 %v1232
    %1345 = vmatprep.subr.bf16.mxu0 %v1229
    %1346 = vmatpush1.bf16.msra.mxu0 %v1228
    %1347 = vmatprep.subr.bf16.mxu0 0
    %1348 = vmatpush2.bf16.msra.mxu0 0
    %1349 = vmatprep.subr.bf16.mxu0 0
    %1350 = vmatpush2.bf16.msra.mxu0 0
    %1351 = vmatprep.subr.bf16.mxu0 0
    %1352 = vmatpush2.bf16.msra.mxu0 0
    %1353 = vmatprep.subr.bf16.mxu0 0
    %1354 = vmatpush2.bf16.msra.mxu0 0
    %1355 = vmatprep.subr.bf16.mxu0 0
    %1356 = vmatpush2.bf16.msra.mxu0 0
    %1357 = vmatprep.subr.bf16.mxu0 0
    %1358 = vmatpush2.bf16.msra.mxu0 0
    %1359 = vmatprep.subr.bf16.mxu0 0
    %1360 = vmatpush2.bf16.msra.mxu0 0
    %1361 = vmatprep.subr.bf16.mxu0 0
    %1362 = vmatpush2.bf16.msra.mxu0 0
    %1363 = vmatprep.mubr.bf16.mxu0 0
    %1364 = vmatmul.mubr.bf16.gmra.mxu0 %v1090
    %v1365 = vpop.f32.mrf.mxu0
    %v1366 = vadd.f32 0.0, %v1365
    %v1367 = vpop.f32.mrf.mxu0
    %v1368 = vadd.f32 0.0, %v1367
    %v1369 = vpop.f32.mrf.mxu0
    %v1370 = vpop.f32.mrf.mxu0
    %1371 = vdwg.mxu0
    %v1372 = vadd.f32 %v1094, %v1325
    %v1373 = vadd.f32 %v1095, %v1327
    %v1374 = vadd.f32 %v1096, %v1366
    %v1375 = vadd.f32 %v1097, %v1368
    %v1376 = vmul.f32 %v1372, 0.5
    %v1377 = vtanh.pop %v1376
    %v1378 = vmul.f32 %v1377, 0.5
    %v1379 = vadd.f32 %v1378, 0.5
    %v1380 = vmul.f32 %v1373, 0.5
    %v1381 = vtanh.pop %v1380
    %v1382 = vmul.f32 %v1381, 0.5
    %v1383 = vadd.f32 %v1382, 0.5
    %v1384 = vtanh.pop %v1374
    %v1385 = vmul.f32 %v1375, 0.5
    %v1386 = vtanh.pop %v1385
    %v1387 = vmul.f32 %v1386, 0.5
    %v1388 = vadd.f32 %v1387, 0.5
    %v1389 = vmul.f32 %v1383, %v1087
    %v1390 = vmul.f32 %v1379, %v1384
    %v1391 = vadd.f32 %v1389, %v1390
    %v1392 = vtanh.pop %v1391
    %v1393 = vmul.f32 %v1388, %v1392
    %v1394 = vpack.c.bf16 %v1393, %v1393
    %s1395 = scalar_lea.vmem %s6, 8
    %1396 = vst [vmem:[%s1395] sm:$0xf] %v1394
    %s1397 = scalar_lea.vmem [#allocation4], 96
    %v1398 = vld [vmem:[%s1397] sm:$0xff]
    %v1399 = vld [vmem:[%s1397 + $0x8] sm:$0xff]
    %v1400 = vld [vmem:[%s1397 + $0x10] sm:$0xff]
    %v1401 = vld [vmem:[%s1397 + $0x18] sm:$0xff]
    %v1402 = vld [vmem:[#allocation7] sm:$0xff]
    %v1403 = vld [vmem:[#allocation7 + $0x8] sm:$0xff]
    %v1404 = vld [vmem:[#allocation7 + $0x10] sm:$0xff]
    %v1405 = vld [vmem:[#allocation7 + $0x18] sm:$0xff]
    %v1406 = vld [vmem:[#allocation7 + $0x20] sm:$0xff]
    %v1407 = vld [vmem:[#allocation7 + $0x28] sm:$0xff]
    %v1408 = vld [vmem:[#allocation7 + $0x30] sm:$0xff]
    %v1409 = vld [vmem:[#allocation7 + $0x38] sm:$0xff]
    %v1410 = vld [vmem:[#allocation7 + $0x40] sm:$0xff]
    %v1411 = vld [vmem:[#allocation7 + $0x48] sm:$0xff]
    %v1412 = vld [vmem:[#allocation7 + $0x50] sm:$0xff]
    %v1413 = vld [vmem:[#allocation7 + $0x58] sm:$0xff]
    %v1414 = vld [vmem:[#allocation7 + $0x60] sm:$0xff]
    %v1415 = vld [vmem:[#allocation7 + $0x68] sm:$0xff]
    %v1416 = vld [vmem:[#allocation7 + $0x70] sm:$0xff]
    %v1417 = vld [vmem:[#allocation7 + $0x78] sm:$0xff]
    %v1418 = vld [vmem:[#allocation7 + $0x80] sm:$0xff]
    %v1419 = vld [vmem:[#allocation7 + $0x88] sm:$0xff]
    %v1420 = vld [vmem:[#allocation7 + $0x90] sm:$0xff]
    %v1421 = vld [vmem:[#allocation7 + $0x98] sm:$0xff]
    %v1422 = vld [vmem:[#allocation7 + $0xa0] sm:$0xff]
    %v1423 = vld [vmem:[#allocation7 + $0xa8] sm:$0xff]
    %v1424 = vld [vmem:[#allocation7 + $0xb0] sm:$0xff]
    %v1425 = vld [vmem:[#allocation7 + $0xb8] sm:$0xff]
    %v1426 = vld [vmem:[#allocation7 + $0xc0] sm:$0xff]
    %v1427 = vld [vmem:[#allocation7 + $0xc8] sm:$0xff]
    %v1428 = vld [vmem:[#allocation7 + $0xd0] sm:$0xff]
    %v1429 = vld [vmem:[#allocation7 + $0xd8] sm:$0xff]
    %v1430 = vld [vmem:[#allocation7 + $0xe0] sm:$0xff]
    %v1431 = vld [vmem:[#allocation7 + $0xe8] sm:$0xff]
    %v1432 = vld [vmem:[#allocation7 + $0xf0] sm:$0xff]
    %v1433 = vld [vmem:[#allocation7 + $0xf8] sm:$0xff]
    %v1466 = vunpack.c.l.b16 %v1402
    %v1467 = vunpack.c.h.b16 %v1402
    %v1468 = vunpack.c.l.b16 %v1403
    %v1469 = vunpack.c.h.b16 %v1403
    %v1470 = vunpack.c.l.b16 %v1404
    %v1471 = vunpack.c.h.b16 %v1404
    %v1472 = vunpack.c.l.b16 %v1405
    %v1473 = vunpack.c.h.b16 %v1405
    %v1474 = vunpack.c.l.b16 %v1406
    %v1475 = vunpack.c.h.b16 %v1406
    %v1476 = vunpack.c.l.b16 %v1407
    %v1477 = vunpack.c.h.b16 %v1407
    %v1478 = vunpack.c.l.b16 %v1408
    %v1479 = vunpack.c.h.b16 %v1408
    %v1480 = vunpack.c.l.b16 %v1409
    %v1481 = vunpack.c.h.b16 %v1409
    %v1482 = vunpack.c.l.b16 %v1410
    %v1483 = vunpack.c.h.b16 %v1410
    %v1484 = vunpack.c.l.b16 %v1411
    %v1485 = vunpack.c.h.b16 %v1411
    %v1486 = vunpack.c.l.b16 %v1412
    %v1487 = vunpack.c.h.b16 %v1412
    %v1488 = vunpack.c.l.b16 %v1413
    %v1489 = vunpack.c.h.b16 %v1413
    %v1490 = vunpack.c.l.b16 %v1414
    %v1491 = vunpack.c.h.b16 %v1414
    %v1492 = vunpack.c.l.b16 %v1415
    %v1493 = vunpack.c.h.b16 %v1415
    %v1494 = vunpack.c.l.b16 %v1416
    %v1495 = vunpack.c.h.b16 %v1416
    %v1496 = vunpack.c.l.b16 %v1417
    %v1497 = vunpack.c.h.b16 %v1417
    %v1498 = vunpack.c.l.b16 %v1418
    %v1499 = vunpack.c.h.b16 %v1418
    %v1500 = vunpack.c.l.b16 %v1419
    %v1501 = vunpack.c.h.b16 %v1419
    %v1502 = vunpack.c.l.b16 %v1420
    %v1503 = vunpack.c.h.b16 %v1420
    %v1504 = vunpack.c.l.b16 %v1421
    %v1505 = vunpack.c.h.b16 %v1421
    %v1506 = vunpack.c.l.b16 %v1422
    %v1507 = vunpack.c.h.b16 %v1422
    %v1508 = vunpack.c.l.b16 %v1423
    %v1509 = vunpack.c.h.b16 %v1423
    %v1510 = vunpack.c.l.b16 %v1424
    %v1511 = vunpack.c.h.b16 %v1424
    %v1512 = vunpack.c.l.b16 %v1425
    %v1513 = vunpack.c.h.b16 %v1425
    %v1514 = vunpack.c.l.b16 %v1426
    %v1515 = vunpack.c.h.b16 %v1426
    %v1516 = vunpack.c.l.b16 %v1427
    %v1517 = vunpack.c.h.b16 %v1427
    %v1518 = vunpack.c.l.b16 %v1428
    %v1519 = vunpack.c.h.b16 %v1428
    %v1520 = vunpack.c.l.b16 %v1429
    %v1521 = vunpack.c.h.b16 %v1429
    %v1522 = vunpack.c.l.b16 %v1430
    %v1523 = vunpack.c.h.b16 %v1430
    %v1524 = vunpack.c.l.b16 %v1431
    %v1525 = vunpack.c.h.b16 %v1431
    %v1526 = vunpack.c.l.b16 %v1432
    %v1527 = vunpack.c.h.b16 %v1432
    %v1528 = vunpack.c.l.b16 %v1433
    %v1529 = vunpack.c.h.b16 %v1433
    %v1530 = vpack.c.b16 %v1470, %v1466
    %v1531 = vpack.c.b16 %v1471, %v1467
    %v1532 = vpack.c.b16 %v1472, %v1468
    %v1533 = vpack.c.b16 %v1473, %v1469
    %v1534 = vpack.c.b16 %v1478, %v1474
    %v1535 = vpack.c.b16 %v1479, %v1475
    %v1536 = vpack.c.b16 %v1480, %v1476
    %v1537 = vpack.c.b16 %v1481, %v1477
    %v1538 = vpack.c.b16 %v1486, %v1482
    %v1539 = vpack.c.b16 %v1487, %v1483
    %v1540 = vpack.c.b16 %v1488, %v1484
    %v1541 = vpack.c.b16 %v1489, %v1485
    %v1542 = vpack.c.b16 %v1494, %v1490
    %v1543 = vpack.c.b16 %v1495, %v1491
    %v1544 = vpack.c.b16 %v1496, %v1492
    %v1545 = vpack.c.b16 %v1497, %v1493
    %v1546 = vpack.c.b16 %v1502, %v1498
    %v1547 = vpack.c.b16 %v1503, %v1499
    %v1548 = vpack.c.b16 %v1504, %v1500
    %v1549 = vpack.c.b16 %v1505, %v1501
    %v1550 = vpack.c.b16 %v1510, %v1506
    %v1551 = vpack.c.b16 %v1511, %v1507
    %v1552 = vpack.c.b16 %v1512, %v1508
    %v1553 = vpack.c.b16 %v1513, %v1509
    %v1554 = vpack.c.b16 %v1518, %v1514
    %v1555 = vpack.c.b16 %v1519, %v1515
    %v1556 = vpack.c.b16 %v1520, %v1516
    %v1557 = vpack.c.b16 %v1521, %v1517
    %v1558 = vpack.c.b16 %v1526, %v1522
    %v1559 = vpack.c.b16 %v1527, %v1523
    %v1560 = vpack.c.b16 %v1528, %v1524
    %v1561 = vpack.c.b16 %v1529, %v1525
    %1594 = vmatprep.subr.bf16.mxu0 %v1559
    %1595 = vmatpush1.bf16.msra.mxu0 %v1558
    %1596 = vmatprep.subr.bf16.mxu0 %v1555
    %1597 = vmatpush1.bf16.msra.mxu0 %v1554
    %1598 = vmatprep.subr.bf16.mxu0 %v1551
    %1599 = vmatpush1.bf16.msra.mxu0 %v1550
    %1600 = vmatprep.subr.bf16.mxu0 %v1547
    %1601 = vmatpush1.bf16.msra.mxu0 %v1546
    %1602 = vmatprep.subr.bf16.mxu0 %v1543
    %1603 = vmatpush1.bf16.msra.mxu0 %v1542
    %1604 = vmatprep.subr.bf16.mxu0 %v1539
    %1605 = vmatpush1.bf16.msra.mxu0 %v1538
    %1606 = vmatprep.subr.bf16.mxu0 %v1535
    %1607 = vmatpush1.bf16.msra.mxu0 %v1534
    %1608 = vmatprep.subr.bf16.mxu0 %v1531
    %1609 = vmatpush1.bf16.msra.mxu0 %v1530
    %1610 = vmatprep.subr.bf16.mxu0 0
    %1611 = vmatpush2.bf16.msra.mxu0 0
    %1612 = vmatprep.subr.bf16.mxu0 0
    %1613 = vmatpush2.bf16.msra.mxu0 0
    %1614 = vmatprep.subr.bf16.mxu0 0
    %1615 = vmatpush2.bf16.msra.mxu0 0
    %1616 = vmatprep.subr.bf16.mxu0 0
    %1617 = vmatpush2.bf16.msra.mxu0 0
    %1618 = vmatprep.subr.bf16.mxu0 0
    %1619 = vmatpush2.bf16.msra.mxu0 0
    %1620 = vmatprep.subr.bf16.mxu0 0
    %1621 = vmatpush2.bf16.msra.mxu0 0
    %1622 = vmatprep.subr.bf16.mxu0 0
    %1623 = vmatpush2.bf16.msra.mxu0 0
    %1624 = vmatprep.subr.bf16.mxu0 0
    %1625 = vmatpush2.bf16.msra.mxu0 0
    %1626 = vmatprep.mubr.bf16.mxu0 0
    %1627 = vmatmul.mubr.bf16.gmra.mxu0 %v1394
    %v1628 = vpop.f32.mrf.mxu0
    %v1629 = vadd.f32 0.0, %v1628
    %v1630 = vpop.f32.mrf.mxu0
    %v1631 = vadd.f32 0.0, %v1630
    %v1632 = vpop.f32.mrf.mxu0
    %v1633 = vpop.f32.mrf.mxu0
    %1634 = vdwg.mxu0
    %1635 = vmatprep.subr.bf16.mxu0 %v1561
    %1636 = vmatpush1.bf16.msra.mxu0 %v1560
    %1637 = vmatprep.subr.bf16.mxu0 %v1557
    %1638 = vmatpush1.bf16.msra.mxu0 %v1556
    %1639 = vmatprep.subr.bf16.mxu0 %v1553
    %1640 = vmatpush1.bf16.msra.mxu0 %v1552
    %1641 = vmatprep.subr.bf16.mxu0 %v1549
    %1642 = vmatpush1.bf16.msra.mxu0 %v1548
    %1643 = vmatprep.subr.bf16.mxu0 %v1545
    %1644 = vmatpush1.bf16.msra.mxu0 %v1544
    %1645 = vmatprep.subr.bf16.mxu0 %v1541
    %1646 = vmatpush1.bf16.msra.mxu0 %v1540
    %1647 = vmatprep.subr.bf16.mxu0 %v1537
    %1648 = vmatpush1.bf16.msra.mxu0 %v1536
    %1649 = vmatprep.subr.bf16.mxu0 %v1533
    %1650 = vmatpush1.bf16.msra.mxu0 %v1532
    %1651 = vmatprep.subr.bf16.mxu0 0
    %1652 = vmatpush2.bf16.msra.mxu0 0
    %1653 = vmatprep.subr.bf16.mxu0 0
    %1654 = vmatpush2.bf16.msra.mxu0 0
    %1655 = vmatprep.subr.bf16.mxu0 0
    %1656 = vmatpush2.bf16.msra.mxu0 0
    %1657 = vmatprep.subr.bf16.mxu0 0
    %1658 = vmatpush2.bf16.msra.mxu0 0
    %1659 = vmatprep.subr.bf16.mxu0 0
    %1660 = vmatpush2.bf16.msra.mxu0 0
    %1661 = vmatprep.subr.bf16.mxu0 0
    %1662 = vmatpush2.bf16.msra.mxu0 0
    %1663 = vmatprep.subr.bf16.mxu0 0
    %1664 = vmatpush2.bf16.msra.mxu0 0
    %1665 = vmatprep.subr.bf16.mxu0 0
    %1666 = vmatpush2.bf16.msra.mxu0 0
    %1667 = vmatprep.mubr.bf16.mxu0 0
    %1668 = vmatmul.mubr.bf16.gmra.mxu0 %v1394
    %v1669 = vpop.f32.mrf.mxu0
    %v1670 = vadd.f32 0.0, %v1669
    %v1671 = vpop.f32.mrf.mxu0
    %v1672 = vadd.f32 0.0, %v1671
    %v1673 = vpop.f32.mrf.mxu0
    %v1674 = vpop.f32.mrf.mxu0
    %1675 = vdwg.mxu0
    %v1676 = vadd.f32 %v1398, %v1629
    %v1677 = vadd.f32 %v1399, %v1631
    %v1678 = vadd.f32 %v1400, %v1670
    %v1679 = vadd.f32 %v1401, %v1672
    %v1680 = vmul.f32 %v1676, 0.5
    %v1681 = vtanh.pop %v1680
    %v1682 = vmul.f32 %v1681, 0.5
    %v1683 = vadd.f32 %v1682, 0.5
    %v1684 = vmul.f32 %v1677, 0.5
    %v1685 = vtanh.pop %v1684
    %v1686 = vmul.f32 %v1685, 0.5
    %v1687 = vadd.f32 %v1686, 0.5
    %v1688 = vtanh.pop %v1678
    %v1689 = vmul.f32 %v1679, 0.5
    %v1690 = vtanh.pop %v1689
    %v1691 = vmul.f32 %v1690, 0.5
    %v1692 = vadd.f32 %v1691, 0.5
    %v1693 = vmul.f32 %v1687, %v1391
    %v1694 = vmul.f32 %v1683, %v1688
    %v1695 = vadd.f32 %v1693, %v1694
    %v1696 = vtanh.pop %v1695
    %v1697 = vmul.f32 %v1692, %v1696
    %v1698 = vpack.c.bf16 %v1697, %v1697
    %s1699 = scalar_lea.vmem %s6, 12
    %1700 = vst [vmem:[%s1699] sm:$0xf] %v1698
    %s1701 = scalar_lea.vmem [#allocation4], 128
    %v1702 = vld [vmem:[%s1701] sm:$0xff]
    %v1703 = vld [vmem:[%s1701 + $0x8] sm:$0xff]
    %v1704 = vld [vmem:[%s1701 + $0x10] sm:$0xff]
    %v1705 = vld [vmem:[%s1701 + $0x18] sm:$0xff]
    %v1706 = vld [vmem:[#allocation7] sm:$0xff]
    %v1707 = vld [vmem:[#allocation7 + $0x8] sm:$0xff]
    %v1708 = vld [vmem:[#allocation7 + $0x10] sm:$0xff]
    %v1709 = vld [vmem:[#allocation7 + $0x18] sm:$0xff]
    %v1710 = vld [vmem:[#allocation7 + $0x20] sm:$0xff]
    %v1711 = vld [vmem:[#allocation7 + $0x28] sm:$0xff]
    %v1712 = vld [vmem:[#allocation7 + $0x30] sm:$0xff]
    %v1713 = vld [vmem:[#allocation7 + $0x38] sm:$0xff]
    %v1714 = vld [vmem:[#allocation7 + $0x40] sm:$0xff]
    %v1715 = vld [vmem:[#allocation7 + $0x48] sm:$0xff]
    %v1716 = vld [vmem:[#allocation7 + $0x50] sm:$0xff]
    %v1717 = vld [vmem:[#allocation7 + $0x58] sm:$0xff]
    %v1718 = vld [vmem:[#allocation7 + $0x60] sm:$0xff]
    %v1719 = vld [vmem:[#allocation7 + $0x68] sm:$0xff]
    %v1720 = vld [vmem:[#allocation7 + $0x70] sm:$0xff]
    %v1721 = vld [vmem:[#allocation7 + $0x78] sm:$0xff]
    %v1722 = vld [vmem:[#allocation7 + $0x80] sm:$0xff]
    %v1723 = vld [vmem:[#allocation7 + $0x88] sm:$0xff]
    %v1724 = vld [vmem:[#allocation7 + $0x90] sm:$0xff]
    %v1725 = vld [vmem:[#allocation7 + $0x98] sm:$0xff]
    %v1726 = vld [vmem:[#allocation7 + $0xa0] sm:$0xff]
    %v1727 = vld [vmem:[#allocation7 + $0xa8] sm:$0xff]
    %v1728 = vld [vmem:[#allocation7 + $0xb0] sm:$0xff]
    %v1729 = vld [vmem:[#allocation7 + $0xb8] sm:$0xff]
    %v1730 = vld [vmem:[#allocation7 + $0xc0] sm:$0xff]
    %v1731 = vld [vmem:[#allocation7 + $0xc8] sm:$0xff]
    %v1732 = vld [vmem:[#allocation7 + $0xd0] sm:$0xff]
    %v1733 = vld [vmem:[#allocation7 + $0xd8] sm:$0xff]
    %v1734 = vld [vmem:[#allocation7 + $0xe0] sm:$0xff]
    %v1735 = vld [vmem:[#allocation7 + $0xe8] sm:$0xff]
    %v1736 = vld [vmem:[#allocation7 + $0xf0] sm:$0xff]
    %v1737 = vld [vmem:[#allocation7 + $0xf8] sm:$0xff]
    %v1770 = vunpack.c.l.b16 %v1706
    %v1771 = vunpack.c.h.b16 %v1706
    %v1772 = vunpack.c.l.b16 %v1707
    %v1773 = vunpack.c.h.b16 %v1707
    %v1774 = vunpack.c.l.b16 %v1708
    %v1775 = vunpack.c.h.b16 %v1708
    %v1776 = vunpack.c.l.b16 %v1709
    %v1777 = vunpack.c.h.b16 %v1709
    %v1778 = vunpack.c.l.b16 %v1710
    %v1779 = vunpack.c.h.b16 %v1710
    %v1780 = vunpack.c.l.b16 %v1711
    %v1781 = vunpack.c.h.b16 %v1711
    %v1782 = vunpack.c.l.b16 %v1712
    %v1783 = vunpack.c.h.b16 %v1712
    %v1784 = vunpack.c.l.b16 %v1713
    %v1785 = vunpack.c.h.b16 %v1713
    %v1786 = vunpack.c.l.b16 %v1714
    %v1787 = vunpack.c.h.b16 %v1714
    %v1788 = vunpack.c.l.b16 %v1715
    %v1789 = vunpack.c.h.b16 %v1715
    %v1790 = vunpack.c.l.b16 %v1716
    %v1791 = vunpack.c.h.b16 %v1716
    %v1792 = vunpack.c.l.b16 %v1717
    %v1793 = vunpack.c.h.b16 %v1717
    %v1794 = vunpack.c.l.b16 %v1718
    %v1795 = vunpack.c.h.b16 %v1718
    %v1796 = vunpack.c.l.b16 %v1719
    %v1797 = vunpack.c.h.b16 %v1719
    %v1798 = vunpack.c.l.b16 %v1720
    %v1799 = vunpack.c.h.b16 %v1720
    %v1800 = vunpack.c.l.b16 %v1721
    %v1801 = vunpack.c.h.b16 %v1721
    %v1802 = vunpack.c.l.b16 %v1722
    %v1803 = vunpack.c.h.b16 %v1722
    %v1804 = vunpack.c.l.b16 %v1723
    %v1805 = vunpack.c.h.b16 %v1723
    %v1806 = vunpack.c.l.b16 %v1724
    %v1807 = vunpack.c.h.b16 %v1724
    %v1808 = vunpack.c.l.b16 %v1725
    %v1809 = vunpack.c.h.b16 %v1725
    %v1810 = vunpack.c.l.b16 %v1726
    %v1811 = vunpack.c.h.b16 %v1726
    %v1812 = vunpack.c.l.b16 %v1727
    %v1813 = vunpack.c.h.b16 %v1727
    %v1814 = vunpack.c.l.b16 %v1728
    %v1815 = vunpack.c.h.b16 %v1728
    %v1816 = vunpack.c.l.b16 %v1729
    %v1817 = vunpack.c.h.b16 %v1729
    %v1818 = vunpack.c.l.b16 %v1730
    %v1819 = vunpack.c.h.b16 %v1730
    %v1820 = vunpack.c.l.b16 %v1731
    %v1821 = vunpack.c.h.b16 %v1731
    %v1822 = vunpack.c.l.b16 %v1732
    %v1823 = vunpack.c.h.b16 %v1732
    %v1824 = vunpack.c.l.b16 %v1733
    %v1825 = vunpack.c.h.b16 %v1733
    %v1826 = vunpack.c.l.b16 %v1734
    %v1827 = vunpack.c.h.b16 %v1734
    %v1828 = vunpack.c.l.b16 %v1735
    %v1829 = vunpack.c.h.b16 %v1735
    %v1830 = vunpack.c.l.b16 %v1736
    %v1831 = vunpack.c.h.b16 %v1736
    %v1832 = vunpack.c.l.b16 %v1737
    %v1833 = vunpack.c.h.b16 %v1737
    %v1834 = vpack.c.b16 %v1774, %v1770
    %v1835 = vpack.c.b16 %v1775, %v1771
    %v1836 = vpack.c.b16 %v1776, %v1772
    %v1837 = vpack.c.b16 %v1777, %v1773
    %v1838 = vpack.c.b16 %v1782, %v1778
    %v1839 = vpack.c.b16 %v1783, %v1779
    %v1840 = vpack.c.b16 %v1784, %v1780
    %v1841 = vpack.c.b16 %v1785, %v1781
    %v1842 = vpack.c.b16 %v1790, %v1786
    %v1843 = vpack.c.b16 %v1791, %v1787
    %v1844 = vpack.c.b16 %v1792, %v1788
    %v1845 = vpack.c.b16 %v1793, %v1789
    %v1846 = vpack.c.b16 %v1798, %v1794
    %v1847 = vpack.c.b16 %v1799, %v1795
    %v1848 = vpack.c.b16 %v1800, %v1796
    %v1849 = vpack.c.b16 %v1801, %v1797
    %v1850 = vpack.c.b16 %v1806, %v1802
    %v1851 = vpack.c.b16 %v1807, %v1803
    %v1852 = vpack.c.b16 %v1808, %v1804
    %v1853 = vpack.c.b16 %v1809, %v1805
    %v1854 = vpack.c.b16 %v1814, %v1810
    %v1855 = vpack.c.b16 %v1815, %v1811
    %v1856 = vpack.c.b16 %v1816, %v1812
    %v1857 = vpack.c.b16 %v1817, %v1813
    %v1858 = vpack.c.b16 %v1822, %v1818
    %v1859 = vpack.c.b16 %v1823, %v1819
    %v1860 = vpack.c.b16 %v1824, %v1820
    %v1861 = vpack.c.b16 %v1825, %v1821
    %v1862 = vpack.c.b16 %v1830, %v1826
    %v1863 = vpack.c.b16 %v1831, %v1827
    %v1864 = vpack.c.b16 %v1832, %v1828
    %v1865 = vpack.c.b16 %v1833, %v1829
    %1898 = vmatprep.subr.bf16.mxu0 %v1863
    %1899 = vmatpush1.bf16.msra.mxu0 %v1862
    %1900 = vmatprep.subr.bf16.mxu0 %v1859
    %1901 = vmatpush1.bf16.msra.mxu0 %v1858
    %1902 = vmatprep.subr.bf16.mxu0 %v1855
    %1903 = vmatpush1.bf16.msra.mxu0 %v1854
    %1904 = vmatprep.subr.bf16.mxu0 %v1851
    %1905 = vmatpush1.bf16.msra.mxu0 %v1850
    %1906 = vmatprep.subr.bf16.mxu0 %v1847
    %1907 = vmatpush1.bf16.msra.mxu0 %v1846
    %1908 = vmatprep.subr.bf16.mxu0 %v1843
    %1909 = vmatpush1.bf16.msra.mxu0 %v1842
    %1910 = vmatprep.subr.bf16.mxu0 %v1839
    %1911 = vmatpush1.bf16.msra.mxu0 %v1838
    %1912 = vmatprep.subr.bf16.mxu0 %v1835
    %1913 = vmatpush1.bf16.msra.mxu0 %v1834
    %1914 = vmatprep.subr.bf16.mxu0 0
    %1915 = vmatpush2.bf16.msra.mxu0 0
    %1916 = vmatprep.subr.bf16.mxu0 0
    %1917 = vmatpush2.bf16.msra.mxu0 0
    %1918 = vmatprep.subr.bf16.mxu0 0
    %1919 = vmatpush2.bf16.msra.mxu0 0
    %1920 = vmatprep.subr.bf16.mxu0 0
    %1921 = vmatpush2.bf16.msra.mxu0 0
    %1922 = vmatprep.subr.bf16.mxu0 0
    %1923 = vmatpush2.bf16.msra.mxu0 0
    %1924 = vmatprep.subr.bf16.mxu0 0
    %1925 = vmatpush2.bf16.msra.mxu0 0
    %1926 = vmatprep.subr.bf16.mxu0 0
    %1927 = vmatpush2.bf16.msra.mxu0 0
    %1928 = vmatprep.subr.bf16.mxu0 0
    %1929 = vmatpush2.bf16.msra.mxu0 0
    %1930 = vmatprep.mubr.bf16.mxu0 0
    %1931 = vmatmul.mubr.bf16.gmra.mxu0 %v1698
    %v1932 = vpop.f32.mrf.mxu0
    %v1933 = vadd.f32 0.0, %v1932
    %v1934 = vpop.f32.mrf.mxu0
    %v1935 = vadd.f32 0.0, %v1934
    %v1936 = vpop.f32.mrf.mxu0
    %v1937 = vpop.f32.mrf.mxu0
    %1938 = vdwg.mxu0
    %1939 = vmatprep.subr.bf16.mxu0 %v1865
    %1940 = vmatpush1.bf16.msra.mxu0 %v1864
    %1941 = vmatprep.subr.bf16.mxu0 %v1861
    %1942 = vmatpush1.bf16.msra.mxu0 %v1860
    %1943 = vmatprep.subr.bf16.mxu0 %v1857
    %1944 = vmatpush1.bf16.msra.mxu0 %v1856
    %1945 = vmatprep.subr.bf16.mxu0 %v1853
    %1946 = vmatpush1.bf16.msra.mxu0 %v1852
    %1947 = vmatprep.subr.bf16.mxu0 %v1849
    %1948 = vmatpush1.bf16.msra.mxu0 %v1848
    %1949 = vmatprep.subr.bf16.mxu0 %v1845
    %1950 = vmatpush1.bf16.msra.mxu0 %v1844
    %1951 = vmatprep.subr.bf16.mxu0 %v1841
    %1952 = vmatpush1.bf16.msra.mxu0 %v1840
    %1953 = vmatprep.subr.bf16.mxu0 %v1837
    %1954 = vmatpush1.bf16.msra.mxu0 %v1836
    %1955 = vmatprep.subr.bf16.mxu0 0
    %1956 = vmatpush2.bf16.msra.mxu0 0
    %1957 = vmatprep.subr.bf16.mxu0 0
    %1958 = vmatpush2.bf16.msra.mxu0 0
    %1959 = vmatprep.subr.bf16.mxu0 0
    %1960 = vmatpush2.bf16.msra.mxu0 0
    %1961 = vmatprep.subr.bf16.mxu0 0
    %1962 = vmatpush2.bf16.msra.mxu0 0
    %1963 = vmatprep.subr.bf16.mxu0 0
    %1964 = vmatpush2.bf16.msra.mxu0 0
    %1965 = vmatprep.subr.bf16.mxu0 0
    %1966 = vmatpush2.bf16.msra.mxu0 0
    %1967 = vmatprep.subr.bf16.mxu0 0
    %1968 = vmatpush2.bf16.msra.mxu0 0
    %1969 = vmatprep.subr.bf16.mxu0 0
    %1970 = vmatpush2.bf16.msra.mxu0 0
    %1971 = vmatprep.mubr.bf16.mxu0 0
    %1972 = vmatmul.mubr.bf16.gmra.mxu0 %v1698
    %v1973 = vpop.f32.mrf.mxu0
    %v1974 = vadd.f32 0.0, %v1973
    %v1975 = vpop.f32.mrf.mxu0
    %v1976 = vadd.f32 0.0, %v1975
    %v1977 = vpop.f32.mrf.mxu0
    %v1978 = vpop.f32.mrf.mxu0
    %1979 = vdwg.mxu0
    %v1980 = vadd.f32 %v1702, %v1933
    %v1981 = vadd.f32 %v1703, %v1935
    %v1982 = vadd.f32 %v1704, %v1974
    %v1983 = vadd.f32 %v1705, %v1976
    %v1984 = vmul.f32 %v1980, 0.5
    %v1985 = vtanh.pop %v1984
    %v1986 = vmul.f32 %v1985, 0.5
    %v1987 = vadd.f32 %v1986, 0.5
    %v1988 = vmul.f32 %v1981, 0.5
    %v1989 = vtanh.pop %v1988
    %v1990 = vmul.f32 %v1989, 0.5
    %v1991 = vadd.f32 %v1990, 0.5
    %v1992 = vtanh.pop %v1982
    %v1993 = vmul.f32 %v1983, 0.5
    %v1994 = vtanh.pop %v1993
    %v1995 = vmul.f32 %v1994, 0.5
    %v1996 = vadd.f32 %v1995, 0.5
    %v1997 = vmul.f32 %v1991, %v1695
    %v1998 = vmul.f32 %v1987, %v1992
    %v1999 = vadd.f32 %v1997, %v1998
    %v2000 = vtanh.pop %v1999
    %v2001 = vmul.f32 %v1996, %v2000
    %v2002 = vpack.c.bf16 %v2001, %v2001
    %s2003 = scalar_lea.vmem %s6, 16
    %2004 = vst [vmem:[%s2003] sm:$0xf] %v2002
    %s2005 = scalar_lea.vmem [#allocation4], 160
    %v2006 = vld [vmem:[%s2005] sm:$0xff]
    %v2007 = vld [vmem:[%s2005 + $0x8] sm:$0xff]
    %v2008 = vld [vmem:[%s2005 + $0x10] sm:$0xff]
    %v2009 = vld [vmem:[%s2005 + $0x18] sm:$0xff]
    %v2010 = vld [vmem:[#allocation7] sm:$0xff]
    %v2011 = vld [vmem:[#allocation7 + $0x8] sm:$0xff]
    %v2012 = vld [vmem:[#allocation7 + $0x10] sm:$0xff]
    %v2013 = vld [vmem:[#allocation7 + $0x18] sm:$0xff]
    %v2014 = vld [vmem:[#allocation7 + $0x20] sm:$0xff]
    %v2015 = vld [vmem:[#allocation7 + $0x28] sm:$0xff]
    %v2016 = vld [vmem:[#allocation7 + $0x30] sm:$0xff]
    %v2017 = vld [vmem:[#allocation7 + $0x38] sm:$0xff]
    %v2018 = vld [vmem:[#allocation7 + $0x40] sm:$0xff]
    %v2019 = vld [vmem:[#allocation7 + $0x48] sm:$0xff]
    %v2020 = vld [vmem:[#allocation7 + $0x50] sm:$0xff]
    %v2021 = vld [vmem:[#allocation7 + $0x58] sm:$0xff]
    %v2022 = vld [vmem:[#allocation7 + $0x60] sm:$0xff]
    %v2023 = vld [vmem:[#allocation7 + $0x68] sm:$0xff]
    %v2024 = vld [vmem:[#allocation7 + $0x70] sm:$0xff]
    %v2025 = vld [vmem:[#allocation7 + $0x78] sm:$0xff]
    %v2026 = vld [vmem:[#allocation7 + $0x80] sm:$0xff]
    %v2027 = vld [vmem:[#allocation7 + $0x88] sm:$0xff]
    %v2028 = vld [vmem:[#allocation7 + $0x90] sm:$0xff]
    %v2029 = vld [vmem:[#allocation7 + $0x98] sm:$0xff]
    %v2030 = vld [vmem:[#allocation7 + $0xa0] sm:$0xff]
    %v2031 = vld [vmem:[#allocation7 + $0xa8] sm:$0xff]
    %v2032 = vld [vmem:[#allocation7 + $0xb0] sm:$0xff]
    %v2033 = vld [vmem:[#allocation7 + $0xb8] sm:$0xff]
    %v2034 = vld [vmem:[#allocation7 + $0xc0] sm:$0xff]
    %v2035 = vld [vmem:[#allocation7 + $0xc8] sm:$0xff]
    %v2036 = vld [vmem:[#allocation7 + $0xd0] sm:$0xff]
    %v2037 = vld [vmem:[#allocation7 + $0xd8] sm:$0xff]
    %v2038 = vld [vmem:[#allocation7 + $0xe0] sm:$0xff]
    %v2039 = vld [vmem:[#allocation7 + $0xe8] sm:$0xff]
    %v2040 = vld [vmem:[#allocation7 + $0xf0] sm:$0xff]
    %v2041 = vld [vmem:[#allocation7 + $0xf8] sm:$0xff]
    %v2074 = vunpack.c.l.b16 %v2010
    %v2075 = vunpack.c.h.b16 %v2010
    %v2076 = vunpack.c.l.b16 %v2011
    %v2077 = vunpack.c.h.b16 %v2011
    %v2078 = vunpack.c.l.b16 %v2012
    %v2079 = vunpack.c.h.b16 %v2012
    %v2080 = vunpack.c.l.b16 %v2013
    %v2081 = vunpack.c.h.b16 %v2013
    %v2082 = vunpack.c.l.b16 %v2014
    %v2083 = vunpack.c.h.b16 %v2014
    %v2084 = vunpack.c.l.b16 %v2015
    %v2085 = vunpack.c.h.b16 %v2015
    %v2086 = vunpack.c.l.b16 %v2016
    %v2087 = vunpack.c.h.b16 %v2016
    %v2088 = vunpack.c.l.b16 %v2017
    %v2089 = vunpack.c.h.b16 %v2017
    %v2090 = vunpack.c.l.b16 %v2018
    %v2091 = vunpack.c.h.b16 %v2018
    %v2092 = vunpack.c.l.b16 %v2019
    %v2093 = vunpack.c.h.b16 %v2019
    %v2094 = vunpack.c.l.b16 %v2020
    %v2095 = vunpack.c.h.b16 %v2020
    %v2096 = vunpack.c.l.b16 %v2021
    %v2097 = vunpack.c.h.b16 %v2021
    %v2098 = vunpack.c.l.b16 %v2022
    %v2099 = vunpack.c.h.b16 %v2022
    %v2100 = vunpack.c.l.b16 %v2023
    %v2101 = vunpack.c.h.b16 %v2023
    %v2102 = vunpack.c.l.b16 %v2024
    %v2103 = vunpack.c.h.b16 %v2024
    %v2104 = vunpack.c.l.b16 %v2025
    %v2105 = vunpack.c.h.b16 %v2025
    %v2106 = vunpack.c.l.b16 %v2026
    %v2107 = vunpack.c.h.b16 %v2026
    %v2108 = vunpack.c.l.b16 %v2027
    %v2109 = vunpack.c.h.b16 %v2027
    %v2110 = vunpack.c.l.b16 %v2028
    %v2111 = vunpack.c.h.b16 %v2028
    %v2112 = vunpack.c.l.b16 %v2029
    %v2113 = vunpack.c.h.b16 %v2029
    %v2114 = vunpack.c.l.b16 %v2030
    %v2115 = vunpack.c.h.b16 %v2030
    %v2116 = vunpack.c.l.b16 %v2031
    %v2117 = vunpack.c.h.b16 %v2031
    %v2118 = vunpack.c.l.b16 %v2032
    %v2119 = vunpack.c.h.b16 %v2032
    %v2120 = vunpack.c.l.b16 %v2033
    %v2121 = vunpack.c.h.b16 %v2033
    %v2122 = vunpack.c.l.b16 %v2034
    %v2123 = vunpack.c.h.b16 %v2034
    %v2124 = vunpack.c.l.b16 %v2035
    %v2125 = vunpack.c.h.b16 %v2035
    %v2126 = vunpack.c.l.b16 %v2036
    %v2127 = vunpack.c.h.b16 %v2036
    %v2128 = vunpack.c.l.b16 %v2037
    %v2129 = vunpack.c.h.b16 %v2037
    %v2130 = vunpack.c.l.b16 %v2038
    %v2131 = vunpack.c.h.b16 %v2038
    %v2132 = vunpack.c.l.b16 %v2039
    %v2133 = vunpack.c.h.b16 %v2039
    %v2134 = vunpack.c.l.b16 %v2040
    %v2135 = vunpack.c.h.b16 %v2040
    %v2136 = vunpack.c.l.b16 %v2041
    %v2137 = vunpack.c.h.b16 %v2041
    %v2138 = vpack.c.b16 %v2078, %v2074
    %v2139 = vpack.c.b16 %v2079, %v2075
    %v2140 = vpack.c.b16 %v2080, %v2076
    %v2141 = vpack.c.b16 %v2081, %v2077
    %v2142 = vpack.c.b16 %v2086, %v2082
    %v2143 = vpack.c.b16 %v2087, %v2083
    %v2144 = vpack.c.b16 %v2088, %v2084
    %v2145 = vpack.c.b16 %v2089, %v2085
    %v2146 = vpack.c.b16 %v2094, %v2090
    %v2147 = vpack.c.b16 %v2095, %v2091
    %v2148 = vpack.c.b16 %v2096, %v2092
    %v2149 = vpack.c.b16 %v2097, %v2093
    %v2150 = vpack.c.b16 %v2102, %v2098
    %v2151 = vpack.c.b16 %v2103, %v2099
    %v2152 = vpack.c.b16 %v2104, %v2100
    %v2153 = vpack.c.b16 %v2105, %v2101
    %v2154 = vpack.c.b16 %v2110, %v2106
    %v2155 = vpack.c.b16 %v2111, %v2107
    %v2156 = vpack.c.b16 %v2112, %v2108
    %v2157 = vpack.c.b16 %v2113, %v2109
    %v2158 = vpack.c.b16 %v2118, %v2114
    %v2159 = vpack.c.b16 %v2119, %v2115
    %v2160 = vpack.c.b16 %v2120, %v2116
    %v2161 = vpack.c.b16 %v2121, %v2117
    %v2162 = vpack.c.b16 %v2126, %v2122
    %v2163 = vpack.c.b16 %v2127, %v2123
    %v2164 = vpack.c.b16 %v2128, %v2124
    %v2165 = vpack.c.b16 %v2129, %v2125
    %v2166 = vpack.c.b16 %v2134, %v2130
    %v2167 = vpack.c.b16 %v2135, %v2131
    %v2168 = vpack.c.b16 %v2136, %v2132
    %v2169 = vpack.c.b16 %v2137, %v2133
    %2202 = vmatprep.subr.bf16.mxu0 %v2167
    %2203 = vmatpush1.bf16.msra.mxu0 %v2166
    %2204 = vmatprep.subr.bf16.mxu0 %v2163
    %2205 = vmatpush1.bf16.msra.mxu0 %v2162
    %2206 = vmatprep.subr.bf16.mxu0 %v2159
    %2207 = vmatpush1.bf16.msra.mxu0 %v2158
    %2208 = vmatprep.subr.bf16.mxu0 %v2155
    %2209 = vmatpush1.bf16.msra.mxu0 %v2154
    %2210 = vmatprep.subr.bf16.mxu0 %v2151
    %2211 = vmatpush1.bf16.msra.mxu0 %v2150
    %2212 = vmatprep.subr.bf16.mxu0 %v2147
    %2213 = vmatpush1.bf16.msra.mxu0 %v2146
    %2214 = vmatprep.subr.bf16.mxu0 %v2143
    %2215 = vmatpush1.bf16.msra.mxu0 %v2142
    %2216 = vmatprep.subr.bf16.mxu0 %v2139
    %2217 = vmatpush1.bf16.msra.mxu0 %v2138
    %2218 = vmatprep.subr.bf16.mxu0 0
    %2219 = vmatpush2.bf16.msra.mxu0 0
    %2220 = vmatprep.subr.bf16.mxu0 0
    %2221 = vmatpush2.bf16.msra.mxu0 0
    %2222 = vmatprep.subr.bf16.mxu0 0
    %2223 = vmatpush2.bf16.msra.mxu0 0
    %2224 = vmatprep.subr.bf16.mxu0 0
    %2225 = vmatpush2.bf16.msra.mxu0 0
    %2226 = vmatprep.subr.bf16.mxu0 0
    %2227 = vmatpush2.bf16.msra.mxu0 0
    %2228 = vmatprep.subr.bf16.mxu0 0
    %2229 = vmatpush2.bf16.msra.mxu0 0
    %2230 = vmatprep.subr.bf16.mxu0 0
    %2231 = vmatpush2.bf16.msra.mxu0 0
    %2232 = vmatprep.subr.bf16.mxu0 0
    %2233 = vmatpush2.bf16.msra.mxu0 0
    %2234 = vmatprep.mubr.bf16.mxu0 0
    %2235 = vmatmul.mubr.bf16.gmra.mxu0 %v2002
    %v2236 = vpop.f32.mrf.mxu0
    %v2237 = vadd.f32 0.0, %v2236
    %v2238 = vpop.f32.mrf.mxu0
    %v2239 = vadd.f32 0.0, %v2238
    %v2240 = vpop.f32.mrf.mxu0
    %v2241 = vpop.f32.mrf.mxu0
    %2242 = vdwg.mxu0
    %2243 = vmatprep.subr.bf16.mxu0 %v2169
    %2244 = vmatpush1.bf16.msra.mxu0 %v2168
    %2245 = vmatprep.subr.bf16.mxu0 %v2165
    %2246 = vmatpush1.bf16.msra.mxu0 %v2164
    %2247 = vmatprep.subr.bf16.mxu0 %v2161
    %2248 = vmatpush1.bf16.msra.mxu0 %v2160
    %2249 = vmatprep.subr.bf16.mxu0 %v2157
    %2250 = vmatpush1.bf16.msra.mxu0 %v2156
    %2251 = vmatprep.subr.bf16.mxu0 %v2153
    %2252 = vmatpush1.bf16.msra.mxu0 %v2152
    %2253 = vmatprep.subr.bf16.mxu0 %v2149
    %2254 = vmatpush1.bf16.msra.mxu0 %v2148
    %2255 = vmatprep.subr.bf16.mxu0 %v2145
    %2256 = vmatpush1.bf16.msra.mxu0 %v2144
    %2257 = vmatprep.subr.bf16.mxu0 %v2141
    %2258 = vmatpush1.bf16.msra.mxu0 %v2140
    %2259 = vmatprep.subr.bf16.mxu0 0
    %2260 = vmatpush2.bf16.msra.mxu0 0
    %2261 = vmatprep.subr.bf16.mxu0 0
    %2262 = vmatpush2.bf16.msra.mxu0 0
    %2263 = vmatprep.subr.bf16.mxu0 0
    %2264 = vmatpush2.bf16.msra.mxu0 0
    %2265 = vmatprep.subr.bf16.mxu0 0
    %2266 = vmatpush2.bf16.msra.mxu0 0
    %2267 = vmatprep.subr.bf16.mxu0 0
    %2268 = vmatpush2.bf16.msra.mxu0 0
    %2269 = vmatprep.subr.bf16.mxu0 0
    %2270 = vmatpush2.bf16.msra.mxu0 0
    %2271 = vmatprep.subr.bf16.mxu0 0
    %2272 = vmatpush2.bf16.msra.mxu0 0
    %2273 = vmatprep.subr.bf16.mxu0 0
    %2274 = vmatpush2.bf16.msra.mxu0 0
    %2275 = vmatprep.mubr.bf16.mxu0 0
    %2276 = vmatmul.mubr.bf16.gmra.mxu0 %v2002
    %v2277 = vpop.f32.mrf.mxu0
    %v2278 = vadd.f32 0.0, %v2277
    %v2279 = vpop.f32.mrf.mxu0
    %v2280 = vadd.f32 0.0, %v2279
    %v2281 = vpop.f32.mrf.mxu0
    %v2282 = vpop.f32.mrf.mxu0
    %2283 = vdwg.mxu0
    %v2284 = vadd.f32 %v2006, %v2237
    %v2285 = vadd.f32 %v2007, %v2239
    %v2286 = vadd.f32 %v2008, %v2278
    %v2287 = vadd.f32 %v2009, %v2280
    %v2288 = vmul.f32 %v2284, 0.5
    %v2289 = vtanh.pop %v2288
    %v2290 = vmul.f32 %v2289, 0.5
    %v2291 = vadd.f32 %v2290, 0.5
    %v2292 = vmul.f32 %v2285, 0.5
    %v2293 = vtanh.pop %v2292
    %v2294 = vmul.f32 %v2293, 0.5
    %v2295 = vadd.f32 %v2294, 0.5
    %v2296 = vtanh.pop %v2286
    %v2297 = vmul.f32 %v2287, 0.5
    %v2298 = vtanh.pop %v2297
    %v2299 = vmul.f32 %v2298, 0.5
    %v2300 = vadd.f32 %v2299, 0.5
    %v2301 = vmul.f32 %v2295, %v1999
    %v2302 = vmul.f32 %v2291, %v2296
    %v2303 = vadd.f32 %v2301, %v2302
    %v2304 = vtanh.pop %v2303
    %v2305 = vmul.f32 %v2300, %v2304
    %v2306 = vpack.c.bf16 %v2305, %v2305
    %s2307 = scalar_lea.vmem %s6, 20
    %2308 = vst [vmem:[%s2307] sm:$0xf] %v2306
    %s2309 = scalar_lea.vmem [#allocation4], 192
    %v2310 = vld [vmem:[%s2309] sm:$0xff]
    %v2311 = vld [vmem:[%s2309 + $0x8] sm:$0xff]
    %v2312 = vld [vmem:[%s2309 + $0x10] sm:$0xff]
    %v2313 = vld [vmem:[%s2309 + $0x18] sm:$0xff]
    %v2314 = vld [vmem:[#allocation7] sm:$0xff]
    %v2315 = vld [vmem:[#allocation7 + $0x8] sm:$0xff]
    %v2316 = vld [vmem:[#allocation7 + $0x10] sm:$0xff]
    %v2317 = vld [vmem:[#allocation7 + $0x18] sm:$0xff]
    %v2318 = vld [vmem:[#allocation7 + $0x20] sm:$0xff]
    %v2319 = vld [vmem:[#allocation7 + $0x28] sm:$0xff]
    %v2320 = vld [vmem:[#allocation7 + $0x30] sm:$0xff]
    %v2321 = vld [vmem:[#allocation7 + $0x38] sm:$0xff]
    %v2322 = vld [vmem:[#allocation7 + $0x40] sm:$0xff]
    %v2323 = vld [vmem:[#allocation7 + $0x48] sm:$0xff]
    %v2324 = vld [vmem:[#allocation7 + $0x50] sm:$0xff]
    %v2325 = vld [vmem:[#allocation7 + $0x58] sm:$0xff]
    %v2326 = vld [vmem:[#allocation7 + $0x60] sm:$0xff]
    %v2327 = vld [vmem:[#allocation7 + $0x68] sm:$0xff]
    %v2328 = vld [vmem:[#allocation7 + $0x70] sm:$0xff]
    %v2329 = vld [vmem:[#allocation7 + $0x78] sm:$0xff]
    %v2330 = vld [vmem:[#allocation7 + $0x80] sm:$0xff]
    %v2331 = vld [vmem:[#allocation7 + $0x88] sm:$0xff]
    %v2332 = vld [vmem:[#allocation7 + $0x90] sm:$0xff]
    %v2333 = vld [vmem:[#allocation7 + $0x98] sm:$0xff]
    %v2334 = vld [vmem:[#allocation7 + $0xa0] sm:$0xff]
    %v2335 = vld [vmem:[#allocation7 + $0xa8] sm:$0xff]
    %v2336 = vld [vmem:[#allocation7 + $0xb0] sm:$0xff]
    %v2337 = vld [vmem:[#allocation7 + $0xb8] sm:$0xff]
    %v2338 = vld [vmem:[#allocation7 + $0xc0] sm:$0xff]
    %v2339 = vld [vmem:[#allocation7 + $0xc8] sm:$0xff]
    %v2340 = vld [vmem:[#allocation7 + $0xd0] sm:$0xff]
    %v2341 = vld [vmem:[#allocation7 + $0xd8] sm:$0xff]
    %v2342 = vld [vmem:[#allocation7 + $0xe0] sm:$0xff]
    %v2343 = vld [vmem:[#allocation7 + $0xe8] sm:$0xff]
    %v2344 = vld [vmem:[#allocation7 + $0xf0] sm:$0xff]
    %v2345 = vld [vmem:[#allocation7 + $0xf8] sm:$0xff]
    %v2378 = vunpack.c.l.b16 %v2314
    %v2379 = vunpack.c.h.b16 %v2314
    %v2380 = vunpack.c.l.b16 %v2315
    %v2381 = vunpack.c.h.b16 %v2315
    %v2382 = vunpack.c.l.b16 %v2316
    %v2383 = vunpack.c.h.b16 %v2316
    %v2384 = vunpack.c.l.b16 %v2317
    %v2385 = vunpack.c.h.b16 %v2317
    %v2386 = vunpack.c.l.b16 %v2318
    %v2387 = vunpack.c.h.b16 %v2318
    %v2388 = vunpack.c.l.b16 %v2319
    %v2389 = vunpack.c.h.b16 %v2319
    %v2390 = vunpack.c.l.b16 %v2320
    %v2391 = vunpack.c.h.b16 %v2320
    %v2392 = vunpack.c.l.b16 %v2321
    %v2393 = vunpack.c.h.b16 %v2321
    %v2394 = vunpack.c.l.b16 %v2322
    %v2395 = vunpack.c.h.b16 %v2322
    %v2396 = vunpack.c.l.b16 %v2323
    %v2397 = vunpack.c.h.b16 %v2323
    %v2398 = vunpack.c.l.b16 %v2324
    %v2399 = vunpack.c.h.b16 %v2324
    %v2400 = vunpack.c.l.b16 %v2325
    %v2401 = vunpack.c.h.b16 %v2325
    %v2402 = vunpack.c.l.b16 %v2326
    %v2403 = vunpack.c.h.b16 %v2326
    %v2404 = vunpack.c.l.b16 %v2327
    %v2405 = vunpack.c.h.b16 %v2327
    %v2406 = vunpack.c.l.b16 %v2328
    %v2407 = vunpack.c.h.b16 %v2328
    %v2408 = vunpack.c.l.b16 %v2329
    %v2409 = vunpack.c.h.b16 %v2329
    %v2410 = vunpack.c.l.b16 %v2330
    %v2411 = vunpack.c.h.b16 %v2330
    %v2412 = vunpack.c.l.b16 %v2331
    %v2413 = vunpack.c.h.b16 %v2331
    %v2414 = vunpack.c.l.b16 %v2332
    %v2415 = vunpack.c.h.b16 %v2332
    %v2416 = vunpack.c.l.b16 %v2333
    %v2417 = vunpack.c.h.b16 %v2333
    %v2418 = vunpack.c.l.b16 %v2334
    %v2419 = vunpack.c.h.b16 %v2334
    %v2420 = vunpack.c.l.b16 %v2335
    %v2421 = vunpack.c.h.b16 %v2335
    %v2422 = vunpack.c.l.b16 %v2336
    %v2423 = vunpack.c.h.b16 %v2336
    %v2424 = vunpack.c.l.b16 %v2337
    %v2425 = vunpack.c.h.b16 %v2337
    %v2426 = vunpack.c.l.b16 %v2338
    %v2427 = vunpack.c.h.b16 %v2338
    %v2428 = vunpack.c.l.b16 %v2339
    %v2429 = vunpack.c.h.b16 %v2339
    %v2430 = vunpack.c.l.b16 %v2340
    %v2431 = vunpack.c.h.b16 %v2340
    %v2432 = vunpack.c.l.b16 %v2341
    %v2433 = vunpack.c.h.b16 %v2341
    %v2434 = vunpack.c.l.b16 %v2342
    %v2435 = vunpack.c.h.b16 %v2342
    %v2436 = vunpack.c.l.b16 %v2343
    %v2437 = vunpack.c.h.b16 %v2343
    %v2438 = vunpack.c.l.b16 %v2344
    %v2439 = vunpack.c.h.b16 %v2344
    %v2440 = vunpack.c.l.b16 %v2345
    %v2441 = vunpack.c.h.b16 %v2345
    %v2442 = vpack.c.b16 %v2382, %v2378
    %v2443 = vpack.c.b16 %v2383, %v2379
    %v2444 = vpack.c.b16 %v2384, %v2380
    %v2445 = vpack.c.b16 %v2385, %v2381
    %v2446 = vpack.c.b16 %v2390, %v2386
    %v2447 = vpack.c.b16 %v2391, %v2387
    %v2448 = vpack.c.b16 %v2392, %v2388
    %v2449 = vpack.c.b16 %v2393, %v2389
    %v2450 = vpack.c.b16 %v2398, %v2394
    %v2451 = vpack.c.b16 %v2399, %v2395
    %v2452 = vpack.c.b16 %v2400, %v2396
    %v2453 = vpack.c.b16 %v2401, %v2397
    %v2454 = vpack.c.b16 %v2406, %v2402
    %v2455 = vpack.c.b16 %v2407, %v2403
    %v2456 = vpack.c.b16 %v2408, %v2404
    %v2457 = vpack.c.b16 %v2409, %v2405
    %v2458 = vpack.c.b16 %v2414, %v2410
    %v2459 = vpack.c.b16 %v2415, %v2411
    %v2460 = vpack.c.b16 %v2416, %v2412
    %v2461 = vpack.c.b16 %v2417, %v2413
    %v2462 = vpack.c.b16 %v2422, %v2418
    %v2463 = vpack.c.b16 %v2423, %v2419
    %v2464 = vpack.c.b16 %v2424, %v2420
    %v2465 = vpack.c.b16 %v2425, %v2421
    %v2466 = vpack.c.b16 %v2430, %v2426
    %v2467 = vpack.c.b16 %v2431, %v2427
    %v2468 = vpack.c.b16 %v2432, %v2428
    %v2469 = vpack.c.b16 %v2433, %v2429
    %v2470 = vpack.c.b16 %v2438, %v2434
    %v2471 = vpack.c.b16 %v2439, %v2435
    %v2472 = vpack.c.b16 %v2440, %v2436
    %v2473 = vpack.c.b16 %v2441, %v2437
    %2506 = vmatprep.subr.bf16.mxu0 %v2471
    %2507 = vmatpush1.bf16.msra.mxu0 %v2470
    %2508 = vmatprep.subr.bf16.mxu0 %v2467
    %2509 = vmatpush1.bf16.msra.mxu0 %v2466
    %2510 = vmatprep.subr.bf16.mxu0 %v2463
    %2511 = vmatpush1.bf16.msra.mxu0 %v2462
    %2512 = vmatprep.subr.bf16.mxu0 %v2459
    %2513 = vmatpush1.bf16.msra.mxu0 %v2458
    %2514 = vmatprep.subr.bf16.mxu0 %v2455
    %2515 = vmatpush1.bf16.msra.mxu0 %v2454
    %2516 = vmatprep.subr.bf16.mxu0 %v2451
    %2517 = vmatpush1.bf16.msra.mxu0 %v2450
    %2518 = vmatprep.subr.bf16.mxu0 %v2447
    %2519 = vmatpush1.bf16.msra.mxu0 %v2446
    %2520 = vmatprep.subr.bf16.mxu0 %v2443
    %2521 = vmatpush1.bf16.msra.mxu0 %v2442
    %2522 = vmatprep.subr.bf16.mxu0 0
    %2523 = vmatpush2.bf16.msra.mxu0 0
    %2524 = vmatprep.subr.bf16.mxu0 0
    %2525 = vmatpush2.bf16.msra.mxu0 0
    %2526 = vmatprep.subr.bf16.mxu0 0
    %2527 = vmatpush2.bf16.msra.mxu0 0
    %2528 = vmatprep.subr.bf16.mxu0 0
    %2529 = vmatpush2.bf16.msra.mxu0 0
    %2530 = vmatprep.subr.bf16.mxu0 0
    %2531 = vmatpush2.bf16.msra.mxu0 0
    %2532 = vmatprep.subr.bf16.mxu0 0
    %2533 = vmatpush2.bf16.msra.mxu0 0
    %2534 = vmatprep.subr.bf16.mxu0 0
    %2535 = vmatpush2.bf16.msra.mxu0 0
    %2536 = vmatprep.subr.bf16.mxu0 0
    %2537 = vmatpush2.bf16.msra.mxu0 0
    %2538 = vmatprep.mubr.bf16.mxu0 0
    %2539 = vmatmul.mubr.bf16.gmra.mxu0 %v2306
    %v2540 = vpop.f32.mrf.mxu0
    %v2541 = vadd.f32 0.0, %v2540
    %v2542 = vpop.f32.mrf.mxu0
    %v2543 = vadd.f32 0.0, %v2542
    %v2544 = vpop.f32.mrf.mxu0
    %v2545 = vpop.f32.mrf.mxu0
    %2546 = vdwg.mxu0
    %2547 = vmatprep.subr.bf16.mxu0 %v2473
    %2548 = vmatpush1.bf16.msra.mxu0 %v2472
    %2549 = vmatprep.subr.bf16.mxu0 %v2469
    %2550 = vmatpush1.bf16.msra.mxu0 %v2468
    %2551 = vmatprep.subr.bf16.mxu0 %v2465
    %2552 = vmatpush1.bf16.msra.mxu0 %v2464
    %2553 = vmatprep.subr.bf16.mxu0 %v2461
    %2554 = vmatpush1.bf16.msra.mxu0 %v2460
    %2555 = vmatprep.subr.bf16.mxu0 %v2457
    %2556 = vmatpush1.bf16.msra.mxu0 %v2456
    %2557 = vmatprep.subr.bf16.mxu0 %v2453
    %2558 = vmatpush1.bf16.msra.mxu0 %v2452
    %2559 = vmatprep.subr.bf16.mxu0 %v2449
    %2560 = vmatpush1.bf16.msra.mxu0 %v2448
    %2561 = vmatprep.subr.bf16.mxu0 %v2445
    %2562 = vmatpush1.bf16.msra.mxu0 %v2444
    %2563 = vmatprep.subr.bf16.mxu0 0
    %2564 = vmatpush2.bf16.msra.mxu0 0
    %2565 = vmatprep.subr.bf16.mxu0 0
    %2566 = vmatpush2.bf16.msra.mxu0 0
    %2567 = vmatprep.subr.bf16.mxu0 0
    %2568 = vmatpush2.bf16.msra.mxu0 0
    %2569 = vmatprep.subr.bf16.mxu0 0
    %2570 = vmatpush2.bf16.msra.mxu0 0
    %2571 = vmatprep.subr.bf16.mxu0 0
    %2572 = vmatpush2.bf16.msra.mxu0 0
    %2573 = vmatprep.subr.bf16.mxu0 0
    %2574 = vmatpush2.bf16.msra.mxu0 0
    %2575 = vmatprep.subr.bf16.mxu0 0
    %2576 = vmatpush2.bf16.msra.mxu0 0
    %2577 = vmatprep.subr.bf16.mxu0 0
    %2578 = vmatpush2.bf16.msra.mxu0 0
    %2579 = vmatprep.mubr.bf16.mxu0 0
    %2580 = vmatmul.mubr.bf16.gmra.mxu0 %v2306
    %v2581 = vpop.f32.mrf.mxu0
    %v2582 = vadd.f32 0.0, %v2581
    %v2583 = vpop.f32.mrf.mxu0
    %v2584 = vadd.f32 0.0, %v2583
    %v2585 = vpop.f32.mrf.mxu0
    %v2586 = vpop.f32.mrf.mxu0
    %2587 = vdwg.mxu0
    %v2588 = vadd.f32 %v2310, %v2541
    %v2589 = vadd.f32 %v2311, %v2543
    %v2590 = vadd.f32 %v2312, %v2582
    %v2591 = vadd.f32 %v2313, %v2584
    %v2592 = vmul.f32 %v2588, 0.5
    %v2593 = vtanh.pop %v2592
    %v2594 = vmul.f32 %v2593, 0.5
    %v2595 = vadd.f32 %v2594, 0.5
    %v2596 = vmul.f32 %v2589, 0.5
    %v2597 = vtanh.pop %v2596
    %v2598 = vmul.f32 %v2597, 0.5
    %v2599 = vadd.f32 %v2598, 0.5
    %v2600 = vtanh.pop %v2590
    %v2601 = vmul.f32 %v2591, 0.5
    %v2602 = vtanh.pop %v2601
    %v2603 = vmul.f32 %v2602, 0.5
    %v2604 = vadd.f32 %v2603, 0.5
    %v2605 = vmul.f32 %v2599, %v2303
    %v2606 = vmul.f32 %v2595, %v2600
    %v2607 = vadd.f32 %v2605, %v2606
    %v2608 = vtanh.pop %v2607
    %v2609 = vmul.f32 %v2604, %v2608
    %v2610 = vpack.c.bf16 %v2609, %v2609
    %s2611 = scalar_lea.vmem %s6, 24
    %2612 = vst [vmem:[%s2611] sm:$0xf] %v2610
    %s2613 = scalar_lea.vmem [#allocation4], 224
    %v2614 = vld [vmem:[%s2613] sm:$0xff]
    %v2615 = vld [vmem:[%s2613 + $0x8] sm:$0xff]
    %v2616 = vld [vmem:[%s2613 + $0x10] sm:$0xff]
    %v2617 = vld [vmem:[%s2613 + $0x18] sm:$0xff]
    %v2618 = vld [vmem:[#allocation7] sm:$0xff]
    %v2619 = vld [vmem:[#allocation7 + $0x8] sm:$0xff]
    %v2620 = vld [vmem:[#allocation7 + $0x10] sm:$0xff]
    %v2621 = vld [vmem:[#allocation7 + $0x18] sm:$0xff]
    %v2622 = vld [vmem:[#allocation7 + $0x20] sm:$0xff]
    %v2623 = vld [vmem:[#allocation7 + $0x28] sm:$0xff]
    %v2624 = vld [vmem:[#allocation7 + $0x30] sm:$0xff]
    %v2625 = vld [vmem:[#allocation7 + $0x38] sm:$0xff]
    %v2626 = vld [vmem:[#allocation7 + $0x40] sm:$0xff]
    %v2627 = vld [vmem:[#allocation7 + $0x48] sm:$0xff]
    %v2628 = vld [vmem:[#allocation7 + $0x50] sm:$0xff]
    %v2629 = vld [vmem:[#allocation7 + $0x58] sm:$0xff]
    %v2630 = vld [vmem:[#allocation7 + $0x60] sm:$0xff]
    %v2631 = vld [vmem:[#allocation7 + $0x68] sm:$0xff]
    %v2632 = vld [vmem:[#allocation7 + $0x70] sm:$0xff]
    %v2633 = vld [vmem:[#allocation7 + $0x78] sm:$0xff]
    %v2634 = vld [vmem:[#allocation7 + $0x80] sm:$0xff]
    %v2635 = vld [vmem:[#allocation7 + $0x88] sm:$0xff]
    %v2636 = vld [vmem:[#allocation7 + $0x90] sm:$0xff]
    %v2637 = vld [vmem:[#allocation7 + $0x98] sm:$0xff]
    %v2638 = vld [vmem:[#allocation7 + $0xa0] sm:$0xff]
    %v2639 = vld [vmem:[#allocation7 + $0xa8] sm:$0xff]
    %v2640 = vld [vmem:[#allocation7 + $0xb0] sm:$0xff]
    %v2641 = vld [vmem:[#allocation7 + $0xb8] sm:$0xff]
    %v2642 = vld [vmem:[#allocation7 + $0xc0] sm:$0xff]
    %v2643 = vld [vmem:[#allocation7 + $0xc8] sm:$0xff]
    %v2644 = vld [vmem:[#allocation7 + $0xd0] sm:$0xff]
    %v2645 = vld [vmem:[#allocation7 + $0xd8] sm:$0xff]
    %v2646 = vld [vmem:[#allocation7 + $0xe0] sm:$0xff]
    %v2647 = vld [vmem:[#allocation7 + $0xe8] sm:$0xff]
    %v2648 = vld [vmem:[#allocation7 + $0xf0] sm:$0xff]
    %v2649 = vld [vmem:[#allocation7 + $0xf8] sm:$0xff]
    %v2682 = vunpack.c.l.b16 %v2618
    %v2683 = vunpack.c.h.b16 %v2618
    %v2684 = vunpack.c.l.b16 %v2619
    %v2685 = vunpack.c.h.b16 %v2619
    %v2686 = vunpack.c.l.b16 %v2620
    %v2687 = vunpack.c.h.b16 %v2620
    %v2688 = vunpack.c.l.b16 %v2621
    %v2689 = vunpack.c.h.b16 %v2621
    %v2690 = vunpack.c.l.b16 %v2622
    %v2691 = vunpack.c.h.b16 %v2622
    %v2692 = vunpack.c.l.b16 %v2623
    %v2693 = vunpack.c.h.b16 %v2623
    %v2694 = vunpack.c.l.b16 %v2624
    %v2695 = vunpack.c.h.b16 %v2624
    %v2696 = vunpack.c.l.b16 %v2625
    %v2697 = vunpack.c.h.b16 %v2625
    %v2698 = vunpack.c.l.b16 %v2626
    %v2699 = vunpack.c.h.b16 %v2626
    %v2700 = vunpack.c.l.b16 %v2627
    %v2701 = vunpack.c.h.b16 %v2627
    %v2702 = vunpack.c.l.b16 %v2628
    %v2703 = vunpack.c.h.b16 %v2628
    %v2704 = vunpack.c.l.b16 %v2629
    %v2705 = vunpack.c.h.b16 %v2629
    %v2706 = vunpack.c.l.b16 %v2630
    %v2707 = vunpack.c.h.b16 %v2630
    %v2708 = vunpack.c.l.b16 %v2631
    %v2709 = vunpack.c.h.b16 %v2631
    %v2710 = vunpack.c.l.b16 %v2632
    %v2711 = vunpack.c.h.b16 %v2632
    %v2712 = vunpack.c.l.b16 %v2633
    %v2713 = vunpack.c.h.b16 %v2633
    %v2714 = vunpack.c.l.b16 %v2634
    %v2715 = vunpack.c.h.b16 %v2634
    %v2716 = vunpack.c.l.b16 %v2635
    %v2717 = vunpack.c.h.b16 %v2635
    %v2718 = vunpack.c.l.b16 %v2636
    %v2719 = vunpack.c.h.b16 %v2636
    %v2720 = vunpack.c.l.b16 %v2637
    %v2721 = vunpack.c.h.b16 %v2637
    %v2722 = vunpack.c.l.b16 %v2638
    %v2723 = vunpack.c.h.b16 %v2638
    %v2724 = vunpack.c.l.b16 %v2639
    %v2725 = vunpack.c.h.b16 %v2639
    %v2726 = vunpack.c.l.b16 %v2640
    %v2727 = vunpack.c.h.b16 %v2640
    %v2728 = vunpack.c.l.b16 %v2641
    %v2729 = vunpack.c.h.b16 %v2641
    %v2730 = vunpack.c.l.b16 %v2642
    %v2731 = vunpack.c.h.b16 %v2642
    %v2732 = vunpack.c.l.b16 %v2643
    %v2733 = vunpack.c.h.b16 %v2643
    %v2734 = vunpack.c.l.b16 %v2644
    %v2735 = vunpack.c.h.b16 %v2644
    %v2736 = vunpack.c.l.b16 %v2645
    %v2737 = vunpack.c.h.b16 %v2645
    %v2738 = vunpack.c.l.b16 %v2646
    %v2739 = vunpack.c.h.b16 %v2646
    %v2740 = vunpack.c.l.b16 %v2647
    %v2741 = vunpack.c.h.b16 %v2647
    %v2742 = vunpack.c.l.b16 %v2648
    %v2743 = vunpack.c.h.b16 %v2648
    %v2744 = vunpack.c.l.b16 %v2649
    %v2745 = vunpack.c.h.b16 %v2649
    %v2746 = vpack.c.b16 %v2686, %v2682
    %v2747 = vpack.c.b16 %v2687, %v2683
    %v2748 = vpack.c.b16 %v2688, %v2684
    %v2749 = vpack.c.b16 %v2689, %v2685
    %v2750 = vpack.c.b16 %v2694, %v2690
    %v2751 = vpack.c.b16 %v2695, %v2691
    %v2752 = vpack.c.b16 %v2696, %v2692
    %v2753 = vpack.c.b16 %v2697, %v2693
    %v2754 = vpack.c.b16 %v2702, %v2698
    %v2755 = vpack.c.b16 %v2703, %v2699
    %v2756 = vpack.c.b16 %v2704, %v2700
    %v2757 = vpack.c.b16 %v2705, %v2701
    %v2758 = vpack.c.b16 %v2710, %v2706
    %v2759 = vpack.c.b16 %v2711, %v2707
    %v2760 = vpack.c.b16 %v2712, %v2708
    %v2761 = vpack.c.b16 %v2713, %v2709
    %v2762 = vpack.c.b16 %v2718, %v2714
    %v2763 = vpack.c.b16 %v2719, %v2715
    %v2764 = vpack.c.b16 %v2720, %v2716
    %v2765 = vpack.c.b16 %v2721, %v2717
    %v2766 = vpack.c.b16 %v2726, %v2722
    %v2767 = vpack.c.b16 %v2727, %v2723
    %v2768 = vpack.c.b16 %v2728, %v2724
    %v2769 = vpack.c.b16 %v2729, %v2725
    %v2770 = vpack.c.b16 %v2734, %v2730
    %v2771 = vpack.c.b16 %v2735, %v2731
    %v2772 = vpack.c.b16 %v2736, %v2732
    %v2773 = vpack.c.b16 %v2737, %v2733
    %v2774 = vpack.c.b16 %v2742, %v2738
    %v2775 = vpack.c.b16 %v2743, %v2739
    %v2776 = vpack.c.b16 %v2744, %v2740
    %v2777 = vpack.c.b16 %v2745, %v2741
    %2810 = vmatprep.subr.bf16.mxu0 %v2775
    %2811 = vmatpush1.bf16.msra.mxu0 %v2774
    %2812 = vmatprep.subr.bf16.mxu0 %v2771
    %2813 = vmatpush1.bf16.msra.mxu0 %v2770
    %2814 = vmatprep.subr.bf16.mxu0 %v2767
    %2815 = vmatpush1.bf16.msra.mxu0 %v2766
    %2816 = vmatprep.subr.bf16.mxu0 %v2763
    %2817 = vmatpush1.bf16.msra.mxu0 %v2762
    %2818 = vmatprep.subr.bf16.mxu0 %v2759
    %2819 = vmatpush1.bf16.msra.mxu0 %v2758
    %2820 = vmatprep.subr.bf16.mxu0 %v2755
    %2821 = vmatpush1.bf16.msra.mxu0 %v2754
    %2822 = vmatprep.subr.bf16.mxu0 %v2751
    %2823 = vmatpush1.bf16.msra.mxu0 %v2750
    %2824 = vmatprep.subr.bf16.mxu0 %v2747
    %2825 = vmatpush1.bf16.msra.mxu0 %v2746
    %2826 = vmatprep.subr.bf16.mxu0 0
    %2827 = vmatpush2.bf16.msra.mxu0 0
    %2828 = vmatprep.subr.bf16.mxu0 0
    %2829 = vmatpush2.bf16.msra.mxu0 0
    %2830 = vmatprep.subr.bf16.mxu0 0
    %2831 = vmatpush2.bf16.msra.mxu0 0
    %2832 = vmatprep.subr.bf16.mxu0 0
    %2833 = vmatpush2.bf16.msra.mxu0 0
    %2834 = vmatprep.subr.bf16.mxu0 0
    %2835 = vmatpush2.bf16.msra.mxu0 0
    %2836 = vmatprep.subr.bf16.mxu0 0
    %2837 = vmatpush2.bf16.msra.mxu0 0
    %2838 = vmatprep.subr.bf16.mxu0 0
    %2839 = vmatpush2.bf16.msra.mxu0 0
    %2840 = vmatprep.subr.bf16.mxu0 0
    %2841 = vmatpush2.bf16.msra.mxu0 0
    %2842 = vmatprep.mubr.bf16.mxu0 0
    %2843 = vmatmul.mubr.bf16.gmra.mxu0 %v2610
    %v2844 = vpop.f32.mrf.mxu0
    %v2845 = vadd.f32 0.0, %v2844
    %v2846 = vpop.f32.mrf.mxu0
    %v2847 = vadd.f32 0.0, %v2846
    %v2848 = vpop.f32.mrf.mxu0
    %v2849 = vpop.f32.mrf.mxu0
    %2850 = vdwg.mxu0
    %2851 = vmatprep.subr.bf16.mxu0 %v2777
    %2852 = vmatpush1.bf16.msra.mxu0 %v2776
    %2853 = vmatprep.subr.bf16.mxu0 %v2773
    %2854 = vmatpush1.bf16.msra.mxu0 %v2772
    %2855 = vmatprep.subr.bf16.mxu0 %v2769
    %2856 = vmatpush1.bf16.msra.mxu0 %v2768
    %2857 = vmatprep.subr.bf16.mxu0 %v2765
    %2858 = vmatpush1.bf16.msra.mxu0 %v2764
    %2859 = vmatprep.subr.bf16.mxu0 %v2761
    %2860 = vmatpush1.bf16.msra.mxu0 %v2760
    %2861 = vmatprep.subr.bf16.mxu0 %v2757
    %2862 = vmatpush1.bf16.msra.mxu0 %v2756
    %2863 = vmatprep.subr.bf16.mxu0 %v2753
    %2864 = vmatpush1.bf16.msra.mxu0 %v2752
    %2865 = vmatprep.subr.bf16.mxu0 %v2749
    %2866 = vmatpush1.bf16.msra.mxu0 %v2748
    %2867 = vmatprep.subr.bf16.mxu0 0
    %2868 = vmatpush2.bf16.msra.mxu0 0
    %2869 = vmatprep.subr.bf16.mxu0 0
    %2870 = vmatpush2.bf16.msra.mxu0 0
    %2871 = vmatprep.subr.bf16.mxu0 0
    %2872 = vmatpush2.bf16.msra.mxu0 0
    %2873 = vmatprep.subr.bf16.mxu0 0
    %2874 = vmatpush2.bf16.msra.mxu0 0
    %2875 = vmatprep.subr.bf16.mxu0 0
    %2876 = vmatpush2.bf16.msra.mxu0 0
    %2877 = vmatprep.subr.bf16.mxu0 0
    %2878 = vmatpush2.bf16.msra.mxu0 0
    %2879 = vmatprep.subr.bf16.mxu0 0
    %2880 = vmatpush2.bf16.msra.mxu0 0
    %2881 = vmatprep.subr.bf16.mxu0 0
    %2882 = vmatpush2.bf16.msra.mxu0 0
    %2883 = vmatprep.mubr.bf16.mxu0 0
    %2884 = vmatmul.mubr.bf16.gmra.mxu0 %v2610
    %v2885 = vpop.f32.mrf.mxu0
    %v2886 = vadd.f32 0.0, %v2885
    %v2887 = vpop.f32.mrf.mxu0
    %v2888 = vadd.f32 0.0, %v2887
    %v2889 = vpop.f32.mrf.mxu0
    %v2890 = vpop.f32.mrf.mxu0
    %2891 = vdwg.mxu0
    %v2892 = vadd.f32 %v2614, %v2845
    %v2893 = vadd.f32 %v2615, %v2847
    %v2894 = vadd.f32 %v2616, %v2886
    %v2895 = vadd.f32 %v2617, %v2888
    %v2896 = vmul.f32 %v2892, 0.5
    %v2897 = vtanh.pop %v2896
    %v2898 = vmul.f32 %v2897, 0.5
    %v2899 = vadd.f32 %v2898, 0.5
    %v2900 = vmul.f32 %v2893, 0.5
    %v2901 = vtanh.pop %v2900
    %v2902 = vmul.f32 %v2901, 0.5
    %v2903 = vadd.f32 %v2902, 0.5
    %v2904 = vtanh.pop %v2894
    %v2905 = vmul.f32 %v2895, 0.5
    %v2906 = vtanh.pop %v2905
    %v2907 = vmul.f32 %v2906, 0.5
    %v2908 = vadd.f32 %v2907, 0.5
    %v2909 = vmul.f32 %v2903, %v2607
    %v2910 = vmul.f32 %v2899, %v2904
    %v2911 = vadd.f32 %v2909, %v2910
    %v2912 = vtanh.pop %v2911
    %v2913 = vmul.f32 %v2908, %v2912
    %v2914 = vpack.c.bf16 %v2913, %v2913
    %s2915 = scalar_lea.vmem %s6, 28
    %2916 = vst [vmem:[%s2915] sm:$0xf] %v2914
    %2917 = vst [vmem:[#allocation2] sm:$0xff] %v2913
    %2918 = vst [vmem:[#allocation3] sm:$0xff] %v2911
    // Predicated region
    $region38: #{custom_lstm_forward.4} parent=1 // pred_check
      _
    $region39: #{custom_lstm_forward.4} parent=1 // pred_check_branch
      %2920 = sbr.rel (0) target = $region41
    $region40: #{custom_lstm_forward.4} parent=1 // pred_region
      _
    $region41: #{custom_lstm_forward.4} parent=1 // pred_fallthru
      _
    // Predicated region
    $region42: #{custom_lstm_forward.4} parent=1 // pred_check
      _
    $region43: #{custom_lstm_forward.4} parent=1 // pred_check_branch
      %2922 = sbr.rel (0) target = $region45
    $region44: #{custom_lstm_forward.4} parent=1 // pred_region
      _
    $region45: #{custom_lstm_forward.4} parent=1 // pred_fallthru
      _
    %2923 = vsyncpa [#allocation6], 1
    %2924 = vsyncpa [#allocation8], 1

// kernel: custom_lstm_forward.5
$region0: #{custom_lstm_forward.5}
  #allocation0 [shape = 'u32[]', space=smem, size = 0x4, offset = 0x4, fixed_abs, tag = 'smem constant byte address 0x4 - core index']
  #allocation1 [shape = 'u32[144,128]{1,0:T(1,128)}', space=vmem, size = 0x12000, scoped, tag = 'internal scratch']
  #allocation2 [shape = 'f32[8,128]{1,0:T(8,128)}', space=vmem, size = 0x1000, scoped, tag = 'scratch operand']
  #allocation3 [shape = 'f32[8,128]{1,0:T(8,128)}', space=vmem, size = 0x1000, scoped, tag = 'scratch operand']
  #allocation4 [shape = 'f32[8,8,512]{2,1,0:T(8,128)}', space=vmem, size = 0x20000, scoped, tag = 'scratch operand']
  %s0 = inlined_call_operand.vmem [shape: bf16[8,8,128], index: 0, kind: input, shape index: {}]
  %s1 = inlined_call_operand.vmem [shape: bf16[128,512], index: 1, kind: input, shape index: {}]
  %s2 = inlined_call_operand.vmem [shape: bf16[128,512], index: 2, kind: input, shape index: {}]
  %s3 = inlined_call_operand.vmem [shape: f32[1,512], index: 3, kind: input, shape index: {}]
  %s4 = inlined_call_operand.vmem [shape: f32[8,128], index: 4, kind: input, shape index: {}]
  %s5 = inlined_call_operand.vmem [shape: f32[8,128], index: 5, kind: input, shape index: {}]
  %s6 = inlined_call_operand.vmem [shape: f32[8,8,128], index: 6, kind: output, shape index: {}]
  %s7 = sld [smem:[#allocation0]]
  $region38: #{custom_lstm_forward.5} parent=0
    _
  %s9 = ssub.s32 1, %s7
  %s10 = scalar_select 0, %s9, %s7
  // Predicated region
  $region2: #{custom_lstm_forward.5} parent=0 // pred_check
    _
  $region3: #{custom_lstm_forward.5} parent=0 // pred_check_branch
    %12 = sbr.rel (0) target = $region5
  $region4: #{custom_lstm_forward.5} parent=0 // pred_region
    _
  $region5: #{custom_lstm_forward.5} parent=0 // pred_fallthru
    _
  // Predicated region
  $region6: #{custom_lstm_forward.5} parent=0 // pred_check
    _
  $region7: #{custom_lstm_forward.5} parent=0 // pred_check_branch
    %14 = sbr.rel (0) target = $region9
  $region8: #{custom_lstm_forward.5} parent=0 // pred_region
    _
  $region9: #{custom_lstm_forward.5} parent=0 // pred_fallthru
    _
  // Predicated region
  $region10: #{custom_lstm_forward.5} parent=0 // pred_check
    _
  $region11: #{custom_lstm_forward.5} parent=0 // pred_check_branch
    %16 = sbr.rel (0) target = $region13
  $region12: #{custom_lstm_forward.5} parent=0 // pred_region
    _
  $region13: #{custom_lstm_forward.5} parent=0 // pred_fallthru
    _
  // Predicated region
  $region14: #{custom_lstm_forward.5} parent=0 // pred_check
    _
  $region15: #{custom_lstm_forward.5} parent=0 // pred_check_branch
    %18 = sbr.rel (0) target = $region17
  $region16: #{custom_lstm_forward.5} parent=0 // pred_region
    _
  $region17: #{custom_lstm_forward.5} parent=0 // pred_fallthru
    _
  // Predicated region
  $region18: #{custom_lstm_forward.5} parent=0 // pred_check
    _
  $region19: #{custom_lstm_forward.5} parent=0 // pred_check_branch
    %20 = sbr.rel (0) target = $region21
  $region20: #{custom_lstm_forward.5} parent=0 // pred_region
    _
  $region21: #{custom_lstm_forward.5} parent=0 // pred_fallthru
    _
  // Predicated region
  $region22: #{custom_lstm_forward.5} parent=0 // pred_check
    _
  $region23: #{custom_lstm_forward.5} parent=0 // pred_check_branch
    %22 = sbr.rel (0) target = $region25
  $region24: #{custom_lstm_forward.5} parent=0 // pred_region
    _
  $region25: #{custom_lstm_forward.5} parent=0 // pred_fallthru
    _
  %p24 = scmp.eq.s32.totalorder 0, 0
  // Predicated region
  $region26: #{custom_lstm_forward.5} parent=0 // pred_check
    %p25 = pneg %p24
  $region27: #{custom_lstm_forward.5} parent=0 // pred_check_branch
    %27 = sbr.rel (%p25) target = $region29
  $region28: #{custom_lstm_forward.5} parent=0 // pred_region
    %v28 = vld [vmem:[%s4] sm:$0xff]
    %29 = vst [vmem:[#allocation2] sm:$0xff] %v28
    %v30 = vld [vmem:[%s5] sm:$0xff]
    %31 = vst [vmem:[#allocation3] sm:$0xff] %v30
  $region29: #{custom_lstm_forward.5} parent=0 // pred_fallthru
    _
  %v32 = vld [vmem:[%s0] sm:$0xf]
  %v33 = vld [vmem:[%s0 + $0x4] sm:$0xf]
  %v34 = vld [vmem:[%s0 + $0x8] sm:$0xf]
  %v35 = vld [vmem:[%s0 + $0xc] sm:$0xf]
  %v36 = vld [vmem:[%s0 + $0x10] sm:$0xf]
  %v37 = vld [vmem:[%s0 + $0x14] sm:$0xf]
  %v38 = vld [vmem:[%s0 + $0x18] sm:$0xf]
  %v39 = vld [vmem:[%s0 + $0x1c] sm:$0xf]
  %v40 = vld [vmem:[%s1] sm:$0xff]
  %v41 = vld [vmem:[%s1 + $0x8] sm:$0xff]
  %v42 = vld [vmem:[%s1 + $0x10] sm:$0xff]
  %v43 = vld [vmem:[%s1 + $0x18] sm:$0xff]
  %v44 = vld [vmem:[%s1 + $0x20] sm:$0xff]
  %v45 = vld [vmem:[%s1 + $0x28] sm:$0xff]
  %v46 = vld [vmem:[%s1 + $0x30] sm:$0xff]
  %v47 = vld [vmem:[%s1 + $0x38] sm:$0xff]
  %v48 = vld [vmem:[%s1 + $0x40] sm:$0xff]
  %v49 = vld [vmem:[%s1 + $0x48] sm:$0xff]
  %v50 = vld [vmem:[%s1 + $0x50] sm:$0xff]
  %v51 = vld [vmem:[%s1 + $0x58] sm:$0xff]
  %v52 = vld [vmem:[%s1 + $0x60] sm:$0xff]
  %v53 = vld [vmem:[%s1 + $0x68] sm:$0xff]
  %v54 = vld [vmem:[%s1 + $0x70] sm:$0xff]
  %v55 = vld [vmem:[%s1 + $0x78] sm:$0xff]
  %v56 = vld [vmem:[%s1 + $0x80] sm:$0xff]
  %v57 = vld [vmem:[%s1 + $0x88] sm:$0xff]
  %v58 = vld [vmem:[%s1 + $0x90] sm:$0xff]
  %v59 = vld [vmem:[%s1 + $0x98] sm:$0xff]
  %v60 = vld [vmem:[%s1 + $0xa0] sm:$0xff]
  %v61 = vld [vmem:[%s1 + $0xa8] sm:$0xff]
  %v62 = vld [vmem:[%s1 + $0xb0] sm:$0xff]
  %v63 = vld [vmem:[%s1 + $0xb8] sm:$0xff]
  %v64 = vld [vmem:[%s1 + $0xc0] sm:$0xff]
  %v65 = vld [vmem:[%s1 + $0xc8] sm:$0xff]
  %v66 = vld [vmem:[%s1 + $0xd0] sm:$0xff]
  %v67 = vld [vmem:[%s1 + $0xd8] sm:$0xff]
  %v68 = vld [vmem:[%s1 + $0xe0] sm:$0xff]
  %v69 = vld [vmem:[%s1 + $0xe8] sm:$0xff]
  %v70 = vld [vmem:[%s1 + $0xf0] sm:$0xff]
  %v71 = vld [vmem:[%s1 + $0xf8] sm:$0xff]
  %v72 = vld [vmem:[%s3] sm:$0xf]
  %v74 = vlaneseq
  %v75 = vshrl.u32 %v74, 7
  %v76 = vsub.s32 0, %v75
  %v77 = vrot.slane %v72, %v76
  %v78 = vlaneseq
  %v79 = vshrl.u32 %v78, 7
  %v80 = vsub.s32 1, %v79
  %v81 = vrot.slane %v72, %v80
  %v82 = vlaneseq
  %v83 = vshrl.u32 %v82, 7
  %v84 = vsub.s32 2, %v83
  %v85 = vrot.slane %v72, %v84
  %v86 = vlaneseq
  %v87 = vshrl.u32 %v86, 7
  %v88 = vsub.s32 3, %v87
  %v89 = vrot.slane %v72, %v88
  %v102 = vunpack.c.l.b16 %v32
  %v103 = vunpack.c.l.b16 %v33
  %v104 = vunpack.c.l.b16 %v34
  %v105 = vunpack.c.l.b16 %v35
  %v106 = vunpack.c.l.b16 %v36
  %v107 = vunpack.c.l.b16 %v37
  %v108 = vunpack.c.l.b16 %v38
  %v109 = vunpack.c.l.b16 %v39
  %v110 = vpack.c.b16 %v103, %v102
  %v111 = vpack.c.b16 %v105, %v104
  %v112 = vpack.c.b16 %v107, %v106
  %v113 = vpack.c.b16 %v109, %v108
  %v150 = vunpack.c.l.b16 %v40
  %v151 = vunpack.c.h.b16 %v40
  %v152 = vunpack.c.l.b16 %v41
  %v153 = vunpack.c.h.b16 %v41
  %v154 = vunpack.c.l.b16 %v42
  %v155 = vunpack.c.h.b16 %v42
  %v156 = vunpack.c.l.b16 %v43
  %v157 = vunpack.c.h.b16 %v43
  %v158 = vunpack.c.l.b16 %v44
  %v159 = vunpack.c.h.b16 %v44
  %v160 = vunpack.c.l.b16 %v45
  %v161 = vunpack.c.h.b16 %v45
  %v162 = vunpack.c.l.b16 %v46
  %v163 = vunpack.c.h.b16 %v46
  %v164 = vunpack.c.l.b16 %v47
  %v165 = vunpack.c.h.b16 %v47
  %v166 = vunpack.c.l.b16 %v48
  %v167 = vunpack.c.h.b16 %v48
  %v168 = vunpack.c.l.b16 %v49
  %v169 = vunpack.c.h.b16 %v49
  %v170 = vunpack.c.l.b16 %v50
  %v171 = vunpack.c.h.b16 %v50
  %v172 = vunpack.c.l.b16 %v51
  %v173 = vunpack.c.h.b16 %v51
  %v174 = vunpack.c.l.b16 %v52
  %v175 = vunpack.c.h.b16 %v52
  %v176 = vunpack.c.l.b16 %v53
  %v177 = vunpack.c.h.b16 %v53
  %v178 = vunpack.c.l.b16 %v54
  %v179 = vunpack.c.h.b16 %v54
  %v180 = vunpack.c.l.b16 %v55
  %v181 = vunpack.c.h.b16 %v55
  %v182 = vunpack.c.l.b16 %v56
  %v183 = vunpack.c.h.b16 %v56
  %v184 = vunpack.c.l.b16 %v57
  %v185 = vunpack.c.h.b16 %v57
  %v186 = vunpack.c.l.b16 %v58
  %v187 = vunpack.c.h.b16 %v58
  %v188 = vunpack.c.l.b16 %v59
  %v189 = vunpack.c.h.b16 %v59
  %v190 = vunpack.c.l.b16 %v60
  %v191 = vunpack.c.h.b16 %v60
  %v192 = vunpack.c.l.b16 %v61
  %v193 = vunpack.c.h.b16 %v61
  %v194 = vunpack.c.l.b16 %v62
  %v195 = vunpack.c.h.b16 %v62
  %v196 = vunpack.c.l.b16 %v63
  %v197 = vunpack.c.h.b16 %v63
  %v198 = vunpack.c.l.b16 %v64
  %v199 = vunpack.c.h.b16 %v64
  %v200 = vunpack.c.l.b16 %v65
  %v201 = vunpack.c.h.b16 %v65
  %v202 = vunpack.c.l.b16 %v66
  %v203 = vunpack.c.h.b16 %v66
  %v204 = vunpack.c.l.b16 %v67
  %v205 = vunpack.c.h.b16 %v67
  %v206 = vunpack.c.l.b16 %v68
  %v207 = vunpack.c.h.b16 %v68
  %v208 = vunpack.c.l.b16 %v69
  %v209 = vunpack.c.h.b16 %v69
  %v210 = vunpack.c.l.b16 %v70
  %v211 = vunpack.c.h.b16 %v70
  %v212 = vunpack.c.l.b16 %v71
  %v213 = vunpack.c.h.b16 %v71
  %v214 = vpack.c.b16 %v154, %v150
  %v215 = vpack.c.b16 %v155, %v151
  %v216 = vpack.c.b16 %v156, %v152
  %v217 = vpack.c.b16 %v157, %v153
  %v218 = vpack.c.b16 %v162, %v158
  %v219 = vpack.c.b16 %v163, %v159
  %v220 = vpack.c.b16 %v164, %v160
  %v221 = vpack.c.b16 %v165, %v161
  %v222 = vpack.c.b16 %v170, %v166
  %v223 = vpack.c.b16 %v171, %v167
  %v224 = vpack.c.b16 %v172, %v168
  %v225 = vpack.c.b16 %v173, %v169
  %v226 = vpack.c.b16 %v178, %v174
  %v227 = vpack.c.b16 %v179, %v175
  %v228 = vpack.c.b16 %v180, %v176
  %v229 = vpack.c.b16 %v181, %v177
  %v230 = vpack.c.b16 %v186, %v182
  %v231 = vpack.c.b16 %v187, %v183
  %v232 = vpack.c.b16 %v188, %v184
  %v233 = vpack.c.b16 %v189, %v185
  %v234 = vpack.c.b16 %v194, %v190
  %v235 = vpack.c.b16 %v195, %v191
  %v236 = vpack.c.b16 %v196, %v192
  %v237 = vpack.c.b16 %v197, %v193
  %v238 = vpack.c.b16 %v202, %v198
  %v239 = vpack.c.b16 %v203, %v199
  %v240 = vpack.c.b16 %v204, %v200
  %v241 = vpack.c.b16 %v205, %v201
  %v242 = vpack.c.b16 %v210, %v206
  %v243 = vpack.c.b16 %v211, %v207
  %v244 = vpack.c.b16 %v212, %v208
  %v245 = vpack.c.b16 %v213, %v209
  %278 = vmatprep.subr.bf16.mxu0 %v243
  %279 = vmatpush1.bf16.msra.mxu0 %v242
  %280 = vmatprep.subr.bf16.mxu0 %v239
  %281 = vmatpush1.bf16.msra.mxu0 %v238
  %282 = vmatprep.subr.bf16.mxu0 %v235
  %283 = vmatpush1.bf16.msra.mxu0 %v234
  %284 = vmatprep.subr.bf16.mxu0 %v231
  %285 = vmatpush1.bf16.msra.mxu0 %v230
  %286 = vmatprep.subr.bf16.mxu0 %v227
  %287 = vmatpush1.bf16.msra.mxu0 %v226
  %288 = vmatprep.subr.bf16.mxu0 %v223
  %289 = vmatpush1.bf16.msra.mxu0 %v222
  %290 = vmatprep.subr.bf16.mxu0 %v219
  %291 = vmatpush1.bf16.msra.mxu0 %v218
  %292 = vmatprep.subr.bf16.mxu0 %v215
  %293 = vmatpush1.bf16.msra.mxu0 %v214
  %294 = vmatprep.subr.bf16.mxu0 0
  %295 = vmatpush2.bf16.msra.mxu0 0
  %296 = vmatprep.subr.bf16.mxu0 0
  %297 = vmatpush2.bf16.msra.mxu0 0
  %298 = vmatprep.subr.bf16.mxu0 0
  %299 = vmatpush2.bf16.msra.mxu0 0
  %300 = vmatprep.subr.bf16.mxu0 0
  %301 = vmatpush2.bf16.msra.mxu0 0
  %302 = vmatprep.subr.bf16.mxu0 0
  %303 = vmatpush2.bf16.msra.mxu0 0
  %304 = vmatprep.subr.bf16.mxu0 0
  %305 = vmatpush2.bf16.msra.mxu0 0
  %306 = vmatprep.subr.bf16.mxu0 0
  %307 = vmatpush2.bf16.msra.mxu0 0
  %308 = vmatprep.subr.bf16.mxu0 0
  %309 = vmatpush2.bf16.msra.mxu0 0
  %310 = vmatprep.mubr.bf16.mxu0 0
  %311 = vmatmul.mubr.bf16.gmra.mxu0 %v110
  %v312 = vpop.f32.mrf.mxu0
  %v313 = vadd.f32 %v77, %v312
  %v314 = vpop.f32.mrf.mxu0
  %v315 = vadd.f32 %v81, %v314
  %v316 = vpop.f32.mrf.mxu0
  %v317 = vadd.f32 %v77, %v316
  %v318 = vpop.f32.mrf.mxu0
  %v319 = vadd.f32 %v81, %v318
  %320 = vmatprep.mubr.bf16.mxu0 0
  %321 = vmatmul.mubr.bf16.gmra.mxu0 %v111
  %v322 = vpop.f32.mrf.mxu0
  %v323 = vadd.f32 %v77, %v322
  %v324 = vpop.f32.mrf.mxu0
  %v325 = vadd.f32 %v81, %v324
  %v326 = vpop.f32.mrf.mxu0
  %v327 = vadd.f32 %v77, %v326
  %v328 = vpop.f32.mrf.mxu0
  %v329 = vadd.f32 %v81, %v328
  %330 = vmatprep.mubr.bf16.mxu0 0
  %331 = vmatmul.mubr.bf16.gmra.mxu0 %v112
  %v332 = vpop.f32.mrf.mxu0
  %v333 = vadd.f32 %v77, %v332
  %v334 = vpop.f32.mrf.mxu0
  %v335 = vadd.f32 %v81, %v334
  %v336 = vpop.f32.mrf.mxu0
  %v337 = vadd.f32 %v77, %v336
  %v338 = vpop.f32.mrf.mxu0
  %v339 = vadd.f32 %v81, %v338
  %340 = vmatprep.mubr.bf16.mxu0 0
  %341 = vmatmul.mubr.bf16.gmra.mxu0 %v113
  %v342 = vpop.f32.mrf.mxu0
  %v343 = vadd.f32 %v77, %v342
  %v344 = vpop.f32.mrf.mxu0
  %v345 = vadd.f32 %v81, %v344
  %v346 = vpop.f32.mrf.mxu0
  %v347 = vadd.f32 %v77, %v346
  %v348 = vpop.f32.mrf.mxu0
  %v349 = vadd.f32 %v81, %v348
  %350 = vdwg.mxu0
  %351 = vmatprep.subr.bf16.mxu0 %v245
  %352 = vmatpush1.bf16.msra.mxu0 %v244
  %353 = vmatprep.subr.bf16.mxu0 %v241
  %354 = vmatpush1.bf16.msra.mxu0 %v240
  %355 = vmatprep.subr.bf16.mxu0 %v237
  %356 = vmatpush1.bf16.msra.mxu0 %v236
  %357 = vmatprep.subr.bf16.mxu0 %v233
  %358 = vmatpush1.bf16.msra.mxu0 %v232
  %359 = vmatprep.subr.bf16.mxu0 %v229
  %360 = vmatpush1.bf16.msra.mxu0 %v228
  %361 = vmatprep.subr.bf16.mxu0 %v225
  %362 = vmatpush1.bf16.msra.mxu0 %v224
  %363 = vmatprep.subr.bf16.mxu0 %v221
  %364 = vmatpush1.bf16.msra.mxu0 %v220
  %365 = vmatprep.subr.bf16.mxu0 %v217
  %366 = vmatpush1.bf16.msra.mxu0 %v216
  %367 = vmatprep.subr.bf16.mxu0 0
  %368 = vmatpush2.bf16.msra.mxu0 0
  %369 = vmatprep.subr.bf16.mxu0 0
  %370 = vmatpush2.bf16.msra.mxu0 0
  %371 = vmatprep.subr.bf16.mxu0 0
  %372 = vmatpush2.bf16.msra.mxu0 0
  %373 = vmatprep.subr.bf16.mxu0 0
  %374 = vmatpush2.bf16.msra.mxu0 0
  %375 = vmatprep.subr.bf16.mxu0 0
  %376 = vmatpush2.bf16.msra.mxu0 0
  %377 = vmatprep.subr.bf16.mxu0 0
  %378 = vmatpush2.bf16.msra.mxu0 0
  %379 = vmatprep.subr.bf16.mxu0 0
  %380 = vmatpush2.bf16.msra.mxu0 0
  %381 = vmatprep.subr.bf16.mxu0 0
  %382 = vmatpush2.bf16.msra.mxu0 0
  %383 = vmatprep.mubr.bf16.mxu0 0
  %384 = vmatmul.mubr.bf16.gmra.mxu0 %v110
  %v385 = vpop.f32.mrf.mxu0
  %v386 = vadd.f32 %v85, %v385
  %v387 = vpop.f32.mrf.mxu0
  %v388 = vadd.f32 %v89, %v387
  %v389 = vpop.f32.mrf.mxu0
  %v390 = vadd.f32 %v85, %v389
  %v391 = vpop.f32.mrf.mxu0
  %v392 = vadd.f32 %v89, %v391
  %393 = vmatprep.mubr.bf16.mxu0 0
  %394 = vmatmul.mubr.bf16.gmra.mxu0 %v111
  %v395 = vpop.f32.mrf.mxu0
  %v396 = vadd.f32 %v85, %v395
  %v397 = vpop.f32.mrf.mxu0
  %v398 = vadd.f32 %v89, %v397
  %v399 = vpop.f32.mrf.mxu0
  %v400 = vadd.f32 %v85, %v399
  %v401 = vpop.f32.mrf.mxu0
  %v402 = vadd.f32 %v89, %v401
  %403 = vmatprep.mubr.bf16.mxu0 0
  %404 = vmatmul.mubr.bf16.gmra.mxu0 %v112
  %v405 = vpop.f32.mrf.mxu0
  %v406 = vadd.f32 %v85, %v405
  %v407 = vpop.f32.mrf.mxu0
  %v408 = vadd.f32 %v89, %v407
  %v409 = vpop.f32.mrf.mxu0
  %v410 = vadd.f32 %v85, %v409
  %v411 = vpop.f32.mrf.mxu0
  %v412 = vadd.f32 %v89, %v411
  %413 = vmatprep.mubr.bf16.mxu0 0
  %414 = vmatmul.mubr.bf16.gmra.mxu0 %v113
  %v415 = vpop.f32.mrf.mxu0
  %v416 = vadd.f32 %v85, %v415
  %v417 = vpop.f32.mrf.mxu0
  %v418 = vadd.f32 %v89, %v417
  %v419 = vpop.f32.mrf.mxu0
  %v420 = vadd.f32 %v85, %v419
  %v421 = vpop.f32.mrf.mxu0
  %v422 = vadd.f32 %v89, %v421
  %423 = vdwg.mxu0
  %424 = vst [vmem:[#allocation4] sm:$0xff] %v313
  %425 = vst [vmem:[#allocation4 + $0x8] sm:$0xff] %v315
  %426 = vst [vmem:[#allocation4 + $0x10] sm:$0xff] %v386
  %427 = vst [vmem:[#allocation4 + $0x18] sm:$0xff] %v388
  %428 = vst [vmem:[#allocation4 + $0x20] sm:$0xff] %v317
  %429 = vst [vmem:[#allocation4 + $0x28] sm:$0xff] %v319
  %430 = vst [vmem:[#allocation4 + $0x30] sm:$0xff] %v390
  %431 = vst [vmem:[#allocation4 + $0x38] sm:$0xff] %v392
  %432 = vst [vmem:[#allocation4 + $0x40] sm:$0xff] %v323
  %433 = vst [vmem:[#allocation4 + $0x48] sm:$0xff] %v325
  %434 = vst [vmem:[#allocation4 + $0x50] sm:$0xff] %v396
  %435 = vst [vmem:[#allocation4 + $0x58] sm:$0xff] %v398
  %436 = vst [vmem:[#allocation4 + $0x60] sm:$0xff] %v327
  %437 = vst [vmem:[#allocation4 + $0x68] sm:$0xff] %v329
  %438 = vst [vmem:[#allocation4 + $0x70] sm:$0xff] %v400
  %439 = vst [vmem:[#allocation4 + $0x78] sm:$0xff] %v402
  %440 = vst [vmem:[#allocation4 + $0x80] sm:$0xff] %v333
  %441 = vst [vmem:[#allocation4 + $0x88] sm:$0xff] %v335
  %442 = vst [vmem:[#allocation4 + $0x90] sm:$0xff] %v406
  %443 = vst [vmem:[#allocation4 + $0x98] sm:$0xff] %v408
  %444 = vst [vmem:[#allocation4 + $0xa0] sm:$0xff] %v337
  %445 = vst [vmem:[#allocation4 + $0xa8] sm:$0xff] %v339
  %446 = vst [vmem:[#allocation4 + $0xb0] sm:$0xff] %v410
  %447 = vst [vmem:[#allocation4 + $0xb8] sm:$0xff] %v412
  %448 = vst [vmem:[#allocation4 + $0xc0] sm:$0xff] %v343
  %449 = vst [vmem:[#allocation4 + $0xc8] sm:$0xff] %v345
  %450 = vst [vmem:[#allocation4 + $0xd0] sm:$0xff] %v416
  %451 = vst [vmem:[#allocation4 + $0xd8] sm:$0xff] %v418
  %452 = vst [vmem:[#allocation4 + $0xe0] sm:$0xff] %v347
  %453 = vst [vmem:[#allocation4 + $0xe8] sm:$0xff] %v349
  %454 = vst [vmem:[#allocation4 + $0xf0] sm:$0xff] %v420
  %455 = vst [vmem:[#allocation4 + $0xf8] sm:$0xff] %v422
  %v456 = vld [vmem:[#allocation2] sm:$0xff]
  %v457 = vld [vmem:[#allocation3] sm:$0xff]
  %v458 = vld [vmem:[#allocation4] sm:$0xff]
  %v459 = vld [vmem:[#allocation4 + $0x8] sm:$0xff]
  %v460 = vld [vmem:[#allocation4 + $0x10] sm:$0xff]
  %v461 = vld [vmem:[#allocation4 + $0x18] sm:$0xff]
  %v462 = vpack.c.bf16 %v456, %v456
  %v463 = vld [vmem:[%s2] sm:$0xff]
  %v464 = vld [vmem:[%s2 + $0x8] sm:$0xff]
  %v465 = vld [vmem:[%s2 + $0x10] sm:$0xff]
  %v466 = vld [vmem:[%s2 + $0x18] sm:$0xff]
  %v467 = vld [vmem:[%s2 + $0x20] sm:$0xff]
  %v468 = vld [vmem:[%s2 + $0x28] sm:$0xff]
  %v469 = vld [vmem:[%s2 + $0x30] sm:$0xff]
  %v470 = vld [vmem:[%s2 + $0x38] sm:$0xff]
  %v471 = vld [vmem:[%s2 + $0x40] sm:$0xff]
  %v472 = vld [vmem:[%s2 + $0x48] sm:$0xff]
  %v473 = vld [vmem:[%s2 + $0x50] sm:$0xff]
  %v474 = vld [vmem:[%s2 + $0x58] sm:$0xff]
  %v475 = vld [vmem:[%s2 + $0x60] sm:$0xff]
  %v476 = vld [vmem:[%s2 + $0x68] sm:$0xff]
  %v477 = vld [vmem:[%s2 + $0x70] sm:$0xff]
  %v478 = vld [vmem:[%s2 + $0x78] sm:$0xff]
  %v479 = vld [vmem:[%s2 + $0x80] sm:$0xff]
  %v480 = vld [vmem:[%s2 + $0x88] sm:$0xff]
  %v481 = vld [vmem:[%s2 + $0x90] sm:$0xff]
  %v482 = vld [vmem:[%s2 + $0x98] sm:$0xff]
  %v483 = vld [vmem:[%s2 + $0xa0] sm:$0xff]
  %v484 = vld [vmem:[%s2 + $0xa8] sm:$0xff]
  %v485 = vld [vmem:[%s2 + $0xb0] sm:$0xff]
  %v486 = vld [vmem:[%s2 + $0xb8] sm:$0xff]
  %v487 = vld [vmem:[%s2 + $0xc0] sm:$0xff]
  %v488 = vld [vmem:[%s2 + $0xc8] sm:$0xff]
  %v489 = vld [vmem:[%s2 + $0xd0] sm:$0xff]
  %v490 = vld [vmem:[%s2 + $0xd8] sm:$0xff]
  %v491 = vld [vmem:[%s2 + $0xe0] sm:$0xff]
  %v492 = vld [vmem:[%s2 + $0xe8] sm:$0xff]
  %v493 = vld [vmem:[%s2 + $0xf0] sm:$0xff]
  %v494 = vld [vmem:[%s2 + $0xf8] sm:$0xff]
  %v527 = vunpack.c.l.b16 %v463
  %v528 = vunpack.c.h.b16 %v463
  %v529 = vunpack.c.l.b16 %v464
  %v530 = vunpack.c.h.b16 %v464
  %v531 = vunpack.c.l.b16 %v465
  %v532 = vunpack.c.h.b16 %v465
  %v533 = vunpack.c.l.b16 %v466
  %v534 = vunpack.c.h.b16 %v466
  %v535 = vunpack.c.l.b16 %v467
  %v536 = vunpack.c.h.b16 %v467
  %v537 = vunpack.c.l.b16 %v468
  %v538 = vunpack.c.h.b16 %v468
  %v539 = vunpack.c.l.b16 %v469
  %v540 = vunpack.c.h.b16 %v469
  %v541 = vunpack.c.l.b16 %v470
  %v542 = vunpack.c.h.b16 %v470
  %v543 = vunpack.c.l.b16 %v471
  %v544 = vunpack.c.h.b16 %v471
  %v545 = vunpack.c.l.b16 %v472
  %v546 = vunpack.c.h.b16 %v472
  %v547 = vunpack.c.l.b16 %v473
  %v548 = vunpack.c.h.b16 %v473
  %v549 = vunpack.c.l.b16 %v474
  %v550 = vunpack.c.h.b16 %v474
  %v551 = vunpack.c.l.b16 %v475
  %v552 = vunpack.c.h.b16 %v475
  %v553 = vunpack.c.l.b16 %v476
  %v554 = vunpack.c.h.b16 %v476
  %v555 = vunpack.c.l.b16 %v477
  %v556 = vunpack.c.h.b16 %v477
  %v557 = vunpack.c.l.b16 %v478
  %v558 = vunpack.c.h.b16 %v478
  %v559 = vunpack.c.l.b16 %v479
  %v560 = vunpack.c.h.b16 %v479
  %v561 = vunpack.c.l.b16 %v480
  %v562 = vunpack.c.h.b16 %v480
  %v563 = vunpack.c.l.b16 %v481
  %v564 = vunpack.c.h.b16 %v481
  %v565 = vunpack.c.l.b16 %v482
  %v566 = vunpack.c.h.b16 %v482
  %v567 = vunpack.c.l.b16 %v483
  %v568 = vunpack.c.h.b16 %v483
  %v569 = vunpack.c.l.b16 %v484
  %v570 = vunpack.c.h.b16 %v484
  %v571 = vunpack.c.l.b16 %v485
  %v572 = vunpack.c.h.b16 %v485
  %v573 = vunpack.c.l.b16 %v486
  %v574 = vunpack.c.h.b16 %v486
  %v575 = vunpack.c.l.b16 %v487
  %v576 = vunpack.c.h.b16 %v487
  %v577 = vunpack.c.l.b16 %v488
  %v578 = vunpack.c.h.b16 %v488
  %v579 = vunpack.c.l.b16 %v489
  %v580 = vunpack.c.h.b16 %v489
  %v581 = vunpack.c.l.b16 %v490
  %v582 = vunpack.c.h.b16 %v490
  %v583 = vunpack.c.l.b16 %v491
  %v584 = vunpack.c.h.b16 %v491
  %v585 = vunpack.c.l.b16 %v492
  %v586 = vunpack.c.h.b16 %v492
  %v587 = vunpack.c.l.b16 %v493
  %v588 = vunpack.c.h.b16 %v493
  %v589 = vunpack.c.l.b16 %v494
  %v590 = vunpack.c.h.b16 %v494
  %v591 = vpack.c.b16 %v531, %v527
  %v592 = vpack.c.b16 %v532, %v528
  %v593 = vpack.c.b16 %v533, %v529
  %v594 = vpack.c.b16 %v534, %v530
  %v595 = vpack.c.b16 %v539, %v535
  %v596 = vpack.c.b16 %v540, %v536
  %v597 = vpack.c.b16 %v541, %v537
  %v598 = vpack.c.b16 %v542, %v538
  %v599 = vpack.c.b16 %v547, %v543
  %v600 = vpack.c.b16 %v548, %v544
  %v601 = vpack.c.b16 %v549, %v545
  %v602 = vpack.c.b16 %v550, %v546
  %v603 = vpack.c.b16 %v555, %v551
  %v604 = vpack.c.b16 %v556, %v552
  %v605 = vpack.c.b16 %v557, %v553
  %v606 = vpack.c.b16 %v558, %v554
  %v607 = vpack.c.b16 %v563, %v559
  %v608 = vpack.c.b16 %v564, %v560
  %v609 = vpack.c.b16 %v565, %v561
  %v610 = vpack.c.b16 %v566, %v562
  %v611 = vpack.c.b16 %v571, %v567
  %v612 = vpack.c.b16 %v572, %v568
  %v613 = vpack.c.b16 %v573, %v569
  %v614 = vpack.c.b16 %v574, %v570
  %v615 = vpack.c.b16 %v579, %v575
  %v616 = vpack.c.b16 %v580, %v576
  %v617 = vpack.c.b16 %v581, %v577
  %v618 = vpack.c.b16 %v582, %v578
  %v619 = vpack.c.b16 %v587, %v583
  %v620 = vpack.c.b16 %v588, %v584
  %v621 = vpack.c.b16 %v589, %v585
  %v622 = vpack.c.b16 %v590, %v586
  %655 = vmatprep.subr.bf16.mxu0 %v620
  %656 = vmatpush1.bf16.msra.mxu0 %v619
  %657 = vmatprep.subr.bf16.mxu0 %v616
  %658 = vmatpush1.bf16.msra.mxu0 %v615
  %659 = vmatprep.subr.bf16.mxu0 %v612
  %660 = vmatpush1.bf16.msra.mxu0 %v611
  %661 = vmatprep.subr.bf16.mxu0 %v608
  %662 = vmatpush1.bf16.msra.mxu0 %v607
  %663 = vmatprep.subr.bf16.mxu0 %v604
  %664 = vmatpush1.bf16.msra.mxu0 %v603
  %665 = vmatprep.subr.bf16.mxu0 %v600
  %666 = vmatpush1.bf16.msra.mxu0 %v599
  %667 = vmatprep.subr.bf16.mxu0 %v596
  %668 = vmatpush1.bf16.msra.mxu0 %v595
  %669 = vmatprep.subr.bf16.mxu0 %v592
  %670 = vmatpush1.bf16.msra.mxu0 %v591
  %671 = vmatprep.subr.bf16.mxu0 0
  %672 = vmatpush2.bf16.msra.mxu0 0
  %673 = vmatprep.subr.bf16.mxu0 0
  %674 = vmatpush2.bf16.msra.mxu0 0
  %675 = vmatprep.subr.bf16.mxu0 0
  %676 = vmatpush2.bf16.msra.mxu0 0
  %677 = vmatprep.subr.bf16.mxu0 0
  %678 = vmatpush2.bf16.msra.mxu0 0
  %679 = vmatprep.subr.bf16.mxu0 0
  %680 = vmatpush2.bf16.msra.mxu0 0
  %681 = vmatprep.subr.bf16.mxu0 0
  %682 = vmatpush2.bf16.msra.mxu0 0
  %683 = vmatprep.subr.bf16.mxu0 0
  %684 = vmatpush2.bf16.msra.mxu0 0
  %685 = vmatprep.subr.bf16.mxu0 0
  %686 = vmatpush2.bf16.msra.mxu0 0
  %687 = vmatprep.mubr.bf16.mxu0 0
  %688 = vmatmul.mubr.bf16.gmra.mxu0 %v462
  %v689 = vpop.f32.mrf.mxu0
  %v690 = vadd.f32 0.0, %v689
  %v691 = vpop.f32.mrf.mxu0
  %v692 = vadd.f32 0.0, %v691
  %v693 = vpop.f32.mrf.mxu0
  %v694 = vpop.f32.mrf.mxu0
  %695 = vdwg.mxu0
  %696 = vmatprep.subr.bf16.mxu0 %v622
  %697 = vmatpush1.bf16.msra.mxu0 %v621
  %698 = vmatprep.subr.bf16.mxu0 %v618
  %699 = vmatpush1.bf16.msra.mxu0 %v617
  %700 = vmatprep.subr.bf16.mxu0 %v614
  %701 = vmatpush1.bf16.msra.mxu0 %v613
  %702 = vmatprep.subr.bf16.mxu0 %v610
  %703 = vmatpush1.bf16.msra.mxu0 %v609
  %704 = vmatprep.subr.bf16.mxu0 %v606
  %705 = vmatpush1.bf16.msra.mxu0 %v605
  %706 = vmatprep.subr.bf16.mxu0 %v602
  %707 = vmatpush1.bf16.msra.mxu0 %v601
  %708 = vmatprep.subr.bf16.mxu0 %v598
  %709 = vmatpush1.bf16.msra.mxu0 %v597
  %710 = vmatprep.subr.bf16.mxu0 %v594
  %711 = vmatpush1.bf16.msra.mxu0 %v593
  %712 = vmatprep.subr.bf16.mxu0 0
  %713 = vmatpush2.bf16.msra.mxu0 0
  %714 = vmatprep.subr.bf16.mxu0 0
  %715 = vmatpush2.bf16.msra.mxu0 0
  %716 = vmatprep.subr.bf16.mxu0 0
  %717 = vmatpush2.bf16.msra.mxu0 0
  %718 = vmatprep.subr.bf16.mxu0 0
  %719 = vmatpush2.bf16.msra.mxu0 0
  %720 = vmatprep.subr.bf16.mxu0 0
  %721 = vmatpush2.bf16.msra.mxu0 0
  %722 = vmatprep.subr.bf16.mxu0 0
  %723 = vmatpush2.bf16.msra.mxu0 0
  %724 = vmatprep.subr.bf16.mxu0 0
  %725 = vmatpush2.bf16.msra.mxu0 0
  %726 = vmatprep.subr.bf16.mxu0 0
  %727 = vmatpush2.bf16.msra.mxu0 0
  %728 = vmatprep.mubr.bf16.mxu0 0
  %729 = vmatmul.mubr.bf16.gmra.mxu0 %v462
  %v730 = vpop.f32.mrf.mxu0
  %v731 = vadd.f32 0.0, %v730
  %v732 = vpop.f32.mrf.mxu0
  %v733 = vadd.f32 0.0, %v732
  %v734 = vpop.f32.mrf.mxu0
  %v735 = vpop.f32.mrf.mxu0
  %736 = vdwg.mxu0
  %v737 = vadd.f32 %v458, %v690
  %v738 = vadd.f32 %v459, %v692
  %v739 = vadd.f32 %v460, %v731
  %v740 = vadd.f32 %v461, %v733
  %v741 = vmul.f32 %v737, 0.5
  %v742 = vtanh.pop %v741
  %v743 = vmul.f32 %v742, 0.5
  %v744 = vadd.f32 %v743, 0.5
  %v745 = vmul.f32 %v738, 0.5
  %v746 = vtanh.pop %v745
  %v747 = vmul.f32 %v746, 0.5
  %v748 = vadd.f32 %v747, 0.5
  %v749 = vtanh.pop %v739
  %v750 = vmul.f32 %v740, 0.5
  %v751 = vtanh.pop %v750
  %v752 = vmul.f32 %v751, 0.5
  %v753 = vadd.f32 %v752, 0.5
  %v754 = vmul.f32 %v748, %v457
  %v755 = vmul.f32 %v744, %v749
  %v756 = vadd.f32 %v754, %v755
  %v757 = vtanh.pop %v756
  %v758 = vmul.f32 %v753, %v757
  %759 = vst [vmem:[%s6] sm:$0xff] %v758
  %s760 = scalar_lea.vmem [#allocation4], 32
  %v761 = vld [vmem:[%s760] sm:$0xff]
  %v762 = vld [vmem:[%s760 + $0x8] sm:$0xff]
  %v763 = vld [vmem:[%s760 + $0x10] sm:$0xff]
  %v764 = vld [vmem:[%s760 + $0x18] sm:$0xff]
  %v765 = vpack.c.bf16 %v758, %v758
  %v766 = vld [vmem:[%s2] sm:$0xff]
  %v767 = vld [vmem:[%s2 + $0x8] sm:$0xff]
  %v768 = vld [vmem:[%s2 + $0x10] sm:$0xff]
  %v769 = vld [vmem:[%s2 + $0x18] sm:$0xff]
  %v770 = vld [vmem:[%s2 + $0x20] sm:$0xff]
  %v771 = vld [vmem:[%s2 + $0x28] sm:$0xff]
  %v772 = vld [vmem:[%s2 + $0x30] sm:$0xff]
  %v773 = vld [vmem:[%s2 + $0x38] sm:$0xff]
  %v774 = vld [vmem:[%s2 + $0x40] sm:$0xff]
  %v775 = vld [vmem:[%s2 + $0x48] sm:$0xff]
  %v776 = vld [vmem:[%s2 + $0x50] sm:$0xff]
  %v777 = vld [vmem:[%s2 + $0x58] sm:$0xff]
  %v778 = vld [vmem:[%s2 + $0x60] sm:$0xff]
  %v779 = vld [vmem:[%s2 + $0x68] sm:$0xff]
  %v780 = vld [vmem:[%s2 + $0x70] sm:$0xff]
  %v781 = vld [vmem:[%s2 + $0x78] sm:$0xff]
  %v782 = vld [vmem:[%s2 + $0x80] sm:$0xff]
  %v783 = vld [vmem:[%s2 + $0x88] sm:$0xff]
  %v784 = vld [vmem:[%s2 + $0x90] sm:$0xff]
  %v785 = vld [vmem:[%s2 + $0x98] sm:$0xff]
  %v786 = vld [vmem:[%s2 + $0xa0] sm:$0xff]
  %v787 = vld [vmem:[%s2 + $0xa8] sm:$0xff]
  %v788 = vld [vmem:[%s2 + $0xb0] sm:$0xff]
  %v789 = vld [vmem:[%s2 + $0xb8] sm:$0xff]
  %v790 = vld [vmem:[%s2 + $0xc0] sm:$0xff]
  %v791 = vld [vmem:[%s2 + $0xc8] sm:$0xff]
  %v792 = vld [vmem:[%s2 + $0xd0] sm:$0xff]
  %v793 = vld [vmem:[%s2 + $0xd8] sm:$0xff]
  %v794 = vld [vmem:[%s2 + $0xe0] sm:$0xff]
  %v795 = vld [vmem:[%s2 + $0xe8] sm:$0xff]
  %v796 = vld [vmem:[%s2 + $0xf0] sm:$0xff]
  %v797 = vld [vmem:[%s2 + $0xf8] sm:$0xff]
  %v830 = vunpack.c.l.b16 %v766
  %v831 = vunpack.c.h.b16 %v766
  %v832 = vunpack.c.l.b16 %v767
  %v833 = vunpack.c.h.b16 %v767
  %v834 = vunpack.c.l.b16 %v768
  %v835 = vunpack.c.h.b16 %v768
  %v836 = vunpack.c.l.b16 %v769
  %v837 = vunpack.c.h.b16 %v769
  %v838 = vunpack.c.l.b16 %v770
  %v839 = vunpack.c.h.b16 %v770
  %v840 = vunpack.c.l.b16 %v771
  %v841 = vunpack.c.h.b16 %v771
  %v842 = vunpack.c.l.b16 %v772
  %v843 = vunpack.c.h.b16 %v772
  %v844 = vunpack.c.l.b16 %v773
  %v845 = vunpack.c.h.b16 %v773
  %v846 = vunpack.c.l.b16 %v774
  %v847 = vunpack.c.h.b16 %v774
  %v848 = vunpack.c.l.b16 %v775
  %v849 = vunpack.c.h.b16 %v775
  %v850 = vunpack.c.l.b16 %v776
  %v851 = vunpack.c.h.b16 %v776
  %v852 = vunpack.c.l.b16 %v777
  %v853 = vunpack.c.h.b16 %v777
  %v854 = vunpack.c.l.b16 %v778
  %v855 = vunpack.c.h.b16 %v778
  %v856 = vunpack.c.l.b16 %v779
  %v857 = vunpack.c.h.b16 %v779
  %v858 = vunpack.c.l.b16 %v780
  %v859 = vunpack.c.h.b16 %v780
  %v860 = vunpack.c.l.b16 %v781
  %v861 = vunpack.c.h.b16 %v781
  %v862 = vunpack.c.l.b16 %v782
  %v863 = vunpack.c.h.b16 %v782
  %v864 = vunpack.c.l.b16 %v783
  %v865 = vunpack.c.h.b16 %v783
  %v866 = vunpack.c.l.b16 %v784
  %v867 = vunpack.c.h.b16 %v784
  %v868 = vunpack.c.l.b16 %v785
  %v869 = vunpack.c.h.b16 %v785
  %v870 = vunpack.c.l.b16 %v786
  %v871 = vunpack.c.h.b16 %v786
  %v872 = vunpack.c.l.b16 %v787
  %v873 = vunpack.c.h.b16 %v787
  %v874 = vunpack.c.l.b16 %v788
  %v875 = vunpack.c.h.b16 %v788
  %v876 = vunpack.c.l.b16 %v789
  %v877 = vunpack.c.h.b16 %v789
  %v878 = vunpack.c.l.b16 %v790
  %v879 = vunpack.c.h.b16 %v790
  %v880 = vunpack.c.l.b16 %v791
  %v881 = vunpack.c.h.b16 %v791
  %v882 = vunpack.c.l.b16 %v792
  %v883 = vunpack.c.h.b16 %v792
  %v884 = vunpack.c.l.b16 %v793
  %v885 = vunpack.c.h.b16 %v793
  %v886 = vunpack.c.l.b16 %v794
  %v887 = vunpack.c.h.b16 %v794
  %v888 = vunpack.c.l.b16 %v795
  %v889 = vunpack.c.h.b16 %v795
  %v890 = vunpack.c.l.b16 %v796
  %v891 = vunpack.c.h.b16 %v796
  %v892 = vunpack.c.l.b16 %v797
  %v893 = vunpack.c.h.b16 %v797
  %v894 = vpack.c.b16 %v834, %v830
  %v895 = vpack.c.b16 %v835, %v831
  %v896 = vpack.c.b16 %v836, %v832
  %v897 = vpack.c.b16 %v837, %v833
  %v898 = vpack.c.b16 %v842, %v838
  %v899 = vpack.c.b16 %v843, %v839
  %v900 = vpack.c.b16 %v844, %v840
  %v901 = vpack.c.b16 %v845, %v841
  %v902 = vpack.c.b16 %v850, %v846
  %v903 = vpack.c.b16 %v851, %v847
  %v904 = vpack.c.b16 %v852, %v848
  %v905 = vpack.c.b16 %v853, %v849
  %v906 = vpack.c.b16 %v858, %v854
  %v907 = vpack.c.b16 %v859, %v855
  %v908 = vpack.c.b16 %v860, %v856
  %v909 = vpack.c.b16 %v861, %v857
  %v910 = vpack.c.b16 %v866, %v862
  %v911 = vpack.c.b16 %v867, %v863
  %v912 = vpack.c.b16 %v868, %v864
  %v913 = vpack.c.b16 %v869, %v865
  %v914 = vpack.c.b16 %v874, %v870
  %v915 = vpack.c.b16 %v875, %v871
  %v916 = vpack.c.b16 %v876, %v872
  %v917 = vpack.c.b16 %v877, %v873
  %v918 = vpack.c.b16 %v882, %v878
  %v919 = vpack.c.b16 %v883, %v879
  %v920 = vpack.c.b16 %v884, %v880
  %v921 = vpack.c.b16 %v885, %v881
  %v922 = vpack.c.b16 %v890, %v886
  %v923 = vpack.c.b16 %v891, %v887
  %v924 = vpack.c.b16 %v892, %v888
  %v925 = vpack.c.b16 %v893, %v889
  %958 = vmatprep.subr.bf16.mxu0 %v923
  %959 = vmatpush1.bf16.msra.mxu0 %v922
  %960 = vmatprep.subr.bf16.mxu0 %v919
  %961 = vmatpush1.bf16.msra.mxu0 %v918
  %962 = vmatprep.subr.bf16.mxu0 %v915
  %963 = vmatpush1.bf16.msra.mxu0 %v914
  %964 = vmatprep.subr.bf16.mxu0 %v911
  %965 = vmatpush1.bf16.msra.mxu0 %v910
  %966 = vmatprep.subr.bf16.mxu0 %v907
  %967 = vmatpush1.bf16.msra.mxu0 %v906
  %968 = vmatprep.subr.bf16.mxu0 %v903
  %969 = vmatpush1.bf16.msra.mxu0 %v902
  %970 = vmatprep.subr.bf16.mxu0 %v899
  %971 = vmatpush1.bf16.msra.mxu0 %v898
  %972 = vmatprep.subr.bf16.mxu0 %v895
  %973 = vmatpush1.bf16.msra.mxu0 %v894
  %974 = vmatprep.subr.bf16.mxu0 0
  %975 = vmatpush2.bf16.msra.mxu0 0
  %976 = vmatprep.subr.bf16.mxu0 0
  %977 = vmatpush2.bf16.msra.mxu0 0
  %978 = vmatprep.subr.bf16.mxu0 0
  %979 = vmatpush2.bf16.msra.mxu0 0
  %980 = vmatprep.subr.bf16.mxu0 0
  %981 = vmatpush2.bf16.msra.mxu0 0
  %982 = vmatprep.subr.bf16.mxu0 0
  %983 = vmatpush2.bf16.msra.mxu0 0
  %984 = vmatprep.subr.bf16.mxu0 0
  %985 = vmatpush2.bf16.msra.mxu0 0
  %986 = vmatprep.subr.bf16.mxu0 0
  %987 = vmatpush2.bf16.msra.mxu0 0
  %988 = vmatprep.subr.bf16.mxu0 0
  %989 = vmatpush2.bf16.msra.mxu0 0
  %990 = vmatprep.mubr.bf16.mxu0 0
  %991 = vmatmul.mubr.bf16.gmra.mxu0 %v765
  %v992 = vpop.f32.mrf.mxu0
  %v993 = vadd.f32 0.0, %v992
  %v994 = vpop.f32.mrf.mxu0
  %v995 = vadd.f32 0.0, %v994
  %v996 = vpop.f32.mrf.mxu0
  %v997 = vpop.f32.mrf.mxu0
  %998 = vdwg.mxu0
  %999 = vmatprep.subr.bf16.mxu0 %v925
  %1000 = vmatpush1.bf16.msra.mxu0 %v924
  %1001 = vmatprep.subr.bf16.mxu0 %v921
  %1002 = vmatpush1.bf16.msra.mxu0 %v920
  %1003 = vmatprep.subr.bf16.mxu0 %v917
  %1004 = vmatpush1.bf16.msra.mxu0 %v916
  %1005 = vmatprep.subr.bf16.mxu0 %v913
  %1006 = vmatpush1.bf16.msra.mxu0 %v912
  %1007 = vmatprep.subr.bf16.mxu0 %v909
  %1008 = vmatpush1.bf16.msra.mxu0 %v908
  %1009 = vmatprep.subr.bf16.mxu0 %v905
  %1010 = vmatpush1.bf16.msra.mxu0 %v904
  %1011 = vmatprep.subr.bf16.mxu0 %v901
  %1012 = vmatpush1.bf16.msra.mxu0 %v900
  %1013 = vmatprep.subr.bf16.mxu0 %v897
  %1014 = vmatpush1.bf16.msra.mxu0 %v896
  %1015 = vmatprep.subr.bf16.mxu0 0
  %1016 = vmatpush2.bf16.msra.mxu0 0
  %1017 = vmatprep.subr.bf16.mxu0 0
  %1018 = vmatpush2.bf16.msra.mxu0 0
  %1019 = vmatprep.subr.bf16.mxu0 0
  %1020 = vmatpush2.bf16.msra.mxu0 0
  %1021 = vmatprep.subr.bf16.mxu0 0
  %1022 = vmatpush2.bf16.msra.mxu0 0
  %1023 = vmatprep.subr.bf16.mxu0 0
  %1024 = vmatpush2.bf16.msra.mxu0 0
  %1025 = vmatprep.subr.bf16.mxu0 0
  %1026 = vmatpush2.bf16.msra.mxu0 0
  %1027 = vmatprep.subr.bf16.mxu0 0
  %1028 = vmatpush2.bf16.msra.mxu0 0
  %1029 = vmatprep.subr.bf16.mxu0 0
  %1030 = vmatpush2.bf16.msra.mxu0 0
  %1031 = vmatprep.mubr.bf16.mxu0 0
  %1032 = vmatmul.mubr.bf16.gmra.mxu0 %v765
  %v1033 = vpop.f32.mrf.mxu0
  %v1034 = vadd.f32 0.0, %v1033
  %v1035 = vpop.f32.mrf.mxu0
  %v1036 = vadd.f32 0.0, %v1035
  %v1037 = vpop.f32.mrf.mxu0
  %v1038 = vpop.f32.mrf.mxu0
  %1039 = vdwg.mxu0
  %v1040 = vadd.f32 %v761, %v993
  %v1041 = vadd.f32 %v762, %v995
  %v1042 = vadd.f32 %v763, %v1034
  %v1043 = vadd.f32 %v764, %v1036
  %v1044 = vmul.f32 %v1040, 0.5
  %v1045 = vtanh.pop %v1044
  %v1046 = vmul.f32 %v1045, 0.5
  %v1047 = vadd.f32 %v1046, 0.5
  %v1048 = vmul.f32 %v1041, 0.5
  %v1049 = vtanh.pop %v1048
  %v1050 = vmul.f32 %v1049, 0.5
  %v1051 = vadd.f32 %v1050, 0.5
  %v1052 = vtanh.pop %v1042
  %v1053 = vmul.f32 %v1043, 0.5
  %v1054 = vtanh.pop %v1053
  %v1055 = vmul.f32 %v1054, 0.5
  %v1056 = vadd.f32 %v1055, 0.5
  %v1057 = vmul.f32 %v1051, %v756
  %v1058 = vmul.f32 %v1047, %v1052
  %v1059 = vadd.f32 %v1057, %v1058
  %v1060 = vtanh.pop %v1059
  %v1061 = vmul.f32 %v1056, %v1060
  %s1062 = scalar_lea.vmem %s6, 8
  %1063 = vst [vmem:[%s1062] sm:$0xff] %v1061
  %s1064 = scalar_lea.vmem [#allocation4], 64
  %v1065 = vld [vmem:[%s1064] sm:$0xff]
  %v1066 = vld [vmem:[%s1064 + $0x8] sm:$0xff]
  %v1067 = vld [vmem:[%s1064 + $0x10] sm:$0xff]
  %v1068 = vld [vmem:[%s1064 + $0x18] sm:$0xff]
  %v1069 = vpack.c.bf16 %v1061, %v1061
  %v1070 = vld [vmem:[%s2] sm:$0xff]
  %v1071 = vld [vmem:[%s2 + $0x8] sm:$0xff]
  %v1072 = vld [vmem:[%s2 + $0x10] sm:$0xff]
  %v1073 = vld [vmem:[%s2 + $0x18] sm:$0xff]
  %v1074 = vld [vmem:[%s2 + $0x20] sm:$0xff]
  %v1075 = vld [vmem:[%s2 + $0x28] sm:$0xff]
  %v1076 = vld [vmem:[%s2 + $0x30] sm:$0xff]
  %v1077 = vld [vmem:[%s2 + $0x38] sm:$0xff]
  %v1078 = vld [vmem:[%s2 + $0x40] sm:$0xff]
  %v1079 = vld [vmem:[%s2 + $0x48] sm:$0xff]
  %v1080 = vld [vmem:[%s2 + $0x50] sm:$0xff]
  %v1081 = vld [vmem:[%s2 + $0x58] sm:$0xff]
  %v1082 = vld [vmem:[%s2 + $0x60] sm:$0xff]
  %v1083 = vld [vmem:[%s2 + $0x68] sm:$0xff]
  %v1084 = vld [vmem:[%s2 + $0x70] sm:$0xff]
  %v1085 = vld [vmem:[%s2 + $0x78] sm:$0xff]
  %v1086 = vld [vmem:[%s2 + $0x80] sm:$0xff]
  %v1087 = vld [vmem:[%s2 + $0x88] sm:$0xff]
  %v1088 = vld [vmem:[%s2 + $0x90] sm:$0xff]
  %v1089 = vld [vmem:[%s2 + $0x98] sm:$0xff]
  %v1090 = vld [vmem:[%s2 + $0xa0] sm:$0xff]
  %v1091 = vld [vmem:[%s2 + $0xa8] sm:$0xff]
  %v1092 = vld [vmem:[%s2 + $0xb0] sm:$0xff]
  %v1093 = vld [vmem:[%s2 + $0xb8] sm:$0xff]
  %v1094 = vld [vmem:[%s2 + $0xc0] sm:$0xff]
  %v1095 = vld [vmem:[%s2 + $0xc8] sm:$0xff]
  %v1096 = vld [vmem:[%s2 + $0xd0] sm:$0xff]
  %v1097 = vld [vmem:[%s2 + $0xd8] sm:$0xff]
  %v1098 = vld [vmem:[%s2 + $0xe0] sm:$0xff]
  %v1099 = vld [vmem:[%s2 + $0xe8] sm:$0xff]
  %v1100 = vld [vmem:[%s2 + $0xf0] sm:$0xff]
  %v1101 = vld [vmem:[%s2 + $0xf8] sm:$0xff]
  %v1134 = vunpack.c.l.b16 %v1070
  %v1135 = vunpack.c.h.b16 %v1070
  %v1136 = vunpack.c.l.b16 %v1071
  %v1137 = vunpack.c.h.b16 %v1071
  %v1138 = vunpack.c.l.b16 %v1072
  %v1139 = vunpack.c.h.b16 %v1072
  %v1140 = vunpack.c.l.b16 %v1073
  %v1141 = vunpack.c.h.b16 %v1073
  %v1142 = vunpack.c.l.b16 %v1074
  %v1143 = vunpack.c.h.b16 %v1074
  %v1144 = vunpack.c.l.b16 %v1075
  %v1145 = vunpack.c.h.b16 %v1075
  %v1146 = vunpack.c.l.b16 %v1076
  %v1147 = vunpack.c.h.b16 %v1076
  %v1148 = vunpack.c.l.b16 %v1077
  %v1149 = vunpack.c.h.b16 %v1077
  %v1150 = vunpack.c.l.b16 %v1078
  %v1151 = vunpack.c.h.b16 %v1078
  %v1152 = vunpack.c.l.b16 %v1079
  %v1153 = vunpack.c.h.b16 %v1079
  %v1154 = vunpack.c.l.b16 %v1080
  %v1155 = vunpack.c.h.b16 %v1080
  %v1156 = vunpack.c.l.b16 %v1081
  %v1157 = vunpack.c.h.b16 %v1081
  %v1158 = vunpack.c.l.b16 %v1082
  %v1159 = vunpack.c.h.b16 %v1082
  %v1160 = vunpack.c.l.b16 %v1083
  %v1161 = vunpack.c.h.b16 %v1083
  %v1162 = vunpack.c.l.b16 %v1084
  %v1163 = vunpack.c.h.b16 %v1084
  %v1164 = vunpack.c.l.b16 %v1085
  %v1165 = vunpack.c.h.b16 %v1085
  %v1166 = vunpack.c.l.b16 %v1086
  %v1167 = vunpack.c.h.b16 %v1086
  %v1168 = vunpack.c.l.b16 %v1087
  %v1169 = vunpack.c.h.b16 %v1087
  %v1170 = vunpack.c.l.b16 %v1088
  %v1171 = vunpack.c.h.b16 %v1088
  %v1172 = vunpack.c.l.b16 %v1089
  %v1173 = vunpack.c.h.b16 %v1089
  %v1174 = vunpack.c.l.b16 %v1090
  %v1175 = vunpack.c.h.b16 %v1090
  %v1176 = vunpack.c.l.b16 %v1091
  %v1177 = vunpack.c.h.b16 %v1091
  %v1178 = vunpack.c.l.b16 %v1092
  %v1179 = vunpack.c.h.b16 %v1092
  %v1180 = vunpack.c.l.b16 %v1093
  %v1181 = vunpack.c.h.b16 %v1093
  %v1182 = vunpack.c.l.b16 %v1094
  %v1183 = vunpack.c.h.b16 %v1094
  %v1184 = vunpack.c.l.b16 %v1095
  %v1185 = vunpack.c.h.b16 %v1095
  %v1186 = vunpack.c.l.b16 %v1096
  %v1187 = vunpack.c.h.b16 %v1096
  %v1188 = vunpack.c.l.b16 %v1097
  %v1189 = vunpack.c.h.b16 %v1097
  %v1190 = vunpack.c.l.b16 %v1098
  %v1191 = vunpack.c.h.b16 %v1098
  %v1192 = vunpack.c.l.b16 %v1099
  %v1193 = vunpack.c.h.b16 %v1099
  %v1194 = vunpack.c.l.b16 %v1100
  %v1195 = vunpack.c.h.b16 %v1100
  %v1196 = vunpack.c.l.b16 %v1101
  %v1197 = vunpack.c.h.b16 %v1101
  %v1198 = vpack.c.b16 %v1138, %v1134
  %v1199 = vpack.c.b16 %v1139, %v1135
  %v1200 = vpack.c.b16 %v1140, %v1136
  %v1201 = vpack.c.b16 %v1141, %v1137
  %v1202 = vpack.c.b16 %v1146, %v1142
  %v1203 = vpack.c.b16 %v1147, %v1143
  %v1204 = vpack.c.b16 %v1148, %v1144
  %v1205 = vpack.c.b16 %v1149, %v1145
  %v1206 = vpack.c.b16 %v1154, %v1150
  %v1207 = vpack.c.b16 %v1155, %v1151
  %v1208 = vpack.c.b16 %v1156, %v1152
  %v1209 = vpack.c.b16 %v1157, %v1153
  %v1210 = vpack.c.b16 %v1162, %v1158
  %v1211 = vpack.c.b16 %v1163, %v1159
  %v1212 = vpack.c.b16 %v1164, %v1160
  %v1213 = vpack.c.b16 %v1165, %v1161
  %v1214 = vpack.c.b16 %v1170, %v1166
  %v1215 = vpack.c.b16 %v1171, %v1167
  %v1216 = vpack.c.b16 %v1172, %v1168
  %v1217 = vpack.c.b16 %v1173, %v1169
  %v1218 = vpack.c.b16 %v1178, %v1174
  %v1219 = vpack.c.b16 %v1179, %v1175
  %v1220 = vpack.c.b16 %v1180, %v1176
  %v1221 = vpack.c.b16 %v1181, %v1177
  %v1222 = vpack.c.b16 %v1186, %v1182
  %v1223 = vpack.c.b16 %v1187, %v1183
  %v1224 = vpack.c.b16 %v1188, %v1184
  %v1225 = vpack.c.b16 %v1189, %v1185
  %v1226 = vpack.c.b16 %v1194, %v1190
  %v1227 = vpack.c.b16 %v1195, %v1191
  %v1228 = vpack.c.b16 %v1196, %v1192
  %v1229 = vpack.c.b16 %v1197, %v1193
  %1262 = vmatprep.subr.bf16.mxu0 %v1227
  %1263 = vmatpush1.bf16.msra.mxu0 %v1226
  %1264 = vmatprep.subr.bf16.mxu0 %v1223
  %1265 = vmatpush1.bf16.msra.mxu0 %v1222
  %1266 = vmatprep.subr.bf16.mxu0 %v1219
  %1267 = vmatpush1.bf16.msra.mxu0 %v1218
  %1268 = vmatprep.subr.bf16.mxu0 %v1215
  %1269 = vmatpush1.bf16.msra.mxu0 %v1214
  %1270 = vmatprep.subr.bf16.mxu0 %v1211
  %1271 = vmatpush1.bf16.msra.mxu0 %v1210
  %1272 = vmatprep.subr.bf16.mxu0 %v1207
  %1273 = vmatpush1.bf16.msra.mxu0 %v1206
  %1274 = vmatprep.subr.bf16.mxu0 %v1203
  %1275 = vmatpush1.bf16.msra.mxu0 %v1202
  %1276 = vmatprep.subr.bf16.mxu0 %v1199
  %1277 = vmatpush1.bf16.msra.mxu0 %v1198
  %1278 = vmatprep.subr.bf16.mxu0 0
  %1279 = vmatpush2.bf16.msra.mxu0 0
  %1280 = vmatprep.subr.bf16.mxu0 0
  %1281 = vmatpush2.bf16.msra.mxu0 0
  %1282 = vmatprep.subr.bf16.mxu0 0
  %1283 = vmatpush2.bf16.msra.mxu0 0
  %1284 = vmatprep.subr.bf16.mxu0 0
  %1285 = vmatpush2.bf16.msra.mxu0 0
  %1286 = vmatprep.subr.bf16.mxu0 0
  %1287 = vmatpush2.bf16.msra.mxu0 0
  %1288 = vmatprep.subr.bf16.mxu0 0
  %1289 = vmatpush2.bf16.msra.mxu0 0
  %1290 = vmatprep.subr.bf16.mxu0 0
  %1291 = vmatpush2.bf16.msra.mxu0 0
  %1292 = vmatprep.subr.bf16.mxu0 0
  %1293 = vmatpush2.bf16.msra.mxu0 0
  %1294 = vmatprep.mubr.bf16.mxu0 0
  %1295 = vmatmul.mubr.bf16.gmra.mxu0 %v1069
  %v1296 = vpop.f32.mrf.mxu0
  %v1297 = vadd.f32 0.0, %v1296
  %v1298 = vpop.f32.mrf.mxu0
  %v1299 = vadd.f32 0.0, %v1298
  %v1300 = vpop.f32.mrf.mxu0
  %v1301 = vpop.f32.mrf.mxu0
  %1302 = vdwg.mxu0
  %1303 = vmatprep.subr.bf16.mxu0 %v1229
  %1304 = vmatpush1.bf16.msra.mxu0 %v1228
  %1305 = vmatprep.subr.bf16.mxu0 %v1225
  %1306 = vmatpush1.bf16.msra.mxu0 %v1224
  %1307 = vmatprep.subr.bf16.mxu0 %v1221
  %1308 = vmatpush1.bf16.msra.mxu0 %v1220
  %1309 = vmatprep.subr.bf16.mxu0 %v1217
  %1310 = vmatpush1.bf16.msra.mxu0 %v1216
  %1311 = vmatprep.subr.bf16.mxu0 %v1213
  %1312 = vmatpush1.bf16.msra.mxu0 %v1212
  %1313 = vmatprep.subr.bf16.mxu0 %v1209
  %1314 = vmatpush1.bf16.msra.mxu0 %v1208
  %1315 = vmatprep.subr.bf16.mxu0 %v1205
  %1316 = vmatpush1.bf16.msra.mxu0 %v1204
  %1317 = vmatprep.subr.bf16.mxu0 %v1201
  %1318 = vmatpush1.bf16.msra.mxu0 %v1200
  %1319 = vmatprep.subr.bf16.mxu0 0
  %1320 = vmatpush2.bf16.msra.mxu0 0
  %1321 = vmatprep.subr.bf16.mxu0 0
  %1322 = vmatpush2.bf16.msra.mxu0 0
  %1323 = vmatprep.subr.bf16.mxu0 0
  %1324 = vmatpush2.bf16.msra.mxu0 0
  %1325 = vmatprep.subr.bf16.mxu0 0
  %1326 = vmatpush2.bf16.msra.mxu0 0
  %1327 = vmatprep.subr.bf16.mxu0 0
  %1328 = vmatpush2.bf16.msra.mxu0 0
  %1329 = vmatprep.subr.bf16.mxu0 0
  %1330 = vmatpush2.bf16.msra.mxu0 0
  %1331 = vmatprep.subr.bf16.mxu0 0
  %1332 = vmatpush2.bf16.msra.mxu0 0
  %1333 = vmatprep.subr.bf16.mxu0 0
  %1334 = vmatpush2.bf16.msra.mxu0 0
  %1335 = vmatprep.mubr.bf16.mxu0 0
  %1336 = vmatmul.mubr.bf16.gmra.mxu0 %v1069
  %v1337 = vpop.f32.mrf.mxu0
  %v1338 = vadd.f32 0.0, %v1337
  %v1339 = vpop.f32.mrf.mxu0
  %v1340 = vadd.f32 0.0, %v1339
  %v1341 = vpop.f32.mrf.mxu0
  %v1342 = vpop.f32.mrf.mxu0
  %1343 = vdwg.mxu0
  %v1344 = vadd.f32 %v1065, %v1297
  %v1345 = vadd.f32 %v1066, %v1299
  %v1346 = vadd.f32 %v1067, %v1338
  %v1347 = vadd.f32 %v1068, %v1340
  %v1348 = vmul.f32 %v1344, 0.5
  %v1349 = vtanh.pop %v1348
  %v1350 = vmul.f32 %v1349, 0.5
  %v1351 = vadd.f32 %v1350, 0.5
  %v1352 = vmul.f32 %v1345, 0.5
  %v1353 = vtanh.pop %v1352
  %v1354 = vmul.f32 %v1353, 0.5
  %v1355 = vadd.f32 %v1354, 0.5
  %v1356 = vtanh.pop %v1346
  %v1357 = vmul.f32 %v1347, 0.5
  %v1358 = vtanh.pop %v1357
  %v1359 = vmul.f32 %v1358, 0.5
  %v1360 = vadd.f32 %v1359, 0.5
  %v1361 = vmul.f32 %v1355, %v1059
  %v1362 = vmul.f32 %v1351, %v1356
  %v1363 = vadd.f32 %v1361, %v1362
  %v1364 = vtanh.pop %v1363
  %v1365 = vmul.f32 %v1360, %v1364
  %s1366 = scalar_lea.vmem %s6, 16
  %1367 = vst [vmem:[%s1366] sm:$0xff] %v1365
  %s1368 = scalar_lea.vmem [#allocation4], 96
  %v1369 = vld [vmem:[%s1368] sm:$0xff]
  %v1370 = vld [vmem:[%s1368 + $0x8] sm:$0xff]
  %v1371 = vld [vmem:[%s1368 + $0x10] sm:$0xff]
  %v1372 = vld [vmem:[%s1368 + $0x18] sm:$0xff]
  %v1373 = vpack.c.bf16 %v1365, %v1365
  %v1374 = vld [vmem:[%s2] sm:$0xff]
  %v1375 = vld [vmem:[%s2 + $0x8] sm:$0xff]
  %v1376 = vld [vmem:[%s2 + $0x10] sm:$0xff]
  %v1377 = vld [vmem:[%s2 + $0x18] sm:$0xff]
  %v1378 = vld [vmem:[%s2 + $0x20] sm:$0xff]
  %v1379 = vld [vmem:[%s2 + $0x28] sm:$0xff]
  %v1380 = vld [vmem:[%s2 + $0x30] sm:$0xff]
  %v1381 = vld [vmem:[%s2 + $0x38] sm:$0xff]
  %v1382 = vld [vmem:[%s2 + $0x40] sm:$0xff]
  %v1383 = vld [vmem:[%s2 + $0x48] sm:$0xff]
  %v1384 = vld [vmem:[%s2 + $0x50] sm:$0xff]
  %v1385 = vld [vmem:[%s2 + $0x58] sm:$0xff]
  %v1386 = vld [vmem:[%s2 + $0x60] sm:$0xff]
  %v1387 = vld [vmem:[%s2 + $0x68] sm:$0xff]
  %v1388 = vld [vmem:[%s2 + $0x70] sm:$0xff]
  %v1389 = vld [vmem:[%s2 + $0x78] sm:$0xff]
  %v1390 = vld [vmem:[%s2 + $0x80] sm:$0xff]
  %v1391 = vld [vmem:[%s2 + $0x88] sm:$0xff]
  %v1392 = vld [vmem:[%s2 + $0x90] sm:$0xff]
  %v1393 = vld [vmem:[%s2 + $0x98] sm:$0xff]
  %v1394 = vld [vmem:[%s2 + $0xa0] sm:$0xff]
  %v1395 = vld [vmem:[%s2 + $0xa8] sm:$0xff]
  %v1396 = vld [vmem:[%s2 + $0xb0] sm:$0xff]
  %v1397 = vld [vmem:[%s2 + $0xb8] sm:$0xff]
  %v1398 = vld [vmem:[%s2 + $0xc0] sm:$0xff]
  %v1399 = vld [vmem:[%s2 + $0xc8] sm:$0xff]
  %v1400 = vld [vmem:[%s2 + $0xd0] sm:$0xff]
  %v1401 = vld [vmem:[%s2 + $0xd8] sm:$0xff]
  %v1402 = vld [vmem:[%s2 + $0xe0] sm:$0xff]
  %v1403 = vld [vmem:[%s2 + $0xe8] sm:$0xff]
  %v1404 = vld [vmem:[%s2 + $0xf0] sm:$0xff]
  %v1405 = vld [vmem:[%s2 + $0xf8] sm:$0xff]
  %v1438 = vunpack.c.l.b16 %v1374
  %v1439 = vunpack.c.h.b16 %v1374
  %v1440 = vunpack.c.l.b16 %v1375
  %v1441 = vunpack.c.h.b16 %v1375
  %v1442 = vunpack.c.l.b16 %v1376
  %v1443 = vunpack.c.h.b16 %v1376
  %v1444 = vunpack.c.l.b16 %v1377
  %v1445 = vunpack.c.h.b16 %v1377
  %v1446 = vunpack.c.l.b16 %v1378
  %v1447 = vunpack.c.h.b16 %v1378
  %v1448 = vunpack.c.l.b16 %v1379
  %v1449 = vunpack.c.h.b16 %v1379
  %v1450 = vunpack.c.l.b16 %v1380
  %v1451 = vunpack.c.h.b16 %v1380
  %v1452 = vunpack.c.l.b16 %v1381
  %v1453 = vunpack.c.h.b16 %v1381
  %v1454 = vunpack.c.l.b16 %v1382
  %v1455 = vunpack.c.h.b16 %v1382
  %v1456 = vunpack.c.l.b16 %v1383
  %v1457 = vunpack.c.h.b16 %v1383
  %v1458 = vunpack.c.l.b16 %v1384
  %v1459 = vunpack.c.h.b16 %v1384
  %v1460 = vunpack.c.l.b16 %v1385
  %v1461 = vunpack.c.h.b16 %v1385
  %v1462 = vunpack.c.l.b16 %v1386
  %v1463 = vunpack.c.h.b16 %v1386
  %v1464 = vunpack.c.l.b16 %v1387
  %v1465 = vunpack.c.h.b16 %v1387
  %v1466 = vunpack.c.l.b16 %v1388
  %v1467 = vunpack.c.h.b16 %v1388
  %v1468 = vunpack.c.l.b16 %v1389
  %v1469 = vunpack.c.h.b16 %v1389
  %v1470 = vunpack.c.l.b16 %v1390
  %v1471 = vunpack.c.h.b16 %v1390
  %v1472 = vunpack.c.l.b16 %v1391
  %v1473 = vunpack.c.h.b16 %v1391
  %v1474 = vunpack.c.l.b16 %v1392
  %v1475 = vunpack.c.h.b16 %v1392
  %v1476 = vunpack.c.l.b16 %v1393
  %v1477 = vunpack.c.h.b16 %v1393
  %v1478 = vunpack.c.l.b16 %v1394
  %v1479 = vunpack.c.h.b16 %v1394
  %v1480 = vunpack.c.l.b16 %v1395
  %v1481 = vunpack.c.h.b16 %v1395
  %v1482 = vunpack.c.l.b16 %v1396
  %v1483 = vunpack.c.h.b16 %v1396
  %v1484 = vunpack.c.l.b16 %v1397
  %v1485 = vunpack.c.h.b16 %v1397
  %v1486 = vunpack.c.l.b16 %v1398
  %v1487 = vunpack.c.h.b16 %v1398
  %v1488 = vunpack.c.l.b16 %v1399
  %v1489 = vunpack.c.h.b16 %v1399
  %v1490 = vunpack.c.l.b16 %v1400
  %v1491 = vunpack.c.h.b16 %v1400
  %v1492 = vunpack.c.l.b16 %v1401
  %v1493 = vunpack.c.h.b16 %v1401
  %v1494 = vunpack.c.l.b16 %v1402
  %v1495 = vunpack.c.h.b16 %v1402
  %v1496 = vunpack.c.l.b16 %v1403
  %v1497 = vunpack.c.h.b16 %v1403
  %v1498 = vunpack.c.l.b16 %v1404
  %v1499 = vunpack.c.h.b16 %v1404
  %v1500 = vunpack.c.l.b16 %v1405
  %v1501 = vunpack.c.h.b16 %v1405
  %v1502 = vpack.c.b16 %v1442, %v1438
  %v1503 = vpack.c.b16 %v1443, %v1439
  %v1504 = vpack.c.b16 %v1444, %v1440
  %v1505 = vpack.c.b16 %v1445, %v1441
  %v1506 = vpack.c.b16 %v1450, %v1446
  %v1507 = vpack.c.b16 %v1451, %v1447
  %v1508 = vpack.c.b16 %v1452, %v1448
  %v1509 = vpack.c.b16 %v1453, %v1449
  %v1510 = vpack.c.b16 %v1458, %v1454
  %v1511 = vpack.c.b16 %v1459, %v1455
  %v1512 = vpack.c.b16 %v1460, %v1456
  %v1513 = vpack.c.b16 %v1461, %v1457
  %v1514 = vpack.c.b16 %v1466, %v1462
  %v1515 = vpack.c.b16 %v1467, %v1463
  %v1516 = vpack.c.b16 %v1468, %v1464
  %v1517 = vpack.c.b16 %v1469, %v1465
  %v1518 = vpack.c.b16 %v1474, %v1470
  %v1519 = vpack.c.b16 %v1475, %v1471
  %v1520 = vpack.c.b16 %v1476, %v1472
  %v1521 = vpack.c.b16 %v1477, %v1473
  %v1522 = vpack.c.b16 %v1482, %v1478
  %v1523 = vpack.c.b16 %v1483, %v1479
  %v1524 = vpack.c.b16 %v1484, %v1480
  %v1525 = vpack.c.b16 %v1485, %v1481
  %v1526 = vpack.c.b16 %v1490, %v1486
  %v1527 = vpack.c.b16 %v1491, %v1487
  %v1528 = vpack.c.b16 %v1492, %v1488
  %v1529 = vpack.c.b16 %v1493, %v1489
  %v1530 = vpack.c.b16 %v1498, %v1494
  %v1531 = vpack.c.b16 %v1499, %v1495
  %v1532 = vpack.c.b16 %v1500, %v1496
  %v1533 = vpack.c.b16 %v1501, %v1497
  %1566 = vmatprep.subr.bf16.mxu0 %v1531
  %1567 = vmatpush1.bf16.msra.mxu0 %v1530
  %1568 = vmatprep.subr.bf16.mxu0 %v1527
  %1569 = vmatpush1.bf16.msra.mxu0 %v1526
  %1570 = vmatprep.subr.bf16.mxu0 %v1523
  %1571 = vmatpush1.bf16.msra.mxu0 %v1522
  %1572 = vmatprep.subr.bf16.mxu0 %v1519
  %1573 = vmatpush1.bf16.msra.mxu0 %v1518
  %1574 = vmatprep.subr.bf16.mxu0 %v1515
  %1575 = vmatpush1.bf16.msra.mxu0 %v1514
  %1576 = vmatprep.subr.bf16.mxu0 %v1511
  %1577 = vmatpush1.bf16.msra.mxu0 %v1510
  %1578 = vmatprep.subr.bf16.mxu0 %v1507
  %1579 = vmatpush1.bf16.msra.mxu0 %v1506
  %1580 = vmatprep.subr.bf16.mxu0 %v1503
  %1581 = vmatpush1.bf16.msra.mxu0 %v1502
  %1582 = vmatprep.subr.bf16.mxu0 0
  %1583 = vmatpush2.bf16.msra.mxu0 0
  %1584 = vmatprep.subr.bf16.mxu0 0
  %1585 = vmatpush2.bf16.msra.mxu0 0
  %1586 = vmatprep.subr.bf16.mxu0 0
  %1587 = vmatpush2.bf16.msra.mxu0 0
  %1588 = vmatprep.subr.bf16.mxu0 0
  %1589 = vmatpush2.bf16.msra.mxu0 0
  %1590 = vmatprep.subr.bf16.mxu0 0
  %1591 = vmatpush2.bf16.msra.mxu0 0
  %1592 = vmatprep.subr.bf16.mxu0 0
  %1593 = vmatpush2.bf16.msra.mxu0 0
  %1594 = vmatprep.subr.bf16.mxu0 0
  %1595 = vmatpush2.bf16.msra.mxu0 0
  %1596 = vmatprep.subr.bf16.mxu0 0
  %1597 = vmatpush2.bf16.msra.mxu0 0
  %1598 = vmatprep.mubr.bf16.mxu0 0
  %1599 = vmatmul.mubr.bf16.gmra.mxu0 %v1373
  %v1600 = vpop.f32.mrf.mxu0
  %v1601 = vadd.f32 0.0, %v1600
  %v1602 = vpop.f32.mrf.mxu0
  %v1603 = vadd.f32 0.0, %v1602
  %v1604 = vpop.f32.mrf.mxu0
  %v1605 = vpop.f32.mrf.mxu0
  %1606 = vdwg.mxu0
  %1607 = vmatprep.subr.bf16.mxu0 %v1533
  %1608 = vmatpush1.bf16.msra.mxu0 %v1532
  %1609 = vmatprep.subr.bf16.mxu0 %v1529
  %1610 = vmatpush1.bf16.msra.mxu0 %v1528
  %1611 = vmatprep.subr.bf16.mxu0 %v1525
  %1612 = vmatpush1.bf16.msra.mxu0 %v1524
  %1613 = vmatprep.subr.bf16.mxu0 %v1521
  %1614 = vmatpush1.bf16.msra.mxu0 %v1520
  %1615 = vmatprep.subr.bf16.mxu0 %v1517
  %1616 = vmatpush1.bf16.msra.mxu0 %v1516
  %1617 = vmatprep.subr.bf16.mxu0 %v1513
  %1618 = vmatpush1.bf16.msra.mxu0 %v1512
  %1619 = vmatprep.subr.bf16.mxu0 %v1509
  %1620 = vmatpush1.bf16.msra.mxu0 %v1508
  %1621 = vmatprep.subr.bf16.mxu0 %v1505
  %1622 = vmatpush1.bf16.msra.mxu0 %v1504
  %1623 = vmatprep.subr.bf16.mxu0 0
  %1624 = vmatpush2.bf16.msra.mxu0 0
  %1625 = vmatprep.subr.bf16.mxu0 0
  %1626 = vmatpush2.bf16.msra.mxu0 0
  %1627 = vmatprep.subr.bf16.mxu0 0
  %1628 = vmatpush2.bf16.msra.mxu0 0
  %1629 = vmatprep.subr.bf16.mxu0 0
  %1630 = vmatpush2.bf16.msra.mxu0 0
  %1631 = vmatprep.subr.bf16.mxu0 0
  %1632 = vmatpush2.bf16.msra.mxu0 0
  %1633 = vmatprep.subr.bf16.mxu0 0
  %1634 = vmatpush2.bf16.msra.mxu0 0
  %1635 = vmatprep.subr.bf16.mxu0 0
  %1636 = vmatpush2.bf16.msra.mxu0 0
  %1637 = vmatprep.subr.bf16.mxu0 0
  %1638 = vmatpush2.bf16.msra.mxu0 0
  %1639 = vmatprep.mubr.bf16.mxu0 0
  %1640 = vmatmul.mubr.bf16.gmra.mxu0 %v1373
  %v1641 = vpop.f32.mrf.mxu0
  %v1642 = vadd.f32 0.0, %v1641
  %v1643 = vpop.f32.mrf.mxu0
  %v1644 = vadd.f32 0.0, %v1643
  %v1645 = vpop.f32.mrf.mxu0
  %v1646 = vpop.f32.mrf.mxu0
  %1647 = vdwg.mxu0
  %v1648 = vadd.f32 %v1369, %v1601
  %v1649 = vadd.f32 %v1370, %v1603
  %v1650 = vadd.f32 %v1371, %v1642
  %v1651 = vadd.f32 %v1372, %v1644
  %v1652 = vmul.f32 %v1648, 0.5
  %v1653 = vtanh.pop %v1652
  %v1654 = vmul.f32 %v1653, 0.5
  %v1655 = vadd.f32 %v1654, 0.5
  %v1656 = vmul.f32 %v1649, 0.5
  %v1657 = vtanh.pop %v1656
  %v1658 = vmul.f32 %v1657, 0.5
  %v1659 = vadd.f32 %v1658, 0.5
  %v1660 = vtanh.pop %v1650
  %v1661 = vmul.f32 %v1651, 0.5
  %v1662 = vtanh.pop %v1661
  %v1663 = vmul.f32 %v1662, 0.5
  %v1664 = vadd.f32 %v1663, 0.5
  %v1665 = vmul.f32 %v1659, %v1363
  %v1666 = vmul.f32 %v1655, %v1660
  %v1667 = vadd.f32 %v1665, %v1666
  %v1668 = vtanh.pop %v1667
  %v1669 = vmul.f32 %v1664, %v1668
  %s1670 = scalar_lea.vmem %s6, 24
  %1671 = vst [vmem:[%s1670] sm:$0xff] %v1669
  %s1672 = scalar_lea.vmem [#allocation4], 128
  %v1673 = vld [vmem:[%s1672] sm:$0xff]
  %v1674 = vld [vmem:[%s1672 + $0x8] sm:$0xff]
  %v1675 = vld [vmem:[%s1672 + $0x10] sm:$0xff]
  %v1676 = vld [vmem:[%s1672 + $0x18] sm:$0xff]
  %v1677 = vpack.c.bf16 %v1669, %v1669
  %v1678 = vld [vmem:[%s2] sm:$0xff]
  %v1679 = vld [vmem:[%s2 + $0x8] sm:$0xff]
  %v1680 = vld [vmem:[%s2 + $0x10] sm:$0xff]
  %v1681 = vld [vmem:[%s2 + $0x18] sm:$0xff]
  %v1682 = vld [vmem:[%s2 + $0x20] sm:$0xff]
  %v1683 = vld [vmem:[%s2 + $0x28] sm:$0xff]
  %v1684 = vld [vmem:[%s2 + $0x30] sm:$0xff]
  %v1685 = vld [vmem:[%s2 + $0x38] sm:$0xff]
  %v1686 = vld [vmem:[%s2 + $0x40] sm:$0xff]
  %v1687 = vld [vmem:[%s2 + $0x48] sm:$0xff]
  %v1688 = vld [vmem:[%s2 + $0x50] sm:$0xff]
  %v1689 = vld [vmem:[%s2 + $0x58] sm:$0xff]
  %v1690 = vld [vmem:[%s2 + $0x60] sm:$0xff]
  %v1691 = vld [vmem:[%s2 + $0x68] sm:$0xff]
  %v1692 = vld [vmem:[%s2 + $0x70] sm:$0xff]
  %v1693 = vld [vmem:[%s2 + $0x78] sm:$0xff]
  %v1694 = vld [vmem:[%s2 + $0x80] sm:$0xff]
  %v1695 = vld [vmem:[%s2 + $0x88] sm:$0xff]
  %v1696 = vld [vmem:[%s2 + $0x90] sm:$0xff]
  %v1697 = vld [vmem:[%s2 + $0x98] sm:$0xff]
  %v1698 = vld [vmem:[%s2 + $0xa0] sm:$0xff]
  %v1699 = vld [vmem:[%s2 + $0xa8] sm:$0xff]
  %v1700 = vld [vmem:[%s2 + $0xb0] sm:$0xff]
  %v1701 = vld [vmem:[%s2 + $0xb8] sm:$0xff]
  %v1702 = vld [vmem:[%s2 + $0xc0] sm:$0xff]
  %v1703 = vld [vmem:[%s2 + $0xc8] sm:$0xff]
  %v1704 = vld [vmem:[%s2 + $0xd0] sm:$0xff]
  %v1705 = vld [vmem:[%s2 + $0xd8] sm:$0xff]
  %v1706 = vld [vmem:[%s2 + $0xe0] sm:$0xff]
  %v1707 = vld [vmem:[%s2 + $0xe8] sm:$0xff]
  %v1708 = vld [vmem:[%s2 + $0xf0] sm:$0xff]
  %v1709 = vld [vmem:[%s2 + $0xf8] sm:$0xff]
  %v1742 = vunpack.c.l.b16 %v1678
  %v1743 = vunpack.c.h.b16 %v1678
  %v1744 = vunpack.c.l.b16 %v1679
  %v1745 = vunpack.c.h.b16 %v1679
  %v1746 = vunpack.c.l.b16 %v1680
  %v1747 = vunpack.c.h.b16 %v1680
  %v1748 = vunpack.c.l.b16 %v1681
  %v1749 = vunpack.c.h.b16 %v1681
  %v1750 = vunpack.c.l.b16 %v1682
  %v1751 = vunpack.c.h.b16 %v1682
  %v1752 = vunpack.c.l.b16 %v1683
  %v1753 = vunpack.c.h.b16 %v1683
  %v1754 = vunpack.c.l.b16 %v1684
  %v1755 = vunpack.c.h.b16 %v1684
  %v1756 = vunpack.c.l.b16 %v1685
  %v1757 = vunpack.c.h.b16 %v1685
  %v1758 = vunpack.c.l.b16 %v1686
  %v1759 = vunpack.c.h.b16 %v1686
  %v1760 = vunpack.c.l.b16 %v1687
  %v1761 = vunpack.c.h.b16 %v1687
  %v1762 = vunpack.c.l.b16 %v1688
  %v1763 = vunpack.c.h.b16 %v1688
  %v1764 = vunpack.c.l.b16 %v1689
  %v1765 = vunpack.c.h.b16 %v1689
  %v1766 = vunpack.c.l.b16 %v1690
  %v1767 = vunpack.c.h.b16 %v1690
  %v1768 = vunpack.c.l.b16 %v1691
  %v1769 = vunpack.c.h.b16 %v1691
  %v1770 = vunpack.c.l.b16 %v1692
  %v1771 = vunpack.c.h.b16 %v1692
  %v1772 = vunpack.c.l.b16 %v1693
  %v1773 = vunpack.c.h.b16 %v1693
  %v1774 = vunpack.c.l.b16 %v1694
  %v1775 = vunpack.c.h.b16 %v1694
  %v1776 = vunpack.c.l.b16 %v1695
  %v1777 = vunpack.c.h.b16 %v1695
  %v1778 = vunpack.c.l.b16 %v1696
  %v1779 = vunpack.c.h.b16 %v1696
  %v1780 = vunpack.c.l.b16 %v1697
  %v1781 = vunpack.c.h.b16 %v1697
  %v1782 = vunpack.c.l.b16 %v1698
  %v1783 = vunpack.c.h.b16 %v1698
  %v1784 = vunpack.c.l.b16 %v1699
  %v1785 = vunpack.c.h.b16 %v1699
  %v1786 = vunpack.c.l.b16 %v1700
  %v1787 = vunpack.c.h.b16 %v1700
  %v1788 = vunpack.c.l.b16 %v1701
  %v1789 = vunpack.c.h.b16 %v1701
  %v1790 = vunpack.c.l.b16 %v1702
  %v1791 = vunpack.c.h.b16 %v1702
  %v1792 = vunpack.c.l.b16 %v1703
  %v1793 = vunpack.c.h.b16 %v1703
  %v1794 = vunpack.c.l.b16 %v1704
  %v1795 = vunpack.c.h.b16 %v1704
  %v1796 = vunpack.c.l.b16 %v1705
  %v1797 = vunpack.c.h.b16 %v1705
  %v1798 = vunpack.c.l.b16 %v1706
  %v1799 = vunpack.c.h.b16 %v1706
  %v1800 = vunpack.c.l.b16 %v1707
  %v1801 = vunpack.c.h.b16 %v1707
  %v1802 = vunpack.c.l.b16 %v1708
  %v1803 = vunpack.c.h.b16 %v1708
  %v1804 = vunpack.c.l.b16 %v1709
  %v1805 = vunpack.c.h.b16 %v1709
  %v1806 = vpack.c.b16 %v1746, %v1742
  %v1807 = vpack.c.b16 %v1747, %v1743
  %v1808 = vpack.c.b16 %v1748, %v1744
  %v1809 = vpack.c.b16 %v1749, %v1745
  %v1810 = vpack.c.b16 %v1754, %v1750
  %v1811 = vpack.c.b16 %v1755, %v1751
  %v1812 = vpack.c.b16 %v1756, %v1752
  %v1813 = vpack.c.b16 %v1757, %v1753
  %v1814 = vpack.c.b16 %v1762, %v1758
  %v1815 = vpack.c.b16 %v1763, %v1759
  %v1816 = vpack.c.b16 %v1764, %v1760
  %v1817 = vpack.c.b16 %v1765, %v1761
  %v1818 = vpack.c.b16 %v1770, %v1766
  %v1819 = vpack.c.b16 %v1771, %v1767
  %v1820 = vpack.c.b16 %v1772, %v1768
  %v1821 = vpack.c.b16 %v1773, %v1769
  %v1822 = vpack.c.b16 %v1778, %v1774
  %v1823 = vpack.c.b16 %v1779, %v1775
  %v1824 = vpack.c.b16 %v1780, %v1776
  %v1825 = vpack.c.b16 %v1781, %v1777
  %v1826 = vpack.c.b16 %v1786, %v1782
  %v1827 = vpack.c.b16 %v1787, %v1783
  %v1828 = vpack.c.b16 %v1788, %v1784
  %v1829 = vpack.c.b16 %v1789, %v1785
  %v1830 = vpack.c.b16 %v1794, %v1790
  %v1831 = vpack.c.b16 %v1795, %v1791
  %v1832 = vpack.c.b16 %v1796, %v1792
  %v1833 = vpack.c.b16 %v1797, %v1793
  %v1834 = vpack.c.b16 %v1802, %v1798
  %v1835 = vpack.c.b16 %v1803, %v1799
  %v1836 = vpack.c.b16 %v1804, %v1800
  %v1837 = vpack.c.b16 %v1805, %v1801
  %1870 = vmatprep.subr.bf16.mxu0 %v1835
  %1871 = vmatpush1.bf16.msra.mxu0 %v1834
  %1872 = vmatprep.subr.bf16.mxu0 %v1831
  %1873 = vmatpush1.bf16.msra.mxu0 %v1830
  %1874 = vmatprep.subr.bf16.mxu0 %v1827
  %1875 = vmatpush1.bf16.msra.mxu0 %v1826
  %1876 = vmatprep.subr.bf16.mxu0 %v1823
  %1877 = vmatpush1.bf16.msra.mxu0 %v1822
  %1878 = vmatprep.subr.bf16.mxu0 %v1819
  %1879 = vmatpush1.bf16.msra.mxu0 %v1818
  %1880 = vmatprep.subr.bf16.mxu0 %v1815
  %1881 = vmatpush1.bf16.msra.mxu0 %v1814
  %1882 = vmatprep.subr.bf16.mxu0 %v1811
  %1883 = vmatpush1.bf16.msra.mxu0 %v1810
  %1884 = vmatprep.subr.bf16.mxu0 %v1807
  %1885 = vmatpush1.bf16.msra.mxu0 %v1806
  %1886 = vmatprep.subr.bf16.mxu0 0
  %1887 = vmatpush2.bf16.msra.mxu0 0
  %1888 = vmatprep.subr.bf16.mxu0 0
  %1889 = vmatpush2.bf16.msra.mxu0 0
  %1890 = vmatprep.subr.bf16.mxu0 0
  %1891 = vmatpush2.bf16.msra.mxu0 0
  %1892 = vmatprep.subr.bf16.mxu0 0
  %1893 = vmatpush2.bf16.msra.mxu0 0
  %1894 = vmatprep.subr.bf16.mxu0 0
  %1895 = vmatpush2.bf16.msra.mxu0 0
  %1896 = vmatprep.subr.bf16.mxu0 0
  %1897 = vmatpush2.bf16.msra.mxu0 0
  %1898 = vmatprep.subr.bf16.mxu0 0
  %1899 = vmatpush2.bf16.msra.mxu0 0
  %1900 = vmatprep.subr.bf16.mxu0 0
  %1901 = vmatpush2.bf16.msra.mxu0 0
  %1902 = vmatprep.mubr.bf16.mxu0 0
  %1903 = vmatmul.mubr.bf16.gmra.mxu0 %v1677
  %v1904 = vpop.f32.mrf.mxu0
  %v1905 = vadd.f32 0.0, %v1904
  %v1906 = vpop.f32.mrf.mxu0
  %v1907 = vadd.f32 0.0, %v1906
  %v1908 = vpop.f32.mrf.mxu0
  %v1909 = vpop.f32.mrf.mxu0
  %1910 = vdwg.mxu0
  %1911 = vmatprep.subr.bf16.mxu0 %v1837
  %1912 = vmatpush1.bf16.msra.mxu0 %v1836
  %1913 = vmatprep.subr.bf16.mxu0 %v1833
  %1914 = vmatpush1.bf16.msra.mxu0 %v1832
  %1915 = vmatprep.subr.bf16.mxu0 %v1829
  %1916 = vmatpush1.bf16.msra.mxu0 %v1828
  %1917 = vmatprep.subr.bf16.mxu0 %v1825
  %1918 = vmatpush1.bf16.msra.mxu0 %v1824
  %1919 = vmatprep.subr.bf16.mxu0 %v1821
  %1920 = vmatpush1.bf16.msra.mxu0 %v1820
  %1921 = vmatprep.subr.bf16.mxu0 %v1817
  %1922 = vmatpush1.bf16.msra.mxu0 %v1816
  %1923 = vmatprep.subr.bf16.mxu0 %v1813
  %1924 = vmatpush1.bf16.msra.mxu0 %v1812
  %1925 = vmatprep.subr.bf16.mxu0 %v1809
  %1926 = vmatpush1.bf16.msra.mxu0 %v1808
  %1927 = vmatprep.subr.bf16.mxu0 0
  %1928 = vmatpush2.bf16.msra.mxu0 0
  %1929 = vmatprep.subr.bf16.mxu0 0
  %1930 = vmatpush2.bf16.msra.mxu0 0
  %1931 = vmatprep.subr.bf16.mxu0 0
  %1932 = vmatpush2.bf16.msra.mxu0 0
  %1933 = vmatprep.subr.bf16.mxu0 0
  %1934 = vmatpush2.bf16.msra.mxu0 0
  %1935 = vmatprep.subr.bf16.mxu0 0
  %1936 = vmatpush2.bf16.msra.mxu0 0
  %1937 = vmatprep.subr.bf16.mxu0 0
  %1938 = vmatpush2.bf16.msra.mxu0 0
  %1939 = vmatprep.subr.bf16.mxu0 0
  %1940 = vmatpush2.bf16.msra.mxu0 0
  %1941 = vmatprep.subr.bf16.mxu0 0
  %1942 = vmatpush2.bf16.msra.mxu0 0
  %1943 = vmatprep.mubr.bf16.mxu0 0
  %1944 = vmatmul.mubr.bf16.gmra.mxu0 %v1677
  %v1945 = vpop.f32.mrf.mxu0
  %v1946 = vadd.f32 0.0, %v1945
  %v1947 = vpop.f32.mrf.mxu0
  %v1948 = vadd.f32 0.0, %v1947
  %v1949 = vpop.f32.mrf.mxu0
  %v1950 = vpop.f32.mrf.mxu0
  %1951 = vdwg.mxu0
  %v1952 = vadd.f32 %v1673, %v1905
  %v1953 = vadd.f32 %v1674, %v1907
  %v1954 = vadd.f32 %v1675, %v1946
  %v1955 = vadd.f32 %v1676, %v1948
  %v1956 = vmul.f32 %v1952, 0.5
  %v1957 = vtanh.pop %v1956
  %v1958 = vmul.f32 %v1957, 0.5
  %v1959 = vadd.f32 %v1958, 0.5
  %v1960 = vmul.f32 %v1953, 0.5
  %v1961 = vtanh.pop %v1960
  %v1962 = vmul.f32 %v1961, 0.5
  %v1963 = vadd.f32 %v1962, 0.5
  %v1964 = vtanh.pop %v1954
  %v1965 = vmul.f32 %v1955, 0.5
  %v1966 = vtanh.pop %v1965
  %v1967 = vmul.f32 %v1966, 0.5
  %v1968 = vadd.f32 %v1967, 0.5
  %v1969 = vmul.f32 %v1963, %v1667
  %v1970 = vmul.f32 %v1959, %v1964
  %v1971 = vadd.f32 %v1969, %v1970
  %v1972 = vtanh.pop %v1971
  %v1973 = vmul.f32 %v1968, %v1972
  %s1974 = scalar_lea.vmem %s6, 32
  %1975 = vst [vmem:[%s1974] sm:$0xff] %v1973
  %s1976 = scalar_lea.vmem [#allocation4], 160
  %v1977 = vld [vmem:[%s1976] sm:$0xff]
  %v1978 = vld [vmem:[%s1976 + $0x8] sm:$0xff]
  %v1979 = vld [vmem:[%s1976 + $0x10] sm:$0xff]
  %v1980 = vld [vmem:[%s1976 + $0x18] sm:$0xff]
  %v1981 = vpack.c.bf16 %v1973, %v1973
  %v1982 = vld [vmem:[%s2] sm:$0xff]
  %v1983 = vld [vmem:[%s2 + $0x8] sm:$0xff]
  %v1984 = vld [vmem:[%s2 + $0x10] sm:$0xff]
  %v1985 = vld [vmem:[%s2 + $0x18] sm:$0xff]
  %v1986 = vld [vmem:[%s2 + $0x20] sm:$0xff]
  %v1987 = vld [vmem:[%s2 + $0x28] sm:$0xff]
  %v1988 = vld [vmem:[%s2 + $0x30] sm:$0xff]
  %v1989 = vld [vmem:[%s2 + $0x38] sm:$0xff]
  %v1990 = vld [vmem:[%s2 + $0x40] sm:$0xff]
  %v1991 = vld [vmem:[%s2 + $0x48] sm:$0xff]
  %v1992 = vld [vmem:[%s2 + $0x50] sm:$0xff]
  %v1993 = vld [vmem:[%s2 + $0x58] sm:$0xff]
  %v1994 = vld [vmem:[%s2 + $0x60] sm:$0xff]
  %v1995 = vld [vmem:[%s2 + $0x68] sm:$0xff]
  %v1996 = vld [vmem:[%s2 + $0x70] sm:$0xff]
  %v1997 = vld [vmem:[%s2 + $0x78] sm:$0xff]
  %v1998 = vld [vmem:[%s2 + $0x80] sm:$0xff]
  %v1999 = vld [vmem:[%s2 + $0x88] sm:$0xff]
  %v2000 = vld [vmem:[%s2 + $0x90] sm:$0xff]
  %v2001 = vld [vmem:[%s2 + $0x98] sm:$0xff]
  %v2002 = vld [vmem:[%s2 + $0xa0] sm:$0xff]
  %v2003 = vld [vmem:[%s2 + $0xa8] sm:$0xff]
  %v2004 = vld [vmem:[%s2 + $0xb0] sm:$0xff]
  %v2005 = vld [vmem:[%s2 + $0xb8] sm:$0xff]
  %v2006 = vld [vmem:[%s2 + $0xc0] sm:$0xff]
  %v2007 = vld [vmem:[%s2 + $0xc8] sm:$0xff]
  %v2008 = vld [vmem:[%s2 + $0xd0] sm:$0xff]
  %v2009 = vld [vmem:[%s2 + $0xd8] sm:$0xff]
  %v2010 = vld [vmem:[%s2 + $0xe0] sm:$0xff]
  %v2011 = vld [vmem:[%s2 + $0xe8] sm:$0xff]
  %v2012 = vld [vmem:[%s2 + $0xf0] sm:$0xff]
  %v2013 = vld [vmem:[%s2 + $0xf8] sm:$0xff]
  %v2046 = vunpack.c.l.b16 %v1982
  %v2047 = vunpack.c.h.b16 %v1982
  %v2048 = vunpack.c.l.b16 %v1983
  %v2049 = vunpack.c.h.b16 %v1983
  %v2050 = vunpack.c.l.b16 %v1984
  %v2051 = vunpack.c.h.b16 %v1984
  %v2052 = vunpack.c.l.b16 %v1985
  %v2053 = vunpack.c.h.b16 %v1985
  %v2054 = vunpack.c.l.b16 %v1986
  %v2055 = vunpack.c.h.b16 %v1986
  %v2056 = vunpack.c.l.b16 %v1987
  %v2057 = vunpack.c.h.b16 %v1987
  %v2058 = vunpack.c.l.b16 %v1988
  %v2059 = vunpack.c.h.b16 %v1988
  %v2060 = vunpack.c.l.b16 %v1989
  %v2061 = vunpack.c.h.b16 %v1989
  %v2062 = vunpack.c.l.b16 %v1990
  %v2063 = vunpack.c.h.b16 %v1990
  %v2064 = vunpack.c.l.b16 %v1991
  %v2065 = vunpack.c.h.b16 %v1991
  %v2066 = vunpack.c.l.b16 %v1992
  %v2067 = vunpack.c.h.b16 %v1992
  %v2068 = vunpack.c.l.b16 %v1993
  %v2069 = vunpack.c.h.b16 %v1993
  %v2070 = vunpack.c.l.b16 %v1994
  %v2071 = vunpack.c.h.b16 %v1994
  %v2072 = vunpack.c.l.b16 %v1995
  %v2073 = vunpack.c.h.b16 %v1995
  %v2074 = vunpack.c.l.b16 %v1996
  %v2075 = vunpack.c.h.b16 %v1996
  %v2076 = vunpack.c.l.b16 %v1997
  %v2077 = vunpack.c.h.b16 %v1997
  %v2078 = vunpack.c.l.b16 %v1998
  %v2079 = vunpack.c.h.b16 %v1998
  %v2080 = vunpack.c.l.b16 %v1999
  %v2081 = vunpack.c.h.b16 %v1999
  %v2082 = vunpack.c.l.b16 %v2000
  %v2083 = vunpack.c.h.b16 %v2000
  %v2084 = vunpack.c.l.b16 %v2001
  %v2085 = vunpack.c.h.b16 %v2001
  %v2086 = vunpack.c.l.b16 %v2002
  %v2087 = vunpack.c.h.b16 %v2002
  %v2088 = vunpack.c.l.b16 %v2003
  %v2089 = vunpack.c.h.b16 %v2003
  %v2090 = vunpack.c.l.b16 %v2004
  %v2091 = vunpack.c.h.b16 %v2004
  %v2092 = vunpack.c.l.b16 %v2005
  %v2093 = vunpack.c.h.b16 %v2005
  %v2094 = vunpack.c.l.b16 %v2006
  %v2095 = vunpack.c.h.b16 %v2006
  %v2096 = vunpack.c.l.b16 %v2007
  %v2097 = vunpack.c.h.b16 %v2007
  %v2098 = vunpack.c.l.b16 %v2008
  %v2099 = vunpack.c.h.b16 %v2008
  %v2100 = vunpack.c.l.b16 %v2009
  %v2101 = vunpack.c.h.b16 %v2009
  %v2102 = vunpack.c.l.b16 %v2010
  %v2103 = vunpack.c.h.b16 %v2010
  %v2104 = vunpack.c.l.b16 %v2011
  %v2105 = vunpack.c.h.b16 %v2011
  %v2106 = vunpack.c.l.b16 %v2012
  %v2107 = vunpack.c.h.b16 %v2012
  %v2108 = vunpack.c.l.b16 %v2013
  %v2109 = vunpack.c.h.b16 %v2013
  %v2110 = vpack.c.b16 %v2050, %v2046
  %v2111 = vpack.c.b16 %v2051, %v2047
  %v2112 = vpack.c.b16 %v2052, %v2048
  %v2113 = vpack.c.b16 %v2053, %v2049
  %v2114 = vpack.c.b16 %v2058, %v2054
  %v2115 = vpack.c.b16 %v2059, %v2055
  %v2116 = vpack.c.b16 %v2060, %v2056
  %v2117 = vpack.c.b16 %v2061, %v2057
  %v2118 = vpack.c.b16 %v2066, %v2062
  %v2119 = vpack.c.b16 %v2067, %v2063
  %v2120 = vpack.c.b16 %v2068, %v2064
  %v2121 = vpack.c.b16 %v2069, %v2065
  %v2122 = vpack.c.b16 %v2074, %v2070
  %v2123 = vpack.c.b16 %v2075, %v2071
  %v2124 = vpack.c.b16 %v2076, %v2072
  %v2125 = vpack.c.b16 %v2077, %v2073
  %v2126 = vpack.c.b16 %v2082, %v2078
  %v2127 = vpack.c.b16 %v2083, %v2079
  %v2128 = vpack.c.b16 %v2084, %v2080
  %v2129 = vpack.c.b16 %v2085, %v2081
  %v2130 = vpack.c.b16 %v2090, %v2086
  %v2131 = vpack.c.b16 %v2091, %v2087
  %v2132 = vpack.c.b16 %v2092, %v2088
  %v2133 = vpack.c.b16 %v2093, %v2089
  %v2134 = vpack.c.b16 %v2098, %v2094
  %v2135 = vpack.c.b16 %v2099, %v2095
  %v2136 = vpack.c.b16 %v2100, %v2096
  %v2137 = vpack.c.b16 %v2101, %v2097
  %v2138 = vpack.c.b16 %v2106, %v2102
  %v2139 = vpack.c.b16 %v2107, %v2103
  %v2140 = vpack.c.b16 %v2108, %v2104
  %v2141 = vpack.c.b16 %v2109, %v2105
  %2174 = vmatprep.subr.bf16.mxu0 %v2139
  %2175 = vmatpush1.bf16.msra.mxu0 %v2138
  %2176 = vmatprep.subr.bf16.mxu0 %v2135
  %2177 = vmatpush1.bf16.msra.mxu0 %v2134
  %2178 = vmatprep.subr.bf16.mxu0 %v2131
  %2179 = vmatpush1.bf16.msra.mxu0 %v2130
  %2180 = vmatprep.subr.bf16.mxu0 %v2127
  %2181 = vmatpush1.bf16.msra.mxu0 %v2126
  %2182 = vmatprep.subr.bf16.mxu0 %v2123
  %2183 = vmatpush1.bf16.msra.mxu0 %v2122
  %2184 = vmatprep.subr.bf16.mxu0 %v2119
  %2185 = vmatpush1.bf16.msra.mxu0 %v2118
  %2186 = vmatprep.subr.bf16.mxu0 %v2115
  %2187 = vmatpush1.bf16.msra.mxu0 %v2114
  %2188 = vmatprep.subr.bf16.mxu0 %v2111
  %2189 = vmatpush1.bf16.msra.mxu0 %v2110
  %2190 = vmatprep.subr.bf16.mxu0 0
  %2191 = vmatpush2.bf16.msra.mxu0 0
  %2192 = vmatprep.subr.bf16.mxu0 0
  %2193 = vmatpush2.bf16.msra.mxu0 0
  %2194 = vmatprep.subr.bf16.mxu0 0
  %2195 = vmatpush2.bf16.msra.mxu0 0
  %2196 = vmatprep.subr.bf16.mxu0 0
  %2197 = vmatpush2.bf16.msra.mxu0 0
  %2198 = vmatprep.subr.bf16.mxu0 0
  %2199 = vmatpush2.bf16.msra.mxu0 0
  %2200 = vmatprep.subr.bf16.mxu0 0
  %2201 = vmatpush2.bf16.msra.mxu0 0
  %2202 = vmatprep.subr.bf16.mxu0 0
  %2203 = vmatpush2.bf16.msra.mxu0 0
  %2204 = vmatprep.subr.bf16.mxu0 0
  %2205 = vmatpush2.bf16.msra.mxu0 0
  %2206 = vmatprep.mubr.bf16.mxu0 0
  %2207 = vmatmul.mubr.bf16.gmra.mxu0 %v1981
  %v2208 = vpop.f32.mrf.mxu0
  %v2209 = vadd.f32 0.0, %v2208
  %v2210 = vpop.f32.mrf.mxu0
  %v2211 = vadd.f32 0.0, %v2210
  %v2212 = vpop.f32.mrf.mxu0
  %v2213 = vpop.f32.mrf.mxu0
  %2214 = vdwg.mxu0
  %2215 = vmatprep.subr.bf16.mxu0 %v2141
  %2216 = vmatpush1.bf16.msra.mxu0 %v2140
  %2217 = vmatprep.subr.bf16.mxu0 %v2137
  %2218 = vmatpush1.bf16.msra.mxu0 %v2136
  %2219 = vmatprep.subr.bf16.mxu0 %v2133
  %2220 = vmatpush1.bf16.msra.mxu0 %v2132
  %2221 = vmatprep.subr.bf16.mxu0 %v2129
  %2222 = vmatpush1.bf16.msra.mxu0 %v2128
  %2223 = vmatprep.subr.bf16.mxu0 %v2125
  %2224 = vmatpush1.bf16.msra.mxu0 %v2124
  %2225 = vmatprep.subr.bf16.mxu0 %v2121
  %2226 = vmatpush1.bf16.msra.mxu0 %v2120
  %2227 = vmatprep.subr.bf16.mxu0 %v2117
  %2228 = vmatpush1.bf16.msra.mxu0 %v2116
  %2229 = vmatprep.subr.bf16.mxu0 %v2113
  %2230 = vmatpush1.bf16.msra.mxu0 %v2112
  %2231 = vmatprep.subr.bf16.mxu0 0
  %2232 = vmatpush2.bf16.msra.mxu0 0
  %2233 = vmatprep.subr.bf16.mxu0 0
  %2234 = vmatpush2.bf16.msra.mxu0 0
  %2235 = vmatprep.subr.bf16.mxu0 0
  %2236 = vmatpush2.bf16.msra.mxu0 0
  %2237 = vmatprep.subr.bf16.mxu0 0
  %2238 = vmatpush2.bf16.msra.mxu0 0
  %2239 = vmatprep.subr.bf16.mxu0 0
  %2240 = vmatpush2.bf16.msra.mxu0 0
  %2241 = vmatprep.subr.bf16.mxu0 0
  %2242 = vmatpush2.bf16.msra.mxu0 0
  %2243 = vmatprep.subr.bf16.mxu0 0
  %2244 = vmatpush2.bf16.msra.mxu0 0
  %2245 = vmatprep.subr.bf16.mxu0 0
  %2246 = vmatpush2.bf16.msra.mxu0 0
  %2247 = vmatprep.mubr.bf16.mxu0 0
  %2248 = vmatmul.mubr.bf16.gmra.mxu0 %v1981
  %v2249 = vpop.f32.mrf.mxu0
  %v2250 = vadd.f32 0.0, %v2249
  %v2251 = vpop.f32.mrf.mxu0
  %v2252 = vadd.f32 0.0, %v2251
  %v2253 = vpop.f32.mrf.mxu0
  %v2254 = vpop.f32.mrf.mxu0
  %2255 = vdwg.mxu0
  %v2256 = vadd.f32 %v1977, %v2209
  %v2257 = vadd.f32 %v1978, %v2211
  %v2258 = vadd.f32 %v1979, %v2250
  %v2259 = vadd.f32 %v1980, %v2252
  %v2260 = vmul.f32 %v2256, 0.5
  %v2261 = vtanh.pop %v2260
  %v2262 = vmul.f32 %v2261, 0.5
  %v2263 = vadd.f32 %v2262, 0.5
  %v2264 = vmul.f32 %v2257, 0.5
  %v2265 = vtanh.pop %v2264
  %v2266 = vmul.f32 %v2265, 0.5
  %v2267 = vadd.f32 %v2266, 0.5
  %v2268 = vtanh.pop %v2258
  %v2269 = vmul.f32 %v2259, 0.5
  %v2270 = vtanh.pop %v2269
  %v2271 = vmul.f32 %v2270, 0.5
  %v2272 = vadd.f32 %v2271, 0.5
  %v2273 = vmul.f32 %v2267, %v1971
  %v2274 = vmul.f32 %v2263, %v2268
  %v2275 = vadd.f32 %v2273, %v2274
  %v2276 = vtanh.pop %v2275
  %v2277 = vmul.f32 %v2272, %v2276
  %s2278 = scalar_lea.vmem %s6, 40
  %2279 = vst [vmem:[%s2278] sm:$0xff] %v2277
  %s2280 = scalar_lea.vmem [#allocation4], 192
  %v2281 = vld [vmem:[%s2280] sm:$0xff]
  %v2282 = vld [vmem:[%s2280 + $0x8] sm:$0xff]
  %v2283 = vld [vmem:[%s2280 + $0x10] sm:$0xff]
  %v2284 = vld [vmem:[%s2280 + $0x18] sm:$0xff]
  %v2285 = vpack.c.bf16 %v2277, %v2277
  %v2286 = vld [vmem:[%s2] sm:$0xff]
  %v2287 = vld [vmem:[%s2 + $0x8] sm:$0xff]
  %v2288 = vld [vmem:[%s2 + $0x10] sm:$0xff]
  %v2289 = vld [vmem:[%s2 + $0x18] sm:$0xff]
  %v2290 = vld [vmem:[%s2 + $0x20] sm:$0xff]
  %v2291 = vld [vmem:[%s2 + $0x28] sm:$0xff]
  %v2292 = vld [vmem:[%s2 + $0x30] sm:$0xff]
  %v2293 = vld [vmem:[%s2 + $0x38] sm:$0xff]
  %v2294 = vld [vmem:[%s2 + $0x40] sm:$0xff]
  %v2295 = vld [vmem:[%s2 + $0x48] sm:$0xff]
  %v2296 = vld [vmem:[%s2 + $0x50] sm:$0xff]
  %v2297 = vld [vmem:[%s2 + $0x58] sm:$0xff]
  %v2298 = vld [vmem:[%s2 + $0x60] sm:$0xff]
  %v2299 = vld [vmem:[%s2 + $0x68] sm:$0xff]
  %v2300 = vld [vmem:[%s2 + $0x70] sm:$0xff]
  %v2301 = vld [vmem:[%s2 + $0x78] sm:$0xff]
  %v2302 = vld [vmem:[%s2 + $0x80] sm:$0xff]
  %v2303 = vld [vmem:[%s2 + $0x88] sm:$0xff]
  %v2304 = vld [vmem:[%s2 + $0x90] sm:$0xff]
  %v2305 = vld [vmem:[%s2 + $0x98] sm:$0xff]
  %v2306 = vld [vmem:[%s2 + $0xa0] sm:$0xff]
  %v2307 = vld [vmem:[%s2 + $0xa8] sm:$0xff]
  %v2308 = vld [vmem:[%s2 + $0xb0] sm:$0xff]
  %v2309 = vld [vmem:[%s2 + $0xb8] sm:$0xff]
  %v2310 = vld [vmem:[%s2 + $0xc0] sm:$0xff]
  %v2311 = vld [vmem:[%s2 + $0xc8] sm:$0xff]
  %v2312 = vld [vmem:[%s2 + $0xd0] sm:$0xff]
  %v2313 = vld [vmem:[%s2 + $0xd8] sm:$0xff]
  %v2314 = vld [vmem:[%s2 + $0xe0] sm:$0xff]
  %v2315 = vld [vmem:[%s2 + $0xe8] sm:$0xff]
  %v2316 = vld [vmem:[%s2 + $0xf0] sm:$0xff]
  %v2317 = vld [vmem:[%s2 + $0xf8] sm:$0xff]
  %v2350 = vunpack.c.l.b16 %v2286
  %v2351 = vunpack.c.h.b16 %v2286
  %v2352 = vunpack.c.l.b16 %v2287
  %v2353 = vunpack.c.h.b16 %v2287
  %v2354 = vunpack.c.l.b16 %v2288
  %v2355 = vunpack.c.h.b16 %v2288
  %v2356 = vunpack.c.l.b16 %v2289
  %v2357 = vunpack.c.h.b16 %v2289
  %v2358 = vunpack.c.l.b16 %v2290
  %v2359 = vunpack.c.h.b16 %v2290
  %v2360 = vunpack.c.l.b16 %v2291
  %v2361 = vunpack.c.h.b16 %v2291
  %v2362 = vunpack.c.l.b16 %v2292
  %v2363 = vunpack.c.h.b16 %v2292
  %v2364 = vunpack.c.l.b16 %v2293
  %v2365 = vunpack.c.h.b16 %v2293
  %v2366 = vunpack.c.l.b16 %v2294
  %v2367 = vunpack.c.h.b16 %v2294
  %v2368 = vunpack.c.l.b16 %v2295
  %v2369 = vunpack.c.h.b16 %v2295
  %v2370 = vunpack.c.l.b16 %v2296
  %v2371 = vunpack.c.h.b16 %v2296
  %v2372 = vunpack.c.l.b16 %v2297
  %v2373 = vunpack.c.h.b16 %v2297
  %v2374 = vunpack.c.l.b16 %v2298
  %v2375 = vunpack.c.h.b16 %v2298
  %v2376 = vunpack.c.l.b16 %v2299
  %v2377 = vunpack.c.h.b16 %v2299
  %v2378 = vunpack.c.l.b16 %v2300
  %v2379 = vunpack.c.h.b16 %v2300
  %v2380 = vunpack.c.l.b16 %v2301
  %v2381 = vunpack.c.h.b16 %v2301
  %v2382 = vunpack.c.l.b16 %v2302
  %v2383 = vunpack.c.h.b16 %v2302
  %v2384 = vunpack.c.l.b16 %v2303
  %v2385 = vunpack.c.h.b16 %v2303
  %v2386 = vunpack.c.l.b16 %v2304
  %v2387 = vunpack.c.h.b16 %v2304
  %v2388 = vunpack.c.l.b16 %v2305
  %v2389 = vunpack.c.h.b16 %v2305
  %v2390 = vunpack.c.l.b16 %v2306
  %v2391 = vunpack.c.h.b16 %v2306
  %v2392 = vunpack.c.l.b16 %v2307
  %v2393 = vunpack.c.h.b16 %v2307
  %v2394 = vunpack.c.l.b16 %v2308
  %v2395 = vunpack.c.h.b16 %v2308
  %v2396 = vunpack.c.l.b16 %v2309
  %v2397 = vunpack.c.h.b16 %v2309
  %v2398 = vunpack.c.l.b16 %v2310
  %v2399 = vunpack.c.h.b16 %v2310
  %v2400 = vunpack.c.l.b16 %v2311
  %v2401 = vunpack.c.h.b16 %v2311
  %v2402 = vunpack.c.l.b16 %v2312
  %v2403 = vunpack.c.h.b16 %v2312
  %v2404 = vunpack.c.l.b16 %v2313
  %v2405 = vunpack.c.h.b16 %v2313
  %v2406 = vunpack.c.l.b16 %v2314
  %v2407 = vunpack.c.h.b16 %v2314
  %v2408 = vunpack.c.l.b16 %v2315
  %v2409 = vunpack.c.h.b16 %v2315
  %v2410 = vunpack.c.l.b16 %v2316
  %v2411 = vunpack.c.h.b16 %v2316
  %v2412 = vunpack.c.l.b16 %v2317
  %v2413 = vunpack.c.h.b16 %v2317
  %v2414 = vpack.c.b16 %v2354, %v2350
  %v2415 = vpack.c.b16 %v2355, %v2351
  %v2416 = vpack.c.b16 %v2356, %v2352
  %v2417 = vpack.c.b16 %v2357, %v2353
  %v2418 = vpack.c.b16 %v2362, %v2358
  %v2419 = vpack.c.b16 %v2363, %v2359
  %v2420 = vpack.c.b16 %v2364, %v2360
  %v2421 = vpack.c.b16 %v2365, %v2361
  %v2422 = vpack.c.b16 %v2370, %v2366
  %v2423 = vpack.c.b16 %v2371, %v2367
  %v2424 = vpack.c.b16 %v2372, %v2368
  %v2425 = vpack.c.b16 %v2373, %v2369
  %v2426 = vpack.c.b16 %v2378, %v2374
  %v2427 = vpack.c.b16 %v2379, %v2375
  %v2428 = vpack.c.b16 %v2380, %v2376
  %v2429 = vpack.c.b16 %v2381, %v2377
  %v2430 = vpack.c.b16 %v2386, %v2382
  %v2431 = vpack.c.b16 %v2387, %v2383
  %v2432 = vpack.c.b16 %v2388, %v2384
  %v2433 = vpack.c.b16 %v2389, %v2385
  %v2434 = vpack.c.b16 %v2394, %v2390
  %v2435 = vpack.c.b16 %v2395, %v2391
  %v2436 = vpack.c.b16 %v2396, %v2392
  %v2437 = vpack.c.b16 %v2397, %v2393
  %v2438 = vpack.c.b16 %v2402, %v2398
  %v2439 = vpack.c.b16 %v2403, %v2399
  %v2440 = vpack.c.b16 %v2404, %v2400
  %v2441 = vpack.c.b16 %v2405, %v2401
  %v2442 = vpack.c.b16 %v2410, %v2406
  %v2443 = vpack.c.b16 %v2411, %v2407
  %v2444 = vpack.c.b16 %v2412, %v2408
  %v2445 = vpack.c.b16 %v2413, %v2409
  %2478 = vmatprep.subr.bf16.mxu0 %v2443
  %2479 = vmatpush1.bf16.msra.mxu0 %v2442
  %2480 = vmatprep.subr.bf16.mxu0 %v2439
  %2481 = vmatpush1.bf16.msra.mxu0 %v2438
  %2482 = vmatprep.subr.bf16.mxu0 %v2435
  %2483 = vmatpush1.bf16.msra.mxu0 %v2434
  %2484 = vmatprep.subr.bf16.mxu0 %v2431
  %2485 = vmatpush1.bf16.msra.mxu0 %v2430
  %2486 = vmatprep.subr.bf16.mxu0 %v2427
  %2487 = vmatpush1.bf16.msra.mxu0 %v2426
  %2488 = vmatprep.subr.bf16.mxu0 %v2423
  %2489 = vmatpush1.bf16.msra.mxu0 %v2422
  %2490 = vmatprep.subr.bf16.mxu0 %v2419
  %2491 = vmatpush1.bf16.msra.mxu0 %v2418
  %2492 = vmatprep.subr.bf16.mxu0 %v2415
  %2493 = vmatpush1.bf16.msra.mxu0 %v2414
  %2494 = vmatprep.subr.bf16.mxu0 0
  %2495 = vmatpush2.bf16.msra.mxu0 0
  %2496 = vmatprep.subr.bf16.mxu0 0
  %2497 = vmatpush2.bf16.msra.mxu0 0
  %2498 = vmatprep.subr.bf16.mxu0 0
  %2499 = vmatpush2.bf16.msra.mxu0 0
  %2500 = vmatprep.subr.bf16.mxu0 0
  %2501 = vmatpush2.bf16.msra.mxu0 0
  %2502 = vmatprep.subr.bf16.mxu0 0
  %2503 = vmatpush2.bf16.msra.mxu0 0
  %2504 = vmatprep.subr.bf16.mxu0 0
  %2505 = vmatpush2.bf16.msra.mxu0 0
  %2506 = vmatprep.subr.bf16.mxu0 0
  %2507 = vmatpush2.bf16.msra.mxu0 0
  %2508 = vmatprep.subr.bf16.mxu0 0
  %2509 = vmatpush2.bf16.msra.mxu0 0
  %2510 = vmatprep.mubr.bf16.mxu0 0
  %2511 = vmatmul.mubr.bf16.gmra.mxu0 %v2285
  %v2512 = vpop.f32.mrf.mxu0
  %v2513 = vadd.f32 0.0, %v2512
  %v2514 = vpop.f32.mrf.mxu0
  %v2515 = vadd.f32 0.0, %v2514
  %v2516 = vpop.f32.mrf.mxu0
  %v2517 = vpop.f32.mrf.mxu0
  %2518 = vdwg.mxu0
  %2519 = vmatprep.subr.bf16.mxu0 %v2445
  %2520 = vmatpush1.bf16.msra.mxu0 %v2444
  %2521 = vmatprep.subr.bf16.mxu0 %v2441
  %2522 = vmatpush1.bf16.msra.mxu0 %v2440
  %2523 = vmatprep.subr.bf16.mxu0 %v2437
  %2524 = vmatpush1.bf16.msra.mxu0 %v2436
  %2525 = vmatprep.subr.bf16.mxu0 %v2433
  %2526 = vmatpush1.bf16.msra.mxu0 %v2432
  %2527 = vmatprep.subr.bf16.mxu0 %v2429
  %2528 = vmatpush1.bf16.msra.mxu0 %v2428
  %2529 = vmatprep.subr.bf16.mxu0 %v2425
  %2530 = vmatpush1.bf16.msra.mxu0 %v2424
  %2531 = vmatprep.subr.bf16.mxu0 %v2421
  %2532 = vmatpush1.bf16.msra.mxu0 %v2420
  %2533 = vmatprep.subr.bf16.mxu0 %v2417
  %2534 = vmatpush1.bf16.msra.mxu0 %v2416
  %2535 = vmatprep.subr.bf16.mxu0 0
  %2536 = vmatpush2.bf16.msra.mxu0 0
  %2537 = vmatprep.subr.bf16.mxu0 0
  %2538 = vmatpush2.bf16.msra.mxu0 0
  %2539 = vmatprep.subr.bf16.mxu0 0
  %2540 = vmatpush2.bf16.msra.mxu0 0
  %2541 = vmatprep.subr.bf16.mxu0 0
  %2542 = vmatpush2.bf16.msra.mxu0 0
  %2543 = vmatprep.subr.bf16.mxu0 0
  %2544 = vmatpush2.bf16.msra.mxu0 0
  %2545 = vmatprep.subr.bf16.mxu0 0
  %2546 = vmatpush2.bf16.msra.mxu0 0
  %2547 = vmatprep.subr.bf16.mxu0 0
  %2548 = vmatpush2.bf16.msra.mxu0 0
  %2549 = vmatprep.subr.bf16.mxu0 0
  %2550 = vmatpush2.bf16.msra.mxu0 0
  %2551 = vmatprep.mubr.bf16.mxu0 0
  %2552 = vmatmul.mubr.bf16.gmra.mxu0 %v2285
  %v2553 = vpop.f32.mrf.mxu0
  %v2554 = vadd.f32 0.0, %v2553
  %v2555 = vpop.f32.mrf.mxu0
  %v2556 = vadd.f32 0.0, %v2555
  %v2557 = vpop.f32.mrf.mxu0
  %v2558 = vpop.f32.mrf.mxu0
  %2559 = vdwg.mxu0
  %v2560 = vadd.f32 %v2281, %v2513
  %v2561 = vadd.f32 %v2282, %v2515
  %v2562 = vadd.f32 %v2283, %v2554
  %v2563 = vadd.f32 %v2284, %v2556
  %v2564 = vmul.f32 %v2560, 0.5
  %v2565 = vtanh.pop %v2564
  %v2566 = vmul.f32 %v2565, 0.5
  %v2567 = vadd.f32 %v2566, 0.5
  %v2568 = vmul.f32 %v2561, 0.5
  %v2569 = vtanh.pop %v2568
  %v2570 = vmul.f32 %v2569, 0.5
  %v2571 = vadd.f32 %v2570, 0.5
  %v2572 = vtanh.pop %v2562
  %v2573 = vmul.f32 %v2563, 0.5
  %v2574 = vtanh.pop %v2573
  %v2575 = vmul.f32 %v2574, 0.5
  %v2576 = vadd.f32 %v2575, 0.5
  %v2577 = vmul.f32 %v2571, %v2275
  %v2578 = vmul.f32 %v2567, %v2572
  %v2579 = vadd.f32 %v2577, %v2578
  %v2580 = vtanh.pop %v2579
  %v2581 = vmul.f32 %v2576, %v2580
  %s2582 = scalar_lea.vmem %s6, 48
  %2583 = vst [vmem:[%s2582] sm:$0xff] %v2581
  %s2584 = scalar_lea.vmem [#allocation4], 224
  %v2585 = vld [vmem:[%s2584] sm:$0xff]
  %v2586 = vld [vmem:[%s2584 + $0x8] sm:$0xff]
  %v2587 = vld [vmem:[%s2584 + $0x10] sm:$0xff]
  %v2588 = vld [vmem:[%s2584 + $0x18] sm:$0xff]
  %v2589 = vpack.c.bf16 %v2581, %v2581
  %v2590 = vld [vmem:[%s2] sm:$0xff]
  %v2591 = vld [vmem:[%s2 + $0x8] sm:$0xff]
  %v2592 = vld [vmem:[%s2 + $0x10] sm:$0xff]
  %v2593 = vld [vmem:[%s2 + $0x18] sm:$0xff]
  %v2594 = vld [vmem:[%s2 + $0x20] sm:$0xff]
  %v2595 = vld [vmem:[%s2 + $0x28] sm:$0xff]
  %v2596 = vld [vmem:[%s2 + $0x30] sm:$0xff]
  %v2597 = vld [vmem:[%s2 + $0x38] sm:$0xff]
  %v2598 = vld [vmem:[%s2 + $0x40] sm:$0xff]
  %v2599 = vld [vmem:[%s2 + $0x48] sm:$0xff]
  %v2600 = vld [vmem:[%s2 + $0x50] sm:$0xff]
  %v2601 = vld [vmem:[%s2 + $0x58] sm:$0xff]
  %v2602 = vld [vmem:[%s2 + $0x60] sm:$0xff]
  %v2603 = vld [vmem:[%s2 + $0x68] sm:$0xff]
  %v2604 = vld [vmem:[%s2 + $0x70] sm:$0xff]
  %v2605 = vld [vmem:[%s2 + $0x78] sm:$0xff]
  %v2606 = vld [vmem:[%s2 + $0x80] sm:$0xff]
  %v2607 = vld [vmem:[%s2 + $0x88] sm:$0xff]
  %v2608 = vld [vmem:[%s2 + $0x90] sm:$0xff]
  %v2609 = vld [vmem:[%s2 + $0x98] sm:$0xff]
  %v2610 = vld [vmem:[%s2 + $0xa0] sm:$0xff]
  %v2611 = vld [vmem:[%s2 + $0xa8] sm:$0xff]
  %v2612 = vld [vmem:[%s2 + $0xb0] sm:$0xff]
  %v2613 = vld [vmem:[%s2 + $0xb8] sm:$0xff]
  %v2614 = vld [vmem:[%s2 + $0xc0] sm:$0xff]
  %v2615 = vld [vmem:[%s2 + $0xc8] sm:$0xff]
  %v2616 = vld [vmem:[%s2 + $0xd0] sm:$0xff]
  %v2617 = vld [vmem:[%s2 + $0xd8] sm:$0xff]
  %v2618 = vld [vmem:[%s2 + $0xe0] sm:$0xff]
  %v2619 = vld [vmem:[%s2 + $0xe8] sm:$0xff]
  %v2620 = vld [vmem:[%s2 + $0xf0] sm:$0xff]
  %v2621 = vld [vmem:[%s2 + $0xf8] sm:$0xff]
  %v2654 = vunpack.c.l.b16 %v2590
  %v2655 = vunpack.c.h.b16 %v2590
  %v2656 = vunpack.c.l.b16 %v2591
  %v2657 = vunpack.c.h.b16 %v2591
  %v2658 = vunpack.c.l.b16 %v2592
  %v2659 = vunpack.c.h.b16 %v2592
  %v2660 = vunpack.c.l.b16 %v2593
  %v2661 = vunpack.c.h.b16 %v2593
  %v2662 = vunpack.c.l.b16 %v2594
  %v2663 = vunpack.c.h.b16 %v2594
  %v2664 = vunpack.c.l.b16 %v2595
  %v2665 = vunpack.c.h.b16 %v2595
  %v2666 = vunpack.c.l.b16 %v2596
  %v2667 = vunpack.c.h.b16 %v2596
  %v2668 = vunpack.c.l.b16 %v2597
  %v2669 = vunpack.c.h.b16 %v2597
  %v2670 = vunpack.c.l.b16 %v2598
  %v2671 = vunpack.c.h.b16 %v2598
  %v2672 = vunpack.c.l.b16 %v2599
  %v2673 = vunpack.c.h.b16 %v2599
  %v2674 = vunpack.c.l.b16 %v2600
  %v2675 = vunpack.c.h.b16 %v2600
  %v2676 = vunpack.c.l.b16 %v2601
  %v2677 = vunpack.c.h.b16 %v2601
  %v2678 = vunpack.c.l.b16 %v2602
  %v2679 = vunpack.c.h.b16 %v2602
  %v2680 = vunpack.c.l.b16 %v2603
  %v2681 = vunpack.c.h.b16 %v2603
  %v2682 = vunpack.c.l.b16 %v2604
  %v2683 = vunpack.c.h.b16 %v2604
  %v2684 = vunpack.c.l.b16 %v2605
  %v2685 = vunpack.c.h.b16 %v2605
  %v2686 = vunpack.c.l.b16 %v2606
  %v2687 = vunpack.c.h.b16 %v2606
  %v2688 = vunpack.c.l.b16 %v2607
  %v2689 = vunpack.c.h.b16 %v2607
  %v2690 = vunpack.c.l.b16 %v2608
  %v2691 = vunpack.c.h.b16 %v2608
  %v2692 = vunpack.c.l.b16 %v2609
  %v2693 = vunpack.c.h.b16 %v2609
  %v2694 = vunpack.c.l.b16 %v2610
  %v2695 = vunpack.c.h.b16 %v2610
  %v2696 = vunpack.c.l.b16 %v2611
  %v2697 = vunpack.c.h.b16 %v2611
  %v2698 = vunpack.c.l.b16 %v2612
  %v2699 = vunpack.c.h.b16 %v2612
  %v2700 = vunpack.c.l.b16 %v2613
  %v2701 = vunpack.c.h.b16 %v2613
  %v2702 = vunpack.c.l.b16 %v2614
  %v2703 = vunpack.c.h.b16 %v2614
  %v2704 = vunpack.c.l.b16 %v2615
  %v2705 = vunpack.c.h.b16 %v2615
  %v2706 = vunpack.c.l.b16 %v2616
  %v2707 = vunpack.c.h.b16 %v2616
  %v2708 = vunpack.c.l.b16 %v2617
  %v2709 = vunpack.c.h.b16 %v2617
  %v2710 = vunpack.c.l.b16 %v2618
  %v2711 = vunpack.c.h.b16 %v2618
  %v2712 = vunpack.c.l.b16 %v2619
  %v2713 = vunpack.c.h.b16 %v2619
  %v2714 = vunpack.c.l.b16 %v2620
  %v2715 = vunpack.c.h.b16 %v2620
  %v2716 = vunpack.c.l.b16 %v2621
  %v2717 = vunpack.c.h.b16 %v2621
  %v2718 = vpack.c.b16 %v2658, %v2654
  %v2719 = vpack.c.b16 %v2659, %v2655
  %v2720 = vpack.c.b16 %v2660, %v2656
  %v2721 = vpack.c.b16 %v2661, %v2657
  %v2722 = vpack.c.b16 %v2666, %v2662
  %v2723 = vpack.c.b16 %v2667, %v2663
  %v2724 = vpack.c.b16 %v2668, %v2664
  %v2725 = vpack.c.b16 %v2669, %v2665
  %v2726 = vpack.c.b16 %v2674, %v2670
  %v2727 = vpack.c.b16 %v2675, %v2671
  %v2728 = vpack.c.b16 %v2676, %v2672
  %v2729 = vpack.c.b16 %v2677, %v2673
  %v2730 = vpack.c.b16 %v2682, %v2678
  %v2731 = vpack.c.b16 %v2683, %v2679
  %v2732 = vpack.c.b16 %v2684, %v2680
  %v2733 = vpack.c.b16 %v2685, %v2681
  %v2734 = vpack.c.b16 %v2690, %v2686
  %v2735 = vpack.c.b16 %v2691, %v2687
  %v2736 = vpack.c.b16 %v2692, %v2688
  %v2737 = vpack.c.b16 %v2693, %v2689
  %v2738 = vpack.c.b16 %v2698, %v2694
  %v2739 = vpack.c.b16 %v2699, %v2695
  %v2740 = vpack.c.b16 %v2700, %v2696
  %v2741 = vpack.c.b16 %v2701, %v2697
  %v2742 = vpack.c.b16 %v2706, %v2702
  %v2743 = vpack.c.b16 %v2707, %v2703
  %v2744 = vpack.c.b16 %v2708, %v2704
  %v2745 = vpack.c.b16 %v2709, %v2705
  %v2746 = vpack.c.b16 %v2714, %v2710
  %v2747 = vpack.c.b16 %v2715, %v2711
  %v2748 = vpack.c.b16 %v2716, %v2712
  %v2749 = vpack.c.b16 %v2717, %v2713
  %2782 = vmatprep.subr.bf16.mxu0 %v2747
  %2783 = vmatpush1.bf16.msra.mxu0 %v2746
  %2784 = vmatprep.subr.bf16.mxu0 %v2743
  %2785 = vmatpush1.bf16.msra.mxu0 %v2742
  %2786 = vmatprep.subr.bf16.mxu0 %v2739
  %2787 = vmatpush1.bf16.msra.mxu0 %v2738
  %2788 = vmatprep.subr.bf16.mxu0 %v2735
  %2789 = vmatpush1.bf16.msra.mxu0 %v2734
  %2790 = vmatprep.subr.bf16.mxu0 %v2731
  %2791 = vmatpush1.bf16.msra.mxu0 %v2730
  %2792 = vmatprep.subr.bf16.mxu0 %v2727
  %2793 = vmatpush1.bf16.msra.mxu0 %v2726
  %2794 = vmatprep.subr.bf16.mxu0 %v2723
  %2795 = vmatpush1.bf16.msra.mxu0 %v2722
  %2796 = vmatprep.subr.bf16.mxu0 %v2719
  %2797 = vmatpush1.bf16.msra.mxu0 %v2718
  %2798 = vmatprep.subr.bf16.mxu0 0
  %2799 = vmatpush2.bf16.msra.mxu0 0
  %2800 = vmatprep.subr.bf16.mxu0 0
  %2801 = vmatpush2.bf16.msra.mxu0 0
  %2802 = vmatprep.subr.bf16.mxu0 0
  %2803 = vmatpush2.bf16.msra.mxu0 0
  %2804 = vmatprep.subr.bf16.mxu0 0
  %2805 = vmatpush2.bf16.msra.mxu0 0
  %2806 = vmatprep.subr.bf16.mxu0 0
  %2807 = vmatpush2.bf16.msra.mxu0 0
  %2808 = vmatprep.subr.bf16.mxu0 0
  %2809 = vmatpush2.bf16.msra.mxu0 0
  %2810 = vmatprep.subr.bf16.mxu0 0
  %2811 = vmatpush2.bf16.msra.mxu0 0
  %2812 = vmatprep.subr.bf16.mxu0 0
  %2813 = vmatpush2.bf16.msra.mxu0 0
  %2814 = vmatprep.mubr.bf16.mxu0 0
  %2815 = vmatmul.mubr.bf16.gmra.mxu0 %v2589
  %v2816 = vpop.f32.mrf.mxu0
  %v2817 = vadd.f32 0.0, %v2816
  %v2818 = vpop.f32.mrf.mxu0
  %v2819 = vadd.f32 0.0, %v2818
  %v2820 = vpop.f32.mrf.mxu0
  %v2821 = vpop.f32.mrf.mxu0
  %2822 = vdwg.mxu0
  %2823 = vmatprep.subr.bf16.mxu0 %v2749
  %2824 = vmatpush1.bf16.msra.mxu0 %v2748
  %2825 = vmatprep.subr.bf16.mxu0 %v2745
  %2826 = vmatpush1.bf16.msra.mxu0 %v2744
  %2827 = vmatprep.subr.bf16.mxu0 %v2741
  %2828 = vmatpush1.bf16.msra.mxu0 %v2740
  %2829 = vmatprep.subr.bf16.mxu0 %v2737
  %2830 = vmatpush1.bf16.msra.mxu0 %v2736
  %2831 = vmatprep.subr.bf16.mxu0 %v2733
  %2832 = vmatpush1.bf16.msra.mxu0 %v2732
  %2833 = vmatprep.subr.bf16.mxu0 %v2729
  %2834 = vmatpush1.bf16.msra.mxu0 %v2728
  %2835 = vmatprep.subr.bf16.mxu0 %v2725
  %2836 = vmatpush1.bf16.msra.mxu0 %v2724
  %2837 = vmatprep.subr.bf16.mxu0 %v2721
  %2838 = vmatpush1.bf16.msra.mxu0 %v2720
  %2839 = vmatprep.subr.bf16.mxu0 0
  %2840 = vmatpush2.bf16.msra.mxu0 0
  %2841 = vmatprep.subr.bf16.mxu0 0
  %2842 = vmatpush2.bf16.msra.mxu0 0
  %2843 = vmatprep.subr.bf16.mxu0 0
  %2844 = vmatpush2.bf16.msra.mxu0 0
  %2845 = vmatprep.subr.bf16.mxu0 0
  %2846 = vmatpush2.bf16.msra.mxu0 0
  %2847 = vmatprep.subr.bf16.mxu0 0
  %2848 = vmatpush2.bf16.msra.mxu0 0
  %2849 = vmatprep.subr.bf16.mxu0 0
  %2850 = vmatpush2.bf16.msra.mxu0 0
  %2851 = vmatprep.subr.bf16.mxu0 0
  %2852 = vmatpush2.bf16.msra.mxu0 0
  %2853 = vmatprep.subr.bf16.mxu0 0
  %2854 = vmatpush2.bf16.msra.mxu0 0
  %2855 = vmatprep.mubr.bf16.mxu0 0
  %2856 = vmatmul.mubr.bf16.gmra.mxu0 %v2589
  %v2857 = vpop.f32.mrf.mxu0
  %v2858 = vadd.f32 0.0, %v2857
  %v2859 = vpop.f32.mrf.mxu0
  %v2860 = vadd.f32 0.0, %v2859
  %v2861 = vpop.f32.mrf.mxu0
  %v2862 = vpop.f32.mrf.mxu0
  %2863 = vdwg.mxu0
  %v2864 = vadd.f32 %v2585, %v2817
  %v2865 = vadd.f32 %v2586, %v2819
  %v2866 = vadd.f32 %v2587, %v2858
  %v2867 = vadd.f32 %v2588, %v2860
  %v2868 = vmul.f32 %v2864, 0.5
  %v2869 = vtanh.pop %v2868
  %v2870 = vmul.f32 %v2869, 0.5
  %v2871 = vadd.f32 %v2870, 0.5
  %v2872 = vmul.f32 %v2865, 0.5
  %v2873 = vtanh.pop %v2872
  %v2874 = vmul.f32 %v2873, 0.5
  %v2875 = vadd.f32 %v2874, 0.5
  %v2876 = vtanh.pop %v2866
  %v2877 = vmul.f32 %v2867, 0.5
  %v2878 = vtanh.pop %v2877
  %v2879 = vmul.f32 %v2878, 0.5
  %v2880 = vadd.f32 %v2879, 0.5
  %v2881 = vmul.f32 %v2875, %v2579
  %v2882 = vmul.f32 %v2871, %v2876
  %v2883 = vadd.f32 %v2881, %v2882
  %v2884 = vtanh.pop %v2883
  %v2885 = vmul.f32 %v2880, %v2884
  %s2886 = scalar_lea.vmem %s6, 56
  %2887 = vst [vmem:[%s2886] sm:$0xff] %v2885
  %2888 = vst [vmem:[#allocation2] sm:$0xff] %v2885
  %2889 = vst [vmem:[#allocation3] sm:$0xff] %v2883
  // Predicated region
  $region30: #{custom_lstm_forward.5} parent=0 // pred_check
    _
  $region31: #{custom_lstm_forward.5} parent=0 // pred_check_branch
    %2891 = sbr.rel (0) target = $region33
  $region32: #{custom_lstm_forward.5} parent=0 // pred_region
    _
  $region33: #{custom_lstm_forward.5} parent=0 // pred_fallthru
    _
  // Predicated region
  $region34: #{custom_lstm_forward.5} parent=0 // pred_check
    _
  $region35: #{custom_lstm_forward.5} parent=0 // pred_check_branch
    %2893 = sbr.rel (0) target = $region37
  $region36: #{custom_lstm_forward.5} parent=0 // pred_region
    _
  $region37: #{custom_lstm_forward.5} parent=0 // pred_fallthru
    _

</llo_original>
